<compile_context>
chip_gen: v7x
topology: tpu7x:2x2x1
jax: 0.10.0
libtpu: 0.0.40
codegen_flags: <defaults>
</compile_context>

<pallas_src>
import functools

import jax
import jax.numpy as jnp
from jax import lax
from jax.experimental import pallas as pl
from jax.experimental.pallas import tpu as pltpu

EPS = 1e-5
LANE = 128          # channel dims are padded to multiples of this
PAD_W = 16          # sublane-aligned halo width of the 3x3 scratch


def _round_up(x, m):
    return (x + m - 1) // m * m


@functools.lru_cache(maxsize=None)
def _vmem_limit_bytes():
    """Half of physical VMEM, capped at 64 MiB (leaves headroom on v7x)."""
    cap = None
    try:
        cap = getattr(pltpu.get_tpu_info(), "vmem_capacity_bytes", None)
    except Exception:
        cap = None
    if not cap:
        cap = 64 * 1024 * 1024
    return int(max(16 * 1024 * 1024, min(cap // 2, 64 * 1024 * 1024)))


def _cparams(semantics):
    return pltpu.CompilerParams(dimension_semantics=semantics,
                                vmem_limit_bytes=_vmem_limit_bytes())


def _pick_row_tile(h, w, c, itemsize, target_bytes=2 * 1024 * 1024):
    """Largest row tile (multiple of 8, divisor of h) with x block <= target."""
    if h * w * c * itemsize <= target_bytes or h % 8 != 0:
        return h
    best = 8
    for th in range(8, h, 8):
        if h % th == 0 and th * w * c * itemsize <= target_bytes:
            best = th
    return best


# ----------------------------------------------------------------------------
# Kernels
# ----------------------------------------------------------------------------
def _moments_kernel(x_ref, mom_ref):
    """Per-image partial [sum, sum-of-squares] over (H, W) for every channel."""
    x = x_ref[0].astype(jnp.float32)                       # (H, W, C)
    s = jnp.sum(x, axis=(0, 1), keepdims=True)             # (1, 1, C)
    ss = jnp.sum(x * x, axis=(0, 1), keepdims=True)        # (1, 1, C)
    mom_ref[...] = jnp.concatenate([s, ss], axis=1)        # (1, 2, C)


def _conv1_stats_kernel(x_ref, s1_ref, t1_ref, w1_ref, h1_ref, mom_ref):
    """BN1 (folded scale/shift) + ReLU + 1x1 conv on a row tile.

    Writes h1 (bf16, reused by the conv2 pass — no recompute) and partial
    one-pass moments of h1 so BN2 batch stats can be formed on the host.
    Only the populated channel prefix (cin_pad lanes) of the buffer is read.
    """
    th, w, cin_pad = x_ref.shape[1], x_ref.shape[2], x_ref.shape[3]
    cm = w1_ref.shape[1]
    x = x_ref[0].astype(jnp.float32)                       # (TH, W, Cin_pad)
    a = jnp.maximum(x * s1_ref[...] + t1_ref[...], 0.0)    # BN1 + ReLU (f32)
    h1 = jnp.dot(a.reshape(th * w, cin_pad).astype(w1_ref.dtype), w1_ref[...],
                 preferred_element_type=jnp.float32)       # 1x1 conv on MXU
    h1_bf = h1.astype(h1_ref.dtype)
    h1_ref[0] = h1_bf.reshape(th, w, cm)
    h1f = h1_bf.astype(jnp.float32)                        # stats of what conv2 reads
    s = jnp.sum(h1f, axis=0, keepdims=True)                # (1, Cmid)
    ss = jnp.sum(h1f * h1f, axis=0, keepdims=True)
    mom_ref[...] = jnp.concatenate([s, ss], axis=0)[None, None]   # (1,1,2,Cmid)


def _conv2_kernel(h1_ref, s2_ref, t2_ref, w2_ref, xblk_ref, y_ref, mom_ref,
                  pad_ref):
    """Per (image, slot channel block): BN2+ReLU on cached h1, 3x3 conv as 9
    accumulating MXU dots (taps read from a zero-haloed VMEM scratch), add the
    result into this layer's 128-lane channel block of the shared buffer
    (dense concat, in place via aliasing) and emit that block's moments."""
    h, w, cm = h1_ref.shape[1], h1_ref.shape[2], h1_ref.shape[3]
    cb = y_ref.shape[3]                                    # 128 output lanes
    cdt = h1_ref.dtype
    wp = pad_ref.shape[1]

    h1 = h1_ref[0].astype(jnp.float32).reshape(h * w, cm)
    b = jnp.maximum(h1 * s2_ref[...] + t2_ref[...], 0.0)   # BN2 + ReLU
    b = b.reshape(h, w, cm).astype(cdt)

    # Stage `b` in a zero-haloed VMEM scratch.  The interior store starts at
    # sublane offset PAD_W (aligned, unmasked); only the halo is re-zeroed
    # each grid step with aligned stores (megacore-safe).
    pad_ref[0, :, :] = jnp.zeros((wp, cm), cdt)
    pad_ref[h + 1, :, :] = jnp.zeros((wp, cm), cdt)
    pad_ref[:, 0:PAD_W, :] = jnp.zeros((h + 2, PAD_W, cm), cdt)
    pad_ref[:, PAD_W + w:wp, :] = jnp.zeros((h + 2, wp - PAD_W - w, cm), cdt)
    pad_ref[1:h + 1, PAD_W:PAD_W + w, :] = b

    # 9 accumulating dots (K=cmidp each) — no lane-concat slab is materialized.
    # w2_ref[k]'s output columns are pre-placed at this layer's slot within
    # the 128-lane block; columns of older channels in the block are zero.
    acc = jnp.zeros((h * w, cb), jnp.float32)
    for k in range(9):
        ky, kx = k // 3, k % 3
        tap = pad_ref[ky:ky + h, PAD_W - 1 + kx:PAD_W - 1 + kx + w, :]
        acc = acc + jnp.dot(tap.reshape(h * w, cm), w2_ref[k],
                            preferred_element_type=jnp.float32)

    # Dense concat: old channels of this block pass through (zero w2 columns),
    # new channels get the conv output.  Whole 128-lane block fully written.
    out = xblk_ref[0].astype(jnp.float32) + acc.reshape(h, w, cb)
    out_bf = out.astype(y_ref.dtype)
    y_ref[0] = out_bf

    # Moments of the updated block (= next layer's BN1 stats for these lanes).
    flat = out_bf.astype(jnp.float32).reshape(h * w, cb)
    s = jnp.sum(flat, axis=0, keepdims=True)
    ss = jnp.sum(flat * flat, axis=0, keepdims=True)
    mom_ref[...] = jnp.concatenate([s, ss], axis=0)[None, None]   # (1,1,2,128)


# ----------------------------------------------------------------------------
# pallas_call wrappers
# ----------------------------------------------------------------------------
def _batch_moments(buf, c_use):
    n, h, w, _ = buf.shape
    part = pl.pallas_call(
        _moments_kernel,
        out_shape=jax.ShapeDtypeStruct((n, 2, c_use), jnp.float32),
        grid=(n,),
        in_specs=[pl.BlockSpec((1, h, w, c_use), lambda i: (i, 0, 0, 0))],
        out_specs=pl.BlockSpec((1, 2, c_use), lambda i: (i, 0, 0)),
        compiler_params=_cparams(("parallel",)),
    )(buf)
    return jnp.sum(part, axis=0)                             # (2, c_use)


def _conv1_stats(buf, s1, t1, w1p, th):
    n, h, w, _ = buf.shape
    cin_pad, cmidp = w1p.shape
    nh = h // th
    h1, part = pl.pallas_call(
        _conv1_stats_kernel,
        out_shape=(jax.ShapeDtypeStruct((n, h, w, cmidp), buf.dtype),
                   jax.ShapeDtypeStruct((n, nh, 2, cmidp), jnp.float32)),
        grid=(n, nh),
        in_specs=[
            pl.BlockSpec((1, th, w, cin_pad), lambda i, j: (i, j, 0, 0)),
            pl.BlockSpec((1, cin_pad), lambda i, j: (0, 0)),
            pl.BlockSpec((1, cin_pad), lambda i, j: (0, 0)),
            pl.BlockSpec((cin_pad, cmidp), lambda i, j: (0, 0)),
        ],
        out_specs=(pl.BlockSpec((1, th, w, cmidp), lambda i, j: (i, j, 0, 0)),
                   pl.BlockSpec((1, 1, 2, cmidp), lambda i, j: (i, j, 0, 0))),
        compiler_params=_cparams(("parallel", "parallel")),
    )(buf, s1, t1, w1p)
    return h1, jnp.sum(part, axis=(0, 1))                    # (2, Cmid)


def _conv2_update(buf, h1, s2, t2, w2m, cb0):
    """Update only the 128-lane channel block(s) holding this layer's slot.
    buf is aliased in place; untouched channel blocks keep their old data."""
    n, h, w, cpad = buf.shape
    cmidp = h1.shape[3]
    n_cb = w2m.shape[2] // LANE
    wp = PAD_W + _round_up(w + 1, PAD_W)     # aligned zero halo on both sides
    new_buf, part = pl.pallas_call(
        _conv2_kernel,
        out_shape=(jax.ShapeDtypeStruct((n, h, w, cpad), buf.dtype),
                   jax.ShapeDtypeStruct((n, n_cb, 2, LANE), jnp.float32)),
        grid=(n, n_cb),
        in_specs=[
            pl.BlockSpec((1, h, w, cmidp), lambda i, j: (i, 0, 0, 0)),     # h1
            pl.BlockSpec((1, cmidp), lambda i, j: (0, 0)),                 # s2
            pl.BlockSpec((1, cmidp), lambda i, j: (0, 0)),                 # t2
            pl.BlockSpec((9, cmidp, LANE), lambda i, j: (0, 0, j)),        # w2
            pl.BlockSpec((1, h, w, LANE), lambda i, j: (i, 0, 0, cb0 + j)),  # buf block
        ],
        out_specs=(pl.BlockSpec((1, h, w, LANE), lambda i, j: (i, 0, 0, cb0 + j)),
                   pl.BlockSpec((1, 1, 2, LANE), lambda i, j: (i, j, 0, 0))),
        scratch_shapes=[pltpu.VMEM((h + 2, wp, cmidp), h1.dtype)],
        input_output_aliases={4: 0},         # shared buffer updated in place
        compiler_params=_cparams(("parallel", "parallel")),
    )(h1, s2, t2, w2m, buf)
    return new_buf, jnp.sum(part, axis=0)                    # (n_cb, 2, 128)
    # TODO(synk): add H-tiling with a 1-row halo for very large H*W on v7x;
    # with bf16 + slot-block narrowing the per-step footprint is already small.


# ----------------------------------------------------------------------------
# Tiny per-channel glue (O(C) work)
# ----------------------------------------------------------------------------
def _bn_scale_shift(moments, gamma, beta, count):
    """Fold batch mean/var (one-pass sum/sumsq) + affine into scale/shift."""
    # TODO(synk): switch to a shifted sum-of-squares / Welford combine if
    # cancellation becomes an issue for very large N*H*W.
    mean = moments[0] / count
    var = jnp.maximum(moments[1] / count - mean * mean, 0.0)
    scale = gamma * lax.rsqrt(var + EPS)
    shift = beta - mean * scale
    return scale.reshape(1, -1), shift.reshape(1, -1)


def prepare_params(params, inp_chl, compute_dtype=jnp.bfloat16):
    """Pad / flatten weights once, OUTSIDE the per-forward jit path.

    w1 is trimmed to the populated channel prefix (cin_pad rows); the 3x3
    weight is restricted to the 128-lane block(s) containing this layer's
    slot, with the output columns placed at [cin - sb_lo, ... + growth)."""
    prepared = []
    cin = inp_chl
    for (g1, b1, w1, g2, b2, w2) in params:
        cmid = w1.shape[1]
        growth = w2.shape[-1]
        cmidp = _round_up(cmid, LANE)
        cin_pad = _round_up(cin, LANE)
        sb_lo = (cin // LANE) * LANE
        n_cb = (_round_up(cin + growth, LANE) - sb_lo) // LANE
        g1p = jnp.zeros((cin_pad,), jnp.float32).at[:cin].set(g1.reshape(-1))
        b1p = jnp.zeros((cin_pad,), jnp.float32).at[:cin].set(b1.reshape(-1))
        w1p = (jnp.zeros((cin_pad, cmidp), jnp.float32)
               .at[:cin, :cmid].set(w1).astype(compute_dtype))
        g2p = jnp.zeros((cmidp,), jnp.float32).at[:cmid].set(g2.reshape(-1))
        b2p = jnp.zeros((cmidp,), jnp.float32).at[:cmid].set(b2.reshape(-1))
        w2m = (jnp.zeros((3, 3, cmidp, n_cb * LANE), jnp.float32)
               .at[:, :, :cmid, cin - sb_lo:cin - sb_lo + growth].set(w2)
               .reshape(9, cmidp, n_cb * LANE).astype(compute_dtype))
        prepared.append((g1p, b1p, w1p, g2p, b2p, w2m))
        cin += growth
    return prepared


# ----------------------------------------------------------------------------
# Public forward
# ----------------------------------------------------------------------------
def dense_block(x_nchw, weights, *, c0, growth, compute_dtype=jnp.bfloat16):
    """DenseBlock forward.  Input/output in NCHW (PyTorch convention).
    `weights` comes from prepare_params; c0/growth are static ints."""
    x = jnp.transpose(x_nchw, (0, 2, 3, 1))                  # NCHW -> NHWC
    n, h, w, _ = x.shape
    c_final = c0 + len(weights) * growth
    cpad = _round_up(c_final, LANE)
    count = n * h * w
    itemsize = jnp.dtype(compute_dtype).itemsize

    # Lane-dense bf16 shared activation buffer; unwritten channels stay 0.
    buf = (jnp.zeros((n, h, w, cpad), compute_dtype)
           .at[..., :c0].set(x.astype(compute_dtype)))

    c0_pad = _round_up(c0, LANE)
    moments = (jnp.zeros((2, cpad), jnp.float32)
               .at[:, :c0_pad].set(_batch_moments(buf, c0_pad)))

    cin = c0
    for (g1p, b1p, w1p, g2p, b2p, w2m) in weights:
        cin_pad, cmidp = w1p.shape
        sb_lo = (cin // LANE) * LANE
        n_cb = w2m.shape[2] // LANE
        th = _pick_row_tile(h, w, cin_pad, itemsize)

        s1, t1 = _bn_scale_shift(moments[:, :cin_pad], g1p, b1p, count)
        h1, mom2 = _conv1_stats(buf, s1, t1, w1p, th)        # BN2 batch stats
        s2, t2 = _bn_scale_shift(mom2, g2p, b2p, count)
        buf, mom_blk = _conv2_update(buf, h1, s2, t2, w2m, sb_lo // LANE)

        # Only this layer's channel block(s) changed; carry the rest over.
        moments = moments.at[:, sb_lo:sb_lo + n_cb * LANE].set(
            jnp.transpose(mom_blk, (1, 0, 2)).reshape(2, n_cb * LANE))
        cin += growth

    out = buf[..., :c_final]
    return jnp.transpose(out, (0, 3, 1, 2)).astype(x_nchw.dtype)  # -> NCHW


# ----------------------------------------------------------------------------
# Reference + synthetic parameters
# ----------------------------------------------------------------------------
def init_dense_block(key, num_layers, inp_chl, growth_rate, bn_size=4):
    """Deterministic synthetic parameters (shapes match the PyTorch module)."""
    params = []
    c = inp_chl
    cmid = bn_size * growth_rate
    for _ in range(num_layers):
        key, k1, k2, k3, k4, k5, k6 = jax.random.split(key, 7)
        g1 = 1.0 + 0.1 * jax.random.normal(k1, (1, c), jnp.float32)      # bn1.weight
        b1 = 0.1 * jax.random.normal(k2, (1, c), jnp.float32)            # bn1.bias
        w1 = 0.1 * jax.random.normal(k3, (c, cmid), jnp.float32)         # conv1 (Cin,Cout)
        g2 = 1.0 + 0.1 * jax.random.normal(k4, (1, cmid), jnp.float32)   # bn2.weight
        b2 = 0.1 * jax.random.normal(k5, (1, cmid), jnp.float32)         # bn2.bias
        w2 = 0.1 * jax.random.normal(k6, (3, 3, cmid, growth_rate),
                                     jnp.float32)                        # conv2 HWIO
        params.append((g1, b1, w1, g2, b2, w2))
        c += growth_rate
    return params


def dense_block_ref(x_nchw, params, conv_dtype=jnp.float32,
                    feat_dtype=jnp.float32):
    """Pure-JAX reference (lax.conv).  conv_dtype = conv operand precision,
    feat_dtype = stored-feature precision (mirrors the kernel's bf16 buffer)."""
    x = jnp.transpose(x_nchw, (0, 2, 3, 1)).astype(feat_dtype).astype(jnp.float32)
    for (g1, b1, w1, g2, b2, w2) in params:
        m = jnp.mean(x, axis=(0, 1, 2), keepdims=True)
        v = jnp.mean((x - m) ** 2, axis=(0, 1, 2), keepdims=True)
        h = jnp.maximum((x - m) * lax.rsqrt(v + EPS) * g1.reshape(1, 1, 1, -1)
                        + b1.reshape(1, 1, 1, -1), 0.0)
        h = lax.conv_general_dilated(
            h.astype(conv_dtype), w1.reshape(1, 1, *w1.shape).astype(conv_dtype),
            (1, 1), 'VALID', dimension_numbers=('NHWC', 'HWIO', 'NHWC'),
            preferred_element_type=jnp.float32, precision=lax.Precision.HIGHEST)
        h = h.astype(feat_dtype).astype(jnp.float32)         # mirrors cached h1
        m2 = jnp.mean(h, axis=(0, 1, 2), keepdims=True)
        v2 = jnp.mean((h - m2) ** 2, axis=(0, 1, 2), keepdims=True)
        h = jnp.maximum((h - m2) * lax.rsqrt(v2 + EPS) * g2.reshape(1, 1, 1, -1)
                        + b2.reshape(1, 1, 1, -1), 0.0)
        y = lax.conv_general_dilated(
            h.astype(conv_dtype), w2.astype(conv_dtype), (1, 1), 'SAME',
            dimension_numbers=('NHWC', 'HWIO', 'NHWC'),
            preferred_element_type=jnp.float32, precision=lax.Precision.HIGHEST)
        x = (jnp.concatenate([x, y], axis=-1)
             .astype(feat_dtype).astype(jnp.float32))         # mirrors bf16 buffer
    return jnp.transpose(x, (0, 3, 1, 2))


if __name__ == "__main__":
    # DenseBlock(num_layers=2, inp_chl=4, growth_rate=4, bn_size=4)
    num_layers, inp_chl, growth_rate, bn_size = 2, 4, 4, 4

    key = jax.random.PRNGKey(0)
    key, xkey = jax.random.split(key)
    x = jax.random.normal(xkey, (2, inp_chl, 16, 16), jnp.float32)   # NCHW

    params = init_dense_block(key, num_layers, inp_chl, growth_rate, bn_size)
    weights = jax.block_until_ready(
        prepare_params(params, inp_chl, jnp.bfloat16))   # padded once, eagerly

    fwd = jax.jit(functools.partial(dense_block, c0=inp_chl, growth=growth_rate,
                                    compute_dtype=jnp.bfloat16))
    out = jax.block_until_ready(fwd(x, weights))

    expected_chl = inp_chl + num_layers * growth_rate
    assert out.shape == (2, expected_chl, 16, 16), out.shape

    # Tight check: reference with bf16 conv operands AND bf16-stored features
    # (same arithmetic as the kernels' MXU matmuls + bf16 buffer).
    ref_bf16 = jax.block_until_ready(
        dense_block_ref(x, params, conv_dtype=jnp.bfloat16,
                        feat_dtype=jnp.bfloat16))
    err = float(jnp.max(jnp.abs(out - ref_bf16)))
    assert jnp.allclose(out, ref_bf16, atol=1e-2, rtol=1e-2), err

    # Loose sanity check against the full-f32 reference (difference is bf16
    # rounding of matmul operands and stored features only).
    ref_f32 = jax.block_until_ready(dense_block_ref(x, params))
    err32 = float(jnp.max(jnp.abs(out - ref_f32)))
    assert jnp.allclose(out, ref_f32, atol=2e-1, rtol=1e-1), err32

    # NOTE: BatchNorm running-stat (momentum) updates are training bookkeeping
    # only; they do not affect this forward pass and are not modeled.
    print("KERNEL_OK")
</pallas_src>

<mosaic_0001>
module attributes {stable_mosaic.version = 11 : i64} {
  func.func @_moments_kernel(%arg0: i32, %arg1: memref<1x16x16x128xbf16, #tpu.memory_space<vmem>>, %arg2: memref<1x2x128xf32, #tpu.memory_space<vmem>>) attributes {dimension_semantics = [#tpu.dimension_semantics<parallel>], iteration_bounds = array<i64: 2>, scalar_prefetch = 0 : i64, scratch_operands = 0 : i64, tpu.core_type = #tpu.core_type<tc>, window_params = [{transform_indices = @transform_0, window_bounds = array<i64: 1, 16, 16, 128>}, {transform_indices = @transform_1, window_bounds = array<i64: 1, 2, 128>}]} {
    %c0 = arith.constant 0 : index
    %c0_0 = arith.constant 0 : index
    %c0_1 = arith.constant 0 : index
    %c0_2 = arith.constant 0 : index
    %0 = vector.load %arg1[%c0, %c0_0, %c0_1, %c0_2] : memref<1x16x16x128xbf16, #tpu.memory_space<vmem>>, vector<1x16x16x128xbf16>
    %1 = vector.shape_cast %0 : vector<1x16x16x128xbf16> to vector<16x16x128xbf16>
    %2 = arith.extf %1 : vector<16x16x128xbf16> to vector<16x16x128xf32>
    %cst = arith.constant dense<0.000000e+00> : vector<128xf32>
    %3 = vector.multi_reduction <add>, %2, %cst [0, 1] : vector<16x16x128xf32> to vector<128xf32>
    %4 = vector.shape_cast %3 : vector<128xf32> to vector<1x1x128xf32>
    %5 = arith.mulf %2, %2 : vector<16x16x128xf32>
    %cst_3 = arith.constant dense<0.000000e+00> : vector<128xf32>
    %6 = vector.multi_reduction <add>, %5, %cst_3 [0, 1] : vector<16x16x128xf32> to vector<128xf32>
    %7 = vector.shape_cast %6 : vector<128xf32> to vector<1x1x128xf32>
    %8 = tpu.concatenate %4, %7 in 1 : vector<1x1x128xf32>, vector<1x1x128xf32> -> vector<1x2x128xf32>
    %c0_4 = arith.constant 0 : index
    %c0_5 = arith.constant 0 : index
    %c0_6 = arith.constant 0 : index
    %9 = vector.load %arg2[%c0_4, %c0_5, %c0_6] : memref<1x2x128xf32, #tpu.memory_space<vmem>>, vector<1x2x128xf32>
    tpu.vector_store %arg2[%c0_4, %c0_5, %c0_6], %8 {strides = array<i32>} : memref<1x2x128xf32, #tpu.memory_space<vmem>>, vector<1x2x128xf32>,
    return
  }
  func.func @transform_0(%arg0: i32) -> (i32, i32, i32, i32) {
    %c0_i32 = arith.constant 0 : i32
    %c0_i32_0 = arith.constant 0 : i32
    %c0_i32_1 = arith.constant 0 : i32
    %c0_i32_2 = arith.constant 0 : i32
    return %arg0, %c0_i32, %c0_i32_0, %c0_i32_1 : i32, i32, i32, i32
  }
  func.func @transform_1(%arg0: i32) -> (i32, i32, i32) {
    %c0_i32 = arith.constant 0 : i32
    %c0_i32_0 = arith.constant 0 : i32
    %c0_i32_1 = arith.constant 0 : i32
    return %arg0, %c0_i32, %c0_i32_0 : i32, i32, i32
  }
}

module attributes {stable_mosaic.version = 11 : i64} {
  func.func @_conv1_stats_kernel(%arg0: i32, %arg1: i32, %arg2: memref<1x16x16x128xbf16, #tpu.memory_space<vmem>>, %arg3: memref<1x128xf32, #tpu.memory_space<vmem>>, %arg4: memref<1x128xf32, #tpu.memory_space<vmem>>, %arg5: memref<128x128xbf16, #tpu.memory_space<vmem>>, %arg6: memref<1x16x16x128xbf16, #tpu.memory_space<vmem>>, %arg7: memref<1x1x2x128xf32, #tpu.memory_space<vmem>>) attributes {dimension_semantics = [#tpu.dimension_semantics<parallel>, #tpu.dimension_semantics<parallel>], iteration_bounds = array<i64: 2, 1>, scalar_prefetch = 0 : i64, scratch_operands = 0 : i64, tpu.core_type = #tpu.core_type<tc>, window_params = [{transform_indices = @transform_0, window_bounds = array<i64: 1, 16, 16, 128>}, {pipeline_mode = #tpu.pipeline_mode<synchronous>, transform_indices = @transform_1, window_bounds = array<i64: 1, 128>}, {pipeline_mode = #tpu.pipeline_mode<synchronous>, transform_indices = @transform_2, window_bounds = array<i64: 1, 128>}, {pipeline_mode = #tpu.pipeline_mode<synchronous>, transform_indices = @transform_3, window_bounds = array<i64: 128, 128>}, {transform_indices = @transform_4, window_bounds = array<i64: 1, 16, 16, 128>}, {transform_indices = @transform_5, window_bounds = array<i64: 1, 1, 2, 128>}]} {
    %c0 = arith.constant 0 : index
    %c0_0 = arith.constant 0 : index
    %c0_1 = arith.constant 0 : index
    %c0_2 = arith.constant 0 : index
    %0 = vector.load %arg2[%c0, %c0_0, %c0_1, %c0_2] : memref<1x16x16x128xbf16, #tpu.memory_space<vmem>>, vector<1x16x16x128xbf16>
    %1 = vector.shape_cast %0 : vector<1x16x16x128xbf16> to vector<16x16x128xbf16>
    %2 = arith.extf %1 : vector<16x16x128xbf16> to vector<16x16x128xf32>
    %c0_3 = arith.constant 0 : index
    %c0_4 = arith.constant 0 : index
    %3 = vector.load %arg3[%c0_3, %c0_4] : memref<1x128xf32, #tpu.memory_space<vmem>>, vector<1x128xf32>
    %4 = vector.shape_cast %3 : vector<1x128xf32> to vector<1x1x128xf32>
    %5 = vector.broadcast %4 : vector<1x1x128xf32> to vector<16x16x128xf32>
    %6 = arith.mulf %2, %5 : vector<16x16x128xf32>
    %c0_5 = arith.constant 0 : index
    %c0_6 = arith.constant 0 : index
    %7 = vector.load %arg4[%c0_5, %c0_6] : memref<1x128xf32, #tpu.memory_space<vmem>>, vector<1x128xf32>
    %8 = vector.shape_cast %7 : vector<1x128xf32> to vector<1x1x128xf32>
    %9 = vector.broadcast %8 : vector<1x1x128xf32> to vector<16x16x128xf32>
    %10 = arith.addf %6, %9 : vector<16x16x128xf32>
    %cst = arith.constant 0.000000e+00 : f32
    %11 = vector.broadcast %cst : f32 to vector<16x16x128xf32>
    %12 = arith.maximumf %10, %11 : vector<16x16x128xf32>
    %13 = vector.shape_cast %12 : vector<16x16x128xf32> to vector<256x128xf32>
    %14 = arith.truncf %13 : vector<256x128xf32> to vector<256x128xbf16>
    %c0_7 = arith.constant 0 : index
    %c0_8 = arith.constant 0 : index
    %15 = vector.load %arg5[%c0_7, %c0_8] : memref<128x128xbf16, #tpu.memory_space<vmem>>, vector<128x128xbf16>
    %cst_9 = arith.constant dense<0.000000e+00> : vector<256x128xf32>
    %16 = tpu.matmul %14, %15, %cst_9 {dimension_numbers = #tpu.dot_dimension_numbers<[1], [0], [0], [1], [0, 0, 1, 1], [], []>} : vector<256x128xbf16>, vector<128x128xbf16>, vector<256x128xf32> -> vector<256x128xf32>
    %17 = arith.truncf %16 : vector<256x128xf32> to vector<256x128xbf16>
    %18 = vector.shape_cast %17 : vector<256x128xbf16> to vector<16x16x128xbf16>
    %c0_10 = arith.constant 0 : index
    %c0_11 = arith.constant 0 : index
    %c0_12 = arith.constant 0 : index
    %c0_13 = arith.constant 0 : index
    %19 = vector.load %arg6[%c0_10, %c0_11, %c0_12, %c0_13] : memref<1x16x16x128xbf16, #tpu.memory_space<vmem>>, vector<1x16x16x128xbf16>
    %20 = vector.shape_cast %19 : vector<1x16x16x128xbf16> to vector<16x16x128xbf16>
    %21 = vector.shape_cast %18 : vector<16x16x128xbf16> to vector<1x16x16x128xbf16>
    tpu.vector_store %arg6[%c0_10, %c0_11, %c0_12, %c0_13], %21 {strides = array<i32>} : memref<1x16x16x128xbf16, #tpu.memory_space<vmem>>, vector<1x16x16x128xbf16>,
    %22 = arith.extf %17 : vector<256x128xbf16> to vector<256x128xf32>
    %cst_14 = arith.constant dense<0.000000e+00> : vector<128xf32>
    %23 = vector.multi_reduction <add>, %22, %cst_14 [0] : vector<256x128xf32> to vector<128xf32>
    %24 = vector.shape_cast %23 : vector<128xf32> to vector<1x128xf32>
    %25 = arith.mulf %22, %22 : vector<256x128xf32>
    %cst_15 = arith.constant dense<0.000000e+00> : vector<128xf32>
    %26 = vector.multi_reduction <add>, %25, %cst_15 [0] : vector<256x128xf32> to vector<128xf32>
    %27 = vector.shape_cast %26 : vector<128xf32> to vector<1x128xf32>
    %28 = tpu.concatenate %24, %27 in 0 : vector<1x128xf32>, vector<1x128xf32> -> vector<2x128xf32>
    %29 = vector.shape_cast %28 : vector<2x128xf32> to vector<1x1x2x128xf32>
    %c0_16 = arith.constant 0 : index
    %c0_17 = arith.constant 0 : index
    %c0_18 = arith.constant 0 : index
    %c0_19 = arith.constant 0 : index
    %30 = vector.load %arg7[%c0_16, %c0_17, %c0_18, %c0_19] : memref<1x1x2x128xf32, #tpu.memory_space<vmem>>, vector<1x1x2x128xf32>
    tpu.vector_store %arg7[%c0_16, %c0_17, %c0_18, %c0_19], %29 {strides = array<i32>} : memref<1x1x2x128xf32, #tpu.memory_space<vmem>>, vector<1x1x2x128xf32>,
    return
  }
  func.func @transform_0(%arg0: i32, %arg1: i32) -> (i32, i32, i32, i32) {
    %c0_i32 = arith.constant 0 : i32
    %c0_i32_0 = arith.constant 0 : i32
    %c0_i32_1 = arith.constant 0 : i32
    return %arg0, %arg1, %c0_i32, %c0_i32_0 : i32, i32, i32, i32
  }
  func.func @transform_1(%arg0: i32, %arg1: i32) -> (i32, i32) {
    %c0_i32 = arith.constant 0 : i32
    %c0_i32_0 = arith.constant 0 : i32
    %c0_i32_1 = arith.constant 0 : i32
    return %c0_i32, %c0_i32_0 : i32, i32
  }
  func.func @transform_2(%arg0: i32, %arg1: i32) -> (i32, i32) {
    %c0_i32 = arith.constant 0 : i32
    %c0_i32_0 = arith.constant 0 : i32
    %c0_i32_1 = arith.constant 0 : i32
    return %c0_i32, %c0_i32_0 : i32, i32
  }
  func.func @transform_3(%arg0: i32, %arg1: i32) -> (i32, i32) {
    %c0_i32 = arith.constant 0 : i32
    %c0_i32_0 = arith.constant 0 : i32
    %c0_i32_1 = arith.constant 0 : i32
    return %c0_i32, %c0_i32_0 : i32, i32
  }
  func.func @transform_4(%arg0: i32, %arg1: i32) -> (i32, i32, i32, i32) {
    %c0_i32 = arith.constant 0 : i32
    %c0_i32_0 = arith.constant 0 : i32
    %c0_i32_1 = arith.constant 0 : i32
    return %arg0, %arg1, %c0_i32, %c0_i32_0 : i32, i32, i32, i32
  }
  func.func @transform_5(%arg0: i32, %arg1: i32) -> (i32, i32, i32, i32) {
    %c0_i32 = arith.constant 0 : i32
    %c0_i32_0 = arith.constant 0 : i32
    %c0_i32_1 = arith.constant 0 : i32
    return %arg0, %arg1, %c0_i32, %c0_i32_0 : i32, i32, i32, i32
  }
}

module attributes {stable_mosaic.version = 11 : i64} {
  func.func @_conv2_kernel(%arg0: i32, %arg1: i32, %arg2: memref<1x16x16x128xbf16, #tpu.memory_space<vmem>>, %arg3: memref<1x128xf32, #tpu.memory_space<vmem>>, %arg4: memref<1x128xf32, #tpu.memory_space<vmem>>, %arg5: memref<9x128x128xbf16, #tpu.memory_space<vmem>>, %arg6: memref<1x16x16x128xbf16, #tpu.memory_space<vmem>>, %arg7: memref<1x16x16x128xbf16, #tpu.memory_space<vmem>>, %arg8: memref<1x1x2x128xf32, #tpu.memory_space<vmem>>, %arg9: memref<18x48x128xbf16, #tpu.memory_space<vmem>>) attributes {dimension_semantics = [#tpu.dimension_semantics<parallel>, #tpu.dimension_semantics<parallel>], iteration_bounds = array<i64: 2, 1>, scalar_prefetch = 0 : i64, scratch_operands = 1 : i64, tpu.core_type = #tpu.core_type<tc>, window_params = [{transform_indices = @transform_0, window_bounds = array<i64: 1, 16, 16, 128>}, {pipeline_mode = #tpu.pipeline_mode<synchronous>, transform_indices = @transform_1, window_bounds = array<i64: 1, 128>}, {pipeline_mode = #tpu.pipeline_mode<synchronous>, transform_indices = @transform_2, window_bounds = array<i64: 1, 128>}, {transform_indices = @transform_3, window_bounds = array<i64: 9, 128, 128>}, {transform_indices = @transform_4, window_bounds = array<i64: 1, 16, 16, 128>}, {transform_indices = @transform_5, window_bounds = array<i64: 1, 16, 16, 128>}, {transform_indices = @transform_6, window_bounds = array<i64: 1, 1, 2, 128>}]} {
    %c0 = arith.constant 0 : index
    %c0_0 = arith.constant 0 : index
    %c0_1 = arith.constant 0 : index
    %c0_2 = arith.constant 0 : index
    %0 = vector.load %arg2[%c0, %c0_0, %c0_1, %c0_2] : memref<1x16x16x128xbf16, #tpu.memory_space<vmem>>, vector<1x16x16x128xbf16>
    %1 = vector.shape_cast %0 : vector<1x16x16x128xbf16> to vector<16x16x128xbf16>
    %2 = arith.extf %1 : vector<16x16x128xbf16> to vector<16x16x128xf32>
    %3 = vector.shape_cast %2 : vector<16x16x128xf32> to vector<256x128xf32>
    %c0_3 = arith.constant 0 : index
    %c0_4 = arith.constant 0 : index
    %4 = vector.load %arg3[%c0_3, %c0_4] : memref<1x128xf32, #tpu.memory_space<vmem>>, vector<1x128xf32>
    %5 = vector.broadcast %4 : vector<1x128xf32> to vector<256x128xf32>
    %6 = arith.mulf %3, %5 : vector<256x128xf32>
    %c0_5 = arith.constant 0 : index
    %c0_6 = arith.constant 0 : index
    %7 = vector.load %arg4[%c0_5, %c0_6] : memref<1x128xf32, #tpu.memory_space<vmem>>, vector<1x128xf32>
    %8 = vector.broadcast %7 : vector<1x128xf32> to vector<256x128xf32>
    %9 = arith.addf %6, %8 : vector<256x128xf32>
    %cst = arith.constant 0.000000e+00 : f32
    %10 = vector.broadcast %cst : f32 to vector<256x128xf32>
    %11 = arith.maximumf %9, %10 : vector<256x128xf32>
    %12 = vector.shape_cast %11 : vector<256x128xf32> to vector<16x16x128xf32>
    %13 = arith.truncf %12 : vector<16x16x128xf32> to vector<16x16x128xbf16>
    %cst_7 = arith.constant 0.000000e+00 : bf16
    %14 = vector.broadcast %cst_7 : bf16 to vector<48x128xbf16>
    %c0_8 = arith.constant 0 : index
    %c0_9 = arith.constant 0 : index
    %c0_10 = arith.constant 0 : index
    %15 = vector.load %arg9[%c0_8, %c0_9, %c0_10] : memref<18x48x128xbf16, #tpu.memory_space<vmem>>, vector<1x48x128xbf16>
    %16 = vector.shape_cast %15 : vector<1x48x128xbf16> to vector<48x128xbf16>
    %17 = vector.shape_cast %14 : vector<48x128xbf16> to vector<1x48x128xbf16>
    tpu.vector_store %arg9[%c0_8, %c0_9, %c0_10], %17 {strides = array<i32>} : memref<18x48x128xbf16, #tpu.memory_space<vmem>>, vector<1x48x128xbf16>,
    %cst_11 = arith.constant 0.000000e+00 : bf16
    %18 = vector.broadcast %cst_11 : bf16 to vector<48x128xbf16>
    %c17 = arith.constant 17 : index
    %c0_12 = arith.constant 0 : index
    %c0_13 = arith.constant 0 : index
    %19 = vector.load %arg9[%c17, %c0_12, %c0_13] : memref<18x48x128xbf16, #tpu.memory_space<vmem>>, vector<1x48x128xbf16>
    %20 = vector.shape_cast %19 : vector<1x48x128xbf16> to vector<48x128xbf16>
    %21 = vector.shape_cast %18 : vector<48x128xbf16> to vector<1x48x128xbf16>
    tpu.vector_store %arg9[%c17, %c0_12, %c0_13], %21 {strides = array<i32>} : memref<18x48x128xbf16, #tpu.memory_space<vmem>>, vector<1x48x128xbf16>,
    %cst_14 = arith.constant 0.000000e+00 : bf16
    %22 = vector.broadcast %cst_14 : bf16 to vector<18x16x128xbf16>
    %c0_15 = arith.constant 0 : index
    %c0_16 = arith.constant 0 : index
    %c0_17 = arith.constant 0 : index
    %23 = vector.load %arg9[%c0_15, %c0_16, %c0_17] : memref<18x48x128xbf16, #tpu.memory_space<vmem>>, vector<18x16x128xbf16>
    tpu.vector_store %arg9[%c0_15, %c0_16, %c0_17], %22 {strides = array<i32>} : memref<18x48x128xbf16, #tpu.memory_space<vmem>>, vector<18x16x128xbf16>,
    %cst_18 = arith.constant 0.000000e+00 : bf16
    %24 = vector.broadcast %cst_18 : bf16 to vector<18x16x128xbf16>
    %c0_19 = arith.constant 0 : index
    %c32 = arith.constant 32 : index
    %c0_20 = arith.constant 0 : index
    %25 = vector.load %arg9[%c0_19, %c32, %c0_20] : memref<18x48x128xbf16, #tpu.memory_space<vmem>>, vector<18x16x128xbf16>
    tpu.vector_store %arg9[%c0_19, %c32, %c0_20], %24 {strides = array<i32>} : memref<18x48x128xbf16, #tpu.memory_space<vmem>>, vector<18x16x128xbf16>,
    %c1 = arith.constant 1 : index
    %c16 = arith.constant 16 : index
    %c0_21 = arith.constant 0 : index
    %26 = vector.load %arg9[%c1, %c16, %c0_21] : memref<18x48x128xbf16, #tpu.memory_space<vmem>>, vector<16x16x128xbf16>
    tpu.vector_store %arg9[%c1, %c16, %c0_21], %13 {strides = array<i32>} : memref<18x48x128xbf16, #tpu.memory_space<vmem>>, vector<16x16x128xbf16>,
    %cst_22 = arith.constant 0.000000e+00 : f32
    %27 = vector.broadcast %cst_22 : f32 to vector<256x128xf32>
    %c0_23 = arith.constant 0 : index
    %c15 = arith.constant 15 : index
    %c0_24 = arith.constant 0 : index
    %28 = vector.load %arg9[%c0_23, %c15, %c0_24] : memref<18x48x128xbf16, #tpu.memory_space<vmem>>, vector<16x16x128xbf16>
    %29 = vector.shape_cast %28 : vector<16x16x128xbf16> to vector<256x128xbf16>
    %c0_25 = arith.constant 0 : index
    %c0_26 = arith.constant 0 : index
    %c0_27 = arith.constant 0 : index
    %30 = vector.load %arg5[%c0_25, %c0_26, %c0_27] : memref<9x128x128xbf16, #tpu.memory_space<vmem>>, vector<1x128x128xbf16>
    %31 = vector.shape_cast %30 : vector<1x128x128xbf16> to vector<128x128xbf16>
    %cst_28 = arith.constant dense<0.000000e+00> : vector<256x128xf32>
    %32 = tpu.matmul %29, %31, %cst_28 {dimension_numbers = #tpu.dot_dimension_numbers<[1], [0], [0], [1], [0, 0, 1, 1], [], []>} : vector<256x128xbf16>, vector<128x128xbf16>, vector<256x128xf32> -> vector<256x128xf32>
    %33 = arith.addf %27, %32 : vector<256x128xf32>
    %c0_29 = arith.constant 0 : index
    %c16_30 = arith.constant 16 : index
    %c0_31 = arith.constant 0 : index
    %34 = vector.load %arg9[%c0_29, %c16_30, %c0_31] : memref<18x48x128xbf16, #tpu.memory_space<vmem>>, vector<16x16x128xbf16>
    %35 = vector.shape_cast %34 : vector<16x16x128xbf16> to vector<256x128xbf16>
    %c1_32 = arith.constant 1 : index
    %c0_33 = arith.constant 0 : index
    %c0_34 = arith.constant 0 : index
    %36 = vector.load %arg5[%c1_32, %c0_33, %c0_34] : memref<9x128x128xbf16, #tpu.memory_space<vmem>>, vector<1x128x128xbf16>
    %37 = vector.shape_cast %36 : vector<1x128x128xbf16> to vector<128x128xbf16>
    %cst_35 = arith.constant dense<0.000000e+00> : vector<256x128xf32>
    %38 = tpu.matmul %35, %37, %cst_35 {dimension_numbers = #tpu.dot_dimension_numbers<[1], [0], [0], [1], [0, 0, 1, 1], [], []>} : vector<256x128xbf16>, vector<128x128xbf16>, vector<256x128xf32> -> vector<256x128xf32>
    %39 = arith.addf %33, %38 : vector<256x128xf32>
    %c0_36 = arith.constant 0 : index
    %c17_37 = arith.constant 17 : index
    %c0_38 = arith.constant 0 : index
    %40 = vector.load %arg9[%c0_36, %c17_37, %c0_38] : memref<18x48x128xbf16, #tpu.memory_space<vmem>>, vector<16x16x128xbf16>
    %41 = vector.shape_cast %40 : vector<16x16x128xbf16> to vector<256x128xbf16>
    %c2 = arith.constant 2 : index
    %c0_39 = arith.constant 0 : index
    %c0_40 = arith.constant 0 : index
    %42 = vector.load %arg5[%c2, %c0_39, %c0_40] : memref<9x128x128xbf16, #tpu.memory_space<vmem>>, vector<1x128x128xbf16>
    %43 = vector.shape_cast %42 : vector<1x128x128xbf16> to vector<128x128xbf16>
    %cst_41 = arith.constant dense<0.000000e+00> : vector<256x128xf32>
    %44 = tpu.matmul %41, %43, %cst_41 {dimension_numbers = #tpu.dot_dimension_numbers<[1], [0], [0], [1], [0, 0, 1, 1], [], []>} : vector<256x128xbf16>, vector<128x128xbf16>, vector<256x128xf32> -> vector<256x128xf32>
    %45 = arith.addf %39, %44 : vector<256x128xf32>
    %c1_42 = arith.constant 1 : index
    %c15_43 = arith.constant 15 : index
    %c0_44 = arith.constant 0 : index
    %46 = vector.load %arg9[%c1_42, %c15_43, %c0_44] : memref<18x48x128xbf16, #tpu.memory_space<vmem>>, vector<16x16x128xbf16>
    %47 = vector.shape_cast %46 : vector<16x16x128xbf16> to vector<256x128xbf16>
    %c3 = arith.constant 3 : index
    %c0_45 = arith.constant 0 : index
    %c0_46 = arith.constant 0 : index
    %48 = vector.load %arg5[%c3, %c0_45, %c0_46] : memref<9x128x128xbf16, #tpu.memory_space<vmem>>, vector<1x128x128xbf16>
    %49 = vector.shape_cast %48 : vector<1x128x128xbf16> to vector<128x128xbf16>
    %cst_47 = arith.constant dense<0.000000e+00> : vector<256x128xf32>
    %50 = tpu.matmul %47, %49, %cst_47 {dimension_numbers = #tpu.dot_dimension_numbers<[1], [0], [0], [1], [0, 0, 1, 1], [], []>} : vector<256x128xbf16>, vector<128x128xbf16>, vector<256x128xf32> -> vector<256x128xf32>
    %51 = arith.addf %45, %50 : vector<256x128xf32>
    %c1_48 = arith.constant 1 : index
    %c16_49 = arith.constant 16 : index
    %c0_50 = arith.constant 0 : index
    %52 = vector.load %arg9[%c1_48, %c16_49, %c0_50] : memref<18x48x128xbf16, #tpu.memory_space<vmem>>, vector<16x16x128xbf16>
    %53 = vector.shape_cast %52 : vector<16x16x128xbf16> to vector<256x128xbf16>
    %c4 = arith.constant 4 : index
    %c0_51 = arith.constant 0 : index
    %c0_52 = arith.constant 0 : index
    %54 = vector.load %arg5[%c4, %c0_51, %c0_52] : memref<9x128x128xbf16, #tpu.memory_space<vmem>>, vector<1x128x128xbf16>
    %55 = vector.shape_cast %54 : vector<1x128x128xbf16> to vector<128x128xbf16>
    %cst_53 = arith.constant dense<0.000000e+00> : vector<256x128xf32>
    %56 = tpu.matmul %53, %55, %cst_53 {dimension_numbers = #tpu.dot_dimension_numbers<[1], [0], [0], [1], [0, 0, 1, 1], [], []>} : vector<256x128xbf16>, vector<128x128xbf16>, vector<256x128xf32> -> vector<256x128xf32>
    %57 = arith.addf %51, %56 : vector<256x128xf32>
    %c1_54 = arith.constant 1 : index
    %c17_55 = arith.constant 17 : index
    %c0_56 = arith.constant 0 : index
    %58 = vector.load %arg9[%c1_54, %c17_55, %c0_56] : memref<18x48x128xbf16, #tpu.memory_space<vmem>>, vector<16x16x128xbf16>
    %59 = vector.shape_cast %58 : vector<16x16x128xbf16> to vector<256x128xbf16>
    %c5 = arith.constant 5 : index
    %c0_57 = arith.constant 0 : index
    %c0_58 = arith.constant 0 : index
    %60 = vector.load %arg5[%c5, %c0_57, %c0_58] : memref<9x128x128xbf16, #tpu.memory_space<vmem>>, vector<1x128x128xbf16>
    %61 = vector.shape_cast %60 : vector<1x128x128xbf16> to vector<128x128xbf16>
    %cst_59 = arith.constant dense<0.000000e+00> : vector<256x128xf32>
    %62 = tpu.matmul %59, %61, %cst_59 {dimension_numbers = #tpu.dot_dimension_numbers<[1], [0], [0], [1], [0, 0, 1, 1], [], []>} : vector<256x128xbf16>, vector<128x128xbf16>, vector<256x128xf32> -> vector<256x128xf32>
    %63 = arith.addf %57, %62 : vector<256x128xf32>
    %c2_60 = arith.constant 2 : index
    %c15_61 = arith.constant 15 : index
    %c0_62 = arith.constant 0 : index
    %64 = vector.load %arg9[%c2_60, %c15_61, %c0_62] : memref<18x48x128xbf16, #tpu.memory_space<vmem>>, vector<16x16x128xbf16>
    %65 = vector.shape_cast %64 : vector<16x16x128xbf16> to vector<256x128xbf16>
    %c6 = arith.constant 6 : index
    %c0_63 = arith.constant 0 : index
    %c0_64 = arith.constant 0 : index
    %66 = vector.load %arg5[%c6, %c0_63, %c0_64] : memref<9x128x128xbf16, #tpu.memory_space<vmem>>, vector<1x128x128xbf16>
    %67 = vector.shape_cast %66 : vector<1x128x128xbf16> to vector<128x128xbf16>
    %cst_65 = arith.constant dense<0.000000e+00> : vector<256x128xf32>
    %68 = tpu.matmul %65, %67, %cst_65 {dimension_numbers = #tpu.dot_dimension_numbers<[1], [0], [0], [1], [0, 0, 1, 1], [], []>} : vector<256x128xbf16>, vector<128x128xbf16>, vector<256x128xf32> -> vector<256x128xf32>
    %69 = arith.addf %63, %68 : vector<256x128xf32>
    %c2_66 = arith.constant 2 : index
    %c16_67 = arith.constant 16 : index
    %c0_68 = arith.constant 0 : index
    %70 = vector.load %arg9[%c2_66, %c16_67, %c0_68] : memref<18x48x128xbf16, #tpu.memory_space<vmem>>, vector<16x16x128xbf16>
    %71 = vector.shape_cast %70 : vector<16x16x128xbf16> to vector<256x128xbf16>
    %c7 = arith.constant 7 : index
    %c0_69 = arith.constant 0 : index
    %c0_70 = arith.constant 0 : index
    %72 = vector.load %arg5[%c7, %c0_69, %c0_70] : memref<9x128x128xbf16, #tpu.memory_space<vmem>>, vector<1x128x128xbf16>
    %73 = vector.shape_cast %72 : vector<1x128x128xbf16> to vector<128x128xbf16>
    %cst_71 = arith.constant dense<0.000000e+00> : vector<256x128xf32>
    %74 = tpu.matmul %71, %73, %cst_71 {dimension_numbers = #tpu.dot_dimension_numbers<[1], [0], [0], [1], [0, 0, 1, 1], [], []>} : vector<256x128xbf16>, vector<128x128xbf16>, vector<256x128xf32> -> vector<256x128xf32>
    %75 = arith.addf %69, %74 : vector<256x128xf32>
    %c2_72 = arith.constant 2 : index
    %c17_73 = arith.constant 17 : index
    %c0_74 = arith.constant 0 : index
    %76 = vector.load %arg9[%c2_72, %c17_73, %c0_74] : memref<18x48x128xbf16, #tpu.memory_space<vmem>>, vector<16x16x128xbf16>
    %77 = vector.shape_cast %76 : vector<16x16x128xbf16> to vector<256x128xbf16>
    %c8 = arith.constant 8 : index
    %c0_75 = arith.constant 0 : index
    %c0_76 = arith.constant 0 : index
    %78 = vector.load %arg5[%c8, %c0_75, %c0_76] : memref<9x128x128xbf16, #tpu.memory_space<vmem>>, vector<1x128x128xbf16>
    %79 = vector.shape_cast %78 : vector<1x128x128xbf16> to vector<128x128xbf16>
    %cst_77 = arith.constant dense<0.000000e+00> : vector<256x128xf32>
    %80 = tpu.matmul %77, %79, %cst_77 {dimension_numbers = #tpu.dot_dimension_numbers<[1], [0], [0], [1], [0, 0, 1, 1], [], []>} : vector<256x128xbf16>, vector<128x128xbf16>, vector<256x128xf32> -> vector<256x128xf32>
    %81 = arith.addf %75, %80 : vector<256x128xf32>
    %c0_78 = arith.constant 0 : index
    %c0_79 = arith.constant 0 : index
    %c0_80 = arith.constant 0 : index
    %c0_81 = arith.constant 0 : index
    %82 = vector.load %arg6[%c0_78, %c0_79, %c0_80, %c0_81] : memref<1x16x16x128xbf16, #tpu.memory_space<vmem>>, vector<1x16x16x128xbf16>
    %83 = vector.shape_cast %82 : vector<1x16x16x128xbf16> to vector<16x16x128xbf16>
    %84 = arith.extf %83 : vector<16x16x128xbf16> to vector<16x16x128xf32>
    %85 = vector.shape_cast %81 : vector<256x128xf32> to vector<16x16x128xf32>
    %86 = arith.addf %84, %85 : vector<16x16x128xf32>
    %87 = arith.truncf %86 : vector<16x16x128xf32> to vector<16x16x128xbf16>
    %c0_82 = arith.constant 0 : index
    %c0_83 = arith.constant 0 : index
    %c0_84 = arith.constant 0 : index
    %c0_85 = arith.constant 0 : index
    %88 = vector.load %arg7[%c0_82, %c0_83, %c0_84, %c0_85] : memref<1x16x16x128xbf16, #tpu.memory_space<vmem>>, vector<1x16x16x128xbf16>
    %89 = vector.shape_cast %88 : vector<1x16x16x128xbf16> to vector<16x16x128xbf16>
    %90 = vector.shape_cast %87 : vector<16x16x128xbf16> to vector<1x16x16x128xbf16>
    tpu.vector_store %arg7[%c0_82, %c0_83, %c0_84, %c0_85], %90 {strides = array<i32>} : memref<1x16x16x128xbf16, #tpu.memory_space<vmem>>, vector<1x16x16x128xbf16>,
    %91 = arith.extf %87 : vector<16x16x128xbf16> to vector<16x16x128xf32>
    %92 = vector.shape_cast %91 : vector<16x16x128xf32> to vector<256x128xf32>
    %cst_86 = arith.constant dense<0.000000e+00> : vector<128xf32>
    %93 = vector.multi_reduction <add>, %92, %cst_86 [0] : vector<256x128xf32> to vector<128xf32>
    %94 = vector.shape_cast %93 : vector<128xf32> to vector<1x128xf32>
    %95 = arith.mulf %92, %92 : vector<256x128xf32>
    %cst_87 = arith.constant dense<0.000000e+00> : vector<128xf32>
    %96 = vector.multi_reduction <add>, %95, %cst_87 [0] : vector<256x128xf32> to vector<128xf32>
    %97 = vector.shape_cast %96 : vector<128xf32> to vector<1x128xf32>
    %98 = tpu.concatenate %94, %97 in 0 : vector<1x128xf32>, vector<1x128xf32> -> vector<2x128xf32>
    %99 = vector.shape_cast %98 : vector<2x128xf32> to vector<1x1x2x128xf32>
    %c0_88 = arith.constant 0 : index
    %c0_89 = arith.constant 0 : index
    %c0_90 = arith.constant 0 : index
    %c0_91 = arith.constant 0 : index
    %100 = vector.load %arg8[%c0_88, %c0_89, %c0_90, %c0_91] : memref<1x1x2x128xf32, #tpu.memory_space<vmem>>, vector<1x1x2x128xf32>
    tpu.vector_store %arg8[%c0_88, %c0_89, %c0_90, %c0_91], %99 {strides = array<i32>} : memref<1x1x2x128xf32, #tpu.memory_space<vmem>>, vector<1x1x2x128xf32>,
    return
  }
  func.func @transform_0(%arg0: i32, %arg1: i32) -> (i32, i32, i32, i32) {
    %c0_i32 = arith.constant 0 : i32
    %c0_i32_0 = arith.constant 0 : i32
    %c0_i32_1 = arith.constant 0 : i32
    %c0_i32_2 = arith.constant 0 : i32
    return %arg0, %c0_i32, %c0_i32_0, %c0_i32_1 : i32, i32, i32, i32
  }
  func.func @transform_1(%arg0: i32, %arg1: i32) -> (i32, i32) {
    %c0_i32 = arith.constant 0 : i32
    %c0_i32_0 = arith.constant 0 : i32
    %c0_i32_1 = arith.constant 0 : i32
    return %c0_i32, %c0_i32_0 : i32, i32
  }
  func.func @transform_2(%arg0: i32, %arg1: i32) -> (i32, i32) {
    %c0_i32 = arith.constant 0 : i32
    %c0_i32_0 = arith.constant 0 : i32
    %c0_i32_1 = arith.constant 0 : i32
    return %c0_i32, %c0_i32_0 : i32, i32
  }
  func.func @transform_3(%arg0: i32, %arg1: i32) -> (i32, i32, i32) {
    %c0_i32 = arith.constant 0 : i32
    %c0_i32_0 = arith.constant 0 : i32
    %c0_i32_1 = arith.constant 0 : i32
    return %c0_i32, %c0_i32_0, %arg1 : i32, i32, i32
  }
  func.func @transform_4(%arg0: i32, %arg1: i32) -> (i32, i32, i32, i32) {
    %c0_i32 = arith.constant 0 : i32
    %0 = arith.addi %c0_i32, %arg1 : i32
    %c0_i32_0 = arith.constant 0 : i32
    %c0_i32_1 = arith.constant 0 : i32
    %c0_i32_2 = arith.constant 0 : i32
    return %arg0, %c0_i32_0, %c0_i32_1, %0 : i32, i32, i32, i32
  }
  func.func @transform_5(%arg0: i32, %arg1: i32) -> (i32, i32, i32, i32) {
    %c0_i32 = arith.constant 0 : i32
    %0 = arith.addi %c0_i32, %arg1 : i32
    %c0_i32_0 = arith.constant 0 : i32
    %c0_i32_1 = arith.constant 0 : i32
    %c0_i32_2 = arith.constant 0 : i32
    return %arg0, %c0_i32_0, %c0_i32_1, %0 : i32, i32, i32, i32
  }
  func.func @transform_6(%arg0: i32, %arg1: i32) -> (i32, i32, i32, i32) {
    %c0_i32 = arith.constant 0 : i32
    %c0_i32_0 = arith.constant 0 : i32
    %c0_i32_1 = arith.constant 0 : i32
    return %arg0, %arg1, %c0_i32, %c0_i32_0 : i32, i32, i32, i32
  }
}

module attributes {stable_mosaic.version = 11 : i64} {
  func.func @_conv2_kernel(%arg0: i32, %arg1: i32, %arg2: memref<1x16x16x128xbf16, #tpu.memory_space<vmem>>, %arg3: memref<1x128xf32, #tpu.memory_space<vmem>>, %arg4: memref<1x128xf32, #tpu.memory_space<vmem>>, %arg5: memref<9x128x128xbf16, #tpu.memory_space<vmem>>, %arg6: memref<1x16x16x128xbf16, #tpu.memory_space<vmem>>, %arg7: memref<1x16x16x128xbf16, #tpu.memory_space<vmem>>, %arg8: memref<1x1x2x128xf32, #tpu.memory_space<vmem>>, %arg9: memref<18x48x128xbf16, #tpu.memory_space<vmem>>) attributes {dimension_semantics = [#tpu.dimension_semantics<parallel>, #tpu.dimension_semantics<parallel>], iteration_bounds = array<i64: 2, 1>, scalar_prefetch = 0 : i64, scratch_operands = 1 : i64, tpu.core_type = #tpu.core_type<tc>, window_params = [{transform_indices = @transform_0, window_bounds = array<i64: 1, 16, 16, 128>}, {pipeline_mode = #tpu.pipeline_mode<synchronous>, transform_indices = @transform_1, window_bounds = array<i64: 1, 128>}, {pipeline_mode = #tpu.pipeline_mode<synchronous>, transform_indices = @transform_2, window_bounds = array<i64: 1, 128>}, {transform_indices = @transform_3, window_bounds = array<i64: 9, 128, 128>}, {transform_indices = @transform_4, window_bounds = array<i64: 1, 16, 16, 128>}, {transform_indices = @transform_5, window_bounds = array<i64: 1, 16, 16, 128>}, {transform_indices = @transform_6, window_bounds = array<i64: 1, 1, 2, 128>}]} {
    %c0 = arith.constant 0 : index
    %c0_0 = arith.constant 0 : index
    %c0_1 = arith.constant 0 : index
    %c0_2 = arith.constant 0 : index
    %0 = vector.load %arg2[%c0, %c0_0, %c0_1, %c0_2] : memref<1x16x16x128xbf16, #tpu.memory_space<vmem>>, vector<1x16x16x128xbf16>
    %1 = vector.shape_cast %0 : vector<1x16x16x128xbf16> to vector<16x16x128xbf16>
    %2 = arith.extf %1 : vector<16x16x128xbf16> to vector<16x16x128xf32>
    %3 = vector.shape_cast %2 : vector<16x16x128xf32> to vector<256x128xf32>
    %c0_3 = arith.constant 0 : index
    %c0_4 = arith.constant 0 : index
    %4 = vector.load %arg3[%c0_3, %c0_4] : memref<1x128xf32, #tpu.memory_space<vmem>>, vector<1x128xf32>
    %5 = vector.broadcast %4 : vector<1x128xf32> to vector<256x128xf32>
    %6 = arith.mulf %3, %5 : vector<256x128xf32>
    %c0_5 = arith.constant 0 : index
    %c0_6 = arith.constant 0 : index
    %7 = vector.load %arg4[%c0_5, %c0_6] : memref<1x128xf32, #tpu.memory_space<vmem>>, vector<1x128xf32>
    %8 = vector.broadcast %7 : vector<1x128xf32> to vector<256x128xf32>
    %9 = arith.addf %6, %8 : vector<256x128xf32>
    %cst = arith.constant 0.000000e+00 : f32
    %10 = vector.broadcast %cst : f32 to vector<256x128xf32>
    %11 = arith.maximumf %9, %10 : vector<256x128xf32>
    %12 = vector.shape_cast %11 : vector<256x128xf32> to vector<16x16x128xf32>
    %13 = arith.truncf %12 : vector<16x16x128xf32> to vector<16x16x128xbf16>
    %cst_7 = arith.constant 0.000000e+00 : bf16
    %14 = vector.broadcast %cst_7 : bf16 to vector<48x128xbf16>
    %c0_8 = arith.constant 0 : index
    %c0_9 = arith.constant 0 : index
    %c0_10 = arith.constant 0 : index
    %15 = vector.load %arg9[%c0_8, %c0_9, %c0_10] : memref<18x48x128xbf16, #tpu.memory_space<vmem>>, vector<1x48x128xbf16>
    %16 = vector.shape_cast %15 : vector<1x48x128xbf16> to vector<48x128xbf16>
    %17 = vector.shape_cast %14 : vector<48x128xbf16> to vector<1x48x128xbf16>
    tpu.vector_store %arg9[%c0_8, %c0_9, %c0_10], %17 {strides = array<i32>} : memref<18x48x128xbf16, #tpu.memory_space<vmem>>, vector<1x48x128xbf16>,
    %cst_11 = arith.constant 0.000000e+00 : bf16
    %18 = vector.broadcast %cst_11 : bf16 to vector<48x128xbf16>
    %c17 = arith.constant 17 : index
    %c0_12 = arith.constant 0 : index
    %c0_13 = arith.constant 0 : index
    %19 = vector.load %arg9[%c17, %c0_12, %c0_13] : memref<18x48x128xbf16, #tpu.memory_space<vmem>>, vector<1x48x128xbf16>
    %20 = vector.shape_cast %19 : vector<1x48x128xbf16> to vector<48x128xbf16>
    %21 = vector.shape_cast %18 : vector<48x128xbf16> to vector<1x48x128xbf16>
    tpu.vector_store %arg9[%c17, %c0_12, %c0_13], %21 {strides = array<i32>} : memref<18x48x128xbf16, #tpu.memory_space<vmem>>, vector<1x48x128xbf16>,
    %cst_14 = arith.constant 0.000000e+00 : bf16
    %22 = vector.broadcast %cst_14 : bf16 to vector<18x16x128xbf16>
    %c0_15 = arith.constant 0 : index
    %c0_16 = arith.constant 0 : index
    %c0_17 = arith.constant 0 : index
    %23 = vector.load %arg9[%c0_15, %c0_16, %c0_17] : memref<18x48x128xbf16, #tpu.memory_space<vmem>>, vector<18x16x128xbf16>
    tpu.vector_store %arg9[%c0_15, %c0_16, %c0_17], %22 {strides = array<i32>} : memref<18x48x128xbf16, #tpu.memory_space<vmem>>, vector<18x16x128xbf16>,
    %cst_18 = arith.constant 0.000000e+00 : bf16
    %24 = vector.broadcast %cst_18 : bf16 to vector<18x16x128xbf16>
    %c0_19 = arith.constant 0 : index
    %c32 = arith.constant 32 : index
    %c0_20 = arith.constant 0 : index
    %25 = vector.load %arg9[%c0_19, %c32, %c0_20] : memref<18x48x128xbf16, #tpu.memory_space<vmem>>, vector<18x16x128xbf16>
    tpu.vector_store %arg9[%c0_19, %c32, %c0_20], %24 {strides = array<i32>} : memref<18x48x128xbf16, #tpu.memory_space<vmem>>, vector<18x16x128xbf16>,
    %c1 = arith.constant 1 : index
    %c16 = arith.constant 16 : index
    %c0_21 = arith.constant 0 : index
    %26 = vector.load %arg9[%c1, %c16, %c0_21] : memref<18x48x128xbf16, #tpu.memory_space<vmem>>, vector<16x16x128xbf16>
    tpu.vector_store %arg9[%c1, %c16, %c0_21], %13 {strides = array<i32>} : memref<18x48x128xbf16, #tpu.memory_space<vmem>>, vector<16x16x128xbf16>,
    %cst_22 = arith.constant 0.000000e+00 : f32
    %27 = vector.broadcast %cst_22 : f32 to vector<256x128xf32>
    %c0_23 = arith.constant 0 : index
    %c15 = arith.constant 15 : index
    %c0_24 = arith.constant 0 : index
    %28 = vector.load %arg9[%c0_23, %c15, %c0_24] : memref<18x48x128xbf16, #tpu.memory_space<vmem>>, vector<16x16x128xbf16>
    %29 = vector.shape_cast %28 : vector<16x16x128xbf16> to vector<256x128xbf16>
    %c0_25 = arith.constant 0 : index
    %c0_26 = arith.constant 0 : index
    %c0_27 = arith.constant 0 : index
    %30 = vector.load %arg5[%c0_25, %c0_26, %c0_27] : memref<9x128x128xbf16, #tpu.memory_space<vmem>>, vector<1x128x128xbf16>
    %31 = vector.shape_cast %30 : vector<1x128x128xbf16> to vector<128x128xbf16>
    %cst_28 = arith.constant dense<0.000000e+00> : vector<256x128xf32>
    %32 = tpu.matmul %29, %31, %cst_28 {dimension_numbers = #tpu.dot_dimension_numbers<[1], [0], [0], [1], [0, 0, 1, 1], [], []>} : vector<256x128xbf16>, vector<128x128xbf16>, vector<256x128xf32> -> vector<256x128xf32>
    %33 = arith.addf %27, %32 : vector<256x128xf32>
    %c0_29 = arith.constant 0 : index
    %c16_30 = arith.constant 16 : index
    %c0_31 = arith.constant 0 : index
    %34 = vector.load %arg9[%c0_29, %c16_30, %c0_31] : memref<18x48x128xbf16, #tpu.memory_space<vmem>>, vector<16x16x128xbf16>
    %35 = vector.shape_cast %34 : vector<16x16x128xbf16> to vector<256x128xbf16>
    %c1_32 = arith.constant 1 : index
    %c0_33 = arith.constant 0 : index
    %c0_34 = arith.constant 0 : index
    %36 = vector.load %arg5[%c1_32, %c0_33, %c0_34] : memref<9x128x128xbf16, #tpu.memory_space<vmem>>, vector<1x128x128xbf16>
    %37 = vector.shape_cast %36 : vector<1x128x128xbf16> to vector<128x128xbf16>
    %cst_35 = arith.constant dense<0.000000e+00> : vector<256x128xf32>
    %38 = tpu.matmul %35, %37, %cst_35 {dimension_numbers = #tpu.dot_dimension_numbers<[1], [0], [0], [1], [0, 0, 1, 1], [], []>} : vector<256x128xbf16>, vector<128x128xbf16>, vector<256x128xf32> -> vector<256x128xf32>
    %39 = arith.addf %33, %38 : vector<256x128xf32>
    %c0_36 = arith.constant 0 : index
    %c17_37 = arith.constant 17 : index
    %c0_38 = arith.constant 0 : index
    %40 = vector.load %arg9[%c0_36, %c17_37, %c0_38] : memref<18x48x128xbf16, #tpu.memory_space<vmem>>, vector<16x16x128xbf16>
    %41 = vector.shape_cast %40 : vector<16x16x128xbf16> to vector<256x128xbf16>
    %c2 = arith.constant 2 : index
    %c0_39 = arith.constant 0 : index
    %c0_40 = arith.constant 0 : index
    %42 = vector.load %arg5[%c2, %c0_39, %c0_40] : memref<9x128x128xbf16, #tpu.memory_space<vmem>>, vector<1x128x128xbf16>
    %43 = vector.shape_cast %42 : vector<1x128x128xbf16> to vector<128x128xbf16>
    %cst_41 = arith.constant dense<0.000000e+00> : vector<256x128xf32>
    %44 = tpu.matmul %41, %43, %cst_41 {dimension_numbers = #tpu.dot_dimension_numbers<[1], [0], [0], [1], [0, 0, 1, 1], [], []>} : vector<256x128xbf16>, vector<128x128xbf16>, vector<256x128xf32> -> vector<256x128xf32>
    %45 = arith.addf %39, %44 : vector<256x128xf32>
    %c1_42 = arith.constant 1 : index
    %c15_43 = arith.constant 15 : index
    %c0_44 = arith.constant 0 : index
    %46 = vector.load %arg9[%c1_42, %c15_43, %c0_44] : memref<18x48x128xbf16, #tpu.memory_space<vmem>>, vector<16x16x128xbf16>
    %47 = vector.shape_cast %46 : vector<16x16x128xbf16> to vector<256x128xbf16>
    %c3 = arith.constant 3 : index
    %c0_45 = arith.constant 0 : index
    %c0_46 = arith.constant 0 : index
    %48 = vector.load %arg5[%c3, %c0_45, %c0_46] : memref<9x128x128xbf16, #tpu.memory_space<vmem>>, vector<1x128x128xbf16>
    %49 = vector.shape_cast %48 : vector<1x128x128xbf16> to vector<128x128xbf16>
    %cst_47 = arith.constant dense<0.000000e+00> : vector<256x128xf32>
    %50 = tpu.matmul %47, %49, %cst_47 {dimension_numbers = #tpu.dot_dimension_numbers<[1], [0], [0], [1], [0, 0, 1, 1], [], []>} : vector<256x128xbf16>, vector<128x128xbf16>, vector<256x128xf32> -> vector<256x128xf32>
    %51 = arith.addf %45, %50 : vector<256x128xf32>
    %c1_48 = arith.constant 1 : index
    %c16_49 = arith.constant 16 : index
    %c0_50 = arith.constant 0 : index
    %52 = vector.load %arg9[%c1_48, %c16_49, %c0_50] : memref<18x48x128xbf16, #tpu.memory_space<vmem>>, vector<16x16x128xbf16>
    %53 = vector.shape_cast %52 : vector<16x16x128xbf16> to vector<256x128xbf16>
    %c4 = arith.constant 4 : index
    %c0_51 = arith.constant 0 : index
    %c0_52 = arith.constant 0 : index
    %54 = vector.load %arg5[%c4, %c0_51, %c0_52] : memref<9x128x128xbf16, #tpu.memory_space<vmem>>, vector<1x128x128xbf16>
    %55 = vector.shape_cast %54 : vector<1x128x128xbf16> to vector<128x128xbf16>
    %cst_53 = arith.constant dense<0.000000e+00> : vector<256x128xf32>
    %56 = tpu.matmul %53, %55, %cst_53 {dimension_numbers = #tpu.dot_dimension_numbers<[1], [0], [0], [1], [0, 0, 1, 1], [], []>} : vector<256x128xbf16>, vector<128x128xbf16>, vector<256x128xf32> -> vector<256x128xf32>
    %57 = arith.addf %51, %56 : vector<256x128xf32>
    %c1_54 = arith.constant 1 : index
    %c17_55 = arith.constant 17 : index
    %c0_56 = arith.constant 0 : index
    %58 = vector.load %arg9[%c1_54, %c17_55, %c0_56] : memref<18x48x128xbf16, #tpu.memory_space<vmem>>, vector<16x16x128xbf16>
    %59 = vector.shape_cast %58 : vector<16x16x128xbf16> to vector<256x128xbf16>
    %c5 = arith.constant 5 : index
    %c0_57 = arith.constant 0 : index
    %c0_58 = arith.constant 0 : index
    %60 = vector.load %arg5[%c5, %c0_57, %c0_58] : memref<9x128x128xbf16, #tpu.memory_space<vmem>>, vector<1x128x128xbf16>
    %61 = vector.shape_cast %60 : vector<1x128x128xbf16> to vector<128x128xbf16>
    %cst_59 = arith.constant dense<0.000000e+00> : vector<256x128xf32>
    %62 = tpu.matmul %59, %61, %cst_59 {dimension_numbers = #tpu.dot_dimension_numbers<[1], [0], [0], [1], [0, 0, 1, 1], [], []>} : vector<256x128xbf16>, vector<128x128xbf16>, vector<256x128xf32> -> vector<256x128xf32>
    %63 = arith.addf %57, %62 : vector<256x128xf32>
    %c2_60 = arith.constant 2 : index
    %c15_61 = arith.constant 15 : index
    %c0_62 = arith.constant 0 : index
    %64 = vector.load %arg9[%c2_60, %c15_61, %c0_62] : memref<18x48x128xbf16, #tpu.memory_space<vmem>>, vector<16x16x128xbf16>
    %65 = vector.shape_cast %64 : vector<16x16x128xbf16> to vector<256x128xbf16>
    %c6 = arith.constant 6 : index
    %c0_63 = arith.constant 0 : index
    %c0_64 = arith.constant 0 : index
    %66 = vector.load %arg5[%c6, %c0_63, %c0_64] : memref<9x128x128xbf16, #tpu.memory_space<vmem>>, vector<1x128x128xbf16>
    %67 = vector.shape_cast %66 : vector<1x128x128xbf16> to vector<128x128xbf16>
    %cst_65 = arith.constant dense<0.000000e+00> : vector<256x128xf32>
    %68 = tpu.matmul %65, %67, %cst_65 {dimension_numbers = #tpu.dot_dimension_numbers<[1], [0], [0], [1], [0, 0, 1, 1], [], []>} : vector<256x128xbf16>, vector<128x128xbf16>, vector<256x128xf32> -> vector<256x128xf32>
    %69 = arith.addf %63, %68 : vector<256x128xf32>
    %c2_66 = arith.constant 2 : index
    %c16_67 = arith.constant 16 : index
    %c0_68 = arith.constant 0 : index
    %70 = vector.load %arg9[%c2_66, %c16_67, %c0_68] : memref<18x48x128xbf16, #tpu.memory_space<vmem>>, vector<16x16x128xbf16>
    %71 = vector.shape_cast %70 : vector<16x16x128xbf16> to vector<256x128xbf16>
    %c7 = arith.constant 7 : index
    %c0_69 = arith.constant 0 : index
    %c0_70 = arith.constant 0 : index
    %72 = vector.load %arg5[%c7, %c0_69, %c0_70] : memref<9x128x128xbf16, #tpu.memory_space<vmem>>, vector<1x128x128xbf16>
    %73 = vector.shape_cast %72 : vector<1x128x128xbf16> to vector<128x128xbf16>
    %cst_71 = arith.constant dense<0.000000e+00> : vector<256x128xf32>
    %74 = tpu.matmul %71, %73, %cst_71 {dimension_numbers = #tpu.dot_dimension_numbers<[1], [0], [0], [1], [0, 0, 1, 1], [], []>} : vector<256x128xbf16>, vector<128x128xbf16>, vector<256x128xf32> -> vector<256x128xf32>
    %75 = arith.addf %69, %74 : vector<256x128xf32>
    %c2_72 = arith.constant 2 : index
    %c17_73 = arith.constant 17 : index
    %c0_74 = arith.constant 0 : index
    %76 = vector.load %arg9[%c2_72, %c17_73, %c0_74] : memref<18x48x128xbf16, #tpu.memory_space<vmem>>, vector<16x16x128xbf16>
    %77 = vector.shape_cast %76 : vector<16x16x128xbf16> to vector<256x128xbf16>
    %c8 = arith.constant 8 : index
    %c0_75 = arith.constant 0 : index
    %c0_76 = arith.constant 0 : index
    %78 = vector.load %arg5[%c8, %c0_75, %c0_76] : memref<9x128x128xbf16, #tpu.memory_space<vmem>>, vector<1x128x128xbf16>
    %79 = vector.shape_cast %78 : vector<1x128x128xbf16> to vector<128x128xbf16>
    %cst_77 = arith.constant dense<0.000000e+00> : vector<256x128xf32>
    %80 = tpu.matmul %77, %79, %cst_77 {dimension_numbers = #tpu.dot_dimension_numbers<[1], [0], [0], [1], [0, 0, 1, 1], [], []>} : vector<256x128xbf16>, vector<128x128xbf16>, vector<256x128xf32> -> vector<256x128xf32>
    %81 = arith.addf %75, %80 : vector<256x128xf32>
    %c0_78 = arith.constant 0 : index
    %c0_79 = arith.constant 0 : index
    %c0_80 = arith.constant 0 : index
    %c0_81 = arith.constant 0 : index
    %82 = vector.load %arg6[%c0_78, %c0_79, %c0_80, %c0_81] : memref<1x16x16x128xbf16, #tpu.memory_space<vmem>>, vector<1x16x16x128xbf16>
    %83 = vector.shape_cast %82 : vector<1x16x16x128xbf16> to vector<16x16x128xbf16>
    %84 = arith.extf %83 : vector<16x16x128xbf16> to vector<16x16x128xf32>
    %85 = vector.shape_cast %81 : vector<256x128xf32> to vector<16x16x128xf32>
    %86 = arith.addf %84, %85 : vector<16x16x128xf32>
    %87 = arith.truncf %86 : vector<16x16x128xf32> to vector<16x16x128xbf16>
    %c0_82 = arith.constant 0 : index
    %c0_83 = arith.constant 0 : index
    %c0_84 = arith.constant 0 : index
    %c0_85 = arith.constant 0 : index
    %88 = vector.load %arg7[%c0_82, %c0_83, %c0_84, %c0_85] : memref<1x16x16x128xbf16, #tpu.memory_space<vmem>>, vector<1x16x16x128xbf16>
    %89 = vector.shape_cast %88 : vector<1x16x16x128xbf16> to vector<16x16x128xbf16>
    %90 = vector.shape_cast %87 : vector<16x16x128xbf16> to vector<1x16x16x128xbf16>
    tpu.vector_store %arg7[%c0_82, %c0_83, %c0_84, %c0_85], %90 {strides = array<i32>} : memref<1x16x16x128xbf16, #tpu.memory_space<vmem>>, vector<1x16x16x128xbf16>,
    %91 = arith.extf %87 : vector<16x16x128xbf16> to vector<16x16x128xf32>
    %92 = vector.shape_cast %91 : vector<16x16x128xf32> to vector<256x128xf32>
    %cst_86 = arith.constant dense<0.000000e+00> : vector<128xf32>
    %93 = vector.multi_reduction <add>, %92, %cst_86 [0] : vector<256x128xf32> to vector<128xf32>
    %94 = vector.shape_cast %93 : vector<128xf32> to vector<1x128xf32>
    %95 = arith.mulf %92, %92 : vector<256x128xf32>
    %cst_87 = arith.constant dense<0.000000e+00> : vector<128xf32>
    %96 = vector.multi_reduction <add>, %95, %cst_87 [0] : vector<256x128xf32> to vector<128xf32>
    %97 = vector.shape_cast %96 : vector<128xf32> to vector<1x128xf32>
    %98 = tpu.concatenate %94, %97 in 0 : vector<1x128xf32>, vector<1x128xf32> -> vector<2x128xf32>
    %99 = vector.shape_cast %98 : vector<2x128xf32> to vector<1x1x2x128xf32>
    %c0_88 = arith.constant 0 : index
    %c0_89 = arith.constant 0 : index
    %c0_90 = arith.constant 0 : index
    %c0_91 = arith.constant 0 : index
    %100 = vector.load %arg8[%c0_88, %c0_89, %c0_90, %c0_91] : memref<1x1x2x128xf32, #tpu.memory_space<vmem>>, vector<1x1x2x128xf32>
    tpu.vector_store %arg8[%c0_88, %c0_89, %c0_90, %c0_91], %99 {strides = array<i32>} : memref<1x1x2x128xf32, #tpu.memory_space<vmem>>, vector<1x1x2x128xf32>,
    return
  }
  func.func @transform_0(%arg0: i32, %arg1: i32) -> (i32, i32, i32, i32) {
    %c0_i32 = arith.constant 0 : i32
    %c0_i32_0 = arith.constant 0 : i32
    %c0_i32_1 = arith.constant 0 : i32
    %c0_i32_2 = arith.constant 0 : i32
    return %arg0, %c0_i32, %c0_i32_0, %c0_i32_1 : i32, i32, i32, i32
  }
  func.func @transform_1(%arg0: i32, %arg1: i32) -> (i32, i32) {
    %c0_i32 = arith.constant 0 : i32
    %c0_i32_0 = arith.constant 0 : i32
    %c0_i32_1 = arith.constant 0 : i32
    return %c0_i32, %c0_i32_0 : i32, i32
  }
  func.func @transform_2(%arg0: i32, %arg1: i32) -> (i32, i32) {
    %c0_i32 = arith.constant 0 : i32
    %c0_i32_0 = arith.constant 0 : i32
    %c0_i32_1 = arith.constant 0 : i32
    return %c0_i32, %c0_i32_0 : i32, i32
  }
  func.func @transform_3(%arg0: i32, %arg1: i32) -> (i32, i32, i32) {
    %c0_i32 = arith.constant 0 : i32
    %c0_i32_0 = arith.constant 0 : i32
    %c0_i32_1 = arith.constant 0 : i32
    return %c0_i32, %c0_i32_0, %arg1 : i32, i32, i32
  }
  func.func @transform_4(%arg0: i32, %arg1: i32) -> (i32, i32, i32, i32) {
    %c0_i32 = arith.constant 0 : i32
    %0 = arith.addi %c0_i32, %arg1 : i32
    %c0_i32_0 = arith.constant 0 : i32
    %c0_i32_1 = arith.constant 0 : i32
    %c0_i32_2 = arith.constant 0 : i32
    return %arg0, %c0_i32_0, %c0_i32_1, %0 : i32, i32, i32, i32
  }
  func.func @transform_5(%arg0: i32, %arg1: i32) -> (i32, i32, i32, i32) {
    %c0_i32 = arith.constant 0 : i32
    %0 = arith.addi %c0_i32, %arg1 : i32
    %c0_i32_0 = arith.constant 0 : i32
    %c0_i32_1 = arith.constant 0 : i32
    %c0_i32_2 = arith.constant 0 : i32
    return %arg0, %c0_i32_0, %c0_i32_1, %0 : i32, i32, i32, i32
  }
  func.func @transform_6(%arg0: i32, %arg1: i32) -> (i32, i32, i32, i32) {
    %c0_i32 = arith.constant 0 : i32
    %c0_i32_0 = arith.constant 0 : i32
    %c0_i32_1 = arith.constant 0 : i32
    return %arg0, %arg1, %c0_i32, %c0_i32_0 : i32, i32, i32, i32
  }
}

</mosaic_0001>

<llo_original>
// kernel: dense_block.5
$region0: #{dense_block.5}
  #allocation0 [shape = 'u32[]', space=smem, size = 0x4, offset = 0x4, fixed_abs, tag = 'smem constant byte address 0x4 - core index']
  #allocation1 [shape = 'u32[144,128]{1,0:T(1,128)}', space=vmem, size = 0x12000, scoped, tag = 'internal scratch']
  %s0 = inlined_call_operand.vmem [shape: bf16[2,16,16,128], index: 0, kind: input, shape index: {}]
  %s1 = inlined_call_operand.vmem [shape: f32[2,2,128], index: 1, kind: output, shape index: {}]
  %s2 = sld [smem:[#allocation0]]
  $region37: #{dense_block.5} parent=0
    _
  %s4 = ssub.s32 1, %s2
  %s5 = scalar_select 0, %s4, %s2
  loop: start=0, step=1, limit=4
  $region2: #{dense_block.5} parent=0 // loop_pre_header
    _
  $region3: #{dense_block.5} parent=0 // loop_header
    %s7 = sphi 0, %s11
    %p8 = scmp.ge.s32.totalorder %s7, 4
    %s17 = sphi 0, %s19
    %s20 = sphi 0, %s17
    %s21 = sphi 0, %s20
    %s37 = sphi 0, %s21
    %s43 = sphi 0, %s45
    %s46 = sphi 0, %s43
    %s47 = sphi 0, %s46
    %s63 = sphi 0, %s47
  $region4: #{dense_block.5} parent=0 // loop_header_branch
    %10 = sbr.rel (%p8) target = $region8
  $region5: #{dense_block.5} parent=0 // loop_body
    %s12 = ssub.s32 %s7, 1
    %s13 = ssub.s32 %s7, 2
    %s14 = sadd.s32 %s7, 1
    %s15 = ssub.s32 %s7, %s14
    %p16 = scmp.eq.s32.totalorder %s15, 0
    %s18 = sadd.s32 %s17, 1
    %s19 = scalar_select %p16, %s17, %s18
    %p22 = pneg %p16
    %p23 = scmp.eq.s32.totalorder %s7, 1
    %p24 = por %p22, %p23
    %p25 = scmp.ne.s32.totalorder %s17, %s20
    %p26 = scmp.eq.s32.totalorder %s7, 0
    %p27 = por %p25, %p26
    %p28 = scmp.ne.s32.totalorder %s17, %s20
    %p29 = scmp.eq.s32.totalorder %s12, 1
    %p30 = por %p28, %p29
    %p31 = scmp.ne.s32.totalorder %s20, %s21
    %p32 = scmp.eq.s32.totalorder %s12, 0
    %p33 = por %p31, %p32
    %p34 = scmp.ne.s32.totalorder %s20, %s21
    %p35 = scmp.eq.s32.totalorder %s13, 1
    %p36 = por %p34, %p35
    %p38 = scmp.ne.s32.totalorder %s21, %s37
    %p39 = scmp.eq.s32.totalorder %s13, 0
    %p40 = por %p38, %p39
    %s41 = ssub.s32 %s7, %s14
    %p42 = scmp.eq.s32.totalorder %s41, 0
    %s44 = sadd.s32 %s43, 1
    %s45 = scalar_select %p42, %s43, %s44
    %p48 = pneg %p42
    %p49 = scmp.eq.s32.totalorder %s7, 1
    %p50 = por %p48, %p49
    %p51 = scmp.ne.s32.totalorder %s43, %s46
    %p52 = scmp.eq.s32.totalorder %s7, 0
    %p53 = por %p51, %p52
    %p54 = scmp.ne.s32.totalorder %s43, %s46
    %p55 = scmp.eq.s32.totalorder %s12, 1
    %p56 = por %p54, %p55
    %p57 = scmp.ne.s32.totalorder %s46, %s47
    %p58 = scmp.eq.s32.totalorder %s12, 0
    %p59 = por %p57, %p58
    %p60 = scmp.ne.s32.totalorder %s46, %s47
    %p61 = scmp.eq.s32.totalorder %s13, 1
    %p62 = por %p60, %p61
    %p64 = scmp.ne.s32.totalorder %s47, %s63
    %p65 = scmp.eq.s32.totalorder %s13, 0
    %p66 = por %p64, %p65
    %p67 = scmp.le.s32.totalorder 1, %s7
    %p68 = scmp.lt.s32.totalorder %s7, 3
    %p69 = pnand %p67, %p68
    %p70 = pneg %p69
    // Predicated region
    $region9: #{dense_block.5} parent=5 // pred_check
      _
    $region10: #{dense_block.5} parent=5 // pred_check_branch
      %72 = sbr.rel (%p69) target = $region12
    $region11: #{dense_block.5} parent=5 // pred_region
      %s73 = ssub.s32 %s7, 1
    $region12: #{dense_block.5} parent=5 // pred_fallthru
      _
    %p74 = scmp.lt.s32.totalorder %s7, 2
    // Predicated region
    $region13: #{dense_block.5} parent=5 // pred_check
      %p75 = pneg %p74
    $region14: #{dense_block.5} parent=5 // pred_check_branch
      %77 = sbr.rel (%p75) target = $region16
    $region15: #{dense_block.5} parent=5 // pred_region
      // Predicated region
      $region17: #{dense_block.5} parent=15 // pred_check
        %p78 = pneg %p27
      $region18: #{dense_block.5} parent=15 // pred_check_branch
        %80 = sbr.rel (%p78) target = $region20
      $region19: #{dense_block.5} parent=15 // pred_region
        %p81 = scmp.lt.s32.totalorder %s7, 1
        %s82 = scalar_select %p81, %s7, 1
        %s83 = smul.addr %s82, 32
        %s84 = smul.addr %s83, 4
        %s85 = scalar_lea.vmem %s0, %s84
      $region20: #{dense_block.5} parent=15 // pred_fallthru
        _
    $region16: #{dense_block.5} parent=5 // pred_fallthru
      _
    %p86 = scmp.le.s32.totalorder 1, %s7
    %p87 = scmp.lt.s32.totalorder %s7, 3
    %p88 = pnand %p86, %p87
    %p89 = pneg %p88
    // Predicated region
    $region21: #{dense_block.5} parent=5 // pred_check
      _
    $region22: #{dense_block.5} parent=5 // pred_check_branch
      %91 = sbr.rel (%p88) target = $region24
    $region23: #{dense_block.5} parent=5 // pred_region
      %s92 = ssub.s32 %s7, 1
      %p93 = scmp.lt.s32.totalorder %s12, 1
      %s94 = scalar_select %p93, %s12, 1
      %s95 = smul.addr %s94, 32
      %s96 = smul.addr %s95, 4
      %s97 = scalar_lea.vmem %s0, %s96
      %p98 = pneg %p33
      %p99 = pneg %p30
      %p100 = pneg %p59
      %p101 = pneg %p56
      %p102 = scmp.lt.s32.totalorder %s12, 1
      %s103 = scalar_select %p102, %s12, 1
      %s104 = smul.addr %s103, 2
      %s105 = scalar_lea.vmem %s1, %s104
      %p106 = scmp.lt.s32.totalorder %s12, 1
      %s107 = scalar_select %p106, %s12, 1
      %s108 = smul.addr %s107, 32
      %s109 = smul.addr %s108, 4
      %s110 = scalar_lea.vmem %s0, %s109
      %p111 = scmp.lt.s32.totalorder %s12, 1
      %s112 = scalar_select %p111, %s12, 1
      %s113 = smul.addr %s112, 2
      %s114 = scalar_lea.vmem %s1, %s113
      %v115 = vld [vmem:[%s110] sm:$0xf]
      %v116 = vld [vmem:[%s110 + $0x4] sm:$0xf]
      %v117 = vld [vmem:[%s110 + $0x8] sm:$0xf]
      %v118 = vld [vmem:[%s110 + $0xc] sm:$0xf]
      %v119 = vld [vmem:[%s110 + $0x10] sm:$0xf]
      %v120 = vld [vmem:[%s110 + $0x14] sm:$0xf]
      %v121 = vld [vmem:[%s110 + $0x18] sm:$0xf]
      %v122 = vld [vmem:[%s110 + $0x1c] sm:$0xf]
      %v123 = vld [vmem:[%s110 + $0x20] sm:$0xf]
      %v124 = vld [vmem:[%s110 + $0x24] sm:$0xf]
      %v125 = vld [vmem:[%s110 + $0x28] sm:$0xf]
      %v126 = vld [vmem:[%s110 + $0x2c] sm:$0xf]
      %v127 = vld [vmem:[%s110 + $0x30] sm:$0xf]
      %v128 = vld [vmem:[%s110 + $0x34] sm:$0xf]
      %v129 = vld [vmem:[%s110 + $0x38] sm:$0xf]
      %v130 = vld [vmem:[%s110 + $0x3c] sm:$0xf]
      %v131 = vld [vmem:[%s110 + $0x40] sm:$0xf]
      %v132 = vld [vmem:[%s110 + $0x44] sm:$0xf]
      %v133 = vld [vmem:[%s110 + $0x48] sm:$0xf]
      %v134 = vld [vmem:[%s110 + $0x4c] sm:$0xf]
      %v135 = vld [vmem:[%s110 + $0x50] sm:$0xf]
      %v136 = vld [vmem:[%s110 + $0x54] sm:$0xf]
      %v137 = vld [vmem:[%s110 + $0x58] sm:$0xf]
      %v138 = vld [vmem:[%s110 + $0x5c] sm:$0xf]
      %v139 = vld [vmem:[%s110 + $0x60] sm:$0xf]
      %v140 = vld [vmem:[%s110 + $0x64] sm:$0xf]
      %v141 = vld [vmem:[%s110 + $0x68] sm:$0xf]
      %v142 = vld [vmem:[%s110 + $0x6c] sm:$0xf]
      %v143 = vld [vmem:[%s110 + $0x70] sm:$0xf]
      %v144 = vld [vmem:[%s110 + $0x74] sm:$0xf]
      %v145 = vld [vmem:[%s110 + $0x78] sm:$0xf]
      %v146 = vld [vmem:[%s110 + $0x7c] sm:$0xf]
      %v147 = vunpack.c.l.bf16 %v115
      %v148 = vunpack.c.l.bf16 %v116
      %v149 = vunpack.c.l.bf16 %v117
      %v150 = vunpack.c.l.bf16 %v118
      %v151 = vunpack.c.l.bf16 %v119
      %v152 = vunpack.c.l.bf16 %v120
      %v153 = vunpack.c.l.bf16 %v121
      %v154 = vunpack.c.l.bf16 %v122
      %v155 = vunpack.c.l.bf16 %v123
      %v156 = vunpack.c.l.bf16 %v124
      %v157 = vunpack.c.l.bf16 %v125
      %v158 = vunpack.c.l.bf16 %v126
      %v159 = vunpack.c.l.bf16 %v127
      %v160 = vunpack.c.l.bf16 %v128
      %v161 = vunpack.c.l.bf16 %v129
      %v162 = vunpack.c.l.bf16 %v130
      %v163 = vunpack.c.l.bf16 %v131
      %v164 = vunpack.c.l.bf16 %v132
      %v165 = vunpack.c.l.bf16 %v133
      %v166 = vunpack.c.l.bf16 %v134
      %v167 = vunpack.c.l.bf16 %v135
      %v168 = vunpack.c.l.bf16 %v136
      %v169 = vunpack.c.l.bf16 %v137
      %v170 = vunpack.c.l.bf16 %v138
      %v171 = vunpack.c.l.bf16 %v139
      %v172 = vunpack.c.l.bf16 %v140
      %v173 = vunpack.c.l.bf16 %v141
      %v174 = vunpack.c.l.bf16 %v142
      %v175 = vunpack.c.l.bf16 %v143
      %v176 = vunpack.c.l.bf16 %v144
      %v177 = vunpack.c.l.bf16 %v145
      %v178 = vunpack.c.l.bf16 %v146
      %v179 = vadd.f32 %v147, %v148
      %v180 = vadd.f32 %v179, %v149
      %v181 = vadd.f32 %v180, %v150
      %v182 = vadd.f32 %v181, %v151
      %v183 = vadd.f32 %v182, %v152
      %v184 = vadd.f32 %v183, %v153
      %v185 = vadd.f32 %v184, %v154
      %v186 = vadd.f32 %v185, %v155
      %v187 = vadd.f32 %v186, %v156
      %v188 = vadd.f32 %v187, %v157
      %v189 = vadd.f32 %v188, %v158
      %v190 = vadd.f32 %v189, %v159
      %v191 = vadd.f32 %v190, %v160
      %v192 = vadd.f32 %v191, %v161
      %v193 = vadd.f32 %v192, %v162
      %v194 = vadd.f32 %v193, %v163
      %v195 = vadd.f32 %v194, %v164
      %v196 = vadd.f32 %v195, %v165
      %v197 = vadd.f32 %v196, %v166
      %v198 = vadd.f32 %v197, %v167
      %v199 = vadd.f32 %v198, %v168
      %v200 = vadd.f32 %v199, %v169
      %v201 = vadd.f32 %v200, %v170
      %v202 = vadd.f32 %v201, %v171
      %v203 = vadd.f32 %v202, %v172
      %v204 = vadd.f32 %v203, %v173
      %v205 = vadd.f32 %v204, %v174
      %v206 = vadd.f32 %v205, %v175
      %v207 = vadd.f32 %v206, %v176
      %v208 = vadd.f32 %v207, %v177
      %v209 = vadd.f32 %v208, %v178
      %v210 = vrot.slane %v209, 4
      %v211 = vadd.f32 %v209, %v210
      %v212 = vrot.slane %v211, 2
      %v213 = vadd.f32 %v211, %v212
      %v214 = vrot.slane %v213, 1
      %v215 = vadd.f32 %v213, %v214
      %v216 = vmul.f32 %v147, %v147
      %v217 = vmul.f32 %v148, %v148
      %v218 = vmul.f32 %v149, %v149
      %v219 = vmul.f32 %v150, %v150
      %v220 = vmul.f32 %v151, %v151
      %v221 = vmul.f32 %v152, %v152
      %v222 = vmul.f32 %v153, %v153
      %v223 = vmul.f32 %v154, %v154
      %v224 = vmul.f32 %v155, %v155
      %v225 = vmul.f32 %v156, %v156
      %v226 = vmul.f32 %v157, %v157
      %v227 = vmul.f32 %v158, %v158
      %v228 = vmul.f32 %v159, %v159
      %v229 = vmul.f32 %v160, %v160
      %v230 = vmul.f32 %v161, %v161
      %v231 = vmul.f32 %v162, %v162
      %v232 = vmul.f32 %v163, %v163
      %v233 = vmul.f32 %v164, %v164
      %v234 = vmul.f32 %v165, %v165
      %v235 = vmul.f32 %v166, %v166
      %v236 = vmul.f32 %v167, %v167
      %v237 = vmul.f32 %v168, %v168
      %v238 = vmul.f32 %v169, %v169
      %v239 = vmul.f32 %v170, %v170
      %v240 = vmul.f32 %v171, %v171
      %v241 = vmul.f32 %v172, %v172
      %v242 = vmul.f32 %v173, %v173
      %v243 = vmul.f32 %v174, %v174
      %v244 = vmul.f32 %v175, %v175
      %v245 = vmul.f32 %v176, %v176
      %v246 = vmul.f32 %v177, %v177
      %v247 = vmul.f32 %v178, %v178
      %v248 = vadd.f32 %v216, %v217
      %v249 = vadd.f32 %v248, %v218
      %v250 = vadd.f32 %v249, %v219
      %v251 = vadd.f32 %v250, %v220
      %v252 = vadd.f32 %v251, %v221
      %v253 = vadd.f32 %v252, %v222
      %v254 = vadd.f32 %v253, %v223
      %v255 = vadd.f32 %v254, %v224
      %v256 = vadd.f32 %v255, %v225
      %v257 = vadd.f32 %v256, %v226
      %v258 = vadd.f32 %v257, %v227
      %v259 = vadd.f32 %v258, %v228
      %v260 = vadd.f32 %v259, %v229
      %v261 = vadd.f32 %v260, %v230
      %v262 = vadd.f32 %v261, %v231
      %v263 = vadd.f32 %v262, %v232
      %v264 = vadd.f32 %v263, %v233
      %v265 = vadd.f32 %v264, %v234
      %v266 = vadd.f32 %v265, %v235
      %v267 = vadd.f32 %v266, %v236
      %v268 = vadd.f32 %v267, %v237
      %v269 = vadd.f32 %v268, %v238
      %v270 = vadd.f32 %v269, %v239
      %v271 = vadd.f32 %v270, %v240
      %v272 = vadd.f32 %v271, %v241
      %v273 = vadd.f32 %v272, %v242
      %v274 = vadd.f32 %v273, %v243
      %v275 = vadd.f32 %v274, %v244
      %v276 = vadd.f32 %v275, %v245
      %v277 = vadd.f32 %v276, %v246
      %v278 = vadd.f32 %v277, %v247
      %v279 = vrot.slane %v278, 4
      %v280 = vadd.f32 %v278, %v279
      %v281 = vrot.slane %v280, 2
      %v282 = vadd.f32 %v280, %v281
      %v283 = vrot.slane %v282, 1
      %v284 = vadd.f32 %v282, %v283
      %vm285 = vcmask 1040384
      %v286 = vsel %vm285, %v215, %v284
      %287 = vst [vmem:[%s114] sm:$0x3] %v286
      %p288 = scmp.lt.s32.totalorder %s12, 1
      %s289 = scalar_select %p288, %s12, 1
      %s290 = smul.addr %s289, 2
      %s291 = scalar_lea.vmem %s1, %s290
      // Predicated region
      $region25: #{dense_block.5} parent=23 // pred_check
        %p292 = pneg %p56
      $region26: #{dense_block.5} parent=23 // pred_check_branch
        %294 = sbr.rel (%p292) target = $region28
      $region27: #{dense_block.5} parent=23 // pred_region
        _
      $region28: #{dense_block.5} parent=23 // pred_fallthru
        _
    $region24: #{dense_block.5} parent=5 // pred_fallthru
      _
    %p295 = scmp.le.s32.totalorder 2, %s7
    // Predicated region
    $region29: #{dense_block.5} parent=5 // pred_check
      %p296 = pneg %p295
    $region30: #{dense_block.5} parent=5 // pred_check_branch
      %298 = sbr.rel (%p296) target = $region32
    $region31: #{dense_block.5} parent=5 // pred_region
      %s299 = ssub.s32 %s7, 2
      // Predicated region
      $region33: #{dense_block.5} parent=31 // pred_check
        %p300 = pneg %p62
      $region34: #{dense_block.5} parent=31 // pred_check_branch
        %302 = sbr.rel (%p300) target = $region36
      $region35: #{dense_block.5} parent=31 // pred_region
        %p303 = scmp.lt.s32.totalorder %s13, 1
        %s304 = scalar_select %p303, %s13, 1
        %s305 = smul.addr %s304, 2
        %s306 = scalar_lea.vmem %s1, %s305
      $region36: #{dense_block.5} parent=31 // pred_fallthru
        _
    $region32: #{dense_block.5} parent=5 // pred_fallthru
      _
  $region6: #{dense_block.5} parent=0 // loop_footer
    %s11 = sadd.s32 1, %s7
  $region7: #{dense_block.5} parent=0 // loop_footer_branch
    %6 = sbr.rel target = $region3
  $region8: #{dense_block.5} parent=0 // loop_exit
    _

// kernel: dense_block.6
$region0: #{dense_block.6}
  #allocation0 [shape = 'u32[]', space=smem, size = 0x4, offset = 0x4, fixed_abs, tag = 'smem constant byte address 0x4 - core index']
  #allocation1 [shape = 'u32[144,128]{1,0:T(1,128)}', space=vmem, size = 0x12000, scoped, tag = 'internal scratch']
  %s0 = inlined_call_operand.vmem [shape: bf16[2,16,16,128], index: 0, kind: input, shape index: {}]
  %s1 = inlined_call_operand.vmem [shape: f32[1,128], index: 1, kind: input, shape index: {}]
  %s2 = inlined_call_operand.vmem [shape: f32[1,128], index: 2, kind: input, shape index: {}]
  %s3 = inlined_call_operand.vmem [shape: bf16[128,128], index: 3, kind: input, shape index: {}]
  %s4 = inlined_call_operand.vmem [shape: bf16[2,16,16,128], index: 4, kind: output, shape index: {0}]
  %s5 = inlined_call_operand.vmem [shape: f32[2,1,2,128], index: 5, kind: output, shape index: {1}]
  %6 = xla_tuple %s4, %s5
  %s7 = sld [smem:[#allocation0]]
  $region57: #{dense_block.6} parent=0
    _
  %s9 = ssub.s32 1, %s7
  %s10 = scalar_select 0, %s9, %s7
  loop: start=0, step=1, limit=4
  $region2: #{dense_block.6} parent=0 // loop_pre_header
    _
  $region3: #{dense_block.6} parent=0 // loop_header
    %s12 = sphi 0, %s16
    %p13 = scmp.ge.s32.totalorder %s12, 4
    %s19 = sphi 0, %s31
    %s20 = sphi 0, %s27
    %s21 = sphi 0, %s19
    %s22 = sphi 0, %s20
    %s23 = sphi 0, %s21
    %s24 = sphi 0, %s22
    %s36 = sphi 0, %s38
    %s39 = sphi 0, %s36
    %s40 = sphi 0, %s39
    %s56 = sphi 0, %s40
    %s60 = sphi 0, %s60
    %s62 = sphi 0, %s60
    %s63 = sphi 0, %s62
    %s77 = sphi 0, %s63
    %s81 = sphi 0, %s81
    %s83 = sphi 0, %s81
    %s84 = sphi 0, %s83
    %s98 = sphi 0, %s84
    %s102 = sphi 0, %s102
    %s104 = sphi 0, %s102
    %s105 = sphi 0, %s104
    %s119 = sphi 0, %s105
    %s127 = sphi 0, %s129
    %s130 = sphi 0, %s127
    %s131 = sphi 0, %s130
    %s147 = sphi 0, %s131
    %s155 = sphi 0, %s157
    %s158 = sphi 0, %s155
    %s159 = sphi 0, %s158
    %s175 = sphi 0, %s159
  $region4: #{dense_block.6} parent=0 // loop_header_branch
    %15 = sbr.rel (%p13) target = $region8
  $region5: #{dense_block.6} parent=0 // loop_body
    %s17 = ssub.s32 %s12, 1
    %s18 = ssub.s32 %s12, 2
    %s25 = sadd.s32 1, %s20
    %p26 = scmp.ge.s32.totalorder %s25, 1
    %s27 = scalar_select %p26, 0, %s25
    %s28 = sadd.s32 1, %s19
    %s29 = scalar_select %p26, %s28, %s19
    %p30 = scmp.ge.s32.totalorder %s29, 2
    %s31 = scalar_select %p30, 0, %s29
    %s32 = ssub.s32 %s19, %s31
    %s33 = ssub.s32 %s20, %s27
    %s34 = sor.u32 %s32, %s33
    %p35 = scmp.eq.s32.totalorder %s34, 0
    %s37 = sadd.s32 %s36, 1
    %s38 = scalar_select %p35, %s36, %s37
    %p41 = pneg %p35
    %p42 = scmp.eq.s32.totalorder %s12, 1
    %p43 = por %p41, %p42
    %p44 = scmp.ne.s32.totalorder %s36, %s39
    %p45 = scmp.eq.s32.totalorder %s12, 0
    %p46 = por %p44, %p45
    %p47 = scmp.ne.s32.totalorder %s36, %s39
    %p48 = scmp.eq.s32.totalorder %s17, 1
    %p49 = por %p47, %p48
    %p50 = scmp.ne.s32.totalorder %s39, %s40
    %p51 = scmp.eq.s32.totalorder %s17, 0
    %p52 = por %p50, %p51
    %p53 = scmp.ne.s32.totalorder %s39, %s40
    %p54 = scmp.eq.s32.totalorder %s18, 1
    %p55 = por %p53, %p54
    %p57 = scmp.ne.s32.totalorder %s40, %s56
    %p58 = scmp.eq.s32.totalorder %s18, 0
    %p59 = por %p57, %p58
    %s61 = sadd.s32 %s60, 1
    %p64 = scmp.eq.s32.totalorder %s12, 1
    %p65 = scmp.ne.s32.totalorder %s60, %s62
    %p66 = scmp.eq.s32.totalorder %s12, 0
    %p67 = por %p65, %p66
    %p68 = scmp.ne.s32.totalorder %s60, %s62
    %p69 = scmp.eq.s32.totalorder %s17, 1
    %p70 = por %p68, %p69
    %p71 = scmp.ne.s32.totalorder %s62, %s63
    %p72 = scmp.eq.s32.totalorder %s17, 0
    %p73 = por %p71, %p72
    %p74 = scmp.ne.s32.totalorder %s62, %s63
    %p75 = scmp.eq.s32.totalorder %s18, 1
    %p76 = por %p74, %p75
    %p78 = scmp.ne.s32.totalorder %s63, %s77
    %p79 = scmp.eq.s32.totalorder %s18, 0
    %p80 = por %p78, %p79
    %s82 = sadd.s32 %s81, 1
    %p85 = scmp.eq.s32.totalorder %s12, 1
    %p86 = scmp.ne.s32.totalorder %s81, %s83
    %p87 = scmp.eq.s32.totalorder %s12, 0
    %p88 = por %p86, %p87
    %p89 = scmp.ne.s32.totalorder %s81, %s83
    %p90 = scmp.eq.s32.totalorder %s17, 1
    %p91 = por %p89, %p90
    %p92 = scmp.ne.s32.totalorder %s83, %s84
    %p93 = scmp.eq.s32.totalorder %s17, 0
    %p94 = por %p92, %p93
    %p95 = scmp.ne.s32.totalorder %s83, %s84
    %p96 = scmp.eq.s32.totalorder %s18, 1
    %p97 = por %p95, %p96
    %p99 = scmp.ne.s32.totalorder %s84, %s98
    %p100 = scmp.eq.s32.totalorder %s18, 0
    %p101 = por %p99, %p100
    %s103 = sadd.s32 %s102, 1
    %p106 = scmp.eq.s32.totalorder %s12, 1
    %p107 = scmp.ne.s32.totalorder %s102, %s104
    %p108 = scmp.eq.s32.totalorder %s12, 0
    %p109 = por %p107, %p108
    %p110 = scmp.ne.s32.totalorder %s102, %s104
    %p111 = scmp.eq.s32.totalorder %s17, 1
    %p112 = por %p110, %p111
    %p113 = scmp.ne.s32.totalorder %s104, %s105
    %p114 = scmp.eq.s32.totalorder %s17, 0
    %p115 = por %p113, %p114
    %p116 = scmp.ne.s32.totalorder %s104, %s105
    %p117 = scmp.eq.s32.totalorder %s18, 1
    %p118 = por %p116, %p117
    %p120 = scmp.ne.s32.totalorder %s105, %s119
    %p121 = scmp.eq.s32.totalorder %s18, 0
    %p122 = por %p120, %p121
    %s123 = ssub.s32 %s19, %s31
    %s124 = ssub.s32 %s20, %s27
    %s125 = sor.u32 %s123, %s124
    %p126 = scmp.eq.s32.totalorder %s125, 0
    %s128 = sadd.s32 %s127, 1
    %s129 = scalar_select %p126, %s127, %s128
    %p132 = pneg %p126
    %p133 = scmp.eq.s32.totalorder %s12, 1
    %p134 = por %p132, %p133
    %p135 = scmp.ne.s32.totalorder %s127, %s130
    %p136 = scmp.eq.s32.totalorder %s12, 0
    %p137 = por %p135, %p136
    %p138 = scmp.ne.s32.totalorder %s127, %s130
    %p139 = scmp.eq.s32.totalorder %s17, 1
    %p140 = por %p138, %p139
    %p141 = scmp.ne.s32.totalorder %s130, %s131
    %p142 = scmp.eq.s32.totalorder %s17, 0
    %p143 = por %p141, %p142
    %p144 = scmp.ne.s32.totalorder %s130, %s131
    %p145 = scmp.eq.s32.totalorder %s18, 1
    %p146 = por %p144, %p145
    %p148 = scmp.ne.s32.totalorder %s131, %s147
    %p149 = scmp.eq.s32.totalorder %s18, 0
    %p150 = por %p148, %p149
    %s151 = ssub.s32 %s19, %s31
    %s152 = ssub.s32 %s20, %s27
    %s153 = sor.u32 %s151, %s152
    %p154 = scmp.eq.s32.totalorder %s153, 0
    %s156 = sadd.s32 %s155, 1
    %s157 = scalar_select %p154, %s155, %s156
    %p160 = pneg %p154
    %p161 = scmp.eq.s32.totalorder %s12, 1
    %p162 = por %p160, %p161
    %p163 = scmp.ne.s32.totalorder %s155, %s158
    %p164 = scmp.eq.s32.totalorder %s12, 0
    %p165 = por %p163, %p164
    %p166 = scmp.ne.s32.totalorder %s155, %s158
    %p167 = scmp.eq.s32.totalorder %s17, 1
    %p168 = por %p166, %p167
    %p169 = scmp.ne.s32.totalorder %s158, %s159
    %p170 = scmp.eq.s32.totalorder %s17, 0
    %p171 = por %p169, %p170
    %p172 = scmp.ne.s32.totalorder %s158, %s159
    %p173 = scmp.eq.s32.totalorder %s18, 1
    %p174 = por %p172, %p173
    %p176 = scmp.ne.s32.totalorder %s159, %s175
    %p177 = scmp.eq.s32.totalorder %s18, 0
    %p178 = por %p176, %p177
    %p179 = scmp.le.s32.totalorder 1, %s12
    %p180 = scmp.lt.s32.totalorder %s12, 3
    %p181 = pnand %p179, %p180
    %p182 = pneg %p181
    // Predicated region
    $region9: #{dense_block.6} parent=5 // pred_check
      _
    $region10: #{dense_block.6} parent=5 // pred_check_branch
      %184 = sbr.rel (%p181) target = $region12
    $region11: #{dense_block.6} parent=5 // pred_region
      %s185 = ssub.s32 %s12, 1
      // Predicated region
      $region13: #{dense_block.6} parent=11 // pred_check
        %p186 = pneg %p73
      $region14: #{dense_block.6} parent=11 // pred_check_branch
        %188 = sbr.rel (%p186) target = $region16
      $region15: #{dense_block.6} parent=11 // pred_region
        _
      $region16: #{dense_block.6} parent=11 // pred_fallthru
        _
      // Predicated region
      $region17: #{dense_block.6} parent=11 // pred_check
        %p189 = pneg %p94
      $region18: #{dense_block.6} parent=11 // pred_check_branch
        %191 = sbr.rel (%p189) target = $region20
      $region19: #{dense_block.6} parent=11 // pred_region
        _
      $region20: #{dense_block.6} parent=11 // pred_fallthru
        _
      // Predicated region
      $region21: #{dense_block.6} parent=11 // pred_check
        %p192 = pneg %p115
      $region22: #{dense_block.6} parent=11 // pred_check_branch
        %194 = sbr.rel (%p192) target = $region24
      $region23: #{dense_block.6} parent=11 // pred_region
        _
      $region24: #{dense_block.6} parent=11 // pred_fallthru
        _
    $region12: #{dense_block.6} parent=5 // pred_fallthru
      _
    %p195 = scmp.lt.s32.totalorder %s12, 2
    // Predicated region
    $region25: #{dense_block.6} parent=5 // pred_check
      %p196 = pneg %p195
    $region26: #{dense_block.6} parent=5 // pred_check_branch
      %198 = sbr.rel (%p196) target = $region28
    $region27: #{dense_block.6} parent=5 // pred_region
      // Predicated region
      $region29: #{dense_block.6} parent=27 // pred_check
        %p199 = pneg %p46
      $region30: #{dense_block.6} parent=27 // pred_check_branch
        %201 = sbr.rel (%p199) target = $region32
      $region31: #{dense_block.6} parent=27 // pred_region
        %s202 = smul.u32 16, %s20
        %p203 = scmp.lt.s32.totalorder %s19, 1
        %s204 = scalar_select %p203, %s19, 1
        %p205 = scmp.lt.s32.totalorder %s202, 15
        %s206 = scalar_select %p205, %s202, 15
        %s207 = smul.addr %s206, 2
        %s208 = smul.addr %s204, 32
        %s209 = sadd.s32 %s207, %s208
        %s210 = smul.addr %s209, 4
        %s211 = scalar_lea.vmem %s0, %s210
        %s212 = smul.u32 16, %s20
      $region32: #{dense_block.6} parent=27 // pred_fallthru
        _
    $region28: #{dense_block.6} parent=5 // pred_fallthru
      _
    %p213 = scmp.le.s32.totalorder 1, %s12
    %p214 = scmp.lt.s32.totalorder %s12, 3
    %p215 = pnand %p213, %p214
    %p216 = pneg %p215
    // Predicated region
    $region33: #{dense_block.6} parent=5 // pred_check
      _
    $region34: #{dense_block.6} parent=5 // pred_check_branch
      %218 = sbr.rel (%p215) target = $region36
    $region35: #{dense_block.6} parent=5 // pred_region
      %s219 = ssub.s32 %s12, 1
      %s220 = smul.u32 16, %s22
      %p221 = scmp.lt.s32.totalorder %s21, 1
      %s222 = scalar_select %p221, %s21, 1
      %p223 = scmp.lt.s32.totalorder %s220, 15
      %s224 = scalar_select %p223, %s220, 15
      %s225 = smul.addr %s224, 2
      %s226 = smul.addr %s222, 32
      %s227 = sadd.s32 %s225, %s226
      %s228 = smul.addr %s227, 4
      %s229 = scalar_lea.vmem %s0, %s228
      %p230 = pneg %p52
      %p231 = pneg %p49
      %p232 = pneg %p73
      %p233 = pneg %p70
      %p234 = pneg %p94
      %p235 = pneg %p91
      %p236 = pneg %p115
      %p237 = pneg %p112
      %p238 = pneg %p143
      %p239 = pneg %p140
      %s240 = smul.u32 16, %s22
      %p241 = scmp.lt.s32.totalorder %s21, 1
      %s242 = scalar_select %p241, %s21, 1
      %p243 = scmp.lt.s32.totalorder %s240, 15
      %s244 = scalar_select %p243, %s240, 15
      %s245 = smul.addr %s244, 2
      %s246 = smul.addr %s242, 32
      %s247 = sadd.s32 %s245, %s246
      %s248 = smul.addr %s247, 4
      %s249 = scalar_lea.vmem %s4, %s248
      %p250 = pneg %p171
      %p251 = pneg %p168
      %p252 = scmp.lt.s32.totalorder %s21, 1
      %s253 = scalar_select %p252, %s21, 1
      %p254 = scmp.lt.s32.totalorder %s22, 0
      %s255 = scalar_select %p254, %s22, 0
      %s256 = sadd.s32 %s255, %s253
      %s257 = smul.addr %s256, 2
      %s258 = scalar_lea.vmem %s5, %s257
      %s259 = smul.u32 16, %s22
      %p260 = scmp.lt.s32.totalorder %s21, 1
      %s261 = scalar_select %p260, %s21, 1
      %p262 = scmp.lt.s32.totalorder %s259, 15
      %s263 = scalar_select %p262, %s259, 15
      %s264 = smul.addr %s263, 2
      %s265 = smul.addr %s261, 32
      %s266 = sadd.s32 %s264, %s265
      %s267 = smul.addr %s266, 4
      %s268 = scalar_lea.vmem %s0, %s267
      %s269 = smul.u32 16, %s22
      %s270 = smul.u32 16, %s22
      %p271 = scmp.lt.s32.totalorder %s21, 1
      %s272 = scalar_select %p271, %s21, 1
      %p273 = scmp.lt.s32.totalorder %s270, 15
      %s274 = scalar_select %p273, %s270, 15
      %s275 = smul.addr %s274, 2
      %s276 = smul.addr %s272, 32
      %s277 = sadd.s32 %s275, %s276
      %s278 = smul.addr %s277, 4
      %s279 = scalar_lea.vmem %s4, %s278
      %s280 = smul.u32 16, %s22
      %p281 = scmp.lt.s32.totalorder %s21, 1
      %s282 = scalar_select %p281, %s21, 1
      %p283 = scmp.lt.s32.totalorder %s22, 0
      %s284 = scalar_select %p283, %s22, 0
      %s285 = sadd.s32 %s284, %s282
      %s286 = smul.addr %s285, 2
      %s287 = scalar_lea.vmem %s5, %s286
      %v289 = vld [vmem:[%s268] sm:$0xf]
      %v290 = vld [vmem:[%s268 + $0x4] sm:$0xf]
      %v291 = vld [vmem:[%s268 + $0x8] sm:$0xf]
      %v292 = vld [vmem:[%s268 + $0xc] sm:$0xf]
      %v293 = vld [vmem:[%s268 + $0x10] sm:$0xf]
      %v294 = vld [vmem:[%s268 + $0x14] sm:$0xf]
      %v295 = vld [vmem:[%s268 + $0x18] sm:$0xf]
      %v296 = vld [vmem:[%s268 + $0x1c] sm:$0xf]
      %v297 = vld [vmem:[%s268 + $0x20] sm:$0xf]
      %v298 = vld [vmem:[%s268 + $0x24] sm:$0xf]
      %v299 = vld [vmem:[%s268 + $0x28] sm:$0xf]
      %v300 = vld [vmem:[%s268 + $0x2c] sm:$0xf]
      %v301 = vld [vmem:[%s268 + $0x30] sm:$0xf]
      %v302 = vld [vmem:[%s268 + $0x34] sm:$0xf]
      %v303 = vld [vmem:[%s268 + $0x38] sm:$0xf]
      %v304 = vld [vmem:[%s268 + $0x3c] sm:$0xf]
      %v305 = vld [vmem:[%s268 + $0x40] sm:$0xf]
      %v306 = vld [vmem:[%s268 + $0x44] sm:$0xf]
      %v307 = vld [vmem:[%s268 + $0x48] sm:$0xf]
      %v308 = vld [vmem:[%s268 + $0x4c] sm:$0xf]
      %v309 = vld [vmem:[%s268 + $0x50] sm:$0xf]
      %v310 = vld [vmem:[%s268 + $0x54] sm:$0xf]
      %v311 = vld [vmem:[%s268 + $0x58] sm:$0xf]
      %v312 = vld [vmem:[%s268 + $0x5c] sm:$0xf]
      %v313 = vld [vmem:[%s268 + $0x60] sm:$0xf]
      %v314 = vld [vmem:[%s268 + $0x64] sm:$0xf]
      %v315 = vld [vmem:[%s268 + $0x68] sm:$0xf]
      %v316 = vld [vmem:[%s268 + $0x6c] sm:$0xf]
      %v317 = vld [vmem:[%s268 + $0x70] sm:$0xf]
      %v318 = vld [vmem:[%s268 + $0x74] sm:$0xf]
      %v319 = vld [vmem:[%s268 + $0x78] sm:$0xf]
      %v320 = vld [vmem:[%s268 + $0x7c] sm:$0xf]
      %v321 = vunpack.c.l.bf16 %v289
      %v322 = vunpack.c.l.bf16 %v290
      %v323 = vunpack.c.l.bf16 %v291
      %v324 = vunpack.c.l.bf16 %v292
      %v325 = vunpack.c.l.bf16 %v293
      %v326 = vunpack.c.l.bf16 %v294
      %v327 = vunpack.c.l.bf16 %v295
      %v328 = vunpack.c.l.bf16 %v296
      %v329 = vunpack.c.l.bf16 %v297
      %v330 = vunpack.c.l.bf16 %v298
      %v331 = vunpack.c.l.bf16 %v299
      %v332 = vunpack.c.l.bf16 %v300
      %v333 = vunpack.c.l.bf16 %v301
      %v334 = vunpack.c.l.bf16 %v302
      %v335 = vunpack.c.l.bf16 %v303
      %v336 = vunpack.c.l.bf16 %v304
      %v337 = vunpack.c.l.bf16 %v305
      %v338 = vunpack.c.l.bf16 %v306
      %v339 = vunpack.c.l.bf16 %v307
      %v340 = vunpack.c.l.bf16 %v308
      %v341 = vunpack.c.l.bf16 %v309
      %v342 = vunpack.c.l.bf16 %v310
      %v343 = vunpack.c.l.bf16 %v311
      %v344 = vunpack.c.l.bf16 %v312
      %v345 = vunpack.c.l.bf16 %v313
      %v346 = vunpack.c.l.bf16 %v314
      %v347 = vunpack.c.l.bf16 %v315
      %v348 = vunpack.c.l.bf16 %v316
      %v349 = vunpack.c.l.bf16 %v317
      %v350 = vunpack.c.l.bf16 %v318
      %v351 = vunpack.c.l.bf16 %v319
      %v352 = vunpack.c.l.bf16 %v320
      %v353 = vld [vmem:[%s1] sm:$0x1]
      %v355 = vlaneseq
      %v356 = vshrl.u32 %v355, 7
      %v357 = vsub.s32 0, %v356
      %v358 = vrot.slane %v353, %v357
      %v360 = vmul.f32 %v321, %v358
      %v361 = vmul.f32 %v322, %v358
      %v362 = vmul.f32 %v323, %v358
      %v363 = vmul.f32 %v324, %v358
      %v364 = vmul.f32 %v325, %v358
      %v365 = vmul.f32 %v326, %v358
      %v366 = vmul.f32 %v327, %v358
      %v367 = vmul.f32 %v328, %v358
      %v368 = vmul.f32 %v329, %v358
      %v369 = vmul.f32 %v330, %v358
      %v370 = vmul.f32 %v331, %v358
      %v371 = vmul.f32 %v332, %v358
      %v372 = vmul.f32 %v333, %v358
      %v373 = vmul.f32 %v334, %v358
      %v374 = vmul.f32 %v335, %v358
      %v375 = vmul.f32 %v336, %v358
      %v376 = vmul.f32 %v337, %v358
      %v377 = vmul.f32 %v338, %v358
      %v378 = vmul.f32 %v339, %v358
      %v379 = vmul.f32 %v340, %v358
      %v380 = vmul.f32 %v341, %v358
      %v381 = vmul.f32 %v342, %v358
      %v382 = vmul.f32 %v343, %v358
      %v383 = vmul.f32 %v344, %v358
      %v384 = vmul.f32 %v345, %v358
      %v385 = vmul.f32 %v346, %v358
      %v386 = vmul.f32 %v347, %v358
      %v387 = vmul.f32 %v348, %v358
      %v388 = vmul.f32 %v349, %v358
      %v389 = vmul.f32 %v350, %v358
      %v390 = vmul.f32 %v351, %v358
      %v391 = vmul.f32 %v352, %v358
      %v392 = vld [vmem:[%s2] sm:$0x1]
      %v394 = vlaneseq
      %v395 = vshrl.u32 %v394, 7
      %v396 = vsub.s32 0, %v395
      %v397 = vrot.slane %v392, %v396
      %v399 = vadd.f32 %v360, %v397
      %v400 = vadd.f32 %v361, %v397
      %v401 = vadd.f32 %v362, %v397
      %v402 = vadd.f32 %v363, %v397
      %v403 = vadd.f32 %v364, %v397
      %v404 = vadd.f32 %v365, %v397
      %v405 = vadd.f32 %v366, %v397
      %v406 = vadd.f32 %v367, %v397
      %v407 = vadd.f32 %v368, %v397
      %v408 = vadd.f32 %v369, %v397
      %v409 = vadd.f32 %v370, %v397
      %v410 = vadd.f32 %v371, %v397
      %v411 = vadd.f32 %v372, %v397
      %v412 = vadd.f32 %v373, %v397
      %v413 = vadd.f32 %v374, %v397
      %v414 = vadd.f32 %v375, %v397
      %v415 = vadd.f32 %v376, %v397
      %v416 = vadd.f32 %v377, %v397
      %v417 = vadd.f32 %v378, %v397
      %v418 = vadd.f32 %v379, %v397
      %v419 = vadd.f32 %v380, %v397
      %v420 = vadd.f32 %v381, %v397
      %v421 = vadd.f32 %v382, %v397
      %v422 = vadd.f32 %v383, %v397
      %v423 = vadd.f32 %v384, %v397
      %v424 = vadd.f32 %v385, %v397
      %v425 = vadd.f32 %v386, %v397
      %v426 = vadd.f32 %v387, %v397
      %v427 = vadd.f32 %v388, %v397
      %v428 = vadd.f32 %v389, %v397
      %v429 = vadd.f32 %v390, %v397
      %v430 = vadd.f32 %v391, %v397
      %v431 = vmax.f32 %v399, 0.0
      %v432 = vmax.f32 %v400, 0.0
      %v433 = vmax.f32 %v401, 0.0
      %v434 = vmax.f32 %v402, 0.0
      %v435 = vmax.f32 %v403, 0.0
      %v436 = vmax.f32 %v404, 0.0
      %v437 = vmax.f32 %v405, 0.0
      %v438 = vmax.f32 %v406, 0.0
      %v439 = vmax.f32 %v407, 0.0
      %v440 = vmax.f32 %v408, 0.0
      %v441 = vmax.f32 %v409, 0.0
      %v442 = vmax.f32 %v410, 0.0
      %v443 = vmax.f32 %v411, 0.0
      %v444 = vmax.f32 %v412, 0.0
      %v445 = vmax.f32 %v413, 0.0
      %v446 = vmax.f32 %v414, 0.0
      %v447 = vmax.f32 %v415, 0.0
      %v448 = vmax.f32 %v416, 0.0
      %v449 = vmax.f32 %v417, 0.0
      %v450 = vmax.f32 %v418, 0.0
      %v451 = vmax.f32 %v419, 0.0
      %v452 = vmax.f32 %v420, 0.0
      %v453 = vmax.f32 %v421, 0.0
      %v454 = vmax.f32 %v422, 0.0
      %v455 = vmax.f32 %v423, 0.0
      %v456 = vmax.f32 %v424, 0.0
      %v457 = vmax.f32 %v425, 0.0
      %v458 = vmax.f32 %v426, 0.0
      %v459 = vmax.f32 %v427, 0.0
      %v460 = vmax.f32 %v428, 0.0
      %v461 = vmax.f32 %v429, 0.0
      %v462 = vmax.f32 %v430, 0.0
      %v463 = vpack.c.bf16 %v432, %v431
      %v464 = vpack.c.bf16 %v434, %v433
      %v465 = vpack.c.bf16 %v436, %v435
      %v466 = vpack.c.bf16 %v438, %v437
      %v467 = vpack.c.bf16 %v440, %v439
      %v468 = vpack.c.bf16 %v442, %v441
      %v469 = vpack.c.bf16 %v444, %v443
      %v470 = vpack.c.bf16 %v446, %v445
      %v471 = vpack.c.bf16 %v448, %v447
      %v472 = vpack.c.bf16 %v450, %v449
      %v473 = vpack.c.bf16 %v452, %v451
      %v474 = vpack.c.bf16 %v454, %v453
      %v475 = vpack.c.bf16 %v456, %v455
      %v476 = vpack.c.bf16 %v458, %v457
      %v477 = vpack.c.bf16 %v460, %v459
      %v478 = vpack.c.bf16 %v462, %v461
      %v479 = vld [vmem:[%s3] sm:$0xf]
      %v480 = vld [vmem:[%s3 + $0x4] sm:$0xf]
      %v481 = vld [vmem:[%s3 + $0x8] sm:$0xf]
      %v482 = vld [vmem:[%s3 + $0xc] sm:$0xf]
      %v483 = vld [vmem:[%s3 + $0x10] sm:$0xf]
      %v484 = vld [vmem:[%s3 + $0x14] sm:$0xf]
      %v485 = vld [vmem:[%s3 + $0x18] sm:$0xf]
      %v486 = vld [vmem:[%s3 + $0x1c] sm:$0xf]
      %v487 = vld [vmem:[%s3 + $0x20] sm:$0xf]
      %v488 = vld [vmem:[%s3 + $0x24] sm:$0xf]
      %v489 = vld [vmem:[%s3 + $0x28] sm:$0xf]
      %v490 = vld [vmem:[%s3 + $0x2c] sm:$0xf]
      %v491 = vld [vmem:[%s3 + $0x30] sm:$0xf]
      %v492 = vld [vmem:[%s3 + $0x34] sm:$0xf]
      %v493 = vld [vmem:[%s3 + $0x38] sm:$0xf]
      %v494 = vld [vmem:[%s3 + $0x3c] sm:$0xf]
      %v511 = vunpack.c.l.b16 %v479
      %v512 = vunpack.c.l.b16 %v480
      %v513 = vunpack.c.l.b16 %v481
      %v514 = vunpack.c.l.b16 %v482
      %v515 = vunpack.c.l.b16 %v483
      %v516 = vunpack.c.l.b16 %v484
      %v517 = vunpack.c.l.b16 %v485
      %v518 = vunpack.c.l.b16 %v486
      %v519 = vunpack.c.l.b16 %v487
      %v520 = vunpack.c.l.b16 %v488
      %v521 = vunpack.c.l.b16 %v489
      %v522 = vunpack.c.l.b16 %v490
      %v523 = vunpack.c.l.b16 %v491
      %v524 = vunpack.c.l.b16 %v492
      %v525 = vunpack.c.l.b16 %v493
      %v526 = vunpack.c.l.b16 %v494
      %v527 = vpack.c.b16 %v512, %v511
      %v528 = vpack.c.b16 %v514, %v513
      %v529 = vpack.c.b16 %v516, %v515
      %v530 = vpack.c.b16 %v518, %v517
      %v531 = vpack.c.b16 %v520, %v519
      %v532 = vpack.c.b16 %v522, %v521
      %v533 = vpack.c.b16 %v524, %v523
      %v534 = vpack.c.b16 %v526, %v525
      %543 = vmatprep.subr.bf16.mxu0 0
      %544 = vmatpush1.bf16.msra.mxu0 %v527
      %545 = vmatprep.subr.bf16.mxu0 0
      %546 = vmatpush1.bf16.msra.mxu0 %v528
      %547 = vmatprep.subr.bf16.mxu0 0
      %548 = vmatpush1.bf16.msra.mxu0 %v529
      %549 = vmatprep.subr.bf16.mxu0 0
      %550 = vmatpush1.bf16.msra.mxu0 %v530
      %551 = vmatprep.subr.bf16.mxu0 0
      %552 = vmatpush1.bf16.msra.mxu0 %v531
      %553 = vmatprep.subr.bf16.mxu0 0
      %554 = vmatpush1.bf16.msra.mxu0 %v532
      %555 = vmatprep.subr.bf16.mxu0 0
      %556 = vmatpush1.bf16.msra.mxu0 %v533
      %557 = vmatprep.subr.bf16.mxu0 0
      %558 = vmatpush1.bf16.msra.mxu0 %v534
      %559 = vmatprep.subr.bf16.mxu0 0
      %560 = vmatpush1.bf16.msra.mxu0 0
      %561 = vmatprep.subr.bf16.mxu0 0
      %562 = vmatpush1.bf16.msra.mxu0 0
      %563 = vmatprep.subr.bf16.mxu0 0
      %564 = vmatpush1.bf16.msra.mxu0 0
      %565 = vmatprep.subr.bf16.mxu0 0
      %566 = vmatpush1.bf16.msra.mxu0 0
      %567 = vmatprep.subr.bf16.mxu0 0
      %568 = vmatpush1.bf16.msra.mxu0 0
      %569 = vmatprep.subr.bf16.mxu0 0
      %570 = vmatpush1.bf16.msra.mxu0 0
      %571 = vmatprep.subr.bf16.mxu0 0
      %572 = vmatpush1.bf16.msra.mxu0 0
      %573 = vmatprep.subr.bf16.mxu0 0
      %574 = vmatpush1.bf16.msra.mxu0 0
      %575 = vmatprep.mubr.bf16.mxu0 0
      %576 = vmatmul.mubr.bf16.gmra.mrb[0].mxu0 %v463
      %v577 = vpop.f32.mrb[0].mxu0
      %v578 = vadd.f32 0.0, %v577
      %v579 = vpop.f32.mrb[0].mxu0
      %v580 = vpop.f32.mrb[0].mxu0
      %v581 = vadd.f32 0.0, %v580
      %v582 = vpop.f32.mrb[0].mxu0
      %583 = vmatprep.mubr.bf16.mxu0 0
      %584 = vmatmul.mubr.bf16.gmra.mrb[0].mxu0 %v464
      %v585 = vpop.f32.mrb[0].mxu0
      %v586 = vadd.f32 0.0, %v585
      %v587 = vpop.f32.mrb[0].mxu0
      %v588 = vpop.f32.mrb[0].mxu0
      %v589 = vadd.f32 0.0, %v588
      %v590 = vpop.f32.mrb[0].mxu0
      %591 = vmatprep.mubr.bf16.mxu0 0
      %592 = vmatmul.mubr.bf16.gmra.mrb[0].mxu0 %v465
      %v593 = vpop.f32.mrb[0].mxu0
      %v594 = vadd.f32 0.0, %v593
      %v595 = vpop.f32.mrb[0].mxu0
      %v596 = vpop.f32.mrb[0].mxu0
      %v597 = vadd.f32 0.0, %v596
      %v598 = vpop.f32.mrb[0].mxu0
      %599 = vmatprep.mubr.bf16.mxu0 0
      %600 = vmatmul.mubr.bf16.gmra.mrb[0].mxu0 %v466
      %v601 = vpop.f32.mrb[0].mxu0
      %v602 = vadd.f32 0.0, %v601
      %v603 = vpop.f32.mrb[0].mxu0
      %v604 = vpop.f32.mrb[0].mxu0
      %v605 = vadd.f32 0.0, %v604
      %v606 = vpop.f32.mrb[0].mxu0
      %607 = vmatprep.mubr.bf16.mxu0 0
      %608 = vmatmul.mubr.bf16.gmra.mrb[0].mxu0 %v467
      %v609 = vpop.f32.mrb[0].mxu0
      %v610 = vadd.f32 0.0, %v609
      %v611 = vpop.f32.mrb[0].mxu0
      %v612 = vpop.f32.mrb[0].mxu0
      %v613 = vadd.f32 0.0, %v612
      %v614 = vpop.f32.mrb[0].mxu0
      %615 = vmatprep.mubr.bf16.mxu0 0
      %616 = vmatmul.mubr.bf16.gmra.mrb[0].mxu0 %v468
      %v617 = vpop.f32.mrb[0].mxu0
      %v618 = vadd.f32 0.0, %v617
      %v619 = vpop.f32.mrb[0].mxu0
      %v620 = vpop.f32.mrb[0].mxu0
      %v621 = vadd.f32 0.0, %v620
      %v622 = vpop.f32.mrb[0].mxu0
      %623 = vmatprep.mubr.bf16.mxu0 0
      %624 = vmatmul.mubr.bf16.gmra.mrb[0].mxu0 %v469
      %v625 = vpop.f32.mrb[0].mxu0
      %v626 = vadd.f32 0.0, %v625
      %v627 = vpop.f32.mrb[0].mxu0
      %v628 = vpop.f32.mrb[0].mxu0
      %v629 = vadd.f32 0.0, %v628
      %v630 = vpop.f32.mrb[0].mxu0
      %631 = vmatprep.mubr.bf16.mxu0 0
      %632 = vmatmul.mubr.bf16.gmra.mrb[0].mxu0 %v470
      %v633 = vpop.f32.mrb[0].mxu0
      %v634 = vadd.f32 0.0, %v633
      %v635 = vpop.f32.mrb[0].mxu0
      %v636 = vpop.f32.mrb[0].mxu0
      %v637 = vadd.f32 0.0, %v636
      %v638 = vpop.f32.mrb[0].mxu0
      %639 = vmatprep.mubr.bf16.mxu0 0
      %640 = vmatmul.mubr.bf16.gmra.mrb[0].mxu0 %v471
      %v641 = vpop.f32.mrb[0].mxu0
      %v642 = vadd.f32 0.0, %v641
      %v643 = vpop.f32.mrb[0].mxu0
      %v644 = vpop.f32.mrb[0].mxu0
      %v645 = vadd.f32 0.0, %v644
      %v646 = vpop.f32.mrb[0].mxu0
      %647 = vmatprep.mubr.bf16.mxu0 0
      %648 = vmatmul.mubr.bf16.gmra.mrb[0].mxu0 %v472
      %v649 = vpop.f32.mrb[0].mxu0
      %v650 = vadd.f32 0.0, %v649
      %v651 = vpop.f32.mrb[0].mxu0
      %v652 = vpop.f32.mrb[0].mxu0
      %v653 = vadd.f32 0.0, %v652
      %v654 = vpop.f32.mrb[0].mxu0
      %655 = vmatprep.mubr.bf16.mxu0 0
      %656 = vmatmul.mubr.bf16.gmra.mrb[0].mxu0 %v473
      %v657 = vpop.f32.mrb[0].mxu0
      %v658 = vadd.f32 0.0, %v657
      %v659 = vpop.f32.mrb[0].mxu0
      %v660 = vpop.f32.mrb[0].mxu0
      %v661 = vadd.f32 0.0, %v660
      %v662 = vpop.f32.mrb[0].mxu0
      %663 = vmatprep.mubr.bf16.mxu0 0
      %664 = vmatmul.mubr.bf16.gmra.mrb[0].mxu0 %v474
      %v665 = vpop.f32.mrb[0].mxu0
      %v666 = vadd.f32 0.0, %v665
      %v667 = vpop.f32.mrb[0].mxu0
      %v668 = vpop.f32.mrb[0].mxu0
      %v669 = vadd.f32 0.0, %v668
      %v670 = vpop.f32.mrb[0].mxu0
      %671 = vmatprep.mubr.bf16.mxu0 0
      %672 = vmatmul.mubr.bf16.gmra.mrb[0].mxu0 %v475
      %v673 = vpop.f32.mrb[0].mxu0
      %v674 = vadd.f32 0.0, %v673
      %v675 = vpop.f32.mrb[0].mxu0
      %v676 = vpop.f32.mrb[0].mxu0
      %v677 = vadd.f32 0.0, %v676
      %v678 = vpop.f32.mrb[0].mxu0
      %679 = vmatprep.mubr.bf16.mxu0 0
      %680 = vmatmul.mubr.bf16.gmra.mrb[0].mxu0 %v476
      %v681 = vpop.f32.mrb[0].mxu0
      %v682 = vadd.f32 0.0, %v681
      %v683 = vpop.f32.mrb[0].mxu0
      %v684 = vpop.f32.mrb[0].mxu0
      %v685 = vadd.f32 0.0, %v684
      %v686 = vpop.f32.mrb[0].mxu0
      %687 = vmatprep.mubr.bf16.mxu0 0
      %688 = vmatmul.mubr.bf16.gmra.mrb[0].mxu0 %v477
      %v689 = vpop.f32.mrb[0].mxu0
      %v690 = vadd.f32 0.0, %v689
      %v691 = vpop.f32.mrb[0].mxu0
      %v692 = vpop.f32.mrb[0].mxu0
      %v693 = vadd.f32 0.0, %v692
      %v694 = vpop.f32.mrb[0].mxu0
      %695 = vmatprep.mubr.bf16.mxu0 0
      %696 = vmatmul.mubr.bf16.gmra.mrb[0].mxu0 %v478
      %v697 = vpop.f32.mrb[0].mxu0
      %v698 = vadd.f32 0.0, %v697
      %v699 = vpop.f32.mrb[0].mxu0
      %v700 = vpop.f32.mrb[0].mxu0
      %v701 = vadd.f32 0.0, %v700
      %v702 = vpop.f32.mrb[0].mxu0
      %703 = vdwg.mxu0
      %v704 = vpack.c.bf16 %v581, %v578
      %v705 = vpack.c.bf16 %v589, %v586
      %v706 = vpack.c.bf16 %v597, %v594
      %v707 = vpack.c.bf16 %v605, %v602
      %v708 = vpack.c.bf16 %v613, %v610
      %v709 = vpack.c.bf16 %v621, %v618
      %v710 = vpack.c.bf16 %v629, %v626
      %v711 = vpack.c.bf16 %v637, %v634
      %v712 = vpack.c.bf16 %v645, %v642
      %v713 = vpack.c.bf16 %v653, %v650
      %v714 = vpack.c.bf16 %v661, %v658
      %v715 = vpack.c.bf16 %v669, %v666
      %v716 = vpack.c.bf16 %v677, %v674
      %v717 = vpack.c.bf16 %v685, %v682
      %v718 = vpack.c.bf16 %v693, %v690
      %v719 = vpack.c.bf16 %v701, %v698
      %v736 = vunpack.c.l.b16 %v704
      %v737 = vunpack.c.h.b16 %v704
      %v738 = vunpack.c.l.b16 %v705
      %v739 = vunpack.c.h.b16 %v705
      %v740 = vunpack.c.l.b16 %v706
      %v741 = vunpack.c.h.b16 %v706
      %v742 = vunpack.c.l.b16 %v707
      %v743 = vunpack.c.h.b16 %v707
      %v744 = vunpack.c.l.b16 %v708
      %v745 = vunpack.c.h.b16 %v708
      %v746 = vunpack.c.l.b16 %v709
      %v747 = vunpack.c.h.b16 %v709
      %v748 = vunpack.c.l.b16 %v710
      %v749 = vunpack.c.h.b16 %v710
      %v750 = vunpack.c.l.b16 %v711
      %v751 = vunpack.c.h.b16 %v711
      %v752 = vunpack.c.l.b16 %v712
      %v753 = vunpack.c.h.b16 %v712
      %v754 = vunpack.c.l.b16 %v713
      %v755 = vunpack.c.h.b16 %v713
      %v756 = vunpack.c.l.b16 %v714
      %v757 = vunpack.c.h.b16 %v714
      %v758 = vunpack.c.l.b16 %v715
      %v759 = vunpack.c.h.b16 %v715
      %v760 = vunpack.c.l.b16 %v716
      %v761 = vunpack.c.h.b16 %v716
      %v762 = vunpack.c.l.b16 %v717
      %v763 = vunpack.c.h.b16 %v717
      %v764 = vunpack.c.l.b16 %v718
      %v765 = vunpack.c.h.b16 %v718
      %v766 = vunpack.c.l.b16 %v719
      %v767 = vunpack.c.h.b16 %v719
      %v768 = vpack.c.b16 %v736, %v736
      %v769 = vpack.c.b16 %v737, %v737
      %v770 = vpack.c.b16 %v738, %v738
      %v771 = vpack.c.b16 %v739, %v739
      %v772 = vpack.c.b16 %v740, %v740
      %v773 = vpack.c.b16 %v741, %v741
      %v774 = vpack.c.b16 %v742, %v742
      %v775 = vpack.c.b16 %v743, %v743
      %v776 = vpack.c.b16 %v744, %v744
      %v777 = vpack.c.b16 %v745, %v745
      %v778 = vpack.c.b16 %v746, %v746
      %v779 = vpack.c.b16 %v747, %v747
      %v780 = vpack.c.b16 %v748, %v748
      %v781 = vpack.c.b16 %v749, %v749
      %v782 = vpack.c.b16 %v750, %v750
      %v783 = vpack.c.b16 %v751, %v751
      %v784 = vpack.c.b16 %v752, %v752
      %v785 = vpack.c.b16 %v753, %v753
      %v786 = vpack.c.b16 %v754, %v754
      %v787 = vpack.c.b16 %v755, %v755
      %v788 = vpack.c.b16 %v756, %v756
      %v789 = vpack.c.b16 %v757, %v757
      %v790 = vpack.c.b16 %v758, %v758
      %v791 = vpack.c.b16 %v759, %v759
      %v792 = vpack.c.b16 %v760, %v760
      %v793 = vpack.c.b16 %v761, %v761
      %v794 = vpack.c.b16 %v762, %v762
      %v795 = vpack.c.b16 %v763, %v763
      %v796 = vpack.c.b16 %v764, %v764
      %v797 = vpack.c.b16 %v765, %v765
      %v798 = vpack.c.b16 %v766, %v766
      %v799 = vpack.c.b16 %v767, %v767
      %832 = vst [vmem:[%s279] sm:$0xf] %v768
      %833 = vst [vmem:[%s279 + $0x4] sm:$0xf] %v769
      %834 = vst [vmem:[%s279 + $0x8] sm:$0xf] %v770
      %835 = vst [vmem:[%s279 + $0xc] sm:$0xf] %v771
      %836 = vst [vmem:[%s279 + $0x10] sm:$0xf] %v772
      %837 = vst [vmem:[%s279 + $0x14] sm:$0xf] %v773
      %838 = vst [vmem:[%s279 + $0x18] sm:$0xf] %v774
      %839 = vst [vmem:[%s279 + $0x1c] sm:$0xf] %v775
      %840 = vst [vmem:[%s279 + $0x20] sm:$0xf] %v776
      %841 = vst [vmem:[%s279 + $0x24] sm:$0xf] %v777
      %842 = vst [vmem:[%s279 + $0x28] sm:$0xf] %v778
      %843 = vst [vmem:[%s279 + $0x2c] sm:$0xf] %v779
      %844 = vst [vmem:[%s279 + $0x30] sm:$0xf] %v780
      %845 = vst [vmem:[%s279 + $0x34] sm:$0xf] %v781
      %846 = vst [vmem:[%s279 + $0x38] sm:$0xf] %v782
      %847 = vst [vmem:[%s279 + $0x3c] sm:$0xf] %v783
      %848 = vst [vmem:[%s279 + $0x40] sm:$0xf] %v784
      %849 = vst [vmem:[%s279 + $0x44] sm:$0xf] %v785
      %850 = vst [vmem:[%s279 + $0x48] sm:$0xf] %v786
      %851 = vst [vmem:[%s279 + $0x4c] sm:$0xf] %v787
      %852 = vst [vmem:[%s279 + $0x50] sm:$0xf] %v788
      %853 = vst [vmem:[%s279 + $0x54] sm:$0xf] %v789
      %854 = vst [vmem:[%s279 + $0x58] sm:$0xf] %v790
      %855 = vst [vmem:[%s279 + $0x5c] sm:$0xf] %v791
      %856 = vst [vmem:[%s279 + $0x60] sm:$0xf] %v792
      %857 = vst [vmem:[%s279 + $0x64] sm:$0xf] %v793
      %858 = vst [vmem:[%s279 + $0x68] sm:$0xf] %v794
      %859 = vst [vmem:[%s279 + $0x6c] sm:$0xf] %v795
      %860 = vst [vmem:[%s279 + $0x70] sm:$0xf] %v796
      %861 = vst [vmem:[%s279 + $0x74] sm:$0xf] %v797
      %862 = vst [vmem:[%s279 + $0x78] sm:$0xf] %v798
      %863 = vst [vmem:[%s279 + $0x7c] sm:$0xf] %v799
      %v864 = vunpack.c.l.bf16 %v704
      %v865 = vunpack.c.h.bf16 %v704
      %v866 = vunpack.c.l.bf16 %v705
      %v867 = vunpack.c.h.bf16 %v705
      %v868 = vunpack.c.l.bf16 %v706
      %v869 = vunpack.c.h.bf16 %v706
      %v870 = vunpack.c.l.bf16 %v707
      %v871 = vunpack.c.h.bf16 %v707
      %v872 = vunpack.c.l.bf16 %v708
      %v873 = vunpack.c.h.bf16 %v708
      %v874 = vunpack.c.l.bf16 %v709
      %v875 = vunpack.c.h.bf16 %v709
      %v876 = vunpack.c.l.bf16 %v710
      %v877 = vunpack.c.h.bf16 %v710
      %v878 = vunpack.c.l.bf16 %v711
      %v879 = vunpack.c.h.bf16 %v711
      %v880 = vunpack.c.l.bf16 %v712
      %v881 = vunpack.c.h.bf16 %v712
      %v882 = vunpack.c.l.bf16 %v713
      %v883 = vunpack.c.h.bf16 %v713
      %v884 = vunpack.c.l.bf16 %v714
      %v885 = vunpack.c.h.bf16 %v714
      %v886 = vunpack.c.l.bf16 %v715
      %v887 = vunpack.c.h.bf16 %v715
      %v888 = vunpack.c.l.bf16 %v716
      %v889 = vunpack.c.h.bf16 %v716
      %v890 = vunpack.c.l.bf16 %v717
      %v891 = vunpack.c.h.bf16 %v717
      %v892 = vunpack.c.l.bf16 %v718
      %v893 = vunpack.c.h.bf16 %v718
      %v894 = vunpack.c.l.bf16 %v719
      %v895 = vunpack.c.h.bf16 %v719
      %v896 = vadd.f32 %v864, %v865
      %v897 = vadd.f32 %v896, %v866
      %v898 = vadd.f32 %v897, %v867
      %v899 = vadd.f32 %v898, %v868
      %v900 = vadd.f32 %v899, %v869
      %v901 = vadd.f32 %v900, %v870
      %v902 = vadd.f32 %v901, %v871
      %v903 = vadd.f32 %v902, %v872
      %v904 = vadd.f32 %v903, %v873
      %v905 = vadd.f32 %v904, %v874
      %v906 = vadd.f32 %v905, %v875
      %v907 = vadd.f32 %v906, %v876
      %v908 = vadd.f32 %v907, %v877
      %v909 = vadd.f32 %v908, %v878
      %v910 = vadd.f32 %v909, %v879
      %v911 = vadd.f32 %v910, %v880
      %v912 = vadd.f32 %v911, %v881
      %v913 = vadd.f32 %v912, %v882
      %v914 = vadd.f32 %v913, %v883
      %v915 = vadd.f32 %v914, %v884
      %v916 = vadd.f32 %v915, %v885
      %v917 = vadd.f32 %v916, %v886
      %v918 = vadd.f32 %v917, %v887
      %v919 = vadd.f32 %v918, %v888
      %v920 = vadd.f32 %v919, %v889
      %v921 = vadd.f32 %v920, %v890
      %v922 = vadd.f32 %v921, %v891
      %v923 = vadd.f32 %v922, %v892
      %v924 = vadd.f32 %v923, %v893
      %v925 = vadd.f32 %v924, %v894
      %v926 = vadd.f32 %v925, %v895
      %v927 = vrot.slane %v926, 4
      %v928 = vadd.f32 %v926, %v927
      %v929 = vrot.slane %v928, 2
      %v930 = vadd.f32 %v928, %v929
      %v931 = vrot.slane %v930, 1
      %v932 = vadd.f32 %v930, %v931
      %v933 = vmul.f32 %v864, %v864
      %v934 = vmul.f32 %v865, %v865
      %v935 = vmul.f32 %v866, %v866
      %v936 = vmul.f32 %v867, %v867
      %v937 = vmul.f32 %v868, %v868
      %v938 = vmul.f32 %v869, %v869
      %v939 = vmul.f32 %v870, %v870
      %v940 = vmul.f32 %v871, %v871
      %v941 = vmul.f32 %v872, %v872
      %v942 = vmul.f32 %v873, %v873
      %v943 = vmul.f32 %v874, %v874
      %v944 = vmul.f32 %v875, %v875
      %v945 = vmul.f32 %v876, %v876
      %v946 = vmul.f32 %v877, %v877
      %v947 = vmul.f32 %v878, %v878
      %v948 = vmul.f32 %v879, %v879
      %v949 = vmul.f32 %v880, %v880
      %v950 = vmul.f32 %v881, %v881
      %v951 = vmul.f32 %v882, %v882
      %v952 = vmul.f32 %v883, %v883
      %v953 = vmul.f32 %v884, %v884
      %v954 = vmul.f32 %v885, %v885
      %v955 = vmul.f32 %v886, %v886
      %v956 = vmul.f32 %v887, %v887
      %v957 = vmul.f32 %v888, %v888
      %v958 = vmul.f32 %v889, %v889
      %v959 = vmul.f32 %v890, %v890
      %v960 = vmul.f32 %v891, %v891
      %v961 = vmul.f32 %v892, %v892
      %v962 = vmul.f32 %v893, %v893
      %v963 = vmul.f32 %v894, %v894
      %v964 = vmul.f32 %v895, %v895
      %v965 = vadd.f32 %v933, %v934
      %v966 = vadd.f32 %v965, %v935
      %v967 = vadd.f32 %v966, %v936
      %v968 = vadd.f32 %v967, %v937
      %v969 = vadd.f32 %v968, %v938
      %v970 = vadd.f32 %v969, %v939
      %v971 = vadd.f32 %v970, %v940
      %v972 = vadd.f32 %v971, %v941
      %v973 = vadd.f32 %v972, %v942
      %v974 = vadd.f32 %v973, %v943
      %v975 = vadd.f32 %v974, %v944
      %v976 = vadd.f32 %v975, %v945
      %v977 = vadd.f32 %v976, %v946
      %v978 = vadd.f32 %v977, %v947
      %v979 = vadd.f32 %v978, %v948
      %v980 = vadd.f32 %v979, %v949
      %v981 = vadd.f32 %v980, %v950
      %v982 = vadd.f32 %v981, %v951
      %v983 = vadd.f32 %v982, %v952
      %v984 = vadd.f32 %v983, %v953
      %v985 = vadd.f32 %v984, %v954
      %v986 = vadd.f32 %v985, %v955
      %v987 = vadd.f32 %v986, %v956
      %v988 = vadd.f32 %v987, %v957
      %v989 = vadd.f32 %v988, %v958
      %v990 = vadd.f32 %v989, %v959
      %v991 = vadd.f32 %v990, %v960
      %v992 = vadd.f32 %v991, %v961
      %v993 = vadd.f32 %v992, %v962
      %v994 = vadd.f32 %v993, %v963
      %v995 = vadd.f32 %v994, %v964
      %v996 = vrot.slane %v995, 4
      %v997 = vadd.f32 %v995, %v996
      %v998 = vrot.slane %v997, 2
      %v999 = vadd.f32 %v997, %v998
      %v1000 = vrot.slane %v999, 1
      %v1001 = vadd.f32 %v999, %v1000
      %vm1002 = vcmask 1040384
      %v1003 = vsel %vm1002, %v932, %v1001
      %1004 = vst [vmem:[%s287] sm:$0x3] %v1003
      %s1005 = smul.u32 16, %s22
      %p1006 = scmp.lt.s32.totalorder %s21, 1
      %s1007 = scalar_select %p1006, %s21, 1
      %p1008 = scmp.lt.s32.totalorder %s1005, 15
      %s1009 = scalar_select %p1008, %s1005, 15
      %s1010 = smul.addr %s1009, 2
      %s1011 = smul.addr %s1007, 32
      %s1012 = sadd.s32 %s1010, %s1011
      %s1013 = smul.addr %s1012, 4
      %s1014 = scalar_lea.vmem %s4, %s1013
      %p1015 = scmp.lt.s32.totalorder %s21, 1
      %s1016 = scalar_select %p1015, %s21, 1
      %p1017 = scmp.lt.s32.totalorder %s22, 0
      %s1018 = scalar_select %p1017, %s22, 0
      %s1019 = sadd.s32 %s1018, %s1016
      %s1020 = smul.addr %s1019, 2
      %s1021 = scalar_lea.vmem %s5, %s1020
      // Predicated region
      $region37: #{dense_block.6} parent=35 // pred_check
        %p1022 = pneg %p140
      $region38: #{dense_block.6} parent=35 // pred_check_branch
        %1024 = sbr.rel (%p1022) target = $region40
      $region39: #{dense_block.6} parent=35 // pred_region
        %s1025 = smul.u32 16, %s22
      $region40: #{dense_block.6} parent=35 // pred_fallthru
        _
      // Predicated region
      $region41: #{dense_block.6} parent=35 // pred_check
        %p1026 = pneg %p168
      $region42: #{dense_block.6} parent=35 // pred_check_branch
        %1028 = sbr.rel (%p1026) target = $region44
      $region43: #{dense_block.6} parent=35 // pred_region
        _
      $region44: #{dense_block.6} parent=35 // pred_fallthru
        _
    $region36: #{dense_block.6} parent=5 // pred_fallthru
      _
    %p1029 = scmp.le.s32.totalorder 2, %s12
    // Predicated region
    $region45: #{dense_block.6} parent=5 // pred_check
      %p1030 = pneg %p1029
    $region46: #{dense_block.6} parent=5 // pred_check_branch
      %1032 = sbr.rel (%p1030) target = $region48
    $region47: #{dense_block.6} parent=5 // pred_region
      %s1033 = ssub.s32 %s12, 2
      // Predicated region
      $region49: #{dense_block.6} parent=47 // pred_check
        %p1034 = pneg %p146
      $region50: #{dense_block.6} parent=47 // pred_check_branch
        %1036 = sbr.rel (%p1034) target = $region52
      $region51: #{dense_block.6} parent=47 // pred_region
        %s1037 = smul.u32 16, %s24
        %p1038 = scmp.lt.s32.totalorder %s23, 1
        %s1039 = scalar_select %p1038, %s23, 1
        %p1040 = scmp.lt.s32.totalorder %s1037, 15
        %s1041 = scalar_select %p1040, %s1037, 15
        %s1042 = smul.addr %s1041, 2
        %s1043 = smul.addr %s1039, 32
        %s1044 = sadd.s32 %s1042, %s1043
        %s1045 = smul.addr %s1044, 4
        %s1046 = scalar_lea.vmem %s4, %s1045
      $region52: #{dense_block.6} parent=47 // pred_fallthru
        _
      // Predicated region
      $region53: #{dense_block.6} parent=47 // pred_check
        %p1047 = pneg %p174
      $region54: #{dense_block.6} parent=47 // pred_check_branch
        %1049 = sbr.rel (%p1047) target = $region56
      $region55: #{dense_block.6} parent=47 // pred_region
        %p1050 = scmp.lt.s32.totalorder %s23, 1
        %s1051 = scalar_select %p1050, %s23, 1
        %p1052 = scmp.lt.s32.totalorder %s24, 0
        %s1053 = scalar_select %p1052, %s24, 0
        %s1054 = sadd.s32 %s1053, %s1051
        %s1055 = smul.addr %s1054, 2
        %s1056 = scalar_lea.vmem %s5, %s1055
      $region56: #{dense_block.6} parent=47 // pred_fallthru
        _
    $region48: #{dense_block.6} parent=5 // pred_fallthru
      _
  $region6: #{dense_block.6} parent=0 // loop_footer
    %s16 = sadd.s32 1, %s12
  $region7: #{dense_block.6} parent=0 // loop_footer_branch
    %11 = sbr.rel target = $region3
  $region8: #{dense_block.6} parent=0 // loop_exit
    _

// kernel: dense_block.7
$region0: #{dense_block.7}
  #allocation0 [shape = 'u32[]', space=smem, size = 0x4, offset = 0x4, fixed_abs, tag = 'smem constant byte address 0x4 - core index']
  #allocation1 [shape = 'u32[144,128]{1,0:T(1,128)}', space=vmem, size = 0x12000, scoped, tag = 'internal scratch']
  #allocation2 [shape = 'bf16[18,48,128]{2,1,0:T(16,128)(2,1)}', space=vmem, size = 0x36000, scoped, tag = 'scratch operand']
  %s0 = inlined_call_operand.vmem [shape: bf16[2,16,16,128], index: 0, kind: input, shape index: {}]
  %s1 = inlined_call_operand.vmem [shape: f32[1,128], index: 1, kind: input, shape index: {}]
  %s2 = inlined_call_operand.vmem [shape: f32[1,128], index: 2, kind: input, shape index: {}]
  %s3 = inlined_call_operand.vmem [shape: bf16[9,128,128], index: 3, kind: input, shape index: {}]
  %s4 = inlined_call_operand.vmem [shape: bf16[2,16,16,128], index: 4, kind: input, shape index: {}, may-alias: {4,5}]
  %s5 = inlined_call_operand.vmem [shape: bf16[2,16,16,128], index: 5, kind: output, shape index: {0}, may-alias: {4,5}]
  %s6 = inlined_call_operand.vmem [shape: f32[2,1,2,128], index: 6, kind: output, shape index: {1}]
  %7 = xla_tuple %s5, %s6
  %s8 = sld [smem:[#allocation0]]
  $region61: #{dense_block.7} parent=0
    _
  %s10 = ssub.s32 1, %s8
  %s11 = scalar_select 0, %s10, %s8
  loop: start=0, step=1, limit=4
  $region2: #{dense_block.7} parent=0 // loop_pre_header
    _
  $region3: #{dense_block.7} parent=0 // loop_header
    %s13 = sphi 0, %s17
    %p14 = scmp.ge.s32.totalorder %s13, 4
    %s20 = sphi 0, %s32
    %s21 = sphi 0, %s28
    %s22 = sphi 0, %s20
    %s23 = sphi 0, %s21
    %s24 = sphi 0, %s22
    %s25 = sphi 0, %s23
    %s35 = sphi 0, %s37
    %s38 = sphi 0, %s35
    %s39 = sphi 0, %s38
    %s55 = sphi 0, %s39
    %s59 = sphi 0, %s59
    %s61 = sphi 0, %s59
    %s62 = sphi 0, %s61
    %s76 = sphi 0, %s62
    %s80 = sphi 0, %s80
    %s82 = sphi 0, %s80
    %s83 = sphi 0, %s82
    %s97 = sphi 0, %s83
    %s103 = sphi 0, %s105
    %s106 = sphi 0, %s103
    %s107 = sphi 0, %s106
    %s123 = sphi 0, %s107
    %s131 = sphi 0, %s133
    %s134 = sphi 0, %s131
    %s135 = sphi 0, %s134
    %s151 = sphi 0, %s135
    %s159 = sphi 0, %s161
    %s162 = sphi 0, %s159
    %s163 = sphi 0, %s162
    %s179 = sphi 0, %s163
    %s187 = sphi 0, %s189
    %s190 = sphi 0, %s187
    %s191 = sphi 0, %s190
    %s207 = sphi 0, %s191
  $region4: #{dense_block.7} parent=0 // loop_header_branch
    %16 = sbr.rel (%p14) target = $region8
  $region5: #{dense_block.7} parent=0 // loop_body
    %s18 = ssub.s32 %s13, 1
    %s19 = ssub.s32 %s13, 2
    %s26 = sadd.s32 1, %s21
    %p27 = scmp.ge.s32.totalorder %s26, 1
    %s28 = scalar_select %p27, 0, %s26
    %s29 = sadd.s32 1, %s20
    %s30 = scalar_select %p27, %s29, %s20
    %p31 = scmp.ge.s32.totalorder %s30, 2
    %s32 = scalar_select %p31, 0, %s30
    %s33 = ssub.s32 %s20, %s32
    %p34 = scmp.eq.s32.totalorder %s33, 0
    %s36 = sadd.s32 %s35, 1
    %s37 = scalar_select %p34, %s35, %s36
    %p40 = pneg %p34
    %p41 = scmp.eq.s32.totalorder %s13, 1
    %p42 = por %p40, %p41
    %p43 = scmp.ne.s32.totalorder %s35, %s38
    %p44 = scmp.eq.s32.totalorder %s13, 0
    %p45 = por %p43, %p44
    %p46 = scmp.ne.s32.totalorder %s35, %s38
    %p47 = scmp.eq.s32.totalorder %s18, 1
    %p48 = por %p46, %p47
    %p49 = scmp.ne.s32.totalorder %s38, %s39
    %p50 = scmp.eq.s32.totalorder %s18, 0
    %p51 = por %p49, %p50
    %p52 = scmp.ne.s32.totalorder %s38, %s39
    %p53 = scmp.eq.s32.totalorder %s19, 1
    %p54 = por %p52, %p53
    %p56 = scmp.ne.s32.totalorder %s39, %s55
    %p57 = scmp.eq.s32.totalorder %s19, 0
    %p58 = por %p56, %p57
    %s60 = sadd.s32 %s59, 1
    %p63 = scmp.eq.s32.totalorder %s13, 1
    %p64 = scmp.ne.s32.totalorder %s59, %s61
    %p65 = scmp.eq.s32.totalorder %s13, 0
    %p66 = por %p64, %p65
    %p67 = scmp.ne.s32.totalorder %s59, %s61
    %p68 = scmp.eq.s32.totalorder %s18, 1
    %p69 = por %p67, %p68
    %p70 = scmp.ne.s32.totalorder %s61, %s62
    %p71 = scmp.eq.s32.totalorder %s18, 0
    %p72 = por %p70, %p71
    %p73 = scmp.ne.s32.totalorder %s61, %s62
    %p74 = scmp.eq.s32.totalorder %s19, 1
    %p75 = por %p73, %p74
    %p77 = scmp.ne.s32.totalorder %s62, %s76
    %p78 = scmp.eq.s32.totalorder %s19, 0
    %p79 = por %p77, %p78
    %s81 = sadd.s32 %s80, 1
    %p84 = scmp.eq.s32.totalorder %s13, 1
    %p85 = scmp.ne.s32.totalorder %s80, %s82
    %p86 = scmp.eq.s32.totalorder %s13, 0
    %p87 = por %p85, %p86
    %p88 = scmp.ne.s32.totalorder %s80, %s82
    %p89 = scmp.eq.s32.totalorder %s18, 1
    %p90 = por %p88, %p89
    %p91 = scmp.ne.s32.totalorder %s82, %s83
    %p92 = scmp.eq.s32.totalorder %s18, 0
    %p93 = por %p91, %p92
    %p94 = scmp.ne.s32.totalorder %s82, %s83
    %p95 = scmp.eq.s32.totalorder %s19, 1
    %p96 = por %p94, %p95
    %p98 = scmp.ne.s32.totalorder %s83, %s97
    %p99 = scmp.eq.s32.totalorder %s19, 0
    %p100 = por %p98, %p99
    %s101 = ssub.s32 %s21, %s28
    %p102 = scmp.eq.s32.totalorder %s101, 0
    %s104 = sadd.s32 %s103, 1
    %s105 = scalar_select %p102, %s103, %s104
    %p108 = pneg %p102
    %p109 = scmp.eq.s32.totalorder %s13, 1
    %p110 = por %p108, %p109
    %p111 = scmp.ne.s32.totalorder %s103, %s106
    %p112 = scmp.eq.s32.totalorder %s13, 0
    %p113 = por %p111, %p112
    %p114 = scmp.ne.s32.totalorder %s103, %s106
    %p115 = scmp.eq.s32.totalorder %s18, 1
    %p116 = por %p114, %p115
    %p117 = scmp.ne.s32.totalorder %s106, %s107
    %p118 = scmp.eq.s32.totalorder %s18, 0
    %p119 = por %p117, %p118
    %p120 = scmp.ne.s32.totalorder %s106, %s107
    %p121 = scmp.eq.s32.totalorder %s19, 1
    %p122 = por %p120, %p121
    %p124 = scmp.ne.s32.totalorder %s107, %s123
    %p125 = scmp.eq.s32.totalorder %s19, 0
    %p126 = por %p124, %p125
    %s127 = ssub.s32 %s20, %s32
    %s128 = ssub.s32 %s21, %s28
    %s129 = sor.u32 %s127, %s128
    %p130 = scmp.eq.s32.totalorder %s129, 0
    %s132 = sadd.s32 %s131, 1
    %s133 = scalar_select %p130, %s131, %s132
    %p136 = pneg %p130
    %p137 = scmp.eq.s32.totalorder %s13, 1
    %p138 = por %p136, %p137
    %p139 = scmp.ne.s32.totalorder %s131, %s134
    %p140 = scmp.eq.s32.totalorder %s13, 0
    %p141 = por %p139, %p140
    %p142 = scmp.ne.s32.totalorder %s131, %s134
    %p143 = scmp.eq.s32.totalorder %s18, 1
    %p144 = por %p142, %p143
    %p145 = scmp.ne.s32.totalorder %s134, %s135
    %p146 = scmp.eq.s32.totalorder %s18, 0
    %p147 = por %p145, %p146
    %p148 = scmp.ne.s32.totalorder %s134, %s135
    %p149 = scmp.eq.s32.totalorder %s19, 1
    %p150 = por %p148, %p149
    %p152 = scmp.ne.s32.totalorder %s135, %s151
    %p153 = scmp.eq.s32.totalorder %s19, 0
    %p154 = por %p152, %p153
    %s155 = ssub.s32 %s20, %s32
    %s156 = ssub.s32 %s21, %s28
    %s157 = sor.u32 %s155, %s156
    %p158 = scmp.eq.s32.totalorder %s157, 0
    %s160 = sadd.s32 %s159, 1
    %s161 = scalar_select %p158, %s159, %s160
    %p164 = pneg %p158
    %p165 = scmp.eq.s32.totalorder %s13, 1
    %p166 = por %p164, %p165
    %p167 = scmp.ne.s32.totalorder %s159, %s162
    %p168 = scmp.eq.s32.totalorder %s13, 0
    %p169 = por %p167, %p168
    %p170 = scmp.ne.s32.totalorder %s159, %s162
    %p171 = scmp.eq.s32.totalorder %s18, 1
    %p172 = por %p170, %p171
    %p173 = scmp.ne.s32.totalorder %s162, %s163
    %p174 = scmp.eq.s32.totalorder %s18, 0
    %p175 = por %p173, %p174
    %p176 = scmp.ne.s32.totalorder %s162, %s163
    %p177 = scmp.eq.s32.totalorder %s19, 1
    %p178 = por %p176, %p177
    %p180 = scmp.ne.s32.totalorder %s163, %s179
    %p181 = scmp.eq.s32.totalorder %s19, 0
    %p182 = por %p180, %p181
    %s183 = ssub.s32 %s20, %s32
    %s184 = ssub.s32 %s21, %s28
    %s185 = sor.u32 %s183, %s184
    %p186 = scmp.eq.s32.totalorder %s185, 0
    %s188 = sadd.s32 %s187, 1
    %s189 = scalar_select %p186, %s187, %s188
    %p192 = pneg %p186
    %p193 = scmp.eq.s32.totalorder %s13, 1
    %p194 = por %p192, %p193
    %p195 = scmp.ne.s32.totalorder %s187, %s190
    %p196 = scmp.eq.s32.totalorder %s13, 0
    %p197 = por %p195, %p196
    %p198 = scmp.ne.s32.totalorder %s187, %s190
    %p199 = scmp.eq.s32.totalorder %s18, 1
    %p200 = por %p198, %p199
    %p201 = scmp.ne.s32.totalorder %s190, %s191
    %p202 = scmp.eq.s32.totalorder %s18, 0
    %p203 = por %p201, %p202
    %p204 = scmp.ne.s32.totalorder %s190, %s191
    %p205 = scmp.eq.s32.totalorder %s19, 1
    %p206 = por %p204, %p205
    %p208 = scmp.ne.s32.totalorder %s191, %s207
    %p209 = scmp.eq.s32.totalorder %s19, 0
    %p210 = por %p208, %p209
    %p211 = scmp.le.s32.totalorder 1, %s13
    %p212 = scmp.lt.s32.totalorder %s13, 3
    %p213 = pnand %p211, %p212
    %p214 = pneg %p213
    // Predicated region
    $region9: #{dense_block.7} parent=5 // pred_check
      _
    $region10: #{dense_block.7} parent=5 // pred_check_branch
      %216 = sbr.rel (%p213) target = $region12
    $region11: #{dense_block.7} parent=5 // pred_region
      %s217 = ssub.s32 %s13, 1
      // Predicated region
      $region13: #{dense_block.7} parent=11 // pred_check
        %p218 = pneg %p72
      $region14: #{dense_block.7} parent=11 // pred_check_branch
        %220 = sbr.rel (%p218) target = $region16
      $region15: #{dense_block.7} parent=11 // pred_region
        _
      $region16: #{dense_block.7} parent=11 // pred_fallthru
        _
      // Predicated region
      $region17: #{dense_block.7} parent=11 // pred_check
        %p221 = pneg %p93
      $region18: #{dense_block.7} parent=11 // pred_check_branch
        %223 = sbr.rel (%p221) target = $region20
      $region19: #{dense_block.7} parent=11 // pred_region
        _
      $region20: #{dense_block.7} parent=11 // pred_fallthru
        _
      // Predicated region
      $region21: #{dense_block.7} parent=11 // pred_check
        %p224 = pneg %p119
      $region22: #{dense_block.7} parent=11 // pred_check_branch
        %226 = sbr.rel (%p224) target = $region24
      $region23: #{dense_block.7} parent=11 // pred_region
        %p227 = scmp.lt.s32.totalorder %s23, 0
        %s228 = scalar_select %p227, %s23, 0
        %s229 = smul.addr %s228, 4
        %s230 = scalar_lea.vmem %s3, %s229
      $region24: #{dense_block.7} parent=11 // pred_fallthru
        _
    $region12: #{dense_block.7} parent=5 // pred_fallthru
      _
    %p231 = scmp.lt.s32.totalorder %s13, 2
    // Predicated region
    $region25: #{dense_block.7} parent=5 // pred_check
      %p232 = pneg %p231
    $region26: #{dense_block.7} parent=5 // pred_check_branch
      %234 = sbr.rel (%p232) target = $region28
    $region27: #{dense_block.7} parent=5 // pred_region
      // Predicated region
      $region29: #{dense_block.7} parent=27 // pred_check
        %p235 = pneg %p45
      $region30: #{dense_block.7} parent=27 // pred_check_branch
        %237 = sbr.rel (%p235) target = $region32
      $region31: #{dense_block.7} parent=27 // pred_region
        %p238 = scmp.lt.s32.totalorder %s20, 1
        %s239 = scalar_select %p238, %s20, 1
        %s240 = smul.addr %s239, 32
        %s241 = smul.addr %s240, 4
        %s242 = scalar_lea.vmem %s0, %s241
      $region32: #{dense_block.7} parent=27 // pred_fallthru
        _
      // Predicated region
      $region33: #{dense_block.7} parent=27 // pred_check
        %p243 = pneg %p141
      $region34: #{dense_block.7} parent=27 // pred_check_branch
        %245 = sbr.rel (%p243) target = $region36
      $region35: #{dense_block.7} parent=27 // pred_region
        %p246 = scmp.lt.s32.totalorder %s20, 1
        %s247 = scalar_select %p246, %s20, 1
        %p248 = scmp.lt.s32.totalorder %s21, 0
        %s249 = scalar_select %p248, %s21, 0
        %s250 = smul.addr %s247, 32
        %s251 = sadd.s32 %s249, %s250
        %s252 = smul.addr %s251, 4
        %s253 = scalar_lea.vmem %s4, %s252
      $region36: #{dense_block.7} parent=27 // pred_fallthru
        _
    $region28: #{dense_block.7} parent=5 // pred_fallthru
      _
    %p254 = scmp.le.s32.totalorder 1, %s13
    %p255 = scmp.lt.s32.totalorder %s13, 3
    %p256 = pnand %p254, %p255
    %p257 = pneg %p256
    // Predicated region
    $region37: #{dense_block.7} parent=5 // pred_check
      _
    $region38: #{dense_block.7} parent=5 // pred_check_branch
      %259 = sbr.rel (%p256) target = $region40
    $region39: #{dense_block.7} parent=5 // pred_region
      %s260 = ssub.s32 %s13, 1
      %p261 = scmp.lt.s32.totalorder %s22, 1
      %s262 = scalar_select %p261, %s22, 1
      %s263 = smul.addr %s262, 32
      %s264 = smul.addr %s263, 4
      %s265 = scalar_lea.vmem %s0, %s264
      %p266 = pneg %p51
      %p267 = pneg %p48
      %p268 = pneg %p72
      %p269 = pneg %p69
      %p270 = pneg %p93
      %p271 = pneg %p90
      %p272 = scmp.lt.s32.totalorder %s23, 0
      %s273 = scalar_select %p272, %s23, 0
      %s274 = smul.addr %s273, 4
      %s275 = scalar_lea.vmem %s3, %s274
      %p276 = pneg %p119
      %p277 = pneg %p116
      %p278 = scmp.lt.s32.totalorder %s22, 1
      %s279 = scalar_select %p278, %s22, 1
      %p280 = scmp.lt.s32.totalorder %s23, 0
      %s281 = scalar_select %p280, %s23, 0
      %s282 = smul.addr %s279, 32
      %s283 = sadd.s32 %s281, %s282
      %s284 = smul.addr %s283, 4
      %s285 = scalar_lea.vmem %s4, %s284
      %p286 = pneg %p147
      %p287 = pneg %p144
      %p288 = pneg %p175
      %p289 = pneg %p172
      %p290 = scmp.lt.s32.totalorder %s22, 1
      %s291 = scalar_select %p290, %s22, 1
      %p292 = scmp.lt.s32.totalorder %s23, 0
      %s293 = scalar_select %p292, %s23, 0
      %s294 = smul.addr %s291, 32
      %s295 = sadd.s32 %s293, %s294
      %s296 = smul.addr %s295, 4
      %s297 = scalar_lea.vmem %s5, %s296
      %p298 = pneg %p203
      %p299 = pneg %p200
      %p300 = scmp.lt.s32.totalorder %s22, 1
      %s301 = scalar_select %p300, %s22, 1
      %p302 = scmp.lt.s32.totalorder %s23, 0
      %s303 = scalar_select %p302, %s23, 0
      %s304 = sadd.s32 %s303, %s301
      %s305 = smul.addr %s304, 2
      %s306 = scalar_lea.vmem %s6, %s305
      %p307 = scmp.lt.s32.totalorder %s22, 1
      %s308 = scalar_select %p307, %s22, 1
      %s309 = smul.addr %s308, 32
      %s310 = smul.addr %s309, 4
      %s311 = scalar_lea.vmem %s0, %s310
      %p312 = scmp.lt.s32.totalorder %s23, 0
      %s313 = scalar_select %p312, %s23, 0
      %s314 = smul.addr %s313, 4
      %s315 = scalar_lea.vmem %s3, %s314
      %p316 = scmp.lt.s32.totalorder %s22, 1
      %s317 = scalar_select %p316, %s22, 1
      %p318 = scmp.lt.s32.totalorder %s23, 0
      %s319 = scalar_select %p318, %s23, 0
      %s320 = smul.addr %s317, 32
      %s321 = sadd.s32 %s319, %s320
      %s322 = smul.addr %s321, 4
      %s323 = scalar_lea.vmem %s4, %s322
      %p324 = scmp.lt.s32.totalorder %s22, 1
      %s325 = scalar_select %p324, %s22, 1
      %p326 = scmp.lt.s32.totalorder %s23, 0
      %s327 = scalar_select %p326, %s23, 0
      %s328 = smul.addr %s325, 32
      %s329 = sadd.s32 %s327, %s328
      %s330 = smul.addr %s329, 4
      %s331 = scalar_lea.vmem %s5, %s330
      %p332 = scmp.lt.s32.totalorder %s22, 1
      %s333 = scalar_select %p332, %s22, 1
      %p334 = scmp.lt.s32.totalorder %s23, 0
      %s335 = scalar_select %p334, %s23, 0
      %s336 = sadd.s32 %s335, %s333
      %s337 = smul.addr %s336, 2
      %s338 = scalar_lea.vmem %s6, %s337
      %v340 = vld [vmem:[%s311] sm:$0xf]
      %v341 = vld [vmem:[%s311 + $0x4] sm:$0xf]
      %v342 = vld [vmem:[%s311 + $0x8] sm:$0xf]
      %v343 = vld [vmem:[%s311 + $0xc] sm:$0xf]
      %v344 = vld [vmem:[%s311 + $0x10] sm:$0xf]
      %v345 = vld [vmem:[%s311 + $0x14] sm:$0xf]
      %v346 = vld [vmem:[%s311 + $0x18] sm:$0xf]
      %v347 = vld [vmem:[%s311 + $0x1c] sm:$0xf]
      %v348 = vld [vmem:[%s311 + $0x20] sm:$0xf]
      %v349 = vld [vmem:[%s311 + $0x24] sm:$0xf]
      %v350 = vld [vmem:[%s311 + $0x28] sm:$0xf]
      %v351 = vld [vmem:[%s311 + $0x2c] sm:$0xf]
      %v352 = vld [vmem:[%s311 + $0x30] sm:$0xf]
      %v353 = vld [vmem:[%s311 + $0x34] sm:$0xf]
      %v354 = vld [vmem:[%s311 + $0x38] sm:$0xf]
      %v355 = vld [vmem:[%s311 + $0x3c] sm:$0xf]
      %v356 = vld [vmem:[%s311 + $0x40] sm:$0xf]
      %v357 = vld [vmem:[%s311 + $0x44] sm:$0xf]
      %v358 = vld [vmem:[%s311 + $0x48] sm:$0xf]
      %v359 = vld [vmem:[%s311 + $0x4c] sm:$0xf]
      %v360 = vld [vmem:[%s311 + $0x50] sm:$0xf]
      %v361 = vld [vmem:[%s311 + $0x54] sm:$0xf]
      %v362 = vld [vmem:[%s311 + $0x58] sm:$0xf]
      %v363 = vld [vmem:[%s311 + $0x5c] sm:$0xf]
      %v364 = vld [vmem:[%s311 + $0x60] sm:$0xf]
      %v365 = vld [vmem:[%s311 + $0x64] sm:$0xf]
      %v366 = vld [vmem:[%s311 + $0x68] sm:$0xf]
      %v367 = vld [vmem:[%s311 + $0x6c] sm:$0xf]
      %v368 = vld [vmem:[%s311 + $0x70] sm:$0xf]
      %v369 = vld [vmem:[%s311 + $0x74] sm:$0xf]
      %v370 = vld [vmem:[%s311 + $0x78] sm:$0xf]
      %v371 = vld [vmem:[%s311 + $0x7c] sm:$0xf]
      %v372 = vunpack.c.l.bf16 %v340
      %v373 = vunpack.c.l.bf16 %v341
      %v374 = vunpack.c.l.bf16 %v342
      %v375 = vunpack.c.l.bf16 %v343
      %v376 = vunpack.c.l.bf16 %v344
      %v377 = vunpack.c.l.bf16 %v345
      %v378 = vunpack.c.l.bf16 %v346
      %v379 = vunpack.c.l.bf16 %v347
      %v380 = vunpack.c.l.bf16 %v348
      %v381 = vunpack.c.l.bf16 %v349
      %v382 = vunpack.c.l.bf16 %v350
      %v383 = vunpack.c.l.bf16 %v351
      %v384 = vunpack.c.l.bf16 %v352
      %v385 = vunpack.c.l.bf16 %v353
      %v386 = vunpack.c.l.bf16 %v354
      %v387 = vunpack.c.l.bf16 %v355
      %v388 = vunpack.c.l.bf16 %v356
      %v389 = vunpack.c.l.bf16 %v357
      %v390 = vunpack.c.l.bf16 %v358
      %v391 = vunpack.c.l.bf16 %v359
      %v392 = vunpack.c.l.bf16 %v360
      %v393 = vunpack.c.l.bf16 %v361
      %v394 = vunpack.c.l.bf16 %v362
      %v395 = vunpack.c.l.bf16 %v363
      %v396 = vunpack.c.l.bf16 %v364
      %v397 = vunpack.c.l.bf16 %v365
      %v398 = vunpack.c.l.bf16 %v366
      %v399 = vunpack.c.l.bf16 %v367
      %v400 = vunpack.c.l.bf16 %v368
      %v401 = vunpack.c.l.bf16 %v369
      %v402 = vunpack.c.l.bf16 %v370
      %v403 = vunpack.c.l.bf16 %v371
      %v404 = vld [vmem:[%s1] sm:$0x1]
      %v406 = vlaneseq
      %v407 = vshrl.u32 %v406, 7
      %v408 = vsub.s32 0, %v407
      %v409 = vrot.slane %v404, %v408
      %v411 = vmul.f32 %v372, %v409
      %v412 = vmul.f32 %v373, %v409
      %v413 = vmul.f32 %v374, %v409
      %v414 = vmul.f32 %v375, %v409
      %v415 = vmul.f32 %v376, %v409
      %v416 = vmul.f32 %v377, %v409
      %v417 = vmul.f32 %v378, %v409
      %v418 = vmul.f32 %v379, %v409
      %v419 = vmul.f32 %v380, %v409
      %v420 = vmul.f32 %v381, %v409
      %v421 = vmul.f32 %v382, %v409
      %v422 = vmul.f32 %v383, %v409
      %v423 = vmul.f32 %v384, %v409
      %v424 = vmul.f32 %v385, %v409
      %v425 = vmul.f32 %v386, %v409
      %v426 = vmul.f32 %v387, %v409
      %v427 = vmul.f32 %v388, %v409
      %v428 = vmul.f32 %v389, %v409
      %v429 = vmul.f32 %v390, %v409
      %v430 = vmul.f32 %v391, %v409
      %v431 = vmul.f32 %v392, %v409
      %v432 = vmul.f32 %v393, %v409
      %v433 = vmul.f32 %v394, %v409
      %v434 = vmul.f32 %v395, %v409
      %v435 = vmul.f32 %v396, %v409
      %v436 = vmul.f32 %v397, %v409
      %v437 = vmul.f32 %v398, %v409
      %v438 = vmul.f32 %v399, %v409
      %v439 = vmul.f32 %v400, %v409
      %v440 = vmul.f32 %v401, %v409
      %v441 = vmul.f32 %v402, %v409
      %v442 = vmul.f32 %v403, %v409
      %v443 = vld [vmem:[%s2] sm:$0x1]
      %v445 = vlaneseq
      %v446 = vshrl.u32 %v445, 7
      %v447 = vsub.s32 0, %v446
      %v448 = vrot.slane %v443, %v447
      %v450 = vadd.f32 %v411, %v448
      %v451 = vadd.f32 %v412, %v448
      %v452 = vadd.f32 %v413, %v448
      %v453 = vadd.f32 %v414, %v448
      %v454 = vadd.f32 %v415, %v448
      %v455 = vadd.f32 %v416, %v448
      %v456 = vadd.f32 %v417, %v448
      %v457 = vadd.f32 %v418, %v448
      %v458 = vadd.f32 %v419, %v448
      %v459 = vadd.f32 %v420, %v448
      %v460 = vadd.f32 %v421, %v448
      %v461 = vadd.f32 %v422, %v448
      %v462 = vadd.f32 %v423, %v448
      %v463 = vadd.f32 %v424, %v448
      %v464 = vadd.f32 %v425, %v448
      %v465 = vadd.f32 %v426, %v448
      %v466 = vadd.f32 %v427, %v448
      %v467 = vadd.f32 %v428, %v448
      %v468 = vadd.f32 %v429, %v448
      %v469 = vadd.f32 %v430, %v448
      %v470 = vadd.f32 %v431, %v448
      %v471 = vadd.f32 %v432, %v448
      %v472 = vadd.f32 %v433, %v448
      %v473 = vadd.f32 %v434, %v448
      %v474 = vadd.f32 %v435, %v448
      %v475 = vadd.f32 %v436, %v448
      %v476 = vadd.f32 %v437, %v448
      %v477 = vadd.f32 %v438, %v448
      %v478 = vadd.f32 %v439, %v448
      %v479 = vadd.f32 %v440, %v448
      %v480 = vadd.f32 %v441, %v448
      %v481 = vadd.f32 %v442, %v448
      %v482 = vmax.f32 %v450, 0.0
      %v483 = vmax.f32 %v451, 0.0
      %v484 = vmax.f32 %v452, 0.0
      %v485 = vmax.f32 %v453, 0.0
      %v486 = vmax.f32 %v454, 0.0
      %v487 = vmax.f32 %v455, 0.0
      %v488 = vmax.f32 %v456, 0.0
      %v489 = vmax.f32 %v457, 0.0
      %v490 = vmax.f32 %v458, 0.0
      %v491 = vmax.f32 %v459, 0.0
      %v492 = vmax.f32 %v460, 0.0
      %v493 = vmax.f32 %v461, 0.0
      %v494 = vmax.f32 %v462, 0.0
      %v495 = vmax.f32 %v463, 0.0
      %v496 = vmax.f32 %v464, 0.0
      %v497 = vmax.f32 %v465, 0.0
      %v498 = vmax.f32 %v466, 0.0
      %v499 = vmax.f32 %v467, 0.0
      %v500 = vmax.f32 %v468, 0.0
      %v501 = vmax.f32 %v469, 0.0
      %v502 = vmax.f32 %v470, 0.0
      %v503 = vmax.f32 %v471, 0.0
      %v504 = vmax.f32 %v472, 0.0
      %v505 = vmax.f32 %v473, 0.0
      %v506 = vmax.f32 %v474, 0.0
      %v507 = vmax.f32 %v475, 0.0
      %v508 = vmax.f32 %v476, 0.0
      %v509 = vmax.f32 %v477, 0.0
      %v510 = vmax.f32 %v478, 0.0
      %v511 = vmax.f32 %v479, 0.0
      %v512 = vmax.f32 %v480, 0.0
      %v513 = vmax.f32 %v481, 0.0
      %v514 = vpack.c.bf16 %v483, %v482
      %v515 = vpack.c.bf16 %v485, %v484
      %v516 = vpack.c.bf16 %v487, %v486
      %v517 = vpack.c.bf16 %v489, %v488
      %v518 = vpack.c.bf16 %v491, %v490
      %v519 = vpack.c.bf16 %v493, %v492
      %v520 = vpack.c.bf16 %v495, %v494
      %v521 = vpack.c.bf16 %v497, %v496
      %v522 = vpack.c.bf16 %v499, %v498
      %v523 = vpack.c.bf16 %v501, %v500
      %v524 = vpack.c.bf16 %v503, %v502
      %v525 = vpack.c.bf16 %v505, %v504
      %v526 = vpack.c.bf16 %v507, %v506
      %v527 = vpack.c.bf16 %v509, %v508
      %v528 = vpack.c.bf16 %v511, %v510
      %v529 = vpack.c.bf16 %v513, %v512
      %530 = vst [vmem:[#allocation2] sm:$0xff] 0
      %531 = vst [vmem:[#allocation2 + $0x8] sm:$0xff] 0
      %532 = vst [vmem:[#allocation2 + $0x10] sm:$0xff] 0
      %s533 = scalar_lea.vmem [#allocation2], 408
      %534 = vst [vmem:[%s533] sm:$0xff] 0
      %535 = vst [vmem:[%s533 + $0x8] sm:$0xff] 0
      %536 = vst [vmem:[%s533 + $0x10] sm:$0xff] 0
      %537 = vst [vmem:[#allocation2] sm:$0xff] 0
      %538 = vst [vmem:[#allocation2 + $0x18] sm:$0xff] 0
      %539 = vst [vmem:[#allocation2 + $0x30] sm:$0xff] 0
      %540 = vst [vmem:[#allocation2 + $0x48] sm:$0xff] 0
      %541 = vst [vmem:[#allocation2 + $0x60] sm:$0xff] 0
      %542 = vst [vmem:[#allocation2 + $0x78] sm:$0xff] 0
      %543 = vst [vmem:[#allocation2 + $0x90] sm:$0xff] 0
      %544 = vst [vmem:[#allocation2 + $0xa8] sm:$0xff] 0
      %545 = vst [vmem:[#allocation2 + $0xc0] sm:$0xff] 0
      %546 = vst [vmem:[#allocation2 + $0xd8] sm:$0xff] 0
      %547 = vst [vmem:[#allocation2 + $0xf0] sm:$0xff] 0
      %548 = vst [vmem:[#allocation2 + $0x108] sm:$0xff] 0
      %549 = vst [vmem:[#allocation2 + $0x120] sm:$0xff] 0
      %550 = vst [vmem:[#allocation2 + $0x138] sm:$0xff] 0
      %551 = vst [vmem:[#allocation2 + $0x150] sm:$0xff] 0
      %552 = vst [vmem:[#allocation2 + $0x168] sm:$0xff] 0
      %553 = vst [vmem:[#allocation2 + $0x180] sm:$0xff] 0
      %554 = vst [vmem:[#allocation2 + $0x198] sm:$0xff] 0
      %555 = vst [vmem:[#allocation2 + $0x10] sm:$0xff] 0
      %556 = vst [vmem:[#allocation2 + $0x28] sm:$0xff] 0
      %557 = vst [vmem:[#allocation2 + $0x40] sm:$0xff] 0
      %558 = vst [vmem:[#allocation2 + $0x58] sm:$0xff] 0
      %559 = vst [vmem:[#allocation2 + $0x70] sm:$0xff] 0
      %560 = vst [vmem:[#allocation2 + $0x88] sm:$0xff] 0
      %561 = vst [vmem:[#allocation2 + $0xa0] sm:$0xff] 0
      %562 = vst [vmem:[#allocation2 + $0xb8] sm:$0xff] 0
      %563 = vst [vmem:[#allocation2 + $0xd0] sm:$0xff] 0
      %564 = vst [vmem:[#allocation2 + $0xe8] sm:$0xff] 0
      %565 = vst [vmem:[#allocation2 + $0x100] sm:$0xff] 0
      %566 = vst [vmem:[#allocation2 + $0x118] sm:$0xff] 0
      %567 = vst [vmem:[#allocation2 + $0x130] sm:$0xff] 0
      %568 = vst [vmem:[#allocation2 + $0x148] sm:$0xff] 0
      %569 = vst [vmem:[#allocation2 + $0x160] sm:$0xff] 0
      %570 = vst [vmem:[#allocation2 + $0x178] sm:$0xff] 0
      %571 = vst [vmem:[#allocation2 + $0x190] sm:$0xff] 0
      %572 = vst [vmem:[#allocation2 + $0x1a8] sm:$0xff] 0
      %s573 = scalar_lea.vmem [#allocation2], 24
      %574 = vst [vmem:[%s573 + $0x8] sm:$0xff] %v514
      %575 = vst [vmem:[%s573 + $0x20] sm:$0xff] %v515
      %576 = vst [vmem:[%s573 + $0x38] sm:$0xff] %v516
      %577 = vst [vmem:[%s573 + $0x50] sm:$0xff] %v517
      %578 = vst [vmem:[%s573 + $0x68] sm:$0xff] %v518
      %579 = vst [vmem:[%s573 + $0x80] sm:$0xff] %v519
      %580 = vst [vmem:[%s573 + $0x98] sm:$0xff] %v520
      %581 = vst [vmem:[%s573 + $0xb0] sm:$0xff] %v521
      %582 = vst [vmem:[%s573 + $0xc8] sm:$0xff] %v522
      %583 = vst [vmem:[%s573 + $0xe0] sm:$0xff] %v523
      %584 = vst [vmem:[%s573 + $0xf8] sm:$0xff] %v524
      %585 = vst [vmem:[%s573 + $0x110] sm:$0xff] %v525
      %586 = vst [vmem:[%s573 + $0x128] sm:$0xff] %v526
      %587 = vst [vmem:[%s573 + $0x140] sm:$0xff] %v527
      %588 = vst [vmem:[%s573 + $0x158] sm:$0xff] %v528
      %589 = vst [vmem:[%s573 + $0x170] sm:$0xff] %v529
      %v590 = vld [vmem:[#allocation2] sm:$0x80]
      %v591 = vld [vmem:[#allocation2 + $0x8] sm:$0xff]
      %v592 = vld [vmem:[#allocation2 + $0x18] sm:$0x80]
      %v593 = vld [vmem:[#allocation2 + $0x20] sm:$0xff]
      %v594 = vld [vmem:[#allocation2 + $0x30] sm:$0x80]
      %v595 = vld [vmem:[#allocation2 + $0x38] sm:$0xff]
      %v596 = vld [vmem:[#allocation2 + $0x48] sm:$0x80]
      %v597 = vld [vmem:[#allocation2 + $0x50] sm:$0xff]
      %v598 = vld [vmem:[#allocation2 + $0x60] sm:$0x80]
      %v599 = vld [vmem:[#allocation2 + $0x68] sm:$0xff]
      %v600 = vld [vmem:[#allocation2 + $0x78] sm:$0x80]
      %v601 = vld [vmem:[#allocation2 + $0x80] sm:$0xff]
      %v602 = vld [vmem:[#allocation2 + $0x90] sm:$0x80]
      %v603 = vld [vmem:[#allocation2 + $0x98] sm:$0xff]
      %v604 = vld [vmem:[#allocation2 + $0xa8] sm:$0x80]
      %v605 = vld [vmem:[#allocation2 + $0xb0] sm:$0xff]
      %v606 = vld [vmem:[#allocation2 + $0xc0] sm:$0x80]
      %v607 = vld [vmem:[#allocation2 + $0xc8] sm:$0xff]
      %v608 = vld [vmem:[#allocation2 + $0xd8] sm:$0x80]
      %v609 = vld [vmem:[#allocation2 + $0xe0] sm:$0xff]
      %v610 = vld [vmem:[#allocation2 + $0xf0] sm:$0x80]
      %v611 = vld [vmem:[#allocation2 + $0xf8] sm:$0xff]
      %v612 = vld [vmem:[#allocation2 + $0x108] sm:$0x80]
      %v613 = vld [vmem:[#allocation2 + $0x110] sm:$0xff]
      %v614 = vld [vmem:[#allocation2 + $0x120] sm:$0x80]
      %v615 = vld [vmem:[#allocation2 + $0x128] sm:$0xff]
      %v616 = vld [vmem:[#allocation2 + $0x138] sm:$0x80]
      %v617 = vld [vmem:[#allocation2 + $0x140] sm:$0xff]
      %v618 = vld [vmem:[#allocation2 + $0x150] sm:$0x80]
      %v619 = vld [vmem:[#allocation2 + $0x158] sm:$0xff]
      %v620 = vld [vmem:[#allocation2 + $0x168] sm:$0x80]
      %v621 = vld [vmem:[#allocation2 + $0x170] sm:$0xff]
      %vm622 = vsmask.f32 256
      %v624 = vshrl.u32 %v590, 16
      %v626 = vrot.slane %v624, 7
      %v628 = vshrl.u32 %v591, 16
      %v630 = vrot.slane %v628, 7
      %v631 = vshll.u32 %v591, 16
      %v633 = vor.u32 %v630, %v631
      %v634 = vsel %vm622, %v626, %v633
      %v636 = vshrl.u32 %v592, 16
      %v638 = vrot.slane %v636, 7
      %v640 = vshrl.u32 %v593, 16
      %v642 = vrot.slane %v640, 7
      %v643 = vshll.u32 %v593, 16
      %v645 = vor.u32 %v642, %v643
      %v646 = vsel %vm622, %v638, %v645
      %v648 = vshrl.u32 %v594, 16
      %v650 = vrot.slane %v648, 7
      %v652 = vshrl.u32 %v595, 16
      %v654 = vrot.slane %v652, 7
      %v655 = vshll.u32 %v595, 16
      %v657 = vor.u32 %v654, %v655
      %v658 = vsel %vm622, %v650, %v657
      %v660 = vshrl.u32 %v596, 16
      %v662 = vrot.slane %v660, 7
      %v664 = vshrl.u32 %v597, 16
      %v666 = vrot.slane %v664, 7
      %v667 = vshll.u32 %v597, 16
      %v669 = vor.u32 %v666, %v667
      %v670 = vsel %vm622, %v662, %v669
      %v672 = vshrl.u32 %v598, 16
      %v674 = vrot.slane %v672, 7
      %v676 = vshrl.u32 %v599, 16
      %v678 = vrot.slane %v676, 7
      %v679 = vshll.u32 %v599, 16
      %v681 = vor.u32 %v678, %v679
      %v682 = vsel %vm622, %v674, %v681
      %v684 = vshrl.u32 %v600, 16
      %v686 = vrot.slane %v684, 7
      %v688 = vshrl.u32 %v601, 16
      %v690 = vrot.slane %v688, 7
      %v691 = vshll.u32 %v601, 16
      %v693 = vor.u32 %v690, %v691
      %v694 = vsel %vm622, %v686, %v693
      %v696 = vshrl.u32 %v602, 16
      %v698 = vrot.slane %v696, 7
      %v700 = vshrl.u32 %v603, 16
      %v702 = vrot.slane %v700, 7
      %v703 = vshll.u32 %v603, 16
      %v705 = vor.u32 %v702, %v703
      %v706 = vsel %vm622, %v698, %v705
      %v708 = vshrl.u32 %v604, 16
      %v710 = vrot.slane %v708, 7
      %v712 = vshrl.u32 %v605, 16
      %v714 = vrot.slane %v712, 7
      %v715 = vshll.u32 %v605, 16
      %v717 = vor.u32 %v714, %v715
      %v718 = vsel %vm622, %v710, %v717
      %v720 = vshrl.u32 %v606, 16
      %v722 = vrot.slane %v720, 7
      %v724 = vshrl.u32 %v607, 16
      %v726 = vrot.slane %v724, 7
      %v727 = vshll.u32 %v607, 16
      %v729 = vor.u32 %v726, %v727
      %v730 = vsel %vm622, %v722, %v729
      %v732 = vshrl.u32 %v608, 16
      %v734 = vrot.slane %v732, 7
      %v736 = vshrl.u32 %v609, 16
      %v738 = vrot.slane %v736, 7
      %v739 = vshll.u32 %v609, 16
      %v741 = vor.u32 %v738, %v739
      %v742 = vsel %vm622, %v734, %v741
      %v744 = vshrl.u32 %v610, 16
      %v746 = vrot.slane %v744, 7
      %v748 = vshrl.u32 %v611, 16
      %v750 = vrot.slane %v748, 7
      %v751 = vshll.u32 %v611, 16
      %v753 = vor.u32 %v750, %v751
      %v754 = vsel %vm622, %v746, %v753
      %v756 = vshrl.u32 %v612, 16
      %v758 = vrot.slane %v756, 7
      %v760 = vshrl.u32 %v613, 16
      %v762 = vrot.slane %v760, 7
      %v763 = vshll.u32 %v613, 16
      %v765 = vor.u32 %v762, %v763
      %v766 = vsel %vm622, %v758, %v765
      %v768 = vshrl.u32 %v614, 16
      %v770 = vrot.slane %v768, 7
      %v772 = vshrl.u32 %v615, 16
      %v774 = vrot.slane %v772, 7
      %v775 = vshll.u32 %v615, 16
      %v777 = vor.u32 %v774, %v775
      %v778 = vsel %vm622, %v770, %v777
      %v780 = vshrl.u32 %v616, 16
      %v782 = vrot.slane %v780, 7
      %v784 = vshrl.u32 %v617, 16
      %v786 = vrot.slane %v784, 7
      %v787 = vshll.u32 %v617, 16
      %v789 = vor.u32 %v786, %v787
      %v790 = vsel %vm622, %v782, %v789
      %v792 = vshrl.u32 %v618, 16
      %v794 = vrot.slane %v792, 7
      %v796 = vshrl.u32 %v619, 16
      %v798 = vrot.slane %v796, 7
      %v799 = vshll.u32 %v619, 16
      %v801 = vor.u32 %v798, %v799
      %v802 = vsel %vm622, %v794, %v801
      %v804 = vshrl.u32 %v620, 16
      %v806 = vrot.slane %v804, 7
      %v808 = vshrl.u32 %v621, 16
      %v810 = vrot.slane %v808, 7
      %v811 = vshll.u32 %v621, 16
      %v813 = vor.u32 %v810, %v811
      %v814 = vsel %vm622, %v806, %v813
      %v831 = vld [vmem:[%s315] sm:$0xf]
      %v832 = vld [vmem:[%s315 + $0x4] sm:$0xf]
      %v833 = vld [vmem:[%s315 + $0x8] sm:$0xf]
      %v834 = vld [vmem:[%s315 + $0xc] sm:$0xf]
      %v835 = vld [vmem:[%s315 + $0x10] sm:$0xf]
      %v836 = vld [vmem:[%s315 + $0x14] sm:$0xf]
      %v837 = vld [vmem:[%s315 + $0x18] sm:$0xf]
      %v838 = vld [vmem:[%s315 + $0x1c] sm:$0xf]
      %v839 = vld [vmem:[%s315 + $0x20] sm:$0xf]
      %v840 = vld [vmem:[%s315 + $0x24] sm:$0xf]
      %v841 = vld [vmem:[%s315 + $0x28] sm:$0xf]
      %v842 = vld [vmem:[%s315 + $0x2c] sm:$0xf]
      %v843 = vld [vmem:[%s315 + $0x30] sm:$0xf]
      %v844 = vld [vmem:[%s315 + $0x34] sm:$0xf]
      %v845 = vld [vmem:[%s315 + $0x38] sm:$0xf]
      %v846 = vld [vmem:[%s315 + $0x3c] sm:$0xf]
      %s847 = scalar_lea.vmem %s315, 64
      %v848 = vld [vmem:[%s847] sm:$0xf]
      %v849 = vld [vmem:[%s847 + $0x4] sm:$0xf]
      %v850 = vld [vmem:[%s847 + $0x8] sm:$0xf]
      %v851 = vld [vmem:[%s847 + $0xc] sm:$0xf]
      %v852 = vld [vmem:[%s847 + $0x10] sm:$0xf]
      %v853 = vld [vmem:[%s847 + $0x14] sm:$0xf]
      %v854 = vld [vmem:[%s847 + $0x18] sm:$0xf]
      %v855 = vld [vmem:[%s847 + $0x1c] sm:$0xf]
      %v856 = vld [vmem:[%s847 + $0x20] sm:$0xf]
      %v857 = vld [vmem:[%s847 + $0x24] sm:$0xf]
      %v858 = vld [vmem:[%s847 + $0x28] sm:$0xf]
      %v859 = vld [vmem:[%s847 + $0x2c] sm:$0xf]
      %v860 = vld [vmem:[%s847 + $0x30] sm:$0xf]
      %v861 = vld [vmem:[%s847 + $0x34] sm:$0xf]
      %v862 = vld [vmem:[%s847 + $0x38] sm:$0xf]
      %v863 = vld [vmem:[%s847 + $0x3c] sm:$0xf]
      %v880 = vunpack.c.l.b16 %v848
      %v881 = vunpack.c.l.b16 %v849
      %v882 = vunpack.c.l.b16 %v850
      %v883 = vunpack.c.l.b16 %v851
      %v884 = vunpack.c.l.b16 %v852
      %v885 = vunpack.c.l.b16 %v853
      %v886 = vunpack.c.l.b16 %v854
      %v887 = vunpack.c.l.b16 %v855
      %v888 = vunpack.c.l.b16 %v856
      %v889 = vunpack.c.l.b16 %v857
      %v890 = vunpack.c.l.b16 %v858
      %v891 = vunpack.c.l.b16 %v859
      %v892 = vunpack.c.l.b16 %v860
      %v893 = vunpack.c.l.b16 %v861
      %v894 = vunpack.c.l.b16 %v862
      %v895 = vunpack.c.l.b16 %v863
      %v896 = vpack.c.b16 %v881, %v880
      %v897 = vpack.c.b16 %v883, %v882
      %v898 = vpack.c.b16 %v885, %v884
      %v899 = vpack.c.b16 %v887, %v886
      %v900 = vpack.c.b16 %v889, %v888
      %v901 = vpack.c.b16 %v891, %v890
      %v902 = vpack.c.b16 %v893, %v892
      %v903 = vpack.c.b16 %v895, %v894
      %912 = vmatprep.subr.bf16.mxu0 0
      %913 = vmatpush1.bf16.msra.mxu0 %v896
      %914 = vmatprep.subr.bf16.mxu0 0
      %915 = vmatpush1.bf16.msra.mxu0 %v897
      %916 = vmatprep.subr.bf16.mxu0 0
      %917 = vmatpush1.bf16.msra.mxu0 %v898
      %918 = vmatprep.subr.bf16.mxu0 0
      %919 = vmatpush1.bf16.msra.mxu0 %v899
      %920 = vmatprep.subr.bf16.mxu0 0
      %921 = vmatpush1.bf16.msra.mxu0 %v900
      %922 = vmatprep.subr.bf16.mxu0 0
      %923 = vmatpush1.bf16.msra.mxu0 %v901
      %924 = vmatprep.subr.bf16.mxu0 0
      %925 = vmatpush1.bf16.msra.mxu0 %v902
      %926 = vmatprep.subr.bf16.mxu0 0
      %927 = vmatpush1.bf16.msra.mxu0 %v903
      %928 = vmatprep.subr.bf16.mxu0 0
      %929 = vmatpush1.bf16.msra.mxu0 0
      %930 = vmatprep.subr.bf16.mxu0 0
      %931 = vmatpush1.bf16.msra.mxu0 0
      %932 = vmatprep.subr.bf16.mxu0 0
      %933 = vmatpush1.bf16.msra.mxu0 0
      %934 = vmatprep.subr.bf16.mxu0 0
      %935 = vmatpush1.bf16.msra.mxu0 0
      %936 = vmatprep.subr.bf16.mxu0 0
      %937 = vmatpush1.bf16.msra.mxu0 0
      %938 = vmatprep.subr.bf16.mxu0 0
      %939 = vmatpush1.bf16.msra.mxu0 0
      %940 = vmatprep.subr.bf16.mxu0 0
      %941 = vmatpush1.bf16.msra.mxu0 0
      %942 = vmatprep.subr.bf16.mxu0 0
      %943 = vmatpush1.bf16.msra.mxu0 0
      %944 = vmatprep.mubr.bf16.mxu0 0
      %945 = vmatmul.mubr.bf16.gmra.mrb[0].mxu0 %v591
      %v946 = vpop.f32.mrb[0].mxu0
      %v947 = vadd.f32 0.0, %v946
      %v948 = vpop.f32.mrb[0].mxu0
      %v949 = vpop.f32.mrb[0].mxu0
      %v950 = vadd.f32 0.0, %v949
      %v951 = vpop.f32.mrb[0].mxu0
      %952 = vmatprep.mubr.bf16.mxu0 0
      %953 = vmatmul.mubr.bf16.gmra.mrb[0].mxu0 %v593
      %v954 = vpop.f32.mrb[0].mxu0
      %v955 = vadd.f32 0.0, %v954
      %v956 = vpop.f32.mrb[0].mxu0
      %v957 = vpop.f32.mrb[0].mxu0
      %v958 = vadd.f32 0.0, %v957
      %v959 = vpop.f32.mrb[0].mxu0
      %960 = vmatprep.mubr.bf16.mxu0 0
      %961 = vmatmul.mubr.bf16.gmra.mrb[0].mxu0 %v595
      %v962 = vpop.f32.mrb[0].mxu0
      %v963 = vadd.f32 0.0, %v962
      %v964 = vpop.f32.mrb[0].mxu0
      %v965 = vpop.f32.mrb[0].mxu0
      %v966 = vadd.f32 0.0, %v965
      %v967 = vpop.f32.mrb[0].mxu0
      %968 = vmatprep.mubr.bf16.mxu0 0
      %969 = vmatmul.mubr.bf16.gmra.mrb[0].mxu0 %v597
      %v970 = vpop.f32.mrb[0].mxu0
      %v971 = vadd.f32 0.0, %v970
      %v972 = vpop.f32.mrb[0].mxu0
      %v973 = vpop.f32.mrb[0].mxu0
      %v974 = vadd.f32 0.0, %v973
      %v975 = vpop.f32.mrb[0].mxu0
      %976 = vmatprep.mubr.bf16.mxu0 0
      %977 = vmatmul.mubr.bf16.gmra.mrb[0].mxu0 %v599
      %v978 = vpop.f32.mrb[0].mxu0
      %v979 = vadd.f32 0.0, %v978
      %v980 = vpop.f32.mrb[0].mxu0
      %v981 = vpop.f32.mrb[0].mxu0
      %v982 = vadd.f32 0.0, %v981
      %v983 = vpop.f32.mrb[0].mxu0
      %984 = vmatprep.mubr.bf16.mxu0 0
      %985 = vmatmul.mubr.bf16.gmra.mrb[0].mxu0 %v601
      %v986 = vpop.f32.mrb[0].mxu0
      %v987 = vadd.f32 0.0, %v986
      %v988 = vpop.f32.mrb[0].mxu0
      %v989 = vpop.f32.mrb[0].mxu0
      %v990 = vadd.f32 0.0, %v989
      %v991 = vpop.f32.mrb[0].mxu0
      %992 = vmatprep.mubr.bf16.mxu0 0
      %993 = vmatmul.mubr.bf16.gmra.mrb[0].mxu0 %v603
      %v994 = vpop.f32.mrb[0].mxu0
      %v995 = vadd.f32 0.0, %v994
      %v996 = vpop.f32.mrb[0].mxu0
      %v997 = vpop.f32.mrb[0].mxu0
      %v998 = vadd.f32 0.0, %v997
      %v999 = vpop.f32.mrb[0].mxu0
      %1000 = vmatprep.mubr.bf16.mxu0 0
      %1001 = vmatmul.mubr.bf16.gmra.mrb[0].mxu0 %v605
      %v1002 = vpop.f32.mrb[0].mxu0
      %v1003 = vadd.f32 0.0, %v1002
      %v1004 = vpop.f32.mrb[0].mxu0
      %v1005 = vpop.f32.mrb[0].mxu0
      %v1006 = vadd.f32 0.0, %v1005
      %v1007 = vpop.f32.mrb[0].mxu0
      %1008 = vmatprep.mubr.bf16.mxu0 0
      %1009 = vmatmul.mubr.bf16.gmra.mrb[0].mxu0 %v607
      %v1010 = vpop.f32.mrb[0].mxu0
      %v1011 = vadd.f32 0.0, %v1010
      %v1012 = vpop.f32.mrb[0].mxu0
      %v1013 = vpop.f32.mrb[0].mxu0
      %v1014 = vadd.f32 0.0, %v1013
      %v1015 = vpop.f32.mrb[0].mxu0
      %1016 = vmatprep.mubr.bf16.mxu0 0
      %1017 = vmatmul.mubr.bf16.gmra.mrb[0].mxu0 %v609
      %v1018 = vpop.f32.mrb[0].mxu0
      %v1019 = vadd.f32 0.0, %v1018
      %v1020 = vpop.f32.mrb[0].mxu0
      %v1021 = vpop.f32.mrb[0].mxu0
      %v1022 = vadd.f32 0.0, %v1021
      %v1023 = vpop.f32.mrb[0].mxu0
      %1024 = vmatprep.mubr.bf16.mxu0 0
      %1025 = vmatmul.mubr.bf16.gmra.mrb[0].mxu0 %v611
      %v1026 = vpop.f32.mrb[0].mxu0
      %v1027 = vadd.f32 0.0, %v1026
      %v1028 = vpop.f32.mrb[0].mxu0
      %v1029 = vpop.f32.mrb[0].mxu0
      %v1030 = vadd.f32 0.0, %v1029
      %v1031 = vpop.f32.mrb[0].mxu0
      %1032 = vmatprep.mubr.bf16.mxu0 0
      %1033 = vmatmul.mubr.bf16.gmra.mrb[0].mxu0 %v613
      %v1034 = vpop.f32.mrb[0].mxu0
      %v1035 = vadd.f32 0.0, %v1034
      %v1036 = vpop.f32.mrb[0].mxu0
      %v1037 = vpop.f32.mrb[0].mxu0
      %v1038 = vadd.f32 0.0, %v1037
      %v1039 = vpop.f32.mrb[0].mxu0
      %1040 = vmatprep.mubr.bf16.mxu0 0
      %1041 = vmatmul.mubr.bf16.gmra.mrb[0].mxu0 %v615
      %v1042 = vpop.f32.mrb[0].mxu0
      %v1043 = vadd.f32 0.0, %v1042
      %v1044 = vpop.f32.mrb[0].mxu0
      %v1045 = vpop.f32.mrb[0].mxu0
      %v1046 = vadd.f32 0.0, %v1045
      %v1047 = vpop.f32.mrb[0].mxu0
      %1048 = vmatprep.mubr.bf16.mxu0 0
      %1049 = vmatmul.mubr.bf16.gmra.mrb[0].mxu0 %v617
      %v1050 = vpop.f32.mrb[0].mxu0
      %v1051 = vadd.f32 0.0, %v1050
      %v1052 = vpop.f32.mrb[0].mxu0
      %v1053 = vpop.f32.mrb[0].mxu0
      %v1054 = vadd.f32 0.0, %v1053
      %v1055 = vpop.f32.mrb[0].mxu0
      %1056 = vmatprep.mubr.bf16.mxu0 0
      %1057 = vmatmul.mubr.bf16.gmra.mrb[0].mxu0 %v619
      %v1058 = vpop.f32.mrb[0].mxu0
      %v1059 = vadd.f32 0.0, %v1058
      %v1060 = vpop.f32.mrb[0].mxu0
      %v1061 = vpop.f32.mrb[0].mxu0
      %v1062 = vadd.f32 0.0, %v1061
      %v1063 = vpop.f32.mrb[0].mxu0
      %1064 = vmatprep.mubr.bf16.mxu0 0
      %1065 = vmatmul.mubr.bf16.gmra.mrb[0].mxu0 %v621
      %v1066 = vpop.f32.mrb[0].mxu0
      %v1067 = vadd.f32 0.0, %v1066
      %v1068 = vpop.f32.mrb[0].mxu0
      %v1069 = vpop.f32.mrb[0].mxu0
      %v1070 = vadd.f32 0.0, %v1069
      %v1071 = vpop.f32.mrb[0].mxu0
      %1072 = vdwg.mxu0
      %v1089 = vunpack.c.l.b16 %v831
      %v1090 = vunpack.c.l.b16 %v832
      %v1091 = vunpack.c.l.b16 %v833
      %v1092 = vunpack.c.l.b16 %v834
      %v1093 = vunpack.c.l.b16 %v835
      %v1094 = vunpack.c.l.b16 %v836
      %v1095 = vunpack.c.l.b16 %v837
      %v1096 = vunpack.c.l.b16 %v838
      %v1097 = vunpack.c.l.b16 %v839
      %v1098 = vunpack.c.l.b16 %v840
      %v1099 = vunpack.c.l.b16 %v841
      %v1100 = vunpack.c.l.b16 %v842
      %v1101 = vunpack.c.l.b16 %v843
      %v1102 = vunpack.c.l.b16 %v844
      %v1103 = vunpack.c.l.b16 %v845
      %v1104 = vunpack.c.l.b16 %v846
      %v1105 = vpack.c.b16 %v1090, %v1089
      %v1106 = vpack.c.b16 %v1092, %v1091
      %v1107 = vpack.c.b16 %v1094, %v1093
      %v1108 = vpack.c.b16 %v1096, %v1095
      %v1109 = vpack.c.b16 %v1098, %v1097
      %v1110 = vpack.c.b16 %v1100, %v1099
      %v1111 = vpack.c.b16 %v1102, %v1101
      %v1112 = vpack.c.b16 %v1104, %v1103
      %1121 = vmatprep.subr.bf16.mxu0 0
      %1122 = vmatpush1.bf16.msra.mxu0 %v1105
      %1123 = vmatprep.subr.bf16.mxu0 0
      %1124 = vmatpush1.bf16.msra.mxu0 %v1106
      %1125 = vmatprep.subr.bf16.mxu0 0
      %1126 = vmatpush1.bf16.msra.mxu0 %v1107
      %1127 = vmatprep.subr.bf16.mxu0 0
      %1128 = vmatpush1.bf16.msra.mxu0 %v1108
      %1129 = vmatprep.subr.bf16.mxu0 0
      %1130 = vmatpush1.bf16.msra.mxu0 %v1109
      %1131 = vmatprep.subr.bf16.mxu0 0
      %1132 = vmatpush1.bf16.msra.mxu0 %v1110
      %1133 = vmatprep.subr.bf16.mxu0 0
      %1134 = vmatpush1.bf16.msra.mxu0 %v1111
      %1135 = vmatprep.subr.bf16.mxu0 0
      %1136 = vmatpush1.bf16.msra.mxu0 %v1112
      %1137 = vmatprep.subr.bf16.mxu0 0
      %1138 = vmatpush1.bf16.msra.mxu0 0
      %1139 = vmatprep.subr.bf16.mxu0 0
      %1140 = vmatpush1.bf16.msra.mxu0 0
      %1141 = vmatprep.subr.bf16.mxu0 0
      %1142 = vmatpush1.bf16.msra.mxu0 0
      %1143 = vmatprep.subr.bf16.mxu0 0
      %1144 = vmatpush1.bf16.msra.mxu0 0
      %1145 = vmatprep.subr.bf16.mxu0 0
      %1146 = vmatpush1.bf16.msra.mxu0 0
      %1147 = vmatprep.subr.bf16.mxu0 0
      %1148 = vmatpush1.bf16.msra.mxu0 0
      %1149 = vmatprep.subr.bf16.mxu0 0
      %1150 = vmatpush1.bf16.msra.mxu0 0
      %1151 = vmatprep.subr.bf16.mxu0 0
      %1152 = vmatpush1.bf16.msra.mxu0 0
      %1153 = vmatprep.mubr.bf16.mxu0 0
      %1154 = vmatmul.mubr.bf16.gmra.mrb[0].mxu0 %v634
      %v1155 = vpop.f32.mrb[0].mxu0
      %v1156 = vadd.f32 %v947, %v1155
      %v1157 = vpop.f32.mrb[0].mxu0
      %v1158 = vpop.f32.mrb[0].mxu0
      %v1159 = vadd.f32 %v950, %v1158
      %v1160 = vpop.f32.mrb[0].mxu0
      %1161 = vmatprep.mubr.bf16.mxu0 0
      %1162 = vmatmul.mubr.bf16.gmra.mrb[0].mxu0 %v646
      %v1163 = vpop.f32.mrb[0].mxu0
      %v1164 = vadd.f32 %v955, %v1163
      %v1165 = vpop.f32.mrb[0].mxu0
      %v1166 = vpop.f32.mrb[0].mxu0
      %v1167 = vadd.f32 %v958, %v1166
      %v1168 = vpop.f32.mrb[0].mxu0
      %1169 = vmatprep.mubr.bf16.mxu0 0
      %1170 = vmatmul.mubr.bf16.gmra.mrb[0].mxu0 %v658
      %v1171 = vpop.f32.mrb[0].mxu0
      %v1172 = vadd.f32 %v963, %v1171
      %v1173 = vpop.f32.mrb[0].mxu0
      %v1174 = vpop.f32.mrb[0].mxu0
      %v1175 = vadd.f32 %v966, %v1174
      %v1176 = vpop.f32.mrb[0].mxu0
      %1177 = vmatprep.mubr.bf16.mxu0 0
      %1178 = vmatmul.mubr.bf16.gmra.mrb[0].mxu0 %v670
      %v1179 = vpop.f32.mrb[0].mxu0
      %v1180 = vadd.f32 %v971, %v1179
      %v1181 = vpop.f32.mrb[0].mxu0
      %v1182 = vpop.f32.mrb[0].mxu0
      %v1183 = vadd.f32 %v974, %v1182
      %v1184 = vpop.f32.mrb[0].mxu0
      %1185 = vmatprep.mubr.bf16.mxu0 0
      %1186 = vmatmul.mubr.bf16.gmra.mrb[0].mxu0 %v682
      %v1187 = vpop.f32.mrb[0].mxu0
      %v1188 = vadd.f32 %v979, %v1187
      %v1189 = vpop.f32.mrb[0].mxu0
      %v1190 = vpop.f32.mrb[0].mxu0
      %v1191 = vadd.f32 %v982, %v1190
      %v1192 = vpop.f32.mrb[0].mxu0
      %1193 = vmatprep.mubr.bf16.mxu0 0
      %1194 = vmatmul.mubr.bf16.gmra.mrb[0].mxu0 %v694
      %v1195 = vpop.f32.mrb[0].mxu0
      %v1196 = vadd.f32 %v987, %v1195
      %v1197 = vpop.f32.mrb[0].mxu0
      %v1198 = vpop.f32.mrb[0].mxu0
      %v1199 = vadd.f32 %v990, %v1198
      %v1200 = vpop.f32.mrb[0].mxu0
      %1201 = vmatprep.mubr.bf16.mxu0 0
      %1202 = vmatmul.mubr.bf16.gmra.mrb[0].mxu0 %v706
      %v1203 = vpop.f32.mrb[0].mxu0
      %v1204 = vadd.f32 %v995, %v1203
      %v1205 = vpop.f32.mrb[0].mxu0
      %v1206 = vpop.f32.mrb[0].mxu0
      %v1207 = vadd.f32 %v998, %v1206
      %v1208 = vpop.f32.mrb[0].mxu0
      %1209 = vmatprep.mubr.bf16.mxu0 0
      %1210 = vmatmul.mubr.bf16.gmra.mrb[0].mxu0 %v718
      %v1211 = vpop.f32.mrb[0].mxu0
      %v1212 = vadd.f32 %v1003, %v1211
      %v1213 = vpop.f32.mrb[0].mxu0
      %v1214 = vpop.f32.mrb[0].mxu0
      %v1215 = vadd.f32 %v1006, %v1214
      %v1216 = vpop.f32.mrb[0].mxu0
      %1217 = vmatprep.mubr.bf16.mxu0 0
      %1218 = vmatmul.mubr.bf16.gmra.mrb[0].mxu0 %v730
      %v1219 = vpop.f32.mrb[0].mxu0
      %v1220 = vadd.f32 %v1011, %v1219
      %v1221 = vpop.f32.mrb[0].mxu0
      %v1222 = vpop.f32.mrb[0].mxu0
      %v1223 = vadd.f32 %v1014, %v1222
      %v1224 = vpop.f32.mrb[0].mxu0
      %1225 = vmatprep.mubr.bf16.mxu0 0
      %1226 = vmatmul.mubr.bf16.gmra.mrb[0].mxu0 %v742
      %v1227 = vpop.f32.mrb[0].mxu0
      %v1228 = vadd.f32 %v1019, %v1227
      %v1229 = vpop.f32.mrb[0].mxu0
      %v1230 = vpop.f32.mrb[0].mxu0
      %v1231 = vadd.f32 %v1022, %v1230
      %v1232 = vpop.f32.mrb[0].mxu0
      %1233 = vmatprep.mubr.bf16.mxu0 0
      %1234 = vmatmul.mubr.bf16.gmra.mrb[0].mxu0 %v754
      %v1235 = vpop.f32.mrb[0].mxu0
      %v1236 = vadd.f32 %v1027, %v1235
      %v1237 = vpop.f32.mrb[0].mxu0
      %v1238 = vpop.f32.mrb[0].mxu0
      %v1239 = vadd.f32 %v1030, %v1238
      %v1240 = vpop.f32.mrb[0].mxu0
      %1241 = vmatprep.mubr.bf16.mxu0 0
      %1242 = vmatmul.mubr.bf16.gmra.mrb[0].mxu0 %v766
      %v1243 = vpop.f32.mrb[0].mxu0
      %v1244 = vadd.f32 %v1035, %v1243
      %v1245 = vpop.f32.mrb[0].mxu0
      %v1246 = vpop.f32.mrb[0].mxu0
      %v1247 = vadd.f32 %v1038, %v1246
      %v1248 = vpop.f32.mrb[0].mxu0
      %1249 = vmatprep.mubr.bf16.mxu0 0
      %1250 = vmatmul.mubr.bf16.gmra.mrb[0].mxu0 %v778
      %v1251 = vpop.f32.mrb[0].mxu0
      %v1252 = vadd.f32 %v1043, %v1251
      %v1253 = vpop.f32.mrb[0].mxu0
      %v1254 = vpop.f32.mrb[0].mxu0
      %v1255 = vadd.f32 %v1046, %v1254
      %v1256 = vpop.f32.mrb[0].mxu0
      %1257 = vmatprep.mubr.bf16.mxu0 0
      %1258 = vmatmul.mubr.bf16.gmra.mrb[0].mxu0 %v790
      %v1259 = vpop.f32.mrb[0].mxu0
      %v1260 = vadd.f32 %v1051, %v1259
      %v1261 = vpop.f32.mrb[0].mxu0
      %v1262 = vpop.f32.mrb[0].mxu0
      %v1263 = vadd.f32 %v1054, %v1262
      %v1264 = vpop.f32.mrb[0].mxu0
      %1265 = vmatprep.mubr.bf16.mxu0 0
      %1266 = vmatmul.mubr.bf16.gmra.mrb[0].mxu0 %v802
      %v1267 = vpop.f32.mrb[0].mxu0
      %v1268 = vadd.f32 %v1059, %v1267
      %v1269 = vpop.f32.mrb[0].mxu0
      %v1270 = vpop.f32.mrb[0].mxu0
      %v1271 = vadd.f32 %v1062, %v1270
      %v1272 = vpop.f32.mrb[0].mxu0
      %1273 = vmatprep.mubr.bf16.mxu0 0
      %1274 = vmatmul.mubr.bf16.gmra.mrb[0].mxu0 %v814
      %v1275 = vpop.f32.mrb[0].mxu0
      %v1276 = vadd.f32 %v1067, %v1275
      %v1277 = vpop.f32.mrb[0].mxu0
      %v1278 = vpop.f32.mrb[0].mxu0
      %v1279 = vadd.f32 %v1070, %v1278
      %v1280 = vpop.f32.mrb[0].mxu0
      %1281 = vdwg.mxu0
      %v1282 = vld [vmem:[#allocation2 + $0x8] sm:$0xff]
      %v1283 = vld [vmem:[#allocation2 + $0x10] sm:$0x1]
      %v1284 = vld [vmem:[#allocation2 + $0x20] sm:$0xff]
      %v1285 = vld [vmem:[#allocation2 + $0x28] sm:$0x1]
      %v1286 = vld [vmem:[#allocation2 + $0x38] sm:$0xff]
      %v1287 = vld [vmem:[#allocation2 + $0x40] sm:$0x1]
      %v1288 = vld [vmem:[#allocation2 + $0x50] sm:$0xff]
      %v1289 = vld [vmem:[#allocation2 + $0x58] sm:$0x1]
      %v1290 = vld [vmem:[#allocation2 + $0x68] sm:$0xff]
      %v1291 = vld [vmem:[#allocation2 + $0x70] sm:$0x1]
      %v1292 = vld [vmem:[#allocation2 + $0x80] sm:$0xff]
      %v1293 = vld [vmem:[#allocation2 + $0x88] sm:$0x1]
      %v1294 = vld [vmem:[#allocation2 + $0x98] sm:$0xff]
      %v1295 = vld [vmem:[#allocation2 + $0xa0] sm:$0x1]
      %v1296 = vld [vmem:[#allocation2 + $0xb0] sm:$0xff]
      %v1297 = vld [vmem:[#allocation2 + $0xb8] sm:$0x1]
      %v1298 = vld [vmem:[#allocation2 + $0xc8] sm:$0xff]
      %v1299 = vld [vmem:[#allocation2 + $0xd0] sm:$0x1]
      %v1300 = vld [vmem:[#allocation2 + $0xe0] sm:$0xff]
      %v1301 = vld [vmem:[#allocation2 + $0xe8] sm:$0x1]
      %v1302 = vld [vmem:[#allocation2 + $0xf8] sm:$0xff]
      %v1303 = vld [vmem:[#allocation2 + $0x100] sm:$0x1]
      %v1304 = vld [vmem:[#allocation2 + $0x110] sm:$0xff]
      %v1305 = vld [vmem:[#allocation2 + $0x118] sm:$0x1]
      %v1306 = vld [vmem:[#allocation2 + $0x128] sm:$0xff]
      %v1307 = vld [vmem:[#allocation2 + $0x130] sm:$0x1]
      %v1308 = vld [vmem:[#allocation2 + $0x140] sm:$0xff]
      %v1309 = vld [vmem:[#allocation2 + $0x148] sm:$0x1]
      %v1310 = vld [vmem:[#allocation2 + $0x158] sm:$0xff]
      %v1311 = vld [vmem:[#allocation2 + $0x160] sm:$0x1]
      %v1312 = vld [vmem:[#allocation2 + $0x170] sm:$0xff]
      %v1313 = vld [vmem:[#allocation2 + $0x178] sm:$0x1]
      %vm1314 = vsmask.f32 7424
      %v1316 = vshrl.u32 %v1282, 16
      %v1318 = vshll.u32 %v1282, 16
      %v1320 = vrot.slane %v1318, 1
      %v1321 = vor.u32 %v1316, %v1320
      %v1323 = vshll.u32 %v1283, 16
      %v1325 = vrot.slane %v1323, 1
      %v1326 = vsel %vm1314, %v1321, %v1325
      %v1328 = vshrl.u32 %v1284, 16
      %v1330 = vshll.u32 %v1284, 16
      %v1332 = vrot.slane %v1330, 1
      %v1333 = vor.u32 %v1328, %v1332
      %v1335 = vshll.u32 %v1285, 16
      %v1337 = vrot.slane %v1335, 1
      %v1338 = vsel %vm1314, %v1333, %v1337
      %v1340 = vshrl.u32 %v1286, 16
      %v1342 = vshll.u32 %v1286, 16
      %v1344 = vrot.slane %v1342, 1
      %v1345 = vor.u32 %v1340, %v1344
      %v1347 = vshll.u32 %v1287, 16
      %v1349 = vrot.slane %v1347, 1
      %v1350 = vsel %vm1314, %v1345, %v1349
      %v1352 = vshrl.u32 %v1288, 16
      %v1354 = vshll.u32 %v1288, 16
      %v1356 = vrot.slane %v1354, 1
      %v1357 = vor.u32 %v1352, %v1356
      %v1359 = vshll.u32 %v1289, 16
      %v1361 = vrot.slane %v1359, 1
      %v1362 = vsel %vm1314, %v1357, %v1361
      %v1364 = vshrl.u32 %v1290, 16
      %v1366 = vshll.u32 %v1290, 16
      %v1368 = vrot.slane %v1366, 1
      %v1369 = vor.u32 %v1364, %v1368
      %v1371 = vshll.u32 %v1291, 16
      %v1373 = vrot.slane %v1371, 1
      %v1374 = vsel %vm1314, %v1369, %v1373
      %v1376 = vshrl.u32 %v1292, 16
      %v1378 = vshll.u32 %v1292, 16
      %v1380 = vrot.slane %v1378, 1
      %v1381 = vor.u32 %v1376, %v1380
      %v1383 = vshll.u32 %v1293, 16
      %v1385 = vrot.slane %v1383, 1
      %v1386 = vsel %vm1314, %v1381, %v1385
      %v1388 = vshrl.u32 %v1294, 16
      %v1390 = vshll.u32 %v1294, 16
      %v1392 = vrot.slane %v1390, 1
      %v1393 = vor.u32 %v1388, %v1392
      %v1395 = vshll.u32 %v1295, 16
      %v1397 = vrot.slane %v1395, 1
      %v1398 = vsel %vm1314, %v1393, %v1397
      %v1400 = vshrl.u32 %v1296, 16
      %v1402 = vshll.u32 %v1296, 16
      %v1404 = vrot.slane %v1402, 1
      %v1405 = vor.u32 %v1400, %v1404
      %v1407 = vshll.u32 %v1297, 16
      %v1409 = vrot.slane %v1407, 1
      %v1410 = vsel %vm1314, %v1405, %v1409
      %v1412 = vshrl.u32 %v1298, 16
      %v1414 = vshll.u32 %v1298, 16
      %v1416 = vrot.slane %v1414, 1
      %v1417 = vor.u32 %v1412, %v1416
      %v1419 = vshll.u32 %v1299, 16
      %v1421 = vrot.slane %v1419, 1
      %v1422 = vsel %vm1314, %v1417, %v1421
      %v1424 = vshrl.u32 %v1300, 16
      %v1426 = vshll.u32 %v1300, 16
      %v1428 = vrot.slane %v1426, 1
      %v1429 = vor.u32 %v1424, %v1428
      %v1431 = vshll.u32 %v1301, 16
      %v1433 = vrot.slane %v1431, 1
      %v1434 = vsel %vm1314, %v1429, %v1433
      %v1436 = vshrl.u32 %v1302, 16
      %v1438 = vshll.u32 %v1302, 16
      %v1440 = vrot.slane %v1438, 1
      %v1441 = vor.u32 %v1436, %v1440
      %v1443 = vshll.u32 %v1303, 16
      %v1445 = vrot.slane %v1443, 1
      %v1446 = vsel %vm1314, %v1441, %v1445
      %v1448 = vshrl.u32 %v1304, 16
      %v1450 = vshll.u32 %v1304, 16
      %v1452 = vrot.slane %v1450, 1
      %v1453 = vor.u32 %v1448, %v1452
      %v1455 = vshll.u32 %v1305, 16
      %v1457 = vrot.slane %v1455, 1
      %v1458 = vsel %vm1314, %v1453, %v1457
      %v1460 = vshrl.u32 %v1306, 16
      %v1462 = vshll.u32 %v1306, 16
      %v1464 = vrot.slane %v1462, 1
      %v1465 = vor.u32 %v1460, %v1464
      %v1467 = vshll.u32 %v1307, 16
      %v1469 = vrot.slane %v1467, 1
      %v1470 = vsel %vm1314, %v1465, %v1469
      %v1472 = vshrl.u32 %v1308, 16
      %v1474 = vshll.u32 %v1308, 16
      %v1476 = vrot.slane %v1474, 1
      %v1477 = vor.u32 %v1472, %v1476
      %v1479 = vshll.u32 %v1309, 16
      %v1481 = vrot.slane %v1479, 1
      %v1482 = vsel %vm1314, %v1477, %v1481
      %v1484 = vshrl.u32 %v1310, 16
      %v1486 = vshll.u32 %v1310, 16
      %v1488 = vrot.slane %v1486, 1
      %v1489 = vor.u32 %v1484, %v1488
      %v1491 = vshll.u32 %v1311, 16
      %v1493 = vrot.slane %v1491, 1
      %v1494 = vsel %vm1314, %v1489, %v1493
      %v1496 = vshrl.u32 %v1312, 16
      %v1498 = vshll.u32 %v1312, 16
      %v1500 = vrot.slane %v1498, 1
      %v1501 = vor.u32 %v1496, %v1500
      %v1503 = vshll.u32 %v1313, 16
      %v1505 = vrot.slane %v1503, 1
      %v1506 = vsel %vm1314, %v1501, %v1505
      %s1523 = scalar_lea.vmem %s315, 128
      %v1524 = vld [vmem:[%s1523] sm:$0xf]
      %v1525 = vld [vmem:[%s1523 + $0x4] sm:$0xf]
      %v1526 = vld [vmem:[%s1523 + $0x8] sm:$0xf]
      %v1527 = vld [vmem:[%s1523 + $0xc] sm:$0xf]
      %v1528 = vld [vmem:[%s1523 + $0x10] sm:$0xf]
      %v1529 = vld [vmem:[%s1523 + $0x14] sm:$0xf]
      %v1530 = vld [vmem:[%s1523 + $0x18] sm:$0xf]
      %v1531 = vld [vmem:[%s1523 + $0x1c] sm:$0xf]
      %v1532 = vld [vmem:[%s1523 + $0x20] sm:$0xf]
      %v1533 = vld [vmem:[%s1523 + $0x24] sm:$0xf]
      %v1534 = vld [vmem:[%s1523 + $0x28] sm:$0xf]
      %v1535 = vld [vmem:[%s1523 + $0x2c] sm:$0xf]
      %v1536 = vld [vmem:[%s1523 + $0x30] sm:$0xf]
      %v1537 = vld [vmem:[%s1523 + $0x34] sm:$0xf]
      %v1538 = vld [vmem:[%s1523 + $0x38] sm:$0xf]
      %v1539 = vld [vmem:[%s1523 + $0x3c] sm:$0xf]
      %v1556 = vunpack.c.l.b16 %v1524
      %v1557 = vunpack.c.l.b16 %v1525
      %v1558 = vunpack.c.l.b16 %v1526
      %v1559 = vunpack.c.l.b16 %v1527
      %v1560 = vunpack.c.l.b16 %v1528
      %v1561 = vunpack.c.l.b16 %v1529
      %v1562 = vunpack.c.l.b16 %v1530
      %v1563 = vunpack.c.l.b16 %v1531
      %v1564 = vunpack.c.l.b16 %v1532
      %v1565 = vunpack.c.l.b16 %v1533
      %v1566 = vunpack.c.l.b16 %v1534
      %v1567 = vunpack.c.l.b16 %v1535
      %v1568 = vunpack.c.l.b16 %v1536
      %v1569 = vunpack.c.l.b16 %v1537
      %v1570 = vunpack.c.l.b16 %v1538
      %v1571 = vunpack.c.l.b16 %v1539
      %v1572 = vpack.c.b16 %v1557, %v1556
      %v1573 = vpack.c.b16 %v1559, %v1558
      %v1574 = vpack.c.b16 %v1561, %v1560
      %v1575 = vpack.c.b16 %v1563, %v1562
      %v1576 = vpack.c.b16 %v1565, %v1564
      %v1577 = vpack.c.b16 %v1567, %v1566
      %v1578 = vpack.c.b16 %v1569, %v1568
      %v1579 = vpack.c.b16 %v1571, %v1570
      %1588 = vmatprep.subr.bf16.mxu0 0
      %1589 = vmatpush1.bf16.msra.mxu0 %v1572
      %1590 = vmatprep.subr.bf16.mxu0 0
      %1591 = vmatpush1.bf16.msra.mxu0 %v1573
      %1592 = vmatprep.subr.bf16.mxu0 0
      %1593 = vmatpush1.bf16.msra.mxu0 %v1574
      %1594 = vmatprep.subr.bf16.mxu0 0
      %1595 = vmatpush1.bf16.msra.mxu0 %v1575
      %1596 = vmatprep.subr.bf16.mxu0 0
      %1597 = vmatpush1.bf16.msra.mxu0 %v1576
      %1598 = vmatprep.subr.bf16.mxu0 0
      %1599 = vmatpush1.bf16.msra.mxu0 %v1577
      %1600 = vmatprep.subr.bf16.mxu0 0
      %1601 = vmatpush1.bf16.msra.mxu0 %v1578
      %1602 = vmatprep.subr.bf16.mxu0 0
      %1603 = vmatpush1.bf16.msra.mxu0 %v1579
      %1604 = vmatprep.subr.bf16.mxu0 0
      %1605 = vmatpush1.bf16.msra.mxu0 0
      %1606 = vmatprep.subr.bf16.mxu0 0
      %1607 = vmatpush1.bf16.msra.mxu0 0
      %1608 = vmatprep.subr.bf16.mxu0 0
      %1609 = vmatpush1.bf16.msra.mxu0 0
      %1610 = vmatprep.subr.bf16.mxu0 0
      %1611 = vmatpush1.bf16.msra.mxu0 0
      %1612 = vmatprep.subr.bf16.mxu0 0
      %1613 = vmatpush1.bf16.msra.mxu0 0
      %1614 = vmatprep.subr.bf16.mxu0 0
      %1615 = vmatpush1.bf16.msra.mxu0 0
      %1616 = vmatprep.subr.bf16.mxu0 0
      %1617 = vmatpush1.bf16.msra.mxu0 0
      %1618 = vmatprep.subr.bf16.mxu0 0
      %1619 = vmatpush1.bf16.msra.mxu0 0
      %1620 = vmatprep.mubr.bf16.mxu0 0
      %1621 = vmatmul.mubr.bf16.gmra.mrb[0].mxu0 %v1326
      %v1622 = vpop.f32.mrb[0].mxu0
      %v1623 = vadd.f32 0.0, %v1622
      %v1624 = vpop.f32.mrb[0].mxu0
      %v1625 = vpop.f32.mrb[0].mxu0
      %v1626 = vadd.f32 0.0, %v1625
      %v1627 = vpop.f32.mrb[0].mxu0
      %1628 = vmatprep.mubr.bf16.mxu0 0
      %1629 = vmatmul.mubr.bf16.gmra.mrb[0].mxu0 %v1338
      %v1630 = vpop.f32.mrb[0].mxu0
      %v1631 = vadd.f32 0.0, %v1630
      %v1632 = vpop.f32.mrb[0].mxu0
      %v1633 = vpop.f32.mrb[0].mxu0
      %v1634 = vadd.f32 0.0, %v1633
      %v1635 = vpop.f32.mrb[0].mxu0
      %1636 = vmatprep.mubr.bf16.mxu0 0
      %1637 = vmatmul.mubr.bf16.gmra.mrb[0].mxu0 %v1350
      %v1638 = vpop.f32.mrb[0].mxu0
      %v1639 = vadd.f32 0.0, %v1638
      %v1640 = vpop.f32.mrb[0].mxu0
      %v1641 = vpop.f32.mrb[0].mxu0
      %v1642 = vadd.f32 0.0, %v1641
      %v1643 = vpop.f32.mrb[0].mxu0
      %1644 = vmatprep.mubr.bf16.mxu0 0
      %1645 = vmatmul.mubr.bf16.gmra.mrb[0].mxu0 %v1362
      %v1646 = vpop.f32.mrb[0].mxu0
      %v1647 = vadd.f32 0.0, %v1646
      %v1648 = vpop.f32.mrb[0].mxu0
      %v1649 = vpop.f32.mrb[0].mxu0
      %v1650 = vadd.f32 0.0, %v1649
      %v1651 = vpop.f32.mrb[0].mxu0
      %1652 = vmatprep.mubr.bf16.mxu0 0
      %1653 = vmatmul.mubr.bf16.gmra.mrb[0].mxu0 %v1374
      %v1654 = vpop.f32.mrb[0].mxu0
      %v1655 = vadd.f32 0.0, %v1654
      %v1656 = vpop.f32.mrb[0].mxu0
      %v1657 = vpop.f32.mrb[0].mxu0
      %v1658 = vadd.f32 0.0, %v1657
      %v1659 = vpop.f32.mrb[0].mxu0
      %1660 = vmatprep.mubr.bf16.mxu0 0
      %1661 = vmatmul.mubr.bf16.gmra.mrb[0].mxu0 %v1386
      %v1662 = vpop.f32.mrb[0].mxu0
      %v1663 = vadd.f32 0.0, %v1662
      %v1664 = vpop.f32.mrb[0].mxu0
      %v1665 = vpop.f32.mrb[0].mxu0
      %v1666 = vadd.f32 0.0, %v1665
      %v1667 = vpop.f32.mrb[0].mxu0
      %1668 = vmatprep.mubr.bf16.mxu0 0
      %1669 = vmatmul.mubr.bf16.gmra.mrb[0].mxu0 %v1398
      %v1670 = vpop.f32.mrb[0].mxu0
      %v1671 = vadd.f32 0.0, %v1670
      %v1672 = vpop.f32.mrb[0].mxu0
      %v1673 = vpop.f32.mrb[0].mxu0
      %v1674 = vadd.f32 0.0, %v1673
      %v1675 = vpop.f32.mrb[0].mxu0
      %1676 = vmatprep.mubr.bf16.mxu0 0
      %1677 = vmatmul.mubr.bf16.gmra.mrb[0].mxu0 %v1410
      %v1678 = vpop.f32.mrb[0].mxu0
      %v1679 = vadd.f32 0.0, %v1678
      %v1680 = vpop.f32.mrb[0].mxu0
      %v1681 = vpop.f32.mrb[0].mxu0
      %v1682 = vadd.f32 0.0, %v1681
      %v1683 = vpop.f32.mrb[0].mxu0
      %1684 = vmatprep.mubr.bf16.mxu0 0
      %1685 = vmatmul.mubr.bf16.gmra.mrb[0].mxu0 %v1422
      %v1686 = vpop.f32.mrb[0].mxu0
      %v1687 = vadd.f32 0.0, %v1686
      %v1688 = vpop.f32.mrb[0].mxu0
      %v1689 = vpop.f32.mrb[0].mxu0
      %v1690 = vadd.f32 0.0, %v1689
      %v1691 = vpop.f32.mrb[0].mxu0
      %1692 = vmatprep.mubr.bf16.mxu0 0
      %1693 = vmatmul.mubr.bf16.gmra.mrb[0].mxu0 %v1434
      %v1694 = vpop.f32.mrb[0].mxu0
      %v1695 = vadd.f32 0.0, %v1694
      %v1696 = vpop.f32.mrb[0].mxu0
      %v1697 = vpop.f32.mrb[0].mxu0
      %v1698 = vadd.f32 0.0, %v1697
      %v1699 = vpop.f32.mrb[0].mxu0
      %1700 = vmatprep.mubr.bf16.mxu0 0
      %1701 = vmatmul.mubr.bf16.gmra.mrb[0].mxu0 %v1446
      %v1702 = vpop.f32.mrb[0].mxu0
      %v1703 = vadd.f32 0.0, %v1702
      %v1704 = vpop.f32.mrb[0].mxu0
      %v1705 = vpop.f32.mrb[0].mxu0
      %v1706 = vadd.f32 0.0, %v1705
      %v1707 = vpop.f32.mrb[0].mxu0
      %1708 = vmatprep.mubr.bf16.mxu0 0
      %1709 = vmatmul.mubr.bf16.gmra.mrb[0].mxu0 %v1458
      %v1710 = vpop.f32.mrb[0].mxu0
      %v1711 = vadd.f32 0.0, %v1710
      %v1712 = vpop.f32.mrb[0].mxu0
      %v1713 = vpop.f32.mrb[0].mxu0
      %v1714 = vadd.f32 0.0, %v1713
      %v1715 = vpop.f32.mrb[0].mxu0
      %1716 = vmatprep.mubr.bf16.mxu0 0
      %1717 = vmatmul.mubr.bf16.gmra.mrb[0].mxu0 %v1470
      %v1718 = vpop.f32.mrb[0].mxu0
      %v1719 = vadd.f32 0.0, %v1718
      %v1720 = vpop.f32.mrb[0].mxu0
      %v1721 = vpop.f32.mrb[0].mxu0
      %v1722 = vadd.f32 0.0, %v1721
      %v1723 = vpop.f32.mrb[0].mxu0
      %1724 = vmatprep.mubr.bf16.mxu0 0
      %1725 = vmatmul.mubr.bf16.gmra.mrb[0].mxu0 %v1482
      %v1726 = vpop.f32.mrb[0].mxu0
      %v1727 = vadd.f32 0.0, %v1726
      %v1728 = vpop.f32.mrb[0].mxu0
      %v1729 = vpop.f32.mrb[0].mxu0
      %v1730 = vadd.f32 0.0, %v1729
      %v1731 = vpop.f32.mrb[0].mxu0
      %1732 = vmatprep.mubr.bf16.mxu0 0
      %1733 = vmatmul.mubr.bf16.gmra.mrb[0].mxu0 %v1494
      %v1734 = vpop.f32.mrb[0].mxu0
      %v1735 = vadd.f32 0.0, %v1734
      %v1736 = vpop.f32.mrb[0].mxu0
      %v1737 = vpop.f32.mrb[0].mxu0
      %v1738 = vadd.f32 0.0, %v1737
      %v1739 = vpop.f32.mrb[0].mxu0
      %1740 = vmatprep.mubr.bf16.mxu0 0
      %1741 = vmatmul.mubr.bf16.gmra.mrb[0].mxu0 %v1506
      %v1742 = vpop.f32.mrb[0].mxu0
      %v1743 = vadd.f32 0.0, %v1742
      %v1744 = vpop.f32.mrb[0].mxu0
      %v1745 = vpop.f32.mrb[0].mxu0
      %v1746 = vadd.f32 0.0, %v1745
      %v1747 = vpop.f32.mrb[0].mxu0
      %1748 = vdwg.mxu0
      %v1749 = vadd.f32 %v1156, %v1623
      %v1750 = vadd.f32 %v1159, %v1626
      %v1751 = vadd.f32 %v1164, %v1631
      %v1752 = vadd.f32 %v1167, %v1634
      %v1753 = vadd.f32 %v1172, %v1639
      %v1754 = vadd.f32 %v1175, %v1642
      %v1755 = vadd.f32 %v1180, %v1647
      %v1756 = vadd.f32 %v1183, %v1650
      %v1757 = vadd.f32 %v1188, %v1655
      %v1758 = vadd.f32 %v1191, %v1658
      %v1759 = vadd.f32 %v1196, %v1663
      %v1760 = vadd.f32 %v1199, %v1666
      %v1761 = vadd.f32 %v1204, %v1671
      %v1762 = vadd.f32 %v1207, %v1674
      %v1763 = vadd.f32 %v1212, %v1679
      %v1764 = vadd.f32 %v1215, %v1682
      %v1765 = vadd.f32 %v1220, %v1687
      %v1766 = vadd.f32 %v1223, %v1690
      %v1767 = vadd.f32 %v1228, %v1695
      %v1768 = vadd.f32 %v1231, %v1698
      %v1769 = vadd.f32 %v1236, %v1703
      %v1770 = vadd.f32 %v1239, %v1706
      %v1771 = vadd.f32 %v1244, %v1711
      %v1772 = vadd.f32 %v1247, %v1714
      %v1773 = vadd.f32 %v1252, %v1719
      %v1774 = vadd.f32 %v1255, %v1722
      %v1775 = vadd.f32 %v1260, %v1727
      %v1776 = vadd.f32 %v1263, %v1730
      %v1777 = vadd.f32 %v1268, %v1735
      %v1778 = vadd.f32 %v1271, %v1738
      %v1779 = vadd.f32 %v1276, %v1743
      %v1780 = vadd.f32 %v1279, %v1746
      %v1781 = vld [vmem:[%s573] sm:$0x80]
      %v1782 = vld [vmem:[%s573 + $0x8] sm:$0xff]
      %v1783 = vld [vmem:[%s573 + $0x18] sm:$0x80]
      %v1784 = vld [vmem:[%s573 + $0x20] sm:$0xff]
      %v1785 = vld [vmem:[%s573 + $0x30] sm:$0x80]
      %v1786 = vld [vmem:[%s573 + $0x38] sm:$0xff]
      %v1787 = vld [vmem:[%s573 + $0x48] sm:$0x80]
      %v1788 = vld [vmem:[%s573 + $0x50] sm:$0xff]
      %v1789 = vld [vmem:[%s573 + $0x60] sm:$0x80]
      %v1790 = vld [vmem:[%s573 + $0x68] sm:$0xff]
      %v1791 = vld [vmem:[%s573 + $0x78] sm:$0x80]
      %v1792 = vld [vmem:[%s573 + $0x80] sm:$0xff]
      %v1793 = vld [vmem:[%s573 + $0x90] sm:$0x80]
      %v1794 = vld [vmem:[%s573 + $0x98] sm:$0xff]
      %v1795 = vld [vmem:[%s573 + $0xa8] sm:$0x80]
      %v1796 = vld [vmem:[%s573 + $0xb0] sm:$0xff]
      %v1797 = vld [vmem:[%s573 + $0xc0] sm:$0x80]
      %v1798 = vld [vmem:[%s573 + $0xc8] sm:$0xff]
      %v1799 = vld [vmem:[%s573 + $0xd8] sm:$0x80]
      %v1800 = vld [vmem:[%s573 + $0xe0] sm:$0xff]
      %v1801 = vld [vmem:[%s573 + $0xf0] sm:$0x80]
      %v1802 = vld [vmem:[%s573 + $0xf8] sm:$0xff]
      %v1803 = vld [vmem:[%s573 + $0x108] sm:$0x80]
      %v1804 = vld [vmem:[%s573 + $0x110] sm:$0xff]
      %v1805 = vld [vmem:[%s573 + $0x120] sm:$0x80]
      %v1806 = vld [vmem:[%s573 + $0x128] sm:$0xff]
      %v1807 = vld [vmem:[%s573 + $0x138] sm:$0x80]
      %v1808 = vld [vmem:[%s573 + $0x140] sm:$0xff]
      %v1809 = vld [vmem:[%s573 + $0x150] sm:$0x80]
      %v1810 = vld [vmem:[%s573 + $0x158] sm:$0xff]
      %v1811 = vld [vmem:[%s573 + $0x168] sm:$0x80]
      %v1812 = vld [vmem:[%s573 + $0x170] sm:$0xff]
      %v1814 = vshrl.u32 %v1781, 16
      %v1816 = vrot.slane %v1814, 7
      %v1818 = vshrl.u32 %v1782, 16
      %v1820 = vrot.slane %v1818, 7
      %v1821 = vshll.u32 %v1782, 16
      %v1823 = vor.u32 %v1820, %v1821
      %v1824 = vsel %vm622, %v1816, %v1823
      %v1826 = vshrl.u32 %v1783, 16
      %v1828 = vrot.slane %v1826, 7
      %v1830 = vshrl.u32 %v1784, 16
      %v1832 = vrot.slane %v1830, 7
      %v1833 = vshll.u32 %v1784, 16
      %v1835 = vor.u32 %v1832, %v1833
      %v1836 = vsel %vm622, %v1828, %v1835
      %v1838 = vshrl.u32 %v1785, 16
      %v1840 = vrot.slane %v1838, 7
      %v1842 = vshrl.u32 %v1786, 16
      %v1844 = vrot.slane %v1842, 7
      %v1845 = vshll.u32 %v1786, 16
      %v1847 = vor.u32 %v1844, %v1845
      %v1848 = vsel %vm622, %v1840, %v1847
      %v1850 = vshrl.u32 %v1787, 16
      %v1852 = vrot.slane %v1850, 7
      %v1854 = vshrl.u32 %v1788, 16
      %v1856 = vrot.slane %v1854, 7
      %v1857 = vshll.u32 %v1788, 16
      %v1859 = vor.u32 %v1856, %v1857
      %v1860 = vsel %vm622, %v1852, %v1859
      %v1862 = vshrl.u32 %v1789, 16
      %v1864 = vrot.slane %v1862, 7
      %v1866 = vshrl.u32 %v1790, 16
      %v1868 = vrot.slane %v1866, 7
      %v1869 = vshll.u32 %v1790, 16
      %v1871 = vor.u32 %v1868, %v1869
      %v1872 = vsel %vm622, %v1864, %v1871
      %v1874 = vshrl.u32 %v1791, 16
      %v1876 = vrot.slane %v1874, 7
      %v1878 = vshrl.u32 %v1792, 16
      %v1880 = vrot.slane %v1878, 7
      %v1881 = vshll.u32 %v1792, 16
      %v1883 = vor.u32 %v1880, %v1881
      %v1884 = vsel %vm622, %v1876, %v1883
      %v1886 = vshrl.u32 %v1793, 16
      %v1888 = vrot.slane %v1886, 7
      %v1890 = vshrl.u32 %v1794, 16
      %v1892 = vrot.slane %v1890, 7
      %v1893 = vshll.u32 %v1794, 16
      %v1895 = vor.u32 %v1892, %v1893
      %v1896 = vsel %vm622, %v1888, %v1895
      %v1898 = vshrl.u32 %v1795, 16
      %v1900 = vrot.slane %v1898, 7
      %v1902 = vshrl.u32 %v1796, 16
      %v1904 = vrot.slane %v1902, 7
      %v1905 = vshll.u32 %v1796, 16
      %v1907 = vor.u32 %v1904, %v1905
      %v1908 = vsel %vm622, %v1900, %v1907
      %v1910 = vshrl.u32 %v1797, 16
      %v1912 = vrot.slane %v1910, 7
      %v1914 = vshrl.u32 %v1798, 16
      %v1916 = vrot.slane %v1914, 7
      %v1917 = vshll.u32 %v1798, 16
      %v1919 = vor.u32 %v1916, %v1917
      %v1920 = vsel %vm622, %v1912, %v1919
      %v1922 = vshrl.u32 %v1799, 16
      %v1924 = vrot.slane %v1922, 7
      %v1926 = vshrl.u32 %v1800, 16
      %v1928 = vrot.slane %v1926, 7
      %v1929 = vshll.u32 %v1800, 16
      %v1931 = vor.u32 %v1928, %v1929
      %v1932 = vsel %vm622, %v1924, %v1931
      %v1934 = vshrl.u32 %v1801, 16
      %v1936 = vrot.slane %v1934, 7
      %v1938 = vshrl.u32 %v1802, 16
      %v1940 = vrot.slane %v1938, 7
      %v1941 = vshll.u32 %v1802, 16
      %v1943 = vor.u32 %v1940, %v1941
      %v1944 = vsel %vm622, %v1936, %v1943
      %v1946 = vshrl.u32 %v1803, 16
      %v1948 = vrot.slane %v1946, 7
      %v1950 = vshrl.u32 %v1804, 16
      %v1952 = vrot.slane %v1950, 7
      %v1953 = vshll.u32 %v1804, 16
      %v1955 = vor.u32 %v1952, %v1953
      %v1956 = vsel %vm622, %v1948, %v1955
      %v1958 = vshrl.u32 %v1805, 16
      %v1960 = vrot.slane %v1958, 7
      %v1962 = vshrl.u32 %v1806, 16
      %v1964 = vrot.slane %v1962, 7
      %v1965 = vshll.u32 %v1806, 16
      %v1967 = vor.u32 %v1964, %v1965
      %v1968 = vsel %vm622, %v1960, %v1967
      %v1970 = vshrl.u32 %v1807, 16
      %v1972 = vrot.slane %v1970, 7
      %v1974 = vshrl.u32 %v1808, 16
      %v1976 = vrot.slane %v1974, 7
      %v1977 = vshll.u32 %v1808, 16
      %v1979 = vor.u32 %v1976, %v1977
      %v1980 = vsel %vm622, %v1972, %v1979
      %v1982 = vshrl.u32 %v1809, 16
      %v1984 = vrot.slane %v1982, 7
      %v1986 = vshrl.u32 %v1810, 16
      %v1988 = vrot.slane %v1986, 7
      %v1989 = vshll.u32 %v1810, 16
      %v1991 = vor.u32 %v1988, %v1989
      %v1992 = vsel %vm622, %v1984, %v1991
      %v1994 = vshrl.u32 %v1811, 16
      %v1996 = vrot.slane %v1994, 7
      %v1998 = vshrl.u32 %v1812, 16
      %v2000 = vrot.slane %v1998, 7
      %v2001 = vshll.u32 %v1812, 16
      %v2003 = vor.u32 %v2000, %v2001
      %v2004 = vsel %vm622, %v1996, %v2003
      %s2021 = scalar_lea.vmem %s315, 192
      %v2022 = vld [vmem:[%s2021] sm:$0xf]
      %v2023 = vld [vmem:[%s2021 + $0x4] sm:$0xf]
      %v2024 = vld [vmem:[%s2021 + $0x8] sm:$0xf]
      %v2025 = vld [vmem:[%s2021 + $0xc] sm:$0xf]
      %v2026 = vld [vmem:[%s2021 + $0x10] sm:$0xf]
      %v2027 = vld [vmem:[%s2021 + $0x14] sm:$0xf]
      %v2028 = vld [vmem:[%s2021 + $0x18] sm:$0xf]
      %v2029 = vld [vmem:[%s2021 + $0x1c] sm:$0xf]
      %v2030 = vld [vmem:[%s2021 + $0x20] sm:$0xf]
      %v2031 = vld [vmem:[%s2021 + $0x24] sm:$0xf]
      %v2032 = vld [vmem:[%s2021 + $0x28] sm:$0xf]
      %v2033 = vld [vmem:[%s2021 + $0x2c] sm:$0xf]
      %v2034 = vld [vmem:[%s2021 + $0x30] sm:$0xf]
      %v2035 = vld [vmem:[%s2021 + $0x34] sm:$0xf]
      %v2036 = vld [vmem:[%s2021 + $0x38] sm:$0xf]
      %v2037 = vld [vmem:[%s2021 + $0x3c] sm:$0xf]
      %v2054 = vunpack.c.l.b16 %v2022
      %v2055 = vunpack.c.l.b16 %v2023
      %v2056 = vunpack.c.l.b16 %v2024
      %v2057 = vunpack.c.l.b16 %v2025
      %v2058 = vunpack.c.l.b16 %v2026
      %v2059 = vunpack.c.l.b16 %v2027
      %v2060 = vunpack.c.l.b16 %v2028
      %v2061 = vunpack.c.l.b16 %v2029
      %v2062 = vunpack.c.l.b16 %v2030
      %v2063 = vunpack.c.l.b16 %v2031
      %v2064 = vunpack.c.l.b16 %v2032
      %v2065 = vunpack.c.l.b16 %v2033
      %v2066 = vunpack.c.l.b16 %v2034
      %v2067 = vunpack.c.l.b16 %v2035
      %v2068 = vunpack.c.l.b16 %v2036
      %v2069 = vunpack.c.l.b16 %v2037
      %v2070 = vpack.c.b16 %v2055, %v2054
      %v2071 = vpack.c.b16 %v2057, %v2056
      %v2072 = vpack.c.b16 %v2059, %v2058
      %v2073 = vpack.c.b16 %v2061, %v2060
      %v2074 = vpack.c.b16 %v2063, %v2062
      %v2075 = vpack.c.b16 %v2065, %v2064
      %v2076 = vpack.c.b16 %v2067, %v2066
      %v2077 = vpack.c.b16 %v2069, %v2068
      %2086 = vmatprep.subr.bf16.mxu0 0
      %2087 = vmatpush1.bf16.msra.mxu0 %v2070
      %2088 = vmatprep.subr.bf16.mxu0 0
      %2089 = vmatpush1.bf16.msra.mxu0 %v2071
      %2090 = vmatprep.subr.bf16.mxu0 0
      %2091 = vmatpush1.bf16.msra.mxu0 %v2072
      %2092 = vmatprep.subr.bf16.mxu0 0
      %2093 = vmatpush1.bf16.msra.mxu0 %v2073
      %2094 = vmatprep.subr.bf16.mxu0 0
      %2095 = vmatpush1.bf16.msra.mxu0 %v2074
      %2096 = vmatprep.subr.bf16.mxu0 0
      %2097 = vmatpush1.bf16.msra.mxu0 %v2075
      %2098 = vmatprep.subr.bf16.mxu0 0
      %2099 = vmatpush1.bf16.msra.mxu0 %v2076
      %2100 = vmatprep.subr.bf16.mxu0 0
      %2101 = vmatpush1.bf16.msra.mxu0 %v2077
      %2102 = vmatprep.subr.bf16.mxu0 0
      %2103 = vmatpush1.bf16.msra.mxu0 0
      %2104 = vmatprep.subr.bf16.mxu0 0
      %2105 = vmatpush1.bf16.msra.mxu0 0
      %2106 = vmatprep.subr.bf16.mxu0 0
      %2107 = vmatpush1.bf16.msra.mxu0 0
      %2108 = vmatprep.subr.bf16.mxu0 0
      %2109 = vmatpush1.bf16.msra.mxu0 0
      %2110 = vmatprep.subr.bf16.mxu0 0
      %2111 = vmatpush1.bf16.msra.mxu0 0
      %2112 = vmatprep.subr.bf16.mxu0 0
      %2113 = vmatpush1.bf16.msra.mxu0 0
      %2114 = vmatprep.subr.bf16.mxu0 0
      %2115 = vmatpush1.bf16.msra.mxu0 0
      %2116 = vmatprep.subr.bf16.mxu0 0
      %2117 = vmatpush1.bf16.msra.mxu0 0
      %2118 = vmatprep.mubr.bf16.mxu0 0
      %2119 = vmatmul.mubr.bf16.gmra.mrb[0].mxu0 %v1824
      %v2120 = vpop.f32.mrb[0].mxu0
      %v2121 = vadd.f32 0.0, %v2120
      %v2122 = vpop.f32.mrb[0].mxu0
      %v2123 = vpop.f32.mrb[0].mxu0
      %v2124 = vadd.f32 0.0, %v2123
      %v2125 = vpop.f32.mrb[0].mxu0
      %2126 = vmatprep.mubr.bf16.mxu0 0
      %2127 = vmatmul.mubr.bf16.gmra.mrb[0].mxu0 %v1836
      %v2128 = vpop.f32.mrb[0].mxu0
      %v2129 = vadd.f32 0.0, %v2128
      %v2130 = vpop.f32.mrb[0].mxu0
      %v2131 = vpop.f32.mrb[0].mxu0
      %v2132 = vadd.f32 0.0, %v2131
      %v2133 = vpop.f32.mrb[0].mxu0
      %2134 = vmatprep.mubr.bf16.mxu0 0
      %2135 = vmatmul.mubr.bf16.gmra.mrb[0].mxu0 %v1848
      %v2136 = vpop.f32.mrb[0].mxu0
      %v2137 = vadd.f32 0.0, %v2136
      %v2138 = vpop.f32.mrb[0].mxu0
      %v2139 = vpop.f32.mrb[0].mxu0
      %v2140 = vadd.f32 0.0, %v2139
      %v2141 = vpop.f32.mrb[0].mxu0
      %2142 = vmatprep.mubr.bf16.mxu0 0
      %2143 = vmatmul.mubr.bf16.gmra.mrb[0].mxu0 %v1860
      %v2144 = vpop.f32.mrb[0].mxu0
      %v2145 = vadd.f32 0.0, %v2144
      %v2146 = vpop.f32.mrb[0].mxu0
      %v2147 = vpop.f32.mrb[0].mxu0
      %v2148 = vadd.f32 0.0, %v2147
      %v2149 = vpop.f32.mrb[0].mxu0
      %2150 = vmatprep.mubr.bf16.mxu0 0
      %2151 = vmatmul.mubr.bf16.gmra.mrb[0].mxu0 %v1872
      %v2152 = vpop.f32.mrb[0].mxu0
      %v2153 = vadd.f32 0.0, %v2152
      %v2154 = vpop.f32.mrb[0].mxu0
      %v2155 = vpop.f32.mrb[0].mxu0
      %v2156 = vadd.f32 0.0, %v2155
      %v2157 = vpop.f32.mrb[0].mxu0
      %2158 = vmatprep.mubr.bf16.mxu0 0
      %2159 = vmatmul.mubr.bf16.gmra.mrb[0].mxu0 %v1884
      %v2160 = vpop.f32.mrb[0].mxu0
      %v2161 = vadd.f32 0.0, %v2160
      %v2162 = vpop.f32.mrb[0].mxu0
      %v2163 = vpop.f32.mrb[0].mxu0
      %v2164 = vadd.f32 0.0, %v2163
      %v2165 = vpop.f32.mrb[0].mxu0
      %2166 = vmatprep.mubr.bf16.mxu0 0
      %2167 = vmatmul.mubr.bf16.gmra.mrb[0].mxu0 %v1896
      %v2168 = vpop.f32.mrb[0].mxu0
      %v2169 = vadd.f32 0.0, %v2168
      %v2170 = vpop.f32.mrb[0].mxu0
      %v2171 = vpop.f32.mrb[0].mxu0
      %v2172 = vadd.f32 0.0, %v2171
      %v2173 = vpop.f32.mrb[0].mxu0
      %2174 = vmatprep.mubr.bf16.mxu0 0
      %2175 = vmatmul.mubr.bf16.gmra.mrb[0].mxu0 %v1908
      %v2176 = vpop.f32.mrb[0].mxu0
      %v2177 = vadd.f32 0.0, %v2176
      %v2178 = vpop.f32.mrb[0].mxu0
      %v2179 = vpop.f32.mrb[0].mxu0
      %v2180 = vadd.f32 0.0, %v2179
      %v2181 = vpop.f32.mrb[0].mxu0
      %2182 = vmatprep.mubr.bf16.mxu0 0
      %2183 = vmatmul.mubr.bf16.gmra.mrb[0].mxu0 %v1920
      %v2184 = vpop.f32.mrb[0].mxu0
      %v2185 = vadd.f32 0.0, %v2184
      %v2186 = vpop.f32.mrb[0].mxu0
      %v2187 = vpop.f32.mrb[0].mxu0
      %v2188 = vadd.f32 0.0, %v2187
      %v2189 = vpop.f32.mrb[0].mxu0
      %2190 = vmatprep.mubr.bf16.mxu0 0
      %2191 = vmatmul.mubr.bf16.gmra.mrb[0].mxu0 %v1932
      %v2192 = vpop.f32.mrb[0].mxu0
      %v2193 = vadd.f32 0.0, %v2192
      %v2194 = vpop.f32.mrb[0].mxu0
      %v2195 = vpop.f32.mrb[0].mxu0
      %v2196 = vadd.f32 0.0, %v2195
      %v2197 = vpop.f32.mrb[0].mxu0
      %2198 = vmatprep.mubr.bf16.mxu0 0
      %2199 = vmatmul.mubr.bf16.gmra.mrb[0].mxu0 %v1944
      %v2200 = vpop.f32.mrb[0].mxu0
      %v2201 = vadd.f32 0.0, %v2200
      %v2202 = vpop.f32.mrb[0].mxu0
      %v2203 = vpop.f32.mrb[0].mxu0
      %v2204 = vadd.f32 0.0, %v2203
      %v2205 = vpop.f32.mrb[0].mxu0
      %2206 = vmatprep.mubr.bf16.mxu0 0
      %2207 = vmatmul.mubr.bf16.gmra.mrb[0].mxu0 %v1956
      %v2208 = vpop.f32.mrb[0].mxu0
      %v2209 = vadd.f32 0.0, %v2208
      %v2210 = vpop.f32.mrb[0].mxu0
      %v2211 = vpop.f32.mrb[0].mxu0
      %v2212 = vadd.f32 0.0, %v2211
      %v2213 = vpop.f32.mrb[0].mxu0
      %2214 = vmatprep.mubr.bf16.mxu0 0
      %2215 = vmatmul.mubr.bf16.gmra.mrb[0].mxu0 %v1968
      %v2216 = vpop.f32.mrb[0].mxu0
      %v2217 = vadd.f32 0.0, %v2216
      %v2218 = vpop.f32.mrb[0].mxu0
      %v2219 = vpop.f32.mrb[0].mxu0
      %v2220 = vadd.f32 0.0, %v2219
      %v2221 = vpop.f32.mrb[0].mxu0
      %2222 = vmatprep.mubr.bf16.mxu0 0
      %2223 = vmatmul.mubr.bf16.gmra.mrb[0].mxu0 %v1980
      %v2224 = vpop.f32.mrb[0].mxu0
      %v2225 = vadd.f32 0.0, %v2224
      %v2226 = vpop.f32.mrb[0].mxu0
      %v2227 = vpop.f32.mrb[0].mxu0
      %v2228 = vadd.f32 0.0, %v2227
      %v2229 = vpop.f32.mrb[0].mxu0
      %2230 = vmatprep.mubr.bf16.mxu0 0
      %2231 = vmatmul.mubr.bf16.gmra.mrb[0].mxu0 %v1992
      %v2232 = vpop.f32.mrb[0].mxu0
      %v2233 = vadd.f32 0.0, %v2232
      %v2234 = vpop.f32.mrb[0].mxu0
      %v2235 = vpop.f32.mrb[0].mxu0
      %v2236 = vadd.f32 0.0, %v2235
      %v2237 = vpop.f32.mrb[0].mxu0
      %2238 = vmatprep.mubr.bf16.mxu0 0
      %2239 = vmatmul.mubr.bf16.gmra.mrb[0].mxu0 %v2004
      %v2240 = vpop.f32.mrb[0].mxu0
      %v2241 = vadd.f32 0.0, %v2240
      %v2242 = vpop.f32.mrb[0].mxu0
      %v2243 = vpop.f32.mrb[0].mxu0
      %v2244 = vadd.f32 0.0, %v2243
      %v2245 = vpop.f32.mrb[0].mxu0
      %2246 = vdwg.mxu0
      %v2247 = vadd.f32 %v1749, %v2121
      %v2248 = vadd.f32 %v1750, %v2124
      %v2249 = vadd.f32 %v1751, %v2129
      %v2250 = vadd.f32 %v1752, %v2132
      %v2251 = vadd.f32 %v1753, %v2137
      %v2252 = vadd.f32 %v1754, %v2140
      %v2253 = vadd.f32 %v1755, %v2145
      %v2254 = vadd.f32 %v1756, %v2148
      %v2255 = vadd.f32 %v1757, %v2153
      %v2256 = vadd.f32 %v1758, %v2156
      %v2257 = vadd.f32 %v1759, %v2161
      %v2258 = vadd.f32 %v1760, %v2164
      %v2259 = vadd.f32 %v1761, %v2169
      %v2260 = vadd.f32 %v1762, %v2172
      %v2261 = vadd.f32 %v1763, %v2177
      %v2262 = vadd.f32 %v1764, %v2180
      %v2263 = vadd.f32 %v1765, %v2185
      %v2264 = vadd.f32 %v1766, %v2188
      %v2265 = vadd.f32 %v1767, %v2193
      %v2266 = vadd.f32 %v1768, %v2196
      %v2267 = vadd.f32 %v1769, %v2201
      %v2268 = vadd.f32 %v1770, %v2204
      %v2269 = vadd.f32 %v1771, %v2209
      %v2270 = vadd.f32 %v1772, %v2212
      %v2271 = vadd.f32 %v1773, %v2217
      %v2272 = vadd.f32 %v1774, %v2220
      %v2273 = vadd.f32 %v1775, %v2225
      %v2274 = vadd.f32 %v1776, %v2228
      %v2275 = vadd.f32 %v1777, %v2233
      %v2276 = vadd.f32 %v1778, %v2236
      %v2277 = vadd.f32 %v1779, %v2241
      %v2278 = vadd.f32 %v1780, %v2244
      %s2279 = scalar_lea.vmem %s315, 256
      %v2280 = vld [vmem:[%s2279] sm:$0xf]
      %v2281 = vld [vmem:[%s2279 + $0x4] sm:$0xf]
      %v2282 = vld [vmem:[%s2279 + $0x8] sm:$0xf]
      %v2283 = vld [vmem:[%s2279 + $0xc] sm:$0xf]
      %v2284 = vld [vmem:[%s2279 + $0x10] sm:$0xf]
      %v2285 = vld [vmem:[%s2279 + $0x14] sm:$0xf]
      %v2286 = vld [vmem:[%s2279 + $0x18] sm:$0xf]
      %v2287 = vld [vmem:[%s2279 + $0x1c] sm:$0xf]
      %v2288 = vld [vmem:[%s2279 + $0x20] sm:$0xf]
      %v2289 = vld [vmem:[%s2279 + $0x24] sm:$0xf]
      %v2290 = vld [vmem:[%s2279 + $0x28] sm:$0xf]
      %v2291 = vld [vmem:[%s2279 + $0x2c] sm:$0xf]
      %v2292 = vld [vmem:[%s2279 + $0x30] sm:$0xf]
      %v2293 = vld [vmem:[%s2279 + $0x34] sm:$0xf]
      %v2294 = vld [vmem:[%s2279 + $0x38] sm:$0xf]
      %v2295 = vld [vmem:[%s2279 + $0x3c] sm:$0xf]
      %v2312 = vunpack.c.l.b16 %v2280
      %v2313 = vunpack.c.l.b16 %v2281
      %v2314 = vunpack.c.l.b16 %v2282
      %v2315 = vunpack.c.l.b16 %v2283
      %v2316 = vunpack.c.l.b16 %v2284
      %v2317 = vunpack.c.l.b16 %v2285
      %v2318 = vunpack.c.l.b16 %v2286
      %v2319 = vunpack.c.l.b16 %v2287
      %v2320 = vunpack.c.l.b16 %v2288
      %v2321 = vunpack.c.l.b16 %v2289
      %v2322 = vunpack.c.l.b16 %v2290
      %v2323 = vunpack.c.l.b16 %v2291
      %v2324 = vunpack.c.l.b16 %v2292
      %v2325 = vunpack.c.l.b16 %v2293
      %v2326 = vunpack.c.l.b16 %v2294
      %v2327 = vunpack.c.l.b16 %v2295
      %v2328 = vpack.c.b16 %v2313, %v2312
      %v2329 = vpack.c.b16 %v2315, %v2314
      %v2330 = vpack.c.b16 %v2317, %v2316
      %v2331 = vpack.c.b16 %v2319, %v2318
      %v2332 = vpack.c.b16 %v2321, %v2320
      %v2333 = vpack.c.b16 %v2323, %v2322
      %v2334 = vpack.c.b16 %v2325, %v2324
      %v2335 = vpack.c.b16 %v2327, %v2326
      %2344 = vmatprep.subr.bf16.mxu0 0
      %2345 = vmatpush1.bf16.msra.mxu0 %v2328
      %2346 = vmatprep.subr.bf16.mxu0 0
      %2347 = vmatpush1.bf16.msra.mxu0 %v2329
      %2348 = vmatprep.subr.bf16.mxu0 0
      %2349 = vmatpush1.bf16.msra.mxu0 %v2330
      %2350 = vmatprep.subr.bf16.mxu0 0
      %2351 = vmatpush1.bf16.msra.mxu0 %v2331
      %2352 = vmatprep.subr.bf16.mxu0 0
      %2353 = vmatpush1.bf16.msra.mxu0 %v2332
      %2354 = vmatprep.subr.bf16.mxu0 0
      %2355 = vmatpush1.bf16.msra.mxu0 %v2333
      %2356 = vmatprep.subr.bf16.mxu0 0
      %2357 = vmatpush1.bf16.msra.mxu0 %v2334
      %2358 = vmatprep.subr.bf16.mxu0 0
      %2359 = vmatpush1.bf16.msra.mxu0 %v2335
      %2360 = vmatprep.subr.bf16.mxu0 0
      %2361 = vmatpush1.bf16.msra.mxu0 0
      %2362 = vmatprep.subr.bf16.mxu0 0
      %2363 = vmatpush1.bf16.msra.mxu0 0
      %2364 = vmatprep.subr.bf16.mxu0 0
      %2365 = vmatpush1.bf16.msra.mxu0 0
      %2366 = vmatprep.subr.bf16.mxu0 0
      %2367 = vmatpush1.bf16.msra.mxu0 0
      %2368 = vmatprep.subr.bf16.mxu0 0
      %2369 = vmatpush1.bf16.msra.mxu0 0
      %2370 = vmatprep.subr.bf16.mxu0 0
      %2371 = vmatpush1.bf16.msra.mxu0 0
      %2372 = vmatprep.subr.bf16.mxu0 0
      %2373 = vmatpush1.bf16.msra.mxu0 0
      %2374 = vmatprep.subr.bf16.mxu0 0
      %2375 = vmatpush1.bf16.msra.mxu0 0
      %2376 = vmatprep.mubr.bf16.mxu0 0
      %2377 = vmatmul.mubr.bf16.gmra.mrb[0].mxu0 %v1782
      %v2378 = vpop.f32.mrb[0].mxu0
      %v2379 = vadd.f32 0.0, %v2378
      %v2380 = vpop.f32.mrb[0].mxu0
      %v2381 = vpop.f32.mrb[0].mxu0
      %v2382 = vadd.f32 0.0, %v2381
      %v2383 = vpop.f32.mrb[0].mxu0
      %2384 = vmatprep.mubr.bf16.mxu0 0
      %2385 = vmatmul.mubr.bf16.gmra.mrb[0].mxu0 %v1784
      %v2386 = vpop.f32.mrb[0].mxu0
      %v2387 = vadd.f32 0.0, %v2386
      %v2388 = vpop.f32.mrb[0].mxu0
      %v2389 = vpop.f32.mrb[0].mxu0
      %v2390 = vadd.f32 0.0, %v2389
      %v2391 = vpop.f32.mrb[0].mxu0
      %2392 = vmatprep.mubr.bf16.mxu0 0
      %2393 = vmatmul.mubr.bf16.gmra.mrb[0].mxu0 %v1786
      %v2394 = vpop.f32.mrb[0].mxu0
      %v2395 = vadd.f32 0.0, %v2394
      %v2396 = vpop.f32.mrb[0].mxu0
      %v2397 = vpop.f32.mrb[0].mxu0
      %v2398 = vadd.f32 0.0, %v2397
      %v2399 = vpop.f32.mrb[0].mxu0
      %2400 = vmatprep.mubr.bf16.mxu0 0
      %2401 = vmatmul.mubr.bf16.gmra.mrb[0].mxu0 %v1788
      %v2402 = vpop.f32.mrb[0].mxu0
      %v2403 = vadd.f32 0.0, %v2402
      %v2404 = vpop.f32.mrb[0].mxu0
      %v2405 = vpop.f32.mrb[0].mxu0
      %v2406 = vadd.f32 0.0, %v2405
      %v2407 = vpop.f32.mrb[0].mxu0
      %2408 = vmatprep.mubr.bf16.mxu0 0
      %2409 = vmatmul.mubr.bf16.gmra.mrb[0].mxu0 %v1790
      %v2410 = vpop.f32.mrb[0].mxu0
      %v2411 = vadd.f32 0.0, %v2410
      %v2412 = vpop.f32.mrb[0].mxu0
      %v2413 = vpop.f32.mrb[0].mxu0
      %v2414 = vadd.f32 0.0, %v2413
      %v2415 = vpop.f32.mrb[0].mxu0
      %2416 = vmatprep.mubr.bf16.mxu0 0
      %2417 = vmatmul.mubr.bf16.gmra.mrb[0].mxu0 %v1792
      %v2418 = vpop.f32.mrb[0].mxu0
      %v2419 = vadd.f32 0.0, %v2418
      %v2420 = vpop.f32.mrb[0].mxu0
      %v2421 = vpop.f32.mrb[0].mxu0
      %v2422 = vadd.f32 0.0, %v2421
      %v2423 = vpop.f32.mrb[0].mxu0
      %2424 = vmatprep.mubr.bf16.mxu0 0
      %2425 = vmatmul.mubr.bf16.gmra.mrb[0].mxu0 %v1794
      %v2426 = vpop.f32.mrb[0].mxu0
      %v2427 = vadd.f32 0.0, %v2426
      %v2428 = vpop.f32.mrb[0].mxu0
      %v2429 = vpop.f32.mrb[0].mxu0
      %v2430 = vadd.f32 0.0, %v2429
      %v2431 = vpop.f32.mrb[0].mxu0
      %2432 = vmatprep.mubr.bf16.mxu0 0
      %2433 = vmatmul.mubr.bf16.gmra.mrb[0].mxu0 %v1796
      %v2434 = vpop.f32.mrb[0].mxu0
      %v2435 = vadd.f32 0.0, %v2434
      %v2436 = vpop.f32.mrb[0].mxu0
      %v2437 = vpop.f32.mrb[0].mxu0
      %v2438 = vadd.f32 0.0, %v2437
      %v2439 = vpop.f32.mrb[0].mxu0
      %2440 = vmatprep.mubr.bf16.mxu0 0
      %2441 = vmatmul.mubr.bf16.gmra.mrb[0].mxu0 %v1798
      %v2442 = vpop.f32.mrb[0].mxu0
      %v2443 = vadd.f32 0.0, %v2442
      %v2444 = vpop.f32.mrb[0].mxu0
      %v2445 = vpop.f32.mrb[0].mxu0
      %v2446 = vadd.f32 0.0, %v2445
      %v2447 = vpop.f32.mrb[0].mxu0
      %2448 = vmatprep.mubr.bf16.mxu0 0
      %2449 = vmatmul.mubr.bf16.gmra.mrb[0].mxu0 %v1800
      %v2450 = vpop.f32.mrb[0].mxu0
      %v2451 = vadd.f32 0.0, %v2450
      %v2452 = vpop.f32.mrb[0].mxu0
      %v2453 = vpop.f32.mrb[0].mxu0
      %v2454 = vadd.f32 0.0, %v2453
      %v2455 = vpop.f32.mrb[0].mxu0
      %2456 = vmatprep.mubr.bf16.mxu0 0
      %2457 = vmatmul.mubr.bf16.gmra.mrb[0].mxu0 %v1802
      %v2458 = vpop.f32.mrb[0].mxu0
      %v2459 = vadd.f32 0.0, %v2458
      %v2460 = vpop.f32.mrb[0].mxu0
      %v2461 = vpop.f32.mrb[0].mxu0
      %v2462 = vadd.f32 0.0, %v2461
      %v2463 = vpop.f32.mrb[0].mxu0
      %2464 = vmatprep.mubr.bf16.mxu0 0
      %2465 = vmatmul.mubr.bf16.gmra.mrb[0].mxu0 %v1804
      %v2466 = vpop.f32.mrb[0].mxu0
      %v2467 = vadd.f32 0.0, %v2466
      %v2468 = vpop.f32.mrb[0].mxu0
      %v2469 = vpop.f32.mrb[0].mxu0
      %v2470 = vadd.f32 0.0, %v2469
      %v2471 = vpop.f32.mrb[0].mxu0
      %2472 = vmatprep.mubr.bf16.mxu0 0
      %2473 = vmatmul.mubr.bf16.gmra.mrb[0].mxu0 %v1806
      %v2474 = vpop.f32.mrb[0].mxu0
      %v2475 = vadd.f32 0.0, %v2474
      %v2476 = vpop.f32.mrb[0].mxu0
      %v2477 = vpop.f32.mrb[0].mxu0
      %v2478 = vadd.f32 0.0, %v2477
      %v2479 = vpop.f32.mrb[0].mxu0
      %2480 = vmatprep.mubr.bf16.mxu0 0
      %2481 = vmatmul.mubr.bf16.gmra.mrb[0].mxu0 %v1808
      %v2482 = vpop.f32.mrb[0].mxu0
      %v2483 = vadd.f32 0.0, %v2482
      %v2484 = vpop.f32.mrb[0].mxu0
      %v2485 = vpop.f32.mrb[0].mxu0
      %v2486 = vadd.f32 0.0, %v2485
      %v2487 = vpop.f32.mrb[0].mxu0
      %2488 = vmatprep.mubr.bf16.mxu0 0
      %2489 = vmatmul.mubr.bf16.gmra.mrb[0].mxu0 %v1810
      %v2490 = vpop.f32.mrb[0].mxu0
      %v2491 = vadd.f32 0.0, %v2490
      %v2492 = vpop.f32.mrb[0].mxu0
      %v2493 = vpop.f32.mrb[0].mxu0
      %v2494 = vadd.f32 0.0, %v2493
      %v2495 = vpop.f32.mrb[0].mxu0
      %2496 = vmatprep.mubr.bf16.mxu0 0
      %2497 = vmatmul.mubr.bf16.gmra.mrb[0].mxu0 %v1812
      %v2498 = vpop.f32.mrb[0].mxu0
      %v2499 = vadd.f32 0.0, %v2498
      %v2500 = vpop.f32.mrb[0].mxu0
      %v2501 = vpop.f32.mrb[0].mxu0
      %v2502 = vadd.f32 0.0, %v2501
      %v2503 = vpop.f32.mrb[0].mxu0
      %2504 = vdwg.mxu0
      %v2505 = vadd.f32 %v2247, %v2379
      %v2506 = vadd.f32 %v2248, %v2382
      %v2507 = vadd.f32 %v2249, %v2387
      %v2508 = vadd.f32 %v2250, %v2390
      %v2509 = vadd.f32 %v2251, %v2395
      %v2510 = vadd.f32 %v2252, %v2398
      %v2511 = vadd.f32 %v2253, %v2403
      %v2512 = vadd.f32 %v2254, %v2406
      %v2513 = vadd.f32 %v2255, %v2411
      %v2514 = vadd.f32 %v2256, %v2414
      %v2515 = vadd.f32 %v2257, %v2419
      %v2516 = vadd.f32 %v2258, %v2422
      %v2517 = vadd.f32 %v2259, %v2427
      %v2518 = vadd.f32 %v2260, %v2430
      %v2519 = vadd.f32 %v2261, %v2435
      %v2520 = vadd.f32 %v2262, %v2438
      %v2521 = vadd.f32 %v2263, %v2443
      %v2522 = vadd.f32 %v2264, %v2446
      %v2523 = vadd.f32 %v2265, %v2451
      %v2524 = vadd.f32 %v2266, %v2454
      %v2525 = vadd.f32 %v2267, %v2459
      %v2526 = vadd.f32 %v2268, %v2462
      %v2527 = vadd.f32 %v2269, %v2467
      %v2528 = vadd.f32 %v2270, %v2470
      %v2529 = vadd.f32 %v2271, %v2475
      %v2530 = vadd.f32 %v2272, %v2478
      %v2531 = vadd.f32 %v2273, %v2483
      %v2532 = vadd.f32 %v2274, %v2486
      %v2533 = vadd.f32 %v2275, %v2491
      %v2534 = vadd.f32 %v2276, %v2494
      %v2535 = vadd.f32 %v2277, %v2499
      %v2536 = vadd.f32 %v2278, %v2502
      %v2537 = vld [vmem:[%s573 + $0x8] sm:$0xff]
      %v2538 = vld [vmem:[%s573 + $0x10] sm:$0x1]
      %v2539 = vld [vmem:[%s573 + $0x20] sm:$0xff]
      %v2540 = vld [vmem:[%s573 + $0x28] sm:$0x1]
      %v2541 = vld [vmem:[%s573 + $0x38] sm:$0xff]
      %v2542 = vld [vmem:[%s573 + $0x40] sm:$0x1]
      %v2543 = vld [vmem:[%s573 + $0x50] sm:$0xff]
      %v2544 = vld [vmem:[%s573 + $0x58] sm:$0x1]
      %v2545 = vld [vmem:[%s573 + $0x68] sm:$0xff]
      %v2546 = vld [vmem:[%s573 + $0x70] sm:$0x1]
      %v2547 = vld [vmem:[%s573 + $0x80] sm:$0xff]
      %v2548 = vld [vmem:[%s573 + $0x88] sm:$0x1]
      %v2549 = vld [vmem:[%s573 + $0x98] sm:$0xff]
      %v2550 = vld [vmem:[%s573 + $0xa0] sm:$0x1]
      %v2551 = vld [vmem:[%s573 + $0xb0] sm:$0xff]
      %v2552 = vld [vmem:[%s573 + $0xb8] sm:$0x1]
      %v2553 = vld [vmem:[%s573 + $0xc8] sm:$0xff]
      %v2554 = vld [vmem:[%s573 + $0xd0] sm:$0x1]
      %v2555 = vld [vmem:[%s573 + $0xe0] sm:$0xff]
      %v2556 = vld [vmem:[%s573 + $0xe8] sm:$0x1]
      %v2557 = vld [vmem:[%s573 + $0xf8] sm:$0xff]
      %v2558 = vld [vmem:[%s573 + $0x100] sm:$0x1]
      %v2559 = vld [vmem:[%s573 + $0x110] sm:$0xff]
      %v2560 = vld [vmem:[%s573 + $0x118] sm:$0x1]
      %v2561 = vld [vmem:[%s573 + $0x128] sm:$0xff]
      %v2562 = vld [vmem:[%s573 + $0x130] sm:$0x1]
      %v2563 = vld [vmem:[%s573 + $0x140] sm:$0xff]
      %v2564 = vld [vmem:[%s573 + $0x148] sm:$0x1]
      %v2565 = vld [vmem:[%s573 + $0x158] sm:$0xff]
      %v2566 = vld [vmem:[%s573 + $0x160] sm:$0x1]
      %v2567 = vld [vmem:[%s573 + $0x170] sm:$0xff]
      %v2568 = vld [vmem:[%s573 + $0x178] sm:$0x1]
      %v2570 = vshrl.u32 %v2537, 16
      %v2572 = vshll.u32 %v2537, 16
      %v2574 = vrot.slane %v2572, 1
      %v2575 = vor.u32 %v2570, %v2574
      %v2577 = vshll.u32 %v2538, 16
      %v2579 = vrot.slane %v2577, 1
      %v2580 = vsel %vm1314, %v2575, %v2579
      %v2582 = vshrl.u32 %v2539, 16
      %v2584 = vshll.u32 %v2539, 16
      %v2586 = vrot.slane %v2584, 1
      %v2587 = vor.u32 %v2582, %v2586
      %v2589 = vshll.u32 %v2540, 16
      %v2591 = vrot.slane %v2589, 1
      %v2592 = vsel %vm1314, %v2587, %v2591
      %v2594 = vshrl.u32 %v2541, 16
      %v2596 = vshll.u32 %v2541, 16
      %v2598 = vrot.slane %v2596, 1
      %v2599 = vor.u32 %v2594, %v2598
      %v2601 = vshll.u32 %v2542, 16
      %v2603 = vrot.slane %v2601, 1
      %v2604 = vsel %vm1314, %v2599, %v2603
      %v2606 = vshrl.u32 %v2543, 16
      %v2608 = vshll.u32 %v2543, 16
      %v2610 = vrot.slane %v2608, 1
      %v2611 = vor.u32 %v2606, %v2610
      %v2613 = vshll.u32 %v2544, 16
      %v2615 = vrot.slane %v2613, 1
      %v2616 = vsel %vm1314, %v2611, %v2615
      %v2618 = vshrl.u32 %v2545, 16
      %v2620 = vshll.u32 %v2545, 16
      %v2622 = vrot.slane %v2620, 1
      %v2623 = vor.u32 %v2618, %v2622
      %v2625 = vshll.u32 %v2546, 16
      %v2627 = vrot.slane %v2625, 1
      %v2628 = vsel %vm1314, %v2623, %v2627
      %v2630 = vshrl.u32 %v2547, 16
      %v2632 = vshll.u32 %v2547, 16
      %v2634 = vrot.slane %v2632, 1
      %v2635 = vor.u32 %v2630, %v2634
      %v2637 = vshll.u32 %v2548, 16
      %v2639 = vrot.slane %v2637, 1
      %v2640 = vsel %vm1314, %v2635, %v2639
      %v2642 = vshrl.u32 %v2549, 16
      %v2644 = vshll.u32 %v2549, 16
      %v2646 = vrot.slane %v2644, 1
      %v2647 = vor.u32 %v2642, %v2646
      %v2649 = vshll.u32 %v2550, 16
      %v2651 = vrot.slane %v2649, 1
      %v2652 = vsel %vm1314, %v2647, %v2651
      %v2654 = vshrl.u32 %v2551, 16
      %v2656 = vshll.u32 %v2551, 16
      %v2658 = vrot.slane %v2656, 1
      %v2659 = vor.u32 %v2654, %v2658
      %v2661 = vshll.u32 %v2552, 16
      %v2663 = vrot.slane %v2661, 1
      %v2664 = vsel %vm1314, %v2659, %v2663
      %v2666 = vshrl.u32 %v2553, 16
      %v2668 = vshll.u32 %v2553, 16
      %v2670 = vrot.slane %v2668, 1
      %v2671 = vor.u32 %v2666, %v2670
      %v2673 = vshll.u32 %v2554, 16
      %v2675 = vrot.slane %v2673, 1
      %v2676 = vsel %vm1314, %v2671, %v2675
      %v2678 = vshrl.u32 %v2555, 16
      %v2680 = vshll.u32 %v2555, 16
      %v2682 = vrot.slane %v2680, 1
      %v2683 = vor.u32 %v2678, %v2682
      %v2685 = vshll.u32 %v2556, 16
      %v2687 = vrot.slane %v2685, 1
      %v2688 = vsel %vm1314, %v2683, %v2687
      %v2690 = vshrl.u32 %v2557, 16
      %v2692 = vshll.u32 %v2557, 16
      %v2694 = vrot.slane %v2692, 1
      %v2695 = vor.u32 %v2690, %v2694
      %v2697 = vshll.u32 %v2558, 16
      %v2699 = vrot.slane %v2697, 1
      %v2700 = vsel %vm1314, %v2695, %v2699
      %v2702 = vshrl.u32 %v2559, 16
      %v2704 = vshll.u32 %v2559, 16
      %v2706 = vrot.slane %v2704, 1
      %v2707 = vor.u32 %v2702, %v2706
      %v2709 = vshll.u32 %v2560, 16
      %v2711 = vrot.slane %v2709, 1
      %v2712 = vsel %vm1314, %v2707, %v2711
      %v2714 = vshrl.u32 %v2561, 16
      %v2716 = vshll.u32 %v2561, 16
      %v2718 = vrot.slane %v2716, 1
      %v2719 = vor.u32 %v2714, %v2718
      %v2721 = vshll.u32 %v2562, 16
      %v2723 = vrot.slane %v2721, 1
      %v2724 = vsel %vm1314, %v2719, %v2723
      %v2726 = vshrl.u32 %v2563, 16
      %v2728 = vshll.u32 %v2563, 16
      %v2730 = vrot.slane %v2728, 1
      %v2731 = vor.u32 %v2726, %v2730
      %v2733 = vshll.u32 %v2564, 16
      %v2735 = vrot.slane %v2733, 1
      %v2736 = vsel %vm1314, %v2731, %v2735
      %v2738 = vshrl.u32 %v2565, 16
      %v2740 = vshll.u32 %v2565, 16
      %v2742 = vrot.slane %v2740, 1
      %v2743 = vor.u32 %v2738, %v2742
      %v2745 = vshll.u32 %v2566, 16
      %v2747 = vrot.slane %v2745, 1
      %v2748 = vsel %vm1314, %v2743, %v2747
      %v2750 = vshrl.u32 %v2567, 16
      %v2752 = vshll.u32 %v2567, 16
      %v2754 = vrot.slane %v2752, 1
      %v2755 = vor.u32 %v2750, %v2754
      %v2757 = vshll.u32 %v2568, 16
      %v2759 = vrot.slane %v2757, 1
      %v2760 = vsel %vm1314, %v2755, %v2759
      %s2777 = scalar_lea.vmem %s315, 320
      %v2778 = vld [vmem:[%s2777] sm:$0xf]
      %v2779 = vld [vmem:[%s2777 + $0x4] sm:$0xf]
      %v2780 = vld [vmem:[%s2777 + $0x8] sm:$0xf]
      %v2781 = vld [vmem:[%s2777 + $0xc] sm:$0xf]
      %v2782 = vld [vmem:[%s2777 + $0x10] sm:$0xf]
      %v2783 = vld [vmem:[%s2777 + $0x14] sm:$0xf]
      %v2784 = vld [vmem:[%s2777 + $0x18] sm:$0xf]
      %v2785 = vld [vmem:[%s2777 + $0x1c] sm:$0xf]
      %v2786 = vld [vmem:[%s2777 + $0x20] sm:$0xf]
      %v2787 = vld [vmem:[%s2777 + $0x24] sm:$0xf]
      %v2788 = vld [vmem:[%s2777 + $0x28] sm:$0xf]
      %v2789 = vld [vmem:[%s2777 + $0x2c] sm:$0xf]
      %v2790 = vld [vmem:[%s2777 + $0x30] sm:$0xf]
      %v2791 = vld [vmem:[%s2777 + $0x34] sm:$0xf]
      %v2792 = vld [vmem:[%s2777 + $0x38] sm:$0xf]
      %v2793 = vld [vmem:[%s2777 + $0x3c] sm:$0xf]
      %v2810 = vunpack.c.l.b16 %v2778
      %v2811 = vunpack.c.l.b16 %v2779
      %v2812 = vunpack.c.l.b16 %v2780
      %v2813 = vunpack.c.l.b16 %v2781
      %v2814 = vunpack.c.l.b16 %v2782
      %v2815 = vunpack.c.l.b16 %v2783
      %v2816 = vunpack.c.l.b16 %v2784
      %v2817 = vunpack.c.l.b16 %v2785
      %v2818 = vunpack.c.l.b16 %v2786
      %v2819 = vunpack.c.l.b16 %v2787
      %v2820 = vunpack.c.l.b16 %v2788
      %v2821 = vunpack.c.l.b16 %v2789
      %v2822 = vunpack.c.l.b16 %v2790
      %v2823 = vunpack.c.l.b16 %v2791
      %v2824 = vunpack.c.l.b16 %v2792
      %v2825 = vunpack.c.l.b16 %v2793
      %v2826 = vpack.c.b16 %v2811, %v2810
      %v2827 = vpack.c.b16 %v2813, %v2812
      %v2828 = vpack.c.b16 %v2815, %v2814
      %v2829 = vpack.c.b16 %v2817, %v2816
      %v2830 = vpack.c.b16 %v2819, %v2818
      %v2831 = vpack.c.b16 %v2821, %v2820
      %v2832 = vpack.c.b16 %v2823, %v2822
      %v2833 = vpack.c.b16 %v2825, %v2824
      %2842 = vmatprep.subr.bf16.mxu0 0
      %2843 = vmatpush1.bf16.msra.mxu0 %v2826
      %2844 = vmatprep.subr.bf16.mxu0 0
      %2845 = vmatpush1.bf16.msra.mxu0 %v2827
      %2846 = vmatprep.subr.bf16.mxu0 0
      %2847 = vmatpush1.bf16.msra.mxu0 %v2828
      %2848 = vmatprep.subr.bf16.mxu0 0
      %2849 = vmatpush1.bf16.msra.mxu0 %v2829
      %2850 = vmatprep.subr.bf16.mxu0 0
      %2851 = vmatpush1.bf16.msra.mxu0 %v2830
      %2852 = vmatprep.subr.bf16.mxu0 0
      %2853 = vmatpush1.bf16.msra.mxu0 %v2831
      %2854 = vmatprep.subr.bf16.mxu0 0
      %2855 = vmatpush1.bf16.msra.mxu0 %v2832
      %2856 = vmatprep.subr.bf16.mxu0 0
      %2857 = vmatpush1.bf16.msra.mxu0 %v2833
      %2858 = vmatprep.subr.bf16.mxu0 0
      %2859 = vmatpush1.bf16.msra.mxu0 0
      %2860 = vmatprep.subr.bf16.mxu0 0
      %2861 = vmatpush1.bf16.msra.mxu0 0
      %2862 = vmatprep.subr.bf16.mxu0 0
      %2863 = vmatpush1.bf16.msra.mxu0 0
      %2864 = vmatprep.subr.bf16.mxu0 0
      %2865 = vmatpush1.bf16.msra.mxu0 0
      %2866 = vmatprep.subr.bf16.mxu0 0
      %2867 = vmatpush1.bf16.msra.mxu0 0
      %2868 = vmatprep.subr.bf16.mxu0 0
      %2869 = vmatpush1.bf16.msra.mxu0 0
      %2870 = vmatprep.subr.bf16.mxu0 0
      %2871 = vmatpush1.bf16.msra.mxu0 0
      %2872 = vmatprep.subr.bf16.mxu0 0
      %2873 = vmatpush1.bf16.msra.mxu0 0
      %2874 = vmatprep.mubr.bf16.mxu0 0
      %2875 = vmatmul.mubr.bf16.gmra.mrb[0].mxu0 %v2580
      %v2876 = vpop.f32.mrb[0].mxu0
      %v2877 = vadd.f32 0.0, %v2876
      %v2878 = vpop.f32.mrb[0].mxu0
      %v2879 = vpop.f32.mrb[0].mxu0
      %v2880 = vadd.f32 0.0, %v2879
      %v2881 = vpop.f32.mrb[0].mxu0
      %2882 = vmatprep.mubr.bf16.mxu0 0
      %2883 = vmatmul.mubr.bf16.gmra.mrb[0].mxu0 %v2592
      %v2884 = vpop.f32.mrb[0].mxu0
      %v2885 = vadd.f32 0.0, %v2884
      %v2886 = vpop.f32.mrb[0].mxu0
      %v2887 = vpop.f32.mrb[0].mxu0
      %v2888 = vadd.f32 0.0, %v2887
      %v2889 = vpop.f32.mrb[0].mxu0
      %2890 = vmatprep.mubr.bf16.mxu0 0
      %2891 = vmatmul.mubr.bf16.gmra.mrb[0].mxu0 %v2604
      %v2892 = vpop.f32.mrb[0].mxu0
      %v2893 = vadd.f32 0.0, %v2892
      %v2894 = vpop.f32.mrb[0].mxu0
      %v2895 = vpop.f32.mrb[0].mxu0
      %v2896 = vadd.f32 0.0, %v2895
      %v2897 = vpop.f32.mrb[0].mxu0
      %2898 = vmatprep.mubr.bf16.mxu0 0
      %2899 = vmatmul.mubr.bf16.gmra.mrb[0].mxu0 %v2616
      %v2900 = vpop.f32.mrb[0].mxu0
      %v2901 = vadd.f32 0.0, %v2900
      %v2902 = vpop.f32.mrb[0].mxu0
      %v2903 = vpop.f32.mrb[0].mxu0
      %v2904 = vadd.f32 0.0, %v2903
      %v2905 = vpop.f32.mrb[0].mxu0
      %2906 = vmatprep.mubr.bf16.mxu0 0
      %2907 = vmatmul.mubr.bf16.gmra.mrb[0].mxu0 %v2628
      %v2908 = vpop.f32.mrb[0].mxu0
      %v2909 = vadd.f32 0.0, %v2908
      %v2910 = vpop.f32.mrb[0].mxu0
      %v2911 = vpop.f32.mrb[0].mxu0
      %v2912 = vadd.f32 0.0, %v2911
      %v2913 = vpop.f32.mrb[0].mxu0
      %2914 = vmatprep.mubr.bf16.mxu0 0
      %2915 = vmatmul.mubr.bf16.gmra.mrb[0].mxu0 %v2640
      %v2916 = vpop.f32.mrb[0].mxu0
      %v2917 = vadd.f32 0.0, %v2916
      %v2918 = vpop.f32.mrb[0].mxu0
      %v2919 = vpop.f32.mrb[0].mxu0
      %v2920 = vadd.f32 0.0, %v2919
      %v2921 = vpop.f32.mrb[0].mxu0
      %2922 = vmatprep.mubr.bf16.mxu0 0
      %2923 = vmatmul.mubr.bf16.gmra.mrb[0].mxu0 %v2652
      %v2924 = vpop.f32.mrb[0].mxu0
      %v2925 = vadd.f32 0.0, %v2924
      %v2926 = vpop.f32.mrb[0].mxu0
      %v2927 = vpop.f32.mrb[0].mxu0
      %v2928 = vadd.f32 0.0, %v2927
      %v2929 = vpop.f32.mrb[0].mxu0
      %2930 = vmatprep.mubr.bf16.mxu0 0
      %2931 = vmatmul.mubr.bf16.gmra.mrb[0].mxu0 %v2664
      %v2932 = vpop.f32.mrb[0].mxu0
      %v2933 = vadd.f32 0.0, %v2932
      %v2934 = vpop.f32.mrb[0].mxu0
      %v2935 = vpop.f32.mrb[0].mxu0
      %v2936 = vadd.f32 0.0, %v2935
      %v2937 = vpop.f32.mrb[0].mxu0
      %2938 = vmatprep.mubr.bf16.mxu0 0
      %2939 = vmatmul.mubr.bf16.gmra.mrb[0].mxu0 %v2676
      %v2940 = vpop.f32.mrb[0].mxu0
      %v2941 = vadd.f32 0.0, %v2940
      %v2942 = vpop.f32.mrb[0].mxu0
      %v2943 = vpop.f32.mrb[0].mxu0
      %v2944 = vadd.f32 0.0, %v2943
      %v2945 = vpop.f32.mrb[0].mxu0
      %2946 = vmatprep.mubr.bf16.mxu0 0
      %2947 = vmatmul.mubr.bf16.gmra.mrb[0].mxu0 %v2688
      %v2948 = vpop.f32.mrb[0].mxu0
      %v2949 = vadd.f32 0.0, %v2948
      %v2950 = vpop.f32.mrb[0].mxu0
      %v2951 = vpop.f32.mrb[0].mxu0
      %v2952 = vadd.f32 0.0, %v2951
      %v2953 = vpop.f32.mrb[0].mxu0
      %2954 = vmatprep.mubr.bf16.mxu0 0
      %2955 = vmatmul.mubr.bf16.gmra.mrb[0].mxu0 %v2700
      %v2956 = vpop.f32.mrb[0].mxu0
      %v2957 = vadd.f32 0.0, %v2956
      %v2958 = vpop.f32.mrb[0].mxu0
      %v2959 = vpop.f32.mrb[0].mxu0
      %v2960 = vadd.f32 0.0, %v2959
      %v2961 = vpop.f32.mrb[0].mxu0
      %2962 = vmatprep.mubr.bf16.mxu0 0
      %2963 = vmatmul.mubr.bf16.gmra.mrb[0].mxu0 %v2712
      %v2964 = vpop.f32.mrb[0].mxu0
      %v2965 = vadd.f32 0.0, %v2964
      %v2966 = vpop.f32.mrb[0].mxu0
      %v2967 = vpop.f32.mrb[0].mxu0
      %v2968 = vadd.f32 0.0, %v2967
      %v2969 = vpop.f32.mrb[0].mxu0
      %2970 = vmatprep.mubr.bf16.mxu0 0
      %2971 = vmatmul.mubr.bf16.gmra.mrb[0].mxu0 %v2724
      %v2972 = vpop.f32.mrb[0].mxu0
      %v2973 = vadd.f32 0.0, %v2972
      %v2974 = vpop.f32.mrb[0].mxu0
      %v2975 = vpop.f32.mrb[0].mxu0
      %v2976 = vadd.f32 0.0, %v2975
      %v2977 = vpop.f32.mrb[0].mxu0
      %2978 = vmatprep.mubr.bf16.mxu0 0
      %2979 = vmatmul.mubr.bf16.gmra.mrb[0].mxu0 %v2736
      %v2980 = vpop.f32.mrb[0].mxu0
      %v2981 = vadd.f32 0.0, %v2980
      %v2982 = vpop.f32.mrb[0].mxu0
      %v2983 = vpop.f32.mrb[0].mxu0
      %v2984 = vadd.f32 0.0, %v2983
      %v2985 = vpop.f32.mrb[0].mxu0
      %2986 = vmatprep.mubr.bf16.mxu0 0
      %2987 = vmatmul.mubr.bf16.gmra.mrb[0].mxu0 %v2748
      %v2988 = vpop.f32.mrb[0].mxu0
      %v2989 = vadd.f32 0.0, %v2988
      %v2990 = vpop.f32.mrb[0].mxu0
      %v2991 = vpop.f32.mrb[0].mxu0
      %v2992 = vadd.f32 0.0, %v2991
      %v2993 = vpop.f32.mrb[0].mxu0
      %2994 = vmatprep.mubr.bf16.mxu0 0
      %2995 = vmatmul.mubr.bf16.gmra.mrb[0].mxu0 %v2760
      %v2996 = vpop.f32.mrb[0].mxu0
      %v2997 = vadd.f32 0.0, %v2996
      %v2998 = vpop.f32.mrb[0].mxu0
      %v2999 = vpop.f32.mrb[0].mxu0
      %v3000 = vadd.f32 0.0, %v2999
      %v3001 = vpop.f32.mrb[0].mxu0
      %3002 = vdwg.mxu0
      %v3003 = vadd.f32 %v2505, %v2877
      %v3004 = vadd.f32 %v2506, %v2880
      %v3005 = vadd.f32 %v2507, %v2885
      %v3006 = vadd.f32 %v2508, %v2888
      %v3007 = vadd.f32 %v2509, %v2893
      %v3008 = vadd.f32 %v2510, %v2896
      %v3009 = vadd.f32 %v2511, %v2901
      %v3010 = vadd.f32 %v2512, %v2904
      %v3011 = vadd.f32 %v2513, %v2909
      %v3012 = vadd.f32 %v2514, %v2912
      %v3013 = vadd.f32 %v2515, %v2917
      %v3014 = vadd.f32 %v2516, %v2920
      %v3015 = vadd.f32 %v2517, %v2925
      %v3016 = vadd.f32 %v2518, %v2928
      %v3017 = vadd.f32 %v2519, %v2933
      %v3018 = vadd.f32 %v2520, %v2936
      %v3019 = vadd.f32 %v2521, %v2941
      %v3020 = vadd.f32 %v2522, %v2944
      %v3021 = vadd.f32 %v2523, %v2949
      %v3022 = vadd.f32 %v2524, %v2952
      %v3023 = vadd.f32 %v2525, %v2957
      %v3024 = vadd.f32 %v2526, %v2960
      %v3025 = vadd.f32 %v2527, %v2965
      %v3026 = vadd.f32 %v2528, %v2968
      %v3027 = vadd.f32 %v2529, %v2973
      %v3028 = vadd.f32 %v2530, %v2976
      %v3029 = vadd.f32 %v2531, %v2981
      %v3030 = vadd.f32 %v2532, %v2984
      %v3031 = vadd.f32 %v2533, %v2989
      %v3032 = vadd.f32 %v2534, %v2992
      %v3033 = vadd.f32 %v2535, %v2997
      %v3034 = vadd.f32 %v2536, %v3000
      %s3035 = scalar_lea.vmem [#allocation2], 48
      %v3036 = vld [vmem:[%s3035] sm:$0x80]
      %v3037 = vld [vmem:[%s3035 + $0x8] sm:$0xff]
      %v3038 = vld [vmem:[%s3035 + $0x18] sm:$0x80]
      %v3039 = vld [vmem:[%s3035 + $0x20] sm:$0xff]
      %v3040 = vld [vmem:[%s3035 + $0x30] sm:$0x80]
      %v3041 = vld [vmem:[%s3035 + $0x38] sm:$0xff]
      %v3042 = vld [vmem:[%s3035 + $0x48] sm:$0x80]
      %v3043 = vld [vmem:[%s3035 + $0x50] sm:$0xff]
      %v3044 = vld [vmem:[%s3035 + $0x60] sm:$0x80]
      %v3045 = vld [vmem:[%s3035 + $0x68] sm:$0xff]
      %v3046 = vld [vmem:[%s3035 + $0x78] sm:$0x80]
      %v3047 = vld [vmem:[%s3035 + $0x80] sm:$0xff]
      %v3048 = vld [vmem:[%s3035 + $0x90] sm:$0x80]
      %v3049 = vld [vmem:[%s3035 + $0x98] sm:$0xff]
      %v3050 = vld [vmem:[%s3035 + $0xa8] sm:$0x80]
      %v3051 = vld [vmem:[%s3035 + $0xb0] sm:$0xff]
      %v3052 = vld [vmem:[%s3035 + $0xc0] sm:$0x80]
      %v3053 = vld [vmem:[%s3035 + $0xc8] sm:$0xff]
      %v3054 = vld [vmem:[%s3035 + $0xd8] sm:$0x80]
      %v3055 = vld [vmem:[%s3035 + $0xe0] sm:$0xff]
      %v3056 = vld [vmem:[%s3035 + $0xf0] sm:$0x80]
      %v3057 = vld [vmem:[%s3035 + $0xf8] sm:$0xff]
      %v3058 = vld [vmem:[%s3035 + $0x108] sm:$0x80]
      %v3059 = vld [vmem:[%s3035 + $0x110] sm:$0xff]
      %v3060 = vld [vmem:[%s3035 + $0x120] sm:$0x80]
      %v3061 = vld [vmem:[%s3035 + $0x128] sm:$0xff]
      %v3062 = vld [vmem:[%s3035 + $0x138] sm:$0x80]
      %v3063 = vld [vmem:[%s3035 + $0x140] sm:$0xff]
      %v3064 = vld [vmem:[%s3035 + $0x150] sm:$0x80]
      %v3065 = vld [vmem:[%s3035 + $0x158] sm:$0xff]
      %v3066 = vld [vmem:[%s3035 + $0x168] sm:$0x80]
      %v3067 = vld [vmem:[%s3035 + $0x170] sm:$0xff]
      %v3069 = vshrl.u32 %v3036, 16
      %v3071 = vrot.slane %v3069, 7
      %v3073 = vshrl.u32 %v3037, 16
      %v3075 = vrot.slane %v3073, 7
      %v3076 = vshll.u32 %v3037, 16
      %v3078 = vor.u32 %v3075, %v3076
      %v3079 = vsel %vm622, %v3071, %v3078
      %v3081 = vshrl.u32 %v3038, 16
      %v3083 = vrot.slane %v3081, 7
      %v3085 = vshrl.u32 %v3039, 16
      %v3087 = vrot.slane %v3085, 7
      %v3088 = vshll.u32 %v3039, 16
      %v3090 = vor.u32 %v3087, %v3088
      %v3091 = vsel %vm622, %v3083, %v3090
      %v3093 = vshrl.u32 %v3040, 16
      %v3095 = vrot.slane %v3093, 7
      %v3097 = vshrl.u32 %v3041, 16
      %v3099 = vrot.slane %v3097, 7
      %v3100 = vshll.u32 %v3041, 16
      %v3102 = vor.u32 %v3099, %v3100
      %v3103 = vsel %vm622, %v3095, %v3102
      %v3105 = vshrl.u32 %v3042, 16
      %v3107 = vrot.slane %v3105, 7
      %v3109 = vshrl.u32 %v3043, 16
      %v3111 = vrot.slane %v3109, 7
      %v3112 = vshll.u32 %v3043, 16
      %v3114 = vor.u32 %v3111, %v3112
      %v3115 = vsel %vm622, %v3107, %v3114
      %v3117 = vshrl.u32 %v3044, 16
      %v3119 = vrot.slane %v3117, 7
      %v3121 = vshrl.u32 %v3045, 16
      %v3123 = vrot.slane %v3121, 7
      %v3124 = vshll.u32 %v3045, 16
      %v3126 = vor.u32 %v3123, %v3124
      %v3127 = vsel %vm622, %v3119, %v3126
      %v3129 = vshrl.u32 %v3046, 16
      %v3131 = vrot.slane %v3129, 7
      %v3133 = vshrl.u32 %v3047, 16
      %v3135 = vrot.slane %v3133, 7
      %v3136 = vshll.u32 %v3047, 16
      %v3138 = vor.u32 %v3135, %v3136
      %v3139 = vsel %vm622, %v3131, %v3138
      %v3141 = vshrl.u32 %v3048, 16
      %v3143 = vrot.slane %v3141, 7
      %v3145 = vshrl.u32 %v3049, 16
      %v3147 = vrot.slane %v3145, 7
      %v3148 = vshll.u32 %v3049, 16
      %v3150 = vor.u32 %v3147, %v3148
      %v3151 = vsel %vm622, %v3143, %v3150
      %v3153 = vshrl.u32 %v3050, 16
      %v3155 = vrot.slane %v3153, 7
      %v3157 = vshrl.u32 %v3051, 16
      %v3159 = vrot.slane %v3157, 7
      %v3160 = vshll.u32 %v3051, 16
      %v3162 = vor.u32 %v3159, %v3160
      %v3163 = vsel %vm622, %v3155, %v3162
      %v3165 = vshrl.u32 %v3052, 16
      %v3167 = vrot.slane %v3165, 7
      %v3169 = vshrl.u32 %v3053, 16
      %v3171 = vrot.slane %v3169, 7
      %v3172 = vshll.u32 %v3053, 16
      %v3174 = vor.u32 %v3171, %v3172
      %v3175 = vsel %vm622, %v3167, %v3174
      %v3177 = vshrl.u32 %v3054, 16
      %v3179 = vrot.slane %v3177, 7
      %v3181 = vshrl.u32 %v3055, 16
      %v3183 = vrot.slane %v3181, 7
      %v3184 = vshll.u32 %v3055, 16
      %v3186 = vor.u32 %v3183, %v3184
      %v3187 = vsel %vm622, %v3179, %v3186
      %v3189 = vshrl.u32 %v3056, 16
      %v3191 = vrot.slane %v3189, 7
      %v3193 = vshrl.u32 %v3057, 16
      %v3195 = vrot.slane %v3193, 7
      %v3196 = vshll.u32 %v3057, 16
      %v3198 = vor.u32 %v3195, %v3196
      %v3199 = vsel %vm622, %v3191, %v3198
      %v3201 = vshrl.u32 %v3058, 16
      %v3203 = vrot.slane %v3201, 7
      %v3205 = vshrl.u32 %v3059, 16
      %v3207 = vrot.slane %v3205, 7
      %v3208 = vshll.u32 %v3059, 16
      %v3210 = vor.u32 %v3207, %v3208
      %v3211 = vsel %vm622, %v3203, %v3210
      %v3213 = vshrl.u32 %v3060, 16
      %v3215 = vrot.slane %v3213, 7
      %v3217 = vshrl.u32 %v3061, 16
      %v3219 = vrot.slane %v3217, 7
      %v3220 = vshll.u32 %v3061, 16
      %v3222 = vor.u32 %v3219, %v3220
      %v3223 = vsel %vm622, %v3215, %v3222
      %v3225 = vshrl.u32 %v3062, 16
      %v3227 = vrot.slane %v3225, 7
      %v3229 = vshrl.u32 %v3063, 16
      %v3231 = vrot.slane %v3229, 7
      %v3232 = vshll.u32 %v3063, 16
      %v3234 = vor.u32 %v3231, %v3232
      %v3235 = vsel %vm622, %v3227, %v3234
      %v3237 = vshrl.u32 %v3064, 16
      %v3239 = vrot.slane %v3237, 7
      %v3241 = vshrl.u32 %v3065, 16
      %v3243 = vrot.slane %v3241, 7
      %v3244 = vshll.u32 %v3065, 16
      %v3246 = vor.u32 %v3243, %v3244
      %v3247 = vsel %vm622, %v3239, %v3246
      %v3249 = vshrl.u32 %v3066, 16
      %v3251 = vrot.slane %v3249, 7
      %v3253 = vshrl.u32 %v3067, 16
      %v3255 = vrot.slane %v3253, 7
      %v3256 = vshll.u32 %v3067, 16
      %v3258 = vor.u32 %v3255, %v3256
      %v3259 = vsel %vm622, %v3251, %v3258
      %s3276 = scalar_lea.vmem %s315, 384
      %v3277 = vld [vmem:[%s3276] sm:$0xf]
      %v3278 = vld [vmem:[%s3276 + $0x4] sm:$0xf]
      %v3279 = vld [vmem:[%s3276 + $0x8] sm:$0xf]
      %v3280 = vld [vmem:[%s3276 + $0xc] sm:$0xf]
      %v3281 = vld [vmem:[%s3276 + $0x10] sm:$0xf]
      %v3282 = vld [vmem:[%s3276 + $0x14] sm:$0xf]
      %v3283 = vld [vmem:[%s3276 + $0x18] sm:$0xf]
      %v3284 = vld [vmem:[%s3276 + $0x1c] sm:$0xf]
      %v3285 = vld [vmem:[%s3276 + $0x20] sm:$0xf]
      %v3286 = vld [vmem:[%s3276 + $0x24] sm:$0xf]
      %v3287 = vld [vmem:[%s3276 + $0x28] sm:$0xf]
      %v3288 = vld [vmem:[%s3276 + $0x2c] sm:$0xf]
      %v3289 = vld [vmem:[%s3276 + $0x30] sm:$0xf]
      %v3290 = vld [vmem:[%s3276 + $0x34] sm:$0xf]
      %v3291 = vld [vmem:[%s3276 + $0x38] sm:$0xf]
      %v3292 = vld [vmem:[%s3276 + $0x3c] sm:$0xf]
      %v3309 = vunpack.c.l.b16 %v3277
      %v3310 = vunpack.c.l.b16 %v3278
      %v3311 = vunpack.c.l.b16 %v3279
      %v3312 = vunpack.c.l.b16 %v3280
      %v3313 = vunpack.c.l.b16 %v3281
      %v3314 = vunpack.c.l.b16 %v3282
      %v3315 = vunpack.c.l.b16 %v3283
      %v3316 = vunpack.c.l.b16 %v3284
      %v3317 = vunpack.c.l.b16 %v3285
      %v3318 = vunpack.c.l.b16 %v3286
      %v3319 = vunpack.c.l.b16 %v3287
      %v3320 = vunpack.c.l.b16 %v3288
      %v3321 = vunpack.c.l.b16 %v3289
      %v3322 = vunpack.c.l.b16 %v3290
      %v3323 = vunpack.c.l.b16 %v3291
      %v3324 = vunpack.c.l.b16 %v3292
      %v3325 = vpack.c.b16 %v3310, %v3309
      %v3326 = vpack.c.b16 %v3312, %v3311
      %v3327 = vpack.c.b16 %v3314, %v3313
      %v3328 = vpack.c.b16 %v3316, %v3315
      %v3329 = vpack.c.b16 %v3318, %v3317
      %v3330 = vpack.c.b16 %v3320, %v3319
      %v3331 = vpack.c.b16 %v3322, %v3321
      %v3332 = vpack.c.b16 %v3324, %v3323
      %3341 = vmatprep.subr.bf16.mxu0 0
      %3342 = vmatpush1.bf16.msra.mxu0 %v3325
      %3343 = vmatprep.subr.bf16.mxu0 0
      %3344 = vmatpush1.bf16.msra.mxu0 %v3326
      %3345 = vmatprep.subr.bf16.mxu0 0
      %3346 = vmatpush1.bf16.msra.mxu0 %v3327
      %3347 = vmatprep.subr.bf16.mxu0 0
      %3348 = vmatpush1.bf16.msra.mxu0 %v3328
      %3349 = vmatprep.subr.bf16.mxu0 0
      %3350 = vmatpush1.bf16.msra.mxu0 %v3329
      %3351 = vmatprep.subr.bf16.mxu0 0
      %3352 = vmatpush1.bf16.msra.mxu0 %v3330
      %3353 = vmatprep.subr.bf16.mxu0 0
      %3354 = vmatpush1.bf16.msra.mxu0 %v3331
      %3355 = vmatprep.subr.bf16.mxu0 0
      %3356 = vmatpush1.bf16.msra.mxu0 %v3332
      %3357 = vmatprep.subr.bf16.mxu0 0
      %3358 = vmatpush1.bf16.msra.mxu0 0
      %3359 = vmatprep.subr.bf16.mxu0 0
      %3360 = vmatpush1.bf16.msra.mxu0 0
      %3361 = vmatprep.subr.bf16.mxu0 0
      %3362 = vmatpush1.bf16.msra.mxu0 0
      %3363 = vmatprep.subr.bf16.mxu0 0
      %3364 = vmatpush1.bf16.msra.mxu0 0
      %3365 = vmatprep.subr.bf16.mxu0 0
      %3366 = vmatpush1.bf16.msra.mxu0 0
      %3367 = vmatprep.subr.bf16.mxu0 0
      %3368 = vmatpush1.bf16.msra.mxu0 0
      %3369 = vmatprep.subr.bf16.mxu0 0
      %3370 = vmatpush1.bf16.msra.mxu0 0
      %3371 = vmatprep.subr.bf16.mxu0 0
      %3372 = vmatpush1.bf16.msra.mxu0 0
      %3373 = vmatprep.mubr.bf16.mxu0 0
      %3374 = vmatmul.mubr.bf16.gmra.mrb[0].mxu0 %v3079
      %v3375 = vpop.f32.mrb[0].mxu0
      %v3376 = vadd.f32 0.0, %v3375
      %v3377 = vpop.f32.mrb[0].mxu0
      %v3378 = vpop.f32.mrb[0].mxu0
      %v3379 = vadd.f32 0.0, %v3378
      %v3380 = vpop.f32.mrb[0].mxu0
      %3381 = vmatprep.mubr.bf16.mxu0 0
      %3382 = vmatmul.mubr.bf16.gmra.mrb[0].mxu0 %v3091
      %v3383 = vpop.f32.mrb[0].mxu0
      %v3384 = vadd.f32 0.0, %v3383
      %v3385 = vpop.f32.mrb[0].mxu0
      %v3386 = vpop.f32.mrb[0].mxu0
      %v3387 = vadd.f32 0.0, %v3386
      %v3388 = vpop.f32.mrb[0].mxu0
      %3389 = vmatprep.mubr.bf16.mxu0 0
      %3390 = vmatmul.mubr.bf16.gmra.mrb[0].mxu0 %v3103
      %v3391 = vpop.f32.mrb[0].mxu0
      %v3392 = vadd.f32 0.0, %v3391
      %v3393 = vpop.f32.mrb[0].mxu0
      %v3394 = vpop.f32.mrb[0].mxu0
      %v3395 = vadd.f32 0.0, %v3394
      %v3396 = vpop.f32.mrb[0].mxu0
      %3397 = vmatprep.mubr.bf16.mxu0 0
      %3398 = vmatmul.mubr.bf16.gmra.mrb[0].mxu0 %v3115
      %v3399 = vpop.f32.mrb[0].mxu0
      %v3400 = vadd.f32 0.0, %v3399
      %v3401 = vpop.f32.mrb[0].mxu0
      %v3402 = vpop.f32.mrb[0].mxu0
      %v3403 = vadd.f32 0.0, %v3402
      %v3404 = vpop.f32.mrb[0].mxu0
      %3405 = vmatprep.mubr.bf16.mxu0 0
      %3406 = vmatmul.mubr.bf16.gmra.mrb[0].mxu0 %v3127
      %v3407 = vpop.f32.mrb[0].mxu0
      %v3408 = vadd.f32 0.0, %v3407
      %v3409 = vpop.f32.mrb[0].mxu0
      %v3410 = vpop.f32.mrb[0].mxu0
      %v3411 = vadd.f32 0.0, %v3410
      %v3412 = vpop.f32.mrb[0].mxu0
      %3413 = vmatprep.mubr.bf16.mxu0 0
      %3414 = vmatmul.mubr.bf16.gmra.mrb[0].mxu0 %v3139
      %v3415 = vpop.f32.mrb[0].mxu0
      %v3416 = vadd.f32 0.0, %v3415
      %v3417 = vpop.f32.mrb[0].mxu0
      %v3418 = vpop.f32.mrb[0].mxu0
      %v3419 = vadd.f32 0.0, %v3418
      %v3420 = vpop.f32.mrb[0].mxu0
      %3421 = vmatprep.mubr.bf16.mxu0 0
      %3422 = vmatmul.mubr.bf16.gmra.mrb[0].mxu0 %v3151
      %v3423 = vpop.f32.mrb[0].mxu0
      %v3424 = vadd.f32 0.0, %v3423
      %v3425 = vpop.f32.mrb[0].mxu0
      %v3426 = vpop.f32.mrb[0].mxu0
      %v3427 = vadd.f32 0.0, %v3426
      %v3428 = vpop.f32.mrb[0].mxu0
      %3429 = vmatprep.mubr.bf16.mxu0 0
      %3430 = vmatmul.mubr.bf16.gmra.mrb[0].mxu0 %v3163
      %v3431 = vpop.f32.mrb[0].mxu0
      %v3432 = vadd.f32 0.0, %v3431
      %v3433 = vpop.f32.mrb[0].mxu0
      %v3434 = vpop.f32.mrb[0].mxu0
      %v3435 = vadd.f32 0.0, %v3434
      %v3436 = vpop.f32.mrb[0].mxu0
      %3437 = vmatprep.mubr.bf16.mxu0 0
      %3438 = vmatmul.mubr.bf16.gmra.mrb[0].mxu0 %v3175
      %v3439 = vpop.f32.mrb[0].mxu0
      %v3440 = vadd.f32 0.0, %v3439
      %v3441 = vpop.f32.mrb[0].mxu0
      %v3442 = vpop.f32.mrb[0].mxu0
      %v3443 = vadd.f32 0.0, %v3442
      %v3444 = vpop.f32.mrb[0].mxu0
      %3445 = vmatprep.mubr.bf16.mxu0 0
      %3446 = vmatmul.mubr.bf16.gmra.mrb[0].mxu0 %v3187
      %v3447 = vpop.f32.mrb[0].mxu0
      %v3448 = vadd.f32 0.0, %v3447
      %v3449 = vpop.f32.mrb[0].mxu0
      %v3450 = vpop.f32.mrb[0].mxu0
      %v3451 = vadd.f32 0.0, %v3450
      %v3452 = vpop.f32.mrb[0].mxu0
      %3453 = vmatprep.mubr.bf16.mxu0 0
      %3454 = vmatmul.mubr.bf16.gmra.mrb[0].mxu0 %v3199
      %v3455 = vpop.f32.mrb[0].mxu0
      %v3456 = vadd.f32 0.0, %v3455
      %v3457 = vpop.f32.mrb[0].mxu0
      %v3458 = vpop.f32.mrb[0].mxu0
      %v3459 = vadd.f32 0.0, %v3458
      %v3460 = vpop.f32.mrb[0].mxu0
      %3461 = vmatprep.mubr.bf16.mxu0 0
      %3462 = vmatmul.mubr.bf16.gmra.mrb[0].mxu0 %v3211
      %v3463 = vpop.f32.mrb[0].mxu0
      %v3464 = vadd.f32 0.0, %v3463
      %v3465 = vpop.f32.mrb[0].mxu0
      %v3466 = vpop.f32.mrb[0].mxu0
      %v3467 = vadd.f32 0.0, %v3466
      %v3468 = vpop.f32.mrb[0].mxu0
      %3469 = vmatprep.mubr.bf16.mxu0 0
      %3470 = vmatmul.mubr.bf16.gmra.mrb[0].mxu0 %v3223
      %v3471 = vpop.f32.mrb[0].mxu0
      %v3472 = vadd.f32 0.0, %v3471
      %v3473 = vpop.f32.mrb[0].mxu0
      %v3474 = vpop.f32.mrb[0].mxu0
      %v3475 = vadd.f32 0.0, %v3474
      %v3476 = vpop.f32.mrb[0].mxu0
      %3477 = vmatprep.mubr.bf16.mxu0 0
      %3478 = vmatmul.mubr.bf16.gmra.mrb[0].mxu0 %v3235
      %v3479 = vpop.f32.mrb[0].mxu0
      %v3480 = vadd.f32 0.0, %v3479
      %v3481 = vpop.f32.mrb[0].mxu0
      %v3482 = vpop.f32.mrb[0].mxu0
      %v3483 = vadd.f32 0.0, %v3482
      %v3484 = vpop.f32.mrb[0].mxu0
      %3485 = vmatprep.mubr.bf16.mxu0 0
      %3486 = vmatmul.mubr.bf16.gmra.mrb[0].mxu0 %v3247
      %v3487 = vpop.f32.mrb[0].mxu0
      %v3488 = vadd.f32 0.0, %v3487
      %v3489 = vpop.f32.mrb[0].mxu0
      %v3490 = vpop.f32.mrb[0].mxu0
      %v3491 = vadd.f32 0.0, %v3490
      %v3492 = vpop.f32.mrb[0].mxu0
      %3493 = vmatprep.mubr.bf16.mxu0 0
      %3494 = vmatmul.mubr.bf16.gmra.mrb[0].mxu0 %v3259
      %v3495 = vpop.f32.mrb[0].mxu0
      %v3496 = vadd.f32 0.0, %v3495
      %v3497 = vpop.f32.mrb[0].mxu0
      %v3498 = vpop.f32.mrb[0].mxu0
      %v3499 = vadd.f32 0.0, %v3498
      %v3500 = vpop.f32.mrb[0].mxu0
      %3501 = vdwg.mxu0
      %v3502 = vadd.f32 %v3003, %v3376
      %v3503 = vadd.f32 %v3004, %v3379
      %v3504 = vadd.f32 %v3005, %v3384
      %v3505 = vadd.f32 %v3006, %v3387
      %v3506 = vadd.f32 %v3007, %v3392
      %v3507 = vadd.f32 %v3008, %v3395
      %v3508 = vadd.f32 %v3009, %v3400
      %v3509 = vadd.f32 %v3010, %v3403
      %v3510 = vadd.f32 %v3011, %v3408
      %v3511 = vadd.f32 %v3012, %v3411
      %v3512 = vadd.f32 %v3013, %v3416
      %v3513 = vadd.f32 %v3014, %v3419
      %v3514 = vadd.f32 %v3015, %v3424
      %v3515 = vadd.f32 %v3016, %v3427
      %v3516 = vadd.f32 %v3017, %v3432
      %v3517 = vadd.f32 %v3018, %v3435
      %v3518 = vadd.f32 %v3019, %v3440
      %v3519 = vadd.f32 %v3020, %v3443
      %v3520 = vadd.f32 %v3021, %v3448
      %v3521 = vadd.f32 %v3022, %v3451
      %v3522 = vadd.f32 %v3023, %v3456
      %v3523 = vadd.f32 %v3024, %v3459
      %v3524 = vadd.f32 %v3025, %v3464
      %v3525 = vadd.f32 %v3026, %v3467
      %v3526 = vadd.f32 %v3027, %v3472
      %v3527 = vadd.f32 %v3028, %v3475
      %v3528 = vadd.f32 %v3029, %v3480
      %v3529 = vadd.f32 %v3030, %v3483
      %v3530 = vadd.f32 %v3031, %v3488
      %v3531 = vadd.f32 %v3032, %v3491
      %v3532 = vadd.f32 %v3033, %v3496
      %v3533 = vadd.f32 %v3034, %v3499
      %s3534 = scalar_lea.vmem %s315, 448
      %v3535 = vld [vmem:[%s3534] sm:$0xf]
      %v3536 = vld [vmem:[%s3534 + $0x4] sm:$0xf]
      %v3537 = vld [vmem:[%s3534 + $0x8] sm:$0xf]
      %v3538 = vld [vmem:[%s3534 + $0xc] sm:$0xf]
      %v3539 = vld [vmem:[%s3534 + $0x10] sm:$0xf]
      %v3540 = vld [vmem:[%s3534 + $0x14] sm:$0xf]
      %v3541 = vld [vmem:[%s3534 + $0x18] sm:$0xf]
      %v3542 = vld [vmem:[%s3534 + $0x1c] sm:$0xf]
      %v3543 = vld [vmem:[%s3534 + $0x20] sm:$0xf]
      %v3544 = vld [vmem:[%s3534 + $0x24] sm:$0xf]
      %v3545 = vld [vmem:[%s3534 + $0x28] sm:$0xf]
      %v3546 = vld [vmem:[%s3534 + $0x2c] sm:$0xf]
      %v3547 = vld [vmem:[%s3534 + $0x30] sm:$0xf]
      %v3548 = vld [vmem:[%s3534 + $0x34] sm:$0xf]
      %v3549 = vld [vmem:[%s3534 + $0x38] sm:$0xf]
      %v3550 = vld [vmem:[%s3534 + $0x3c] sm:$0xf]
      %v3567 = vunpack.c.l.b16 %v3535
      %v3568 = vunpack.c.l.b16 %v3536
      %v3569 = vunpack.c.l.b16 %v3537
      %v3570 = vunpack.c.l.b16 %v3538
      %v3571 = vunpack.c.l.b16 %v3539
      %v3572 = vunpack.c.l.b16 %v3540
      %v3573 = vunpack.c.l.b16 %v3541
      %v3574 = vunpack.c.l.b16 %v3542
      %v3575 = vunpack.c.l.b16 %v3543
      %v3576 = vunpack.c.l.b16 %v3544
      %v3577 = vunpack.c.l.b16 %v3545
      %v3578 = vunpack.c.l.b16 %v3546
      %v3579 = vunpack.c.l.b16 %v3547
      %v3580 = vunpack.c.l.b16 %v3548
      %v3581 = vunpack.c.l.b16 %v3549
      %v3582 = vunpack.c.l.b16 %v3550
      %v3583 = vpack.c.b16 %v3568, %v3567
      %v3584 = vpack.c.b16 %v3570, %v3569
      %v3585 = vpack.c.b16 %v3572, %v3571
      %v3586 = vpack.c.b16 %v3574, %v3573
      %v3587 = vpack.c.b16 %v3576, %v3575
      %v3588 = vpack.c.b16 %v3578, %v3577
      %v3589 = vpack.c.b16 %v3580, %v3579
      %v3590 = vpack.c.b16 %v3582, %v3581
      %3599 = vmatprep.subr.bf16.mxu0 0
      %3600 = vmatpush1.bf16.msra.mxu0 %v3583
      %3601 = vmatprep.subr.bf16.mxu0 0
      %3602 = vmatpush1.bf16.msra.mxu0 %v3584
      %3603 = vmatprep.subr.bf16.mxu0 0
      %3604 = vmatpush1.bf16.msra.mxu0 %v3585
      %3605 = vmatprep.subr.bf16.mxu0 0
      %3606 = vmatpush1.bf16.msra.mxu0 %v3586
      %3607 = vmatprep.subr.bf16.mxu0 0
      %3608 = vmatpush1.bf16.msra.mxu0 %v3587
      %3609 = vmatprep.subr.bf16.mxu0 0
      %3610 = vmatpush1.bf16.msra.mxu0 %v3588
      %3611 = vmatprep.subr.bf16.mxu0 0
      %3612 = vmatpush1.bf16.msra.mxu0 %v3589
      %3613 = vmatprep.subr.bf16.mxu0 0
      %3614 = vmatpush1.bf16.msra.mxu0 %v3590
      %3615 = vmatprep.subr.bf16.mxu0 0
      %3616 = vmatpush1.bf16.msra.mxu0 0
      %3617 = vmatprep.subr.bf16.mxu0 0
      %3618 = vmatpush1.bf16.msra.mxu0 0
      %3619 = vmatprep.subr.bf16.mxu0 0
      %3620 = vmatpush1.bf16.msra.mxu0 0
      %3621 = vmatprep.subr.bf16.mxu0 0
      %3622 = vmatpush1.bf16.msra.mxu0 0
      %3623 = vmatprep.subr.bf16.mxu0 0
      %3624 = vmatpush1.bf16.msra.mxu0 0
      %3625 = vmatprep.subr.bf16.mxu0 0
      %3626 = vmatpush1.bf16.msra.mxu0 0
      %3627 = vmatprep.subr.bf16.mxu0 0
      %3628 = vmatpush1.bf16.msra.mxu0 0
      %3629 = vmatprep.subr.bf16.mxu0 0
      %3630 = vmatpush1.bf16.msra.mxu0 0
      %3631 = vmatprep.mubr.bf16.mxu0 0
      %3632 = vmatmul.mubr.bf16.gmra.mrb[0].mxu0 %v3037
      %v3633 = vpop.f32.mrb[0].mxu0
      %v3634 = vadd.f32 0.0, %v3633
      %v3635 = vpop.f32.mrb[0].mxu0
      %v3636 = vpop.f32.mrb[0].mxu0
      %v3637 = vadd.f32 0.0, %v3636
      %v3638 = vpop.f32.mrb[0].mxu0
      %3639 = vmatprep.mubr.bf16.mxu0 0
      %3640 = vmatmul.mubr.bf16.gmra.mrb[0].mxu0 %v3039
      %v3641 = vpop.f32.mrb[0].mxu0
      %v3642 = vadd.f32 0.0, %v3641
      %v3643 = vpop.f32.mrb[0].mxu0
      %v3644 = vpop.f32.mrb[0].mxu0
      %v3645 = vadd.f32 0.0, %v3644
      %v3646 = vpop.f32.mrb[0].mxu0
      %3647 = vmatprep.mubr.bf16.mxu0 0
      %3648 = vmatmul.mubr.bf16.gmra.mrb[0].mxu0 %v3041
      %v3649 = vpop.f32.mrb[0].mxu0
      %v3650 = vadd.f32 0.0, %v3649
      %v3651 = vpop.f32.mrb[0].mxu0
      %v3652 = vpop.f32.mrb[0].mxu0
      %v3653 = vadd.f32 0.0, %v3652
      %v3654 = vpop.f32.mrb[0].mxu0
      %3655 = vmatprep.mubr.bf16.mxu0 0
      %3656 = vmatmul.mubr.bf16.gmra.mrb[0].mxu0 %v3043
      %v3657 = vpop.f32.mrb[0].mxu0
      %v3658 = vadd.f32 0.0, %v3657
      %v3659 = vpop.f32.mrb[0].mxu0
      %v3660 = vpop.f32.mrb[0].mxu0
      %v3661 = vadd.f32 0.0, %v3660
      %v3662 = vpop.f32.mrb[0].mxu0
      %3663 = vmatprep.mubr.bf16.mxu0 0
      %3664 = vmatmul.mubr.bf16.gmra.mrb[0].mxu0 %v3045
      %v3665 = vpop.f32.mrb[0].mxu0
      %v3666 = vadd.f32 0.0, %v3665
      %v3667 = vpop.f32.mrb[0].mxu0
      %v3668 = vpop.f32.mrb[0].mxu0
      %v3669 = vadd.f32 0.0, %v3668
      %v3670 = vpop.f32.mrb[0].mxu0
      %3671 = vmatprep.mubr.bf16.mxu0 0
      %3672 = vmatmul.mubr.bf16.gmra.mrb[0].mxu0 %v3047
      %v3673 = vpop.f32.mrb[0].mxu0
      %v3674 = vadd.f32 0.0, %v3673
      %v3675 = vpop.f32.mrb[0].mxu0
      %v3676 = vpop.f32.mrb[0].mxu0
      %v3677 = vadd.f32 0.0, %v3676
      %v3678 = vpop.f32.mrb[0].mxu0
      %3679 = vmatprep.mubr.bf16.mxu0 0
      %3680 = vmatmul.mubr.bf16.gmra.mrb[0].mxu0 %v3049
      %v3681 = vpop.f32.mrb[0].mxu0
      %v3682 = vadd.f32 0.0, %v3681
      %v3683 = vpop.f32.mrb[0].mxu0
      %v3684 = vpop.f32.mrb[0].mxu0
      %v3685 = vadd.f32 0.0, %v3684
      %v3686 = vpop.f32.mrb[0].mxu0
      %3687 = vmatprep.mubr.bf16.mxu0 0
      %3688 = vmatmul.mubr.bf16.gmra.mrb[0].mxu0 %v3051
      %v3689 = vpop.f32.mrb[0].mxu0
      %v3690 = vadd.f32 0.0, %v3689
      %v3691 = vpop.f32.mrb[0].mxu0
      %v3692 = vpop.f32.mrb[0].mxu0
      %v3693 = vadd.f32 0.0, %v3692
      %v3694 = vpop.f32.mrb[0].mxu0
      %3695 = vmatprep.mubr.bf16.mxu0 0
      %3696 = vmatmul.mubr.bf16.gmra.mrb[0].mxu0 %v3053
      %v3697 = vpop.f32.mrb[0].mxu0
      %v3698 = vadd.f32 0.0, %v3697
      %v3699 = vpop.f32.mrb[0].mxu0
      %v3700 = vpop.f32.mrb[0].mxu0
      %v3701 = vadd.f32 0.0, %v3700
      %v3702 = vpop.f32.mrb[0].mxu0
      %3703 = vmatprep.mubr.bf16.mxu0 0
      %3704 = vmatmul.mubr.bf16.gmra.mrb[0].mxu0 %v3055
      %v3705 = vpop.f32.mrb[0].mxu0
      %v3706 = vadd.f32 0.0, %v3705
      %v3707 = vpop.f32.mrb[0].mxu0
      %v3708 = vpop.f32.mrb[0].mxu0
      %v3709 = vadd.f32 0.0, %v3708
      %v3710 = vpop.f32.mrb[0].mxu0
      %3711 = vmatprep.mubr.bf16.mxu0 0
      %3712 = vmatmul.mubr.bf16.gmra.mrb[0].mxu0 %v3057
      %v3713 = vpop.f32.mrb[0].mxu0
      %v3714 = vadd.f32 0.0, %v3713
      %v3715 = vpop.f32.mrb[0].mxu0
      %v3716 = vpop.f32.mrb[0].mxu0
      %v3717 = vadd.f32 0.0, %v3716
      %v3718 = vpop.f32.mrb[0].mxu0
      %3719 = vmatprep.mubr.bf16.mxu0 0
      %3720 = vmatmul.mubr.bf16.gmra.mrb[0].mxu0 %v3059
      %v3721 = vpop.f32.mrb[0].mxu0
      %v3722 = vadd.f32 0.0, %v3721
      %v3723 = vpop.f32.mrb[0].mxu0
      %v3724 = vpop.f32.mrb[0].mxu0
      %v3725 = vadd.f32 0.0, %v3724
      %v3726 = vpop.f32.mrb[0].mxu0
      %3727 = vmatprep.mubr.bf16.mxu0 0
      %3728 = vmatmul.mubr.bf16.gmra.mrb[0].mxu0 %v3061
      %v3729 = vpop.f32.mrb[0].mxu0
      %v3730 = vadd.f32 0.0, %v3729
      %v3731 = vpop.f32.mrb[0].mxu0
      %v3732 = vpop.f32.mrb[0].mxu0
      %v3733 = vadd.f32 0.0, %v3732
      %v3734 = vpop.f32.mrb[0].mxu0
      %3735 = vmatprep.mubr.bf16.mxu0 0
      %3736 = vmatmul.mubr.bf16.gmra.mrb[0].mxu0 %v3063
      %v3737 = vpop.f32.mrb[0].mxu0
      %v3738 = vadd.f32 0.0, %v3737
      %v3739 = vpop.f32.mrb[0].mxu0
      %v3740 = vpop.f32.mrb[0].mxu0
      %v3741 = vadd.f32 0.0, %v3740
      %v3742 = vpop.f32.mrb[0].mxu0
      %3743 = vmatprep.mubr.bf16.mxu0 0
      %3744 = vmatmul.mubr.bf16.gmra.mrb[0].mxu0 %v3065
      %v3745 = vpop.f32.mrb[0].mxu0
      %v3746 = vadd.f32 0.0, %v3745
      %v3747 = vpop.f32.mrb[0].mxu0
      %v3748 = vpop.f32.mrb[0].mxu0
      %v3749 = vadd.f32 0.0, %v3748
      %v3750 = vpop.f32.mrb[0].mxu0
      %3751 = vmatprep.mubr.bf16.mxu0 0
      %3752 = vmatmul.mubr.bf16.gmra.mrb[0].mxu0 %v3067
      %v3753 = vpop.f32.mrb[0].mxu0
      %v3754 = vadd.f32 0.0, %v3753
      %v3755 = vpop.f32.mrb[0].mxu0
      %v3756 = vpop.f32.mrb[0].mxu0
      %v3757 = vadd.f32 0.0, %v3756
      %v3758 = vpop.f32.mrb[0].mxu0
      %3759 = vdwg.mxu0
      %v3760 = vadd.f32 %v3502, %v3634
      %v3761 = vadd.f32 %v3503, %v3637
      %v3762 = vadd.f32 %v3504, %v3642
      %v3763 = vadd.f32 %v3505, %v3645
      %v3764 = vadd.f32 %v3506, %v3650
      %v3765 = vadd.f32 %v3507, %v3653
      %v3766 = vadd.f32 %v3508, %v3658
      %v3767 = vadd.f32 %v3509, %v3661
      %v3768 = vadd.f32 %v3510, %v3666
      %v3769 = vadd.f32 %v3511, %v3669
      %v3770 = vadd.f32 %v3512, %v3674
      %v3771 = vadd.f32 %v3513, %v3677
      %v3772 = vadd.f32 %v3514, %v3682
      %v3773 = vadd.f32 %v3515, %v3685
      %v3774 = vadd.f32 %v3516, %v3690
      %v3775 = vadd.f32 %v3517, %v3693
      %v3776 = vadd.f32 %v3518, %v3698
      %v3777 = vadd.f32 %v3519, %v3701
      %v3778 = vadd.f32 %v3520, %v3706
      %v3779 = vadd.f32 %v3521, %v3709
      %v3780 = vadd.f32 %v3522, %v3714
      %v3781 = vadd.f32 %v3523, %v3717
      %v3782 = vadd.f32 %v3524, %v3722
      %v3783 = vadd.f32 %v3525, %v3725
      %v3784 = vadd.f32 %v3526, %v3730
      %v3785 = vadd.f32 %v3527, %v3733
      %v3786 = vadd.f32 %v3528, %v3738
      %v3787 = vadd.f32 %v3529, %v3741
      %v3788 = vadd.f32 %v3530, %v3746
      %v3789 = vadd.f32 %v3531, %v3749
      %v3790 = vadd.f32 %v3532, %v3754
      %v3791 = vadd.f32 %v3533, %v3757
      %v3792 = vld [vmem:[%s3035 + $0x8] sm:$0xff]
      %v3793 = vld [vmem:[%s3035 + $0x10] sm:$0x1]
      %v3794 = vld [vmem:[%s3035 + $0x20] sm:$0xff]
      %v3795 = vld [vmem:[%s3035 + $0x28] sm:$0x1]
      %v3796 = vld [vmem:[%s3035 + $0x38] sm:$0xff]
      %v3797 = vld [vmem:[%s3035 + $0x40] sm:$0x1]
      %v3798 = vld [vmem:[%s3035 + $0x50] sm:$0xff]
      %v3799 = vld [vmem:[%s3035 + $0x58] sm:$0x1]
      %v3800 = vld [vmem:[%s3035 + $0x68] sm:$0xff]
      %v3801 = vld [vmem:[%s3035 + $0x70] sm:$0x1]
      %v3802 = vld [vmem:[%s3035 + $0x80] sm:$0xff]
      %v3803 = vld [vmem:[%s3035 + $0x88] sm:$0x1]
      %v3804 = vld [vmem:[%s3035 + $0x98] sm:$0xff]
      %v3805 = vld [vmem:[%s3035 + $0xa0] sm:$0x1]
      %v3806 = vld [vmem:[%s3035 + $0xb0] sm:$0xff]
      %v3807 = vld [vmem:[%s3035 + $0xb8] sm:$0x1]
      %v3808 = vld [vmem:[%s3035 + $0xc8] sm:$0xff]
      %v3809 = vld [vmem:[%s3035 + $0xd0] sm:$0x1]
      %v3810 = vld [vmem:[%s3035 + $0xe0] sm:$0xff]
      %v3811 = vld [vmem:[%s3035 + $0xe8] sm:$0x1]
      %v3812 = vld [vmem:[%s3035 + $0xf8] sm:$0xff]
      %v3813 = vld [vmem:[%s3035 + $0x100] sm:$0x1]
      %v3814 = vld [vmem:[%s3035 + $0x110] sm:$0xff]
      %v3815 = vld [vmem:[%s3035 + $0x118] sm:$0x1]
      %v3816 = vld [vmem:[%s3035 + $0x128] sm:$0xff]
      %v3817 = vld [vmem:[%s3035 + $0x130] sm:$0x1]
      %v3818 = vld [vmem:[%s3035 + $0x140] sm:$0xff]
      %v3819 = vld [vmem:[%s3035 + $0x148] sm:$0x1]
      %v3820 = vld [vmem:[%s3035 + $0x158] sm:$0xff]
      %v3821 = vld [vmem:[%s3035 + $0x160] sm:$0x1]
      %v3822 = vld [vmem:[%s3035 + $0x170] sm:$0xff]
      %v3823 = vld [vmem:[%s3035 + $0x178] sm:$0x1]
      %v3825 = vshrl.u32 %v3792, 16
      %v3827 = vshll.u32 %v3792, 16
      %v3829 = vrot.slane %v3827, 1
      %v3830 = vor.u32 %v3825, %v3829
      %v3832 = vshll.u32 %v3793, 16
      %v3834 = vrot.slane %v3832, 1
      %v3835 = vsel %vm1314, %v3830, %v3834
      %v3837 = vshrl.u32 %v3794, 16
      %v3839 = vshll.u32 %v3794, 16
      %v3841 = vrot.slane %v3839, 1
      %v3842 = vor.u32 %v3837, %v3841
      %v3844 = vshll.u32 %v3795, 16
      %v3846 = vrot.slane %v3844, 1
      %v3847 = vsel %vm1314, %v3842, %v3846
      %v3849 = vshrl.u32 %v3796, 16
      %v3851 = vshll.u32 %v3796, 16
      %v3853 = vrot.slane %v3851, 1
      %v3854 = vor.u32 %v3849, %v3853
      %v3856 = vshll.u32 %v3797, 16
      %v3858 = vrot.slane %v3856, 1
      %v3859 = vsel %vm1314, %v3854, %v3858
      %v3861 = vshrl.u32 %v3798, 16
      %v3863 = vshll.u32 %v3798, 16
      %v3865 = vrot.slane %v3863, 1
      %v3866 = vor.u32 %v3861, %v3865
      %v3868 = vshll.u32 %v3799, 16
      %v3870 = vrot.slane %v3868, 1
      %v3871 = vsel %vm1314, %v3866, %v3870
      %v3873 = vshrl.u32 %v3800, 16
      %v3875 = vshll.u32 %v3800, 16
      %v3877 = vrot.slane %v3875, 1
      %v3878 = vor.u32 %v3873, %v3877
      %v3880 = vshll.u32 %v3801, 16
      %v3882 = vrot.slane %v3880, 1
      %v3883 = vsel %vm1314, %v3878, %v3882
      %v3885 = vshrl.u32 %v3802, 16
      %v3887 = vshll.u32 %v3802, 16
      %v3889 = vrot.slane %v3887, 1
      %v3890 = vor.u32 %v3885, %v3889
      %v3892 = vshll.u32 %v3803, 16
      %v3894 = vrot.slane %v3892, 1
      %v3895 = vsel %vm1314, %v3890, %v3894
      %v3897 = vshrl.u32 %v3804, 16
      %v3899 = vshll.u32 %v3804, 16
      %v3901 = vrot.slane %v3899, 1
      %v3902 = vor.u32 %v3897, %v3901
      %v3904 = vshll.u32 %v3805, 16
      %v3906 = vrot.slane %v3904, 1
      %v3907 = vsel %vm1314, %v3902, %v3906
      %v3909 = vshrl.u32 %v3806, 16
      %v3911 = vshll.u32 %v3806, 16
      %v3913 = vrot.slane %v3911, 1
      %v3914 = vor.u32 %v3909, %v3913
      %v3916 = vshll.u32 %v3807, 16
      %v3918 = vrot.slane %v3916, 1
      %v3919 = vsel %vm1314, %v3914, %v3918
      %v3921 = vshrl.u32 %v3808, 16
      %v3923 = vshll.u32 %v3808, 16
      %v3925 = vrot.slane %v3923, 1
      %v3926 = vor.u32 %v3921, %v3925
      %v3928 = vshll.u32 %v3809, 16
      %v3930 = vrot.slane %v3928, 1
      %v3931 = vsel %vm1314, %v3926, %v3930
      %v3933 = vshrl.u32 %v3810, 16
      %v3935 = vshll.u32 %v3810, 16
      %v3937 = vrot.slane %v3935, 1
      %v3938 = vor.u32 %v3933, %v3937
      %v3940 = vshll.u32 %v3811, 16
      %v3942 = vrot.slane %v3940, 1
      %v3943 = vsel %vm1314, %v3938, %v3942
      %v3945 = vshrl.u32 %v3812, 16
      %v3947 = vshll.u32 %v3812, 16
      %v3949 = vrot.slane %v3947, 1
      %v3950 = vor.u32 %v3945, %v3949
      %v3952 = vshll.u32 %v3813, 16
      %v3954 = vrot.slane %v3952, 1
      %v3955 = vsel %vm1314, %v3950, %v3954
      %v3957 = vshrl.u32 %v3814, 16
      %v3959 = vshll.u32 %v3814, 16
      %v3961 = vrot.slane %v3959, 1
      %v3962 = vor.u32 %v3957, %v3961
      %v3964 = vshll.u32 %v3815, 16
      %v3966 = vrot.slane %v3964, 1
      %v3967 = vsel %vm1314, %v3962, %v3966
      %v3969 = vshrl.u32 %v3816, 16
      %v3971 = vshll.u32 %v3816, 16
      %v3973 = vrot.slane %v3971, 1
      %v3974 = vor.u32 %v3969, %v3973
      %v3976 = vshll.u32 %v3817, 16
      %v3978 = vrot.slane %v3976, 1
      %v3979 = vsel %vm1314, %v3974, %v3978
      %v3981 = vshrl.u32 %v3818, 16
      %v3983 = vshll.u32 %v3818, 16
      %v3985 = vrot.slane %v3983, 1
      %v3986 = vor.u32 %v3981, %v3985
      %v3988 = vshll.u32 %v3819, 16
      %v3990 = vrot.slane %v3988, 1
      %v3991 = vsel %vm1314, %v3986, %v3990
      %v3993 = vshrl.u32 %v3820, 16
      %v3995 = vshll.u32 %v3820, 16
      %v3997 = vrot.slane %v3995, 1
      %v3998 = vor.u32 %v3993, %v3997
      %v4000 = vshll.u32 %v3821, 16
      %v4002 = vrot.slane %v4000, 1
      %v4003 = vsel %vm1314, %v3998, %v4002
      %v4005 = vshrl.u32 %v3822, 16
      %v4007 = vshll.u32 %v3822, 16
      %v4009 = vrot.slane %v4007, 1
      %v4010 = vor.u32 %v4005, %v4009
      %v4012 = vshll.u32 %v3823, 16
      %v4014 = vrot.slane %v4012, 1
      %v4015 = vsel %vm1314, %v4010, %v4014
      %s4032 = scalar_lea.vmem %s315, 512
      %v4033 = vld [vmem:[%s4032] sm:$0xf]
      %v4034 = vld [vmem:[%s4032 + $0x4] sm:$0xf]
      %v4035 = vld [vmem:[%s4032 + $0x8] sm:$0xf]
      %v4036 = vld [vmem:[%s4032 + $0xc] sm:$0xf]
      %v4037 = vld [vmem:[%s4032 + $0x10] sm:$0xf]
      %v4038 = vld [vmem:[%s4032 + $0x14] sm:$0xf]
      %v4039 = vld [vmem:[%s4032 + $0x18] sm:$0xf]
      %v4040 = vld [vmem:[%s4032 + $0x1c] sm:$0xf]
      %v4041 = vld [vmem:[%s4032 + $0x20] sm:$0xf]
      %v4042 = vld [vmem:[%s4032 + $0x24] sm:$0xf]
      %v4043 = vld [vmem:[%s4032 + $0x28] sm:$0xf]
      %v4044 = vld [vmem:[%s4032 + $0x2c] sm:$0xf]
      %v4045 = vld [vmem:[%s4032 + $0x30] sm:$0xf]
      %v4046 = vld [vmem:[%s4032 + $0x34] sm:$0xf]
      %v4047 = vld [vmem:[%s4032 + $0x38] sm:$0xf]
      %v4048 = vld [vmem:[%s4032 + $0x3c] sm:$0xf]
      %v4065 = vunpack.c.l.b16 %v4033
      %v4066 = vunpack.c.l.b16 %v4034
      %v4067 = vunpack.c.l.b16 %v4035
      %v4068 = vunpack.c.l.b16 %v4036
      %v4069 = vunpack.c.l.b16 %v4037
      %v4070 = vunpack.c.l.b16 %v4038
      %v4071 = vunpack.c.l.b16 %v4039
      %v4072 = vunpack.c.l.b16 %v4040
      %v4073 = vunpack.c.l.b16 %v4041
      %v4074 = vunpack.c.l.b16 %v4042
      %v4075 = vunpack.c.l.b16 %v4043
      %v4076 = vunpack.c.l.b16 %v4044
      %v4077 = vunpack.c.l.b16 %v4045
      %v4078 = vunpack.c.l.b16 %v4046
      %v4079 = vunpack.c.l.b16 %v4047
      %v4080 = vunpack.c.l.b16 %v4048
      %v4081 = vpack.c.b16 %v4066, %v4065
      %v4082 = vpack.c.b16 %v4068, %v4067
      %v4083 = vpack.c.b16 %v4070, %v4069
      %v4084 = vpack.c.b16 %v4072, %v4071
      %v4085 = vpack.c.b16 %v4074, %v4073
      %v4086 = vpack.c.b16 %v4076, %v4075
      %v4087 = vpack.c.b16 %v4078, %v4077
      %v4088 = vpack.c.b16 %v4080, %v4079
      %4097 = vmatprep.subr.bf16.mxu0 0
      %4098 = vmatpush1.bf16.msra.mxu0 %v4081
      %4099 = vmatprep.subr.bf16.mxu0 0
      %4100 = vmatpush1.bf16.msra.mxu0 %v4082
      %4101 = vmatprep.subr.bf16.mxu0 0
      %4102 = vmatpush1.bf16.msra.mxu0 %v4083
      %4103 = vmatprep.subr.bf16.mxu0 0
      %4104 = vmatpush1.bf16.msra.mxu0 %v4084
      %4105 = vmatprep.subr.bf16.mxu0 0
      %4106 = vmatpush1.bf16.msra.mxu0 %v4085
      %4107 = vmatprep.subr.bf16.mxu0 0
      %4108 = vmatpush1.bf16.msra.mxu0 %v4086
      %4109 = vmatprep.subr.bf16.mxu0 0
      %4110 = vmatpush1.bf16.msra.mxu0 %v4087
      %4111 = vmatprep.subr.bf16.mxu0 0
      %4112 = vmatpush1.bf16.msra.mxu0 %v4088
      %4113 = vmatprep.subr.bf16.mxu0 0
      %4114 = vmatpush1.bf16.msra.mxu0 0
      %4115 = vmatprep.subr.bf16.mxu0 0
      %4116 = vmatpush1.bf16.msra.mxu0 0
      %4117 = vmatprep.subr.bf16.mxu0 0
      %4118 = vmatpush1.bf16.msra.mxu0 0
      %4119 = vmatprep.subr.bf16.mxu0 0
      %4120 = vmatpush1.bf16.msra.mxu0 0
      %4121 = vmatprep.subr.bf16.mxu0 0
      %4122 = vmatpush1.bf16.msra.mxu0 0
      %4123 = vmatprep.subr.bf16.mxu0 0
      %4124 = vmatpush1.bf16.msra.mxu0 0
      %4125 = vmatprep.subr.bf16.mxu0 0
      %4126 = vmatpush1.bf16.msra.mxu0 0
      %4127 = vmatprep.subr.bf16.mxu0 0
      %4128 = vmatpush1.bf16.msra.mxu0 0
      %4129 = vmatprep.mubr.bf16.mxu0 0
      %4130 = vmatmul.mubr.bf16.gmra.mrb[0].mxu0 %v3835
      %v4131 = vpop.f32.mrb[0].mxu0
      %v4132 = vadd.f32 0.0, %v4131
      %v4133 = vpop.f32.mrb[0].mxu0
      %v4134 = vpop.f32.mrb[0].mxu0
      %v4135 = vadd.f32 0.0, %v4134
      %v4136 = vpop.f32.mrb[0].mxu0
      %4137 = vmatprep.mubr.bf16.mxu0 0
      %4138 = vmatmul.mubr.bf16.gmra.mrb[0].mxu0 %v3847
      %v4139 = vpop.f32.mrb[0].mxu0
      %v4140 = vadd.f32 0.0, %v4139
      %v4141 = vpop.f32.mrb[0].mxu0
      %v4142 = vpop.f32.mrb[0].mxu0
      %v4143 = vadd.f32 0.0, %v4142
      %v4144 = vpop.f32.mrb[0].mxu0
      %4145 = vmatprep.mubr.bf16.mxu0 0
      %4146 = vmatmul.mubr.bf16.gmra.mrb[0].mxu0 %v3859
      %v4147 = vpop.f32.mrb[0].mxu0
      %v4148 = vadd.f32 0.0, %v4147
      %v4149 = vpop.f32.mrb[0].mxu0
      %v4150 = vpop.f32.mrb[0].mxu0
      %v4151 = vadd.f32 0.0, %v4150
      %v4152 = vpop.f32.mrb[0].mxu0
      %4153 = vmatprep.mubr.bf16.mxu0 0
      %4154 = vmatmul.mubr.bf16.gmra.mrb[0].mxu0 %v3871
      %v4155 = vpop.f32.mrb[0].mxu0
      %v4156 = vadd.f32 0.0, %v4155
      %v4157 = vpop.f32.mrb[0].mxu0
      %v4158 = vpop.f32.mrb[0].mxu0
      %v4159 = vadd.f32 0.0, %v4158
      %v4160 = vpop.f32.mrb[0].mxu0
      %4161 = vmatprep.mubr.bf16.mxu0 0
      %4162 = vmatmul.mubr.bf16.gmra.mrb[0].mxu0 %v3883
      %v4163 = vpop.f32.mrb[0].mxu0
      %v4164 = vadd.f32 0.0, %v4163
      %v4165 = vpop.f32.mrb[0].mxu0
      %v4166 = vpop.f32.mrb[0].mxu0
      %v4167 = vadd.f32 0.0, %v4166
      %v4168 = vpop.f32.mrb[0].mxu0
      %4169 = vmatprep.mubr.bf16.mxu0 0
      %4170 = vmatmul.mubr.bf16.gmra.mrb[0].mxu0 %v3895
      %v4171 = vpop.f32.mrb[0].mxu0
      %v4172 = vadd.f32 0.0, %v4171
      %v4173 = vpop.f32.mrb[0].mxu0
      %v4174 = vpop.f32.mrb[0].mxu0
      %v4175 = vadd.f32 0.0, %v4174
      %v4176 = vpop.f32.mrb[0].mxu0
      %4177 = vmatprep.mubr.bf16.mxu0 0
      %4178 = vmatmul.mubr.bf16.gmra.mrb[0].mxu0 %v3907
      %v4179 = vpop.f32.mrb[0].mxu0
      %v4180 = vadd.f32 0.0, %v4179
      %v4181 = vpop.f32.mrb[0].mxu0
      %v4182 = vpop.f32.mrb[0].mxu0
      %v4183 = vadd.f32 0.0, %v4182
      %v4184 = vpop.f32.mrb[0].mxu0
      %4185 = vmatprep.mubr.bf16.mxu0 0
      %4186 = vmatmul.mubr.bf16.gmra.mrb[0].mxu0 %v3919
      %v4187 = vpop.f32.mrb[0].mxu0
      %v4188 = vadd.f32 0.0, %v4187
      %v4189 = vpop.f32.mrb[0].mxu0
      %v4190 = vpop.f32.mrb[0].mxu0
      %v4191 = vadd.f32 0.0, %v4190
      %v4192 = vpop.f32.mrb[0].mxu0
      %4193 = vmatprep.mubr.bf16.mxu0 0
      %4194 = vmatmul.mubr.bf16.gmra.mrb[0].mxu0 %v3931
      %v4195 = vpop.f32.mrb[0].mxu0
      %v4196 = vadd.f32 0.0, %v4195
      %v4197 = vpop.f32.mrb[0].mxu0
      %v4198 = vpop.f32.mrb[0].mxu0
      %v4199 = vadd.f32 0.0, %v4198
      %v4200 = vpop.f32.mrb[0].mxu0
      %4201 = vmatprep.mubr.bf16.mxu0 0
      %4202 = vmatmul.mubr.bf16.gmra.mrb[0].mxu0 %v3943
      %v4203 = vpop.f32.mrb[0].mxu0
      %v4204 = vadd.f32 0.0, %v4203
      %v4205 = vpop.f32.mrb[0].mxu0
      %v4206 = vpop.f32.mrb[0].mxu0
      %v4207 = vadd.f32 0.0, %v4206
      %v4208 = vpop.f32.mrb[0].mxu0
      %4209 = vmatprep.mubr.bf16.mxu0 0
      %4210 = vmatmul.mubr.bf16.gmra.mrb[0].mxu0 %v3955
      %v4211 = vpop.f32.mrb[0].mxu0
      %v4212 = vadd.f32 0.0, %v4211
      %v4213 = vpop.f32.mrb[0].mxu0
      %v4214 = vpop.f32.mrb[0].mxu0
      %v4215 = vadd.f32 0.0, %v4214
      %v4216 = vpop.f32.mrb[0].mxu0
      %4217 = vmatprep.mubr.bf16.mxu0 0
      %4218 = vmatmul.mubr.bf16.gmra.mrb[0].mxu0 %v3967
      %v4219 = vpop.f32.mrb[0].mxu0
      %v4220 = vadd.f32 0.0, %v4219
      %v4221 = vpop.f32.mrb[0].mxu0
      %v4222 = vpop.f32.mrb[0].mxu0
      %v4223 = vadd.f32 0.0, %v4222
      %v4224 = vpop.f32.mrb[0].mxu0
      %4225 = vmatprep.mubr.bf16.mxu0 0
      %4226 = vmatmul.mubr.bf16.gmra.mrb[0].mxu0 %v3979
      %v4227 = vpop.f32.mrb[0].mxu0
      %v4228 = vadd.f32 0.0, %v4227
      %v4229 = vpop.f32.mrb[0].mxu0
      %v4230 = vpop.f32.mrb[0].mxu0
      %v4231 = vadd.f32 0.0, %v4230
      %v4232 = vpop.f32.mrb[0].mxu0
      %4233 = vmatprep.mubr.bf16.mxu0 0
      %4234 = vmatmul.mubr.bf16.gmra.mrb[0].mxu0 %v3991
      %v4235 = vpop.f32.mrb[0].mxu0
      %v4236 = vadd.f32 0.0, %v4235
      %v4237 = vpop.f32.mrb[0].mxu0
      %v4238 = vpop.f32.mrb[0].mxu0
      %v4239 = vadd.f32 0.0, %v4238
      %v4240 = vpop.f32.mrb[0].mxu0
      %4241 = vmatprep.mubr.bf16.mxu0 0
      %4242 = vmatmul.mubr.bf16.gmra.mrb[0].mxu0 %v4003
      %v4243 = vpop.f32.mrb[0].mxu0
      %v4244 = vadd.f32 0.0, %v4243
      %v4245 = vpop.f32.mrb[0].mxu0
      %v4246 = vpop.f32.mrb[0].mxu0
      %v4247 = vadd.f32 0.0, %v4246
      %v4248 = vpop.f32.mrb[0].mxu0
      %4249 = vmatprep.mubr.bf16.mxu0 0
      %4250 = vmatmul.mubr.bf16.gmra.mrb[0].mxu0 %v4015
      %v4251 = vpop.f32.mrb[0].mxu0
      %v4252 = vadd.f32 0.0, %v4251
      %v4253 = vpop.f32.mrb[0].mxu0
      %v4254 = vpop.f32.mrb[0].mxu0
      %v4255 = vadd.f32 0.0, %v4254
      %v4256 = vpop.f32.mrb[0].mxu0
      %4257 = vdwg.mxu0
      %v4258 = vadd.f32 %v3760, %v4132
      %v4259 = vadd.f32 %v3761, %v4135
      %v4260 = vadd.f32 %v3762, %v4140
      %v4261 = vadd.f32 %v3763, %v4143
      %v4262 = vadd.f32 %v3764, %v4148
      %v4263 = vadd.f32 %v3765, %v4151
      %v4264 = vadd.f32 %v3766, %v4156
      %v4265 = vadd.f32 %v3767, %v4159
      %v4266 = vadd.f32 %v3768, %v4164
      %v4267 = vadd.f32 %v3769, %v4167
      %v4268 = vadd.f32 %v3770, %v4172
      %v4269 = vadd.f32 %v3771, %v4175
      %v4270 = vadd.f32 %v3772, %v4180
      %v4271 = vadd.f32 %v3773, %v4183
      %v4272 = vadd.f32 %v3774, %v4188
      %v4273 = vadd.f32 %v3775, %v4191
      %v4274 = vadd.f32 %v3776, %v4196
      %v4275 = vadd.f32 %v3777, %v4199
      %v4276 = vadd.f32 %v3778, %v4204
      %v4277 = vadd.f32 %v3779, %v4207
      %v4278 = vadd.f32 %v3780, %v4212
      %v4279 = vadd.f32 %v3781, %v4215
      %v4280 = vadd.f32 %v3782, %v4220
      %v4281 = vadd.f32 %v3783, %v4223
      %v4282 = vadd.f32 %v3784, %v4228
      %v4283 = vadd.f32 %v3785, %v4231
      %v4284 = vadd.f32 %v3786, %v4236
      %v4285 = vadd.f32 %v3787, %v4239
      %v4286 = vadd.f32 %v3788, %v4244
      %v4287 = vadd.f32 %v3789, %v4247
      %v4288 = vadd.f32 %v3790, %v4252
      %v4289 = vadd.f32 %v3791, %v4255
      %v4290 = vld [vmem:[%s323] sm:$0xf]
      %v4291 = vld [vmem:[%s323 + $0x4] sm:$0xf]
      %v4292 = vld [vmem:[%s323 + $0x8] sm:$0xf]
      %v4293 = vld [vmem:[%s323 + $0xc] sm:$0xf]
      %v4294 = vld [vmem:[%s323 + $0x10] sm:$0xf]
      %v4295 = vld [vmem:[%s323 + $0x14] sm:$0xf]
      %v4296 = vld [vmem:[%s323 + $0x18] sm:$0xf]
      %v4297 = vld [vmem:[%s323 + $0x1c] sm:$0xf]
      %v4298 = vld [vmem:[%s323 + $0x20] sm:$0xf]
      %v4299 = vld [vmem:[%s323 + $0x24] sm:$0xf]
      %v4300 = vld [vmem:[%s323 + $0x28] sm:$0xf]
      %v4301 = vld [vmem:[%s323 + $0x2c] sm:$0xf]
      %v4302 = vld [vmem:[%s323 + $0x30] sm:$0xf]
      %v4303 = vld [vmem:[%s323 + $0x34] sm:$0xf]
      %v4304 = vld [vmem:[%s323 + $0x38] sm:$0xf]
      %v4305 = vld [vmem:[%s323 + $0x3c] sm:$0xf]
      %v4306 = vld [vmem:[%s323 + $0x40] sm:$0xf]
      %v4307 = vld [vmem:[%s323 + $0x44] sm:$0xf]
      %v4308 = vld [vmem:[%s323 + $0x48] sm:$0xf]
      %v4309 = vld [vmem:[%s323 + $0x4c] sm:$0xf]
      %v4310 = vld [vmem:[%s323 + $0x50] sm:$0xf]
      %v4311 = vld [vmem:[%s323 + $0x54] sm:$0xf]
      %v4312 = vld [vmem:[%s323 + $0x58] sm:$0xf]
      %v4313 = vld [vmem:[%s323 + $0x5c] sm:$0xf]
      %v4314 = vld [vmem:[%s323 + $0x60] sm:$0xf]
      %v4315 = vld [vmem:[%s323 + $0x64] sm:$0xf]
      %v4316 = vld [vmem:[%s323 + $0x68] sm:$0xf]
      %v4317 = vld [vmem:[%s323 + $0x6c] sm:$0xf]
      %v4318 = vld [vmem:[%s323 + $0x70] sm:$0xf]
      %v4319 = vld [vmem:[%s323 + $0x74] sm:$0xf]
      %v4320 = vld [vmem:[%s323 + $0x78] sm:$0xf]
      %v4321 = vld [vmem:[%s323 + $0x7c] sm:$0xf]
      %v4322 = vunpack.c.l.bf16 %v4290
      %v4323 = vunpack.c.l.bf16 %v4291
      %v4324 = vunpack.c.l.bf16 %v4292
      %v4325 = vunpack.c.l.bf16 %v4293
      %v4326 = vunpack.c.l.bf16 %v4294
      %v4327 = vunpack.c.l.bf16 %v4295
      %v4328 = vunpack.c.l.bf16 %v4296
      %v4329 = vunpack.c.l.bf16 %v4297
      %v4330 = vunpack.c.l.bf16 %v4298
      %v4331 = vunpack.c.l.bf16 %v4299
      %v4332 = vunpack.c.l.bf16 %v4300
      %v4333 = vunpack.c.l.bf16 %v4301
      %v4334 = vunpack.c.l.bf16 %v4302
      %v4335 = vunpack.c.l.bf16 %v4303
      %v4336 = vunpack.c.l.bf16 %v4304
      %v4337 = vunpack.c.l.bf16 %v4305
      %v4338 = vunpack.c.l.bf16 %v4306
      %v4339 = vunpack.c.l.bf16 %v4307
      %v4340 = vunpack.c.l.bf16 %v4308
      %v4341 = vunpack.c.l.bf16 %v4309
      %v4342 = vunpack.c.l.bf16 %v4310
      %v4343 = vunpack.c.l.bf16 %v4311
      %v4344 = vunpack.c.l.bf16 %v4312
      %v4345 = vunpack.c.l.bf16 %v4313
      %v4346 = vunpack.c.l.bf16 %v4314
      %v4347 = vunpack.c.l.bf16 %v4315
      %v4348 = vunpack.c.l.bf16 %v4316
      %v4349 = vunpack.c.l.bf16 %v4317
      %v4350 = vunpack.c.l.bf16 %v4318
      %v4351 = vunpack.c.l.bf16 %v4319
      %v4352 = vunpack.c.l.bf16 %v4320
      %v4353 = vunpack.c.l.bf16 %v4321
      %v4354 = vadd.f32 %v4322, %v4258
      %v4355 = vadd.f32 %v4323, %v4259
      %v4356 = vadd.f32 %v4324, %v4260
      %v4357 = vadd.f32 %v4325, %v4261
      %v4358 = vadd.f32 %v4326, %v4262
      %v4359 = vadd.f32 %v4327, %v4263
      %v4360 = vadd.f32 %v4328, %v4264
      %v4361 = vadd.f32 %v4329, %v4265
      %v4362 = vadd.f32 %v4330, %v4266
      %v4363 = vadd.f32 %v4331, %v4267
      %v4364 = vadd.f32 %v4332, %v4268
      %v4365 = vadd.f32 %v4333, %v4269
      %v4366 = vadd.f32 %v4334, %v4270
      %v4367 = vadd.f32 %v4335, %v4271
      %v4368 = vadd.f32 %v4336, %v4272
      %v4369 = vadd.f32 %v4337, %v4273
      %v4370 = vadd.f32 %v4338, %v4274
      %v4371 = vadd.f32 %v4339, %v4275
      %v4372 = vadd.f32 %v4340, %v4276
      %v4373 = vadd.f32 %v4341, %v4277
      %v4374 = vadd.f32 %v4342, %v4278
      %v4375 = vadd.f32 %v4343, %v4279
      %v4376 = vadd.f32 %v4344, %v4280
      %v4377 = vadd.f32 %v4345, %v4281
      %v4378 = vadd.f32 %v4346, %v4282
      %v4379 = vadd.f32 %v4347, %v4283
      %v4380 = vadd.f32 %v4348, %v4284
      %v4381 = vadd.f32 %v4349, %v4285
      %v4382 = vadd.f32 %v4350, %v4286
      %v4383 = vadd.f32 %v4351, %v4287
      %v4384 = vadd.f32 %v4352, %v4288
      %v4385 = vadd.f32 %v4353, %v4289
      %v4386 = vpack.c.bf16 %v4355, %v4354
      %v4387 = vpack.c.bf16 %v4357, %v4356
      %v4388 = vpack.c.bf16 %v4359, %v4358
      %v4389 = vpack.c.bf16 %v4361, %v4360
      %v4390 = vpack.c.bf16 %v4363, %v4362
      %v4391 = vpack.c.bf16 %v4365, %v4364
      %v4392 = vpack.c.bf16 %v4367, %v4366
      %v4393 = vpack.c.bf16 %v4369, %v4368
      %v4394 = vpack.c.bf16 %v4371, %v4370
      %v4395 = vpack.c.bf16 %v4373, %v4372
      %v4396 = vpack.c.bf16 %v4375, %v4374
      %v4397 = vpack.c.bf16 %v4377, %v4376
      %v4398 = vpack.c.bf16 %v4379, %v4378
      %v4399 = vpack.c.bf16 %v4381, %v4380
      %v4400 = vpack.c.bf16 %v4383, %v4382
      %v4401 = vpack.c.bf16 %v4385, %v4384
      %v4418 = vunpack.c.l.b16 %v4386
      %v4419 = vunpack.c.h.b16 %v4386
      %v4420 = vunpack.c.l.b16 %v4387
      %v4421 = vunpack.c.h.b16 %v4387
      %v4422 = vunpack.c.l.b16 %v4388
      %v4423 = vunpack.c.h.b16 %v4388
      %v4424 = vunpack.c.l.b16 %v4389
      %v4425 = vunpack.c.h.b16 %v4389
      %v4426 = vunpack.c.l.b16 %v4390
      %v4427 = vunpack.c.h.b16 %v4390
      %v4428 = vunpack.c.l.b16 %v4391
      %v4429 = vunpack.c.h.b16 %v4391
      %v4430 = vunpack.c.l.b16 %v4392
      %v4431 = vunpack.c.h.b16 %v4392
      %v4432 = vunpack.c.l.b16 %v4393
      %v4433 = vunpack.c.h.b16 %v4393
      %v4434 = vunpack.c.l.b16 %v4394
      %v4435 = vunpack.c.h.b16 %v4394
      %v4436 = vunpack.c.l.b16 %v4395
      %v4437 = vunpack.c.h.b16 %v4395
      %v4438 = vunpack.c.l.b16 %v4396
      %v4439 = vunpack.c.h.b16 %v4396
      %v4440 = vunpack.c.l.b16 %v4397
      %v4441 = vunpack.c.h.b16 %v4397
      %v4442 = vunpack.c.l.b16 %v4398
      %v4443 = vunpack.c.h.b16 %v4398
      %v4444 = vunpack.c.l.b16 %v4399
      %v4445 = vunpack.c.h.b16 %v4399
      %v4446 = vunpack.c.l.b16 %v4400
      %v4447 = vunpack.c.h.b16 %v4400
      %v4448 = vunpack.c.l.b16 %v4401
      %v4449 = vunpack.c.h.b16 %v4401
      %v4450 = vpack.c.b16 %v4418, %v4418
      %v4451 = vpack.c.b16 %v4419, %v4419
      %v4452 = vpack.c.b16 %v4420, %v4420
      %v4453 = vpack.c.b16 %v4421, %v4421
      %v4454 = vpack.c.b16 %v4422, %v4422
      %v4455 = vpack.c.b16 %v4423, %v4423
      %v4456 = vpack.c.b16 %v4424, %v4424
      %v4457 = vpack.c.b16 %v4425, %v4425
      %v4458 = vpack.c.b16 %v4426, %v4426
      %v4459 = vpack.c.b16 %v4427, %v4427
      %v4460 = vpack.c.b16 %v4428, %v4428
      %v4461 = vpack.c.b16 %v4429, %v4429
      %v4462 = vpack.c.b16 %v4430, %v4430
      %v4463 = vpack.c.b16 %v4431, %v4431
      %v4464 = vpack.c.b16 %v4432, %v4432
      %v4465 = vpack.c.b16 %v4433, %v4433
      %v4466 = vpack.c.b16 %v4434, %v4434
      %v4467 = vpack.c.b16 %v4435, %v4435
      %v4468 = vpack.c.b16 %v4436, %v4436
      %v4469 = vpack.c.b16 %v4437, %v4437
      %v4470 = vpack.c.b16 %v4438, %v4438
      %v4471 = vpack.c.b16 %v4439, %v4439
      %v4472 = vpack.c.b16 %v4440, %v4440
      %v4473 = vpack.c.b16 %v4441, %v4441
      %v4474 = vpack.c.b16 %v4442, %v4442
      %v4475 = vpack.c.b16 %v4443, %v4443
      %v4476 = vpack.c.b16 %v4444, %v4444
      %v4477 = vpack.c.b16 %v4445, %v4445
      %v4478 = vpack.c.b16 %v4446, %v4446
      %v4479 = vpack.c.b16 %v4447, %v4447
      %v4480 = vpack.c.b16 %v4448, %v4448
      %v4481 = vpack.c.b16 %v4449, %v4449
      %4514 = vst [vmem:[%s331] sm:$0xf] %v4450
      %4515 = vst [vmem:[%s331 + $0x4] sm:$0xf] %v4451
      %4516 = vst [vmem:[%s331 + $0x8] sm:$0xf] %v4452
      %4517 = vst [vmem:[%s331 + $0xc] sm:$0xf] %v4453
      %4518 = vst [vmem:[%s331 + $0x10] sm:$0xf] %v4454
      %4519 = vst [vmem:[%s331 + $0x14] sm:$0xf] %v4455
      %4520 = vst [vmem:[%s331 + $0x18] sm:$0xf] %v4456
      %4521 = vst [vmem:[%s331 + $0x1c] sm:$0xf] %v4457
      %4522 = vst [vmem:[%s331 + $0x20] sm:$0xf] %v4458
      %4523 = vst [vmem:[%s331 + $0x24] sm:$0xf] %v4459
      %4524 = vst [vmem:[%s331 + $0x28] sm:$0xf] %v4460
      %4525 = vst [vmem:[%s331 + $0x2c] sm:$0xf] %v4461
      %4526 = vst [vmem:[%s331 + $0x30] sm:$0xf] %v4462
      %4527 = vst [vmem:[%s331 + $0x34] sm:$0xf] %v4463
      %4528 = vst [vmem:[%s331 + $0x38] sm:$0xf] %v4464
      %4529 = vst [vmem:[%s331 + $0x3c] sm:$0xf] %v4465
      %4530 = vst [vmem:[%s331 + $0x40] sm:$0xf] %v4466
      %4531 = vst [vmem:[%s331 + $0x44] sm:$0xf] %v4467
      %4532 = vst [vmem:[%s331 + $0x48] sm:$0xf] %v4468
      %4533 = vst [vmem:[%s331 + $0x4c] sm:$0xf] %v4469
      %4534 = vst [vmem:[%s331 + $0x50] sm:$0xf] %v4470
      %4535 = vst [vmem:[%s331 + $0x54] sm:$0xf] %v4471
      %4536 = vst [vmem:[%s331 + $0x58] sm:$0xf] %v4472
      %4537 = vst [vmem:[%s331 + $0x5c] sm:$0xf] %v4473
      %4538 = vst [vmem:[%s331 + $0x60] sm:$0xf] %v4474
      %4539 = vst [vmem:[%s331 + $0x64] sm:$0xf] %v4475
      %4540 = vst [vmem:[%s331 + $0x68] sm:$0xf] %v4476
      %4541 = vst [vmem:[%s331 + $0x6c] sm:$0xf] %v4477
      %4542 = vst [vmem:[%s331 + $0x70] sm:$0xf] %v4478
      %4543 = vst [vmem:[%s331 + $0x74] sm:$0xf] %v4479
      %4544 = vst [vmem:[%s331 + $0x78] sm:$0xf] %v4480
      %4545 = vst [vmem:[%s331 + $0x7c] sm:$0xf] %v4481
      %v4546 = vunpack.c.l.bf16 %v4386
      %v4547 = vunpack.c.h.bf16 %v4386
      %v4548 = vunpack.c.l.bf16 %v4387
      %v4549 = vunpack.c.h.bf16 %v4387
      %v4550 = vunpack.c.l.bf16 %v4388
      %v4551 = vunpack.c.h.bf16 %v4388
      %v4552 = vunpack.c.l.bf16 %v4389
      %v4553 = vunpack.c.h.bf16 %v4389
      %v4554 = vunpack.c.l.bf16 %v4390
      %v4555 = vunpack.c.h.bf16 %v4390
      %v4556 = vunpack.c.l.bf16 %v4391
      %v4557 = vunpack.c.h.bf16 %v4391
      %v4558 = vunpack.c.l.bf16 %v4392
      %v4559 = vunpack.c.h.bf16 %v4392
      %v4560 = vunpack.c.l.bf16 %v4393
      %v4561 = vunpack.c.h.bf16 %v4393
      %v4562 = vunpack.c.l.bf16 %v4394
      %v4563 = vunpack.c.h.bf16 %v4394
      %v4564 = vunpack.c.l.bf16 %v4395
      %v4565 = vunpack.c.h.bf16 %v4395
      %v4566 = vunpack.c.l.bf16 %v4396
      %v4567 = vunpack.c.h.bf16 %v4396
      %v4568 = vunpack.c.l.bf16 %v4397
      %v4569 = vunpack.c.h.bf16 %v4397
      %v4570 = vunpack.c.l.bf16 %v4398
      %v4571 = vunpack.c.h.bf16 %v4398
      %v4572 = vunpack.c.l.bf16 %v4399
      %v4573 = vunpack.c.h.bf16 %v4399
      %v4574 = vunpack.c.l.bf16 %v4400
      %v4575 = vunpack.c.h.bf16 %v4400
      %v4576 = vunpack.c.l.bf16 %v4401
      %v4577 = vunpack.c.h.bf16 %v4401
      %v4578 = vadd.f32 %v4546, %v4547
      %v4579 = vadd.f32 %v4578, %v4548
      %v4580 = vadd.f32 %v4579, %v4549
      %v4581 = vadd.f32 %v4580, %v4550
      %v4582 = vadd.f32 %v4581, %v4551
      %v4583 = vadd.f32 %v4582, %v4552
      %v4584 = vadd.f32 %v4583, %v4553
      %v4585 = vadd.f32 %v4584, %v4554
      %v4586 = vadd.f32 %v4585, %v4555
      %v4587 = vadd.f32 %v4586, %v4556
      %v4588 = vadd.f32 %v4587, %v4557
      %v4589 = vadd.f32 %v4588, %v4558
      %v4590 = vadd.f32 %v4589, %v4559
      %v4591 = vadd.f32 %v4590, %v4560
      %v4592 = vadd.f32 %v4591, %v4561
      %v4593 = vadd.f32 %v4592, %v4562
      %v4594 = vadd.f32 %v4593, %v4563
      %v4595 = vadd.f32 %v4594, %v4564
      %v4596 = vadd.f32 %v4595, %v4565
      %v4597 = vadd.f32 %v4596, %v4566
      %v4598 = vadd.f32 %v4597, %v4567
      %v4599 = vadd.f32 %v4598, %v4568
      %v4600 = vadd.f32 %v4599, %v4569
      %v4601 = vadd.f32 %v4600, %v4570
      %v4602 = vadd.f32 %v4601, %v4571
      %v4603 = vadd.f32 %v4602, %v4572
      %v4604 = vadd.f32 %v4603, %v4573
      %v4605 = vadd.f32 %v4604, %v4574
      %v4606 = vadd.f32 %v4605, %v4575
      %v4607 = vadd.f32 %v4606, %v4576
      %v4608 = vadd.f32 %v4607, %v4577
      %v4609 = vrot.slane %v4608, 4
      %v4610 = vadd.f32 %v4608, %v4609
      %v4611 = vrot.slane %v4610, 2
      %v4612 = vadd.f32 %v4610, %v4611
      %v4613 = vrot.slane %v4612, 1
      %v4614 = vadd.f32 %v4612, %v4613
      %v4615 = vmul.f32 %v4546, %v4546
      %v4616 = vmul.f32 %v4547, %v4547
      %v4617 = vmul.f32 %v4548, %v4548
      %v4618 = vmul.f32 %v4549, %v4549
      %v4619 = vmul.f32 %v4550, %v4550
      %v4620 = vmul.f32 %v4551, %v4551
      %v4621 = vmul.f32 %v4552, %v4552
      %v4622 = vmul.f32 %v4553, %v4553
      %v4623 = vmul.f32 %v4554, %v4554
      %v4624 = vmul.f32 %v4555, %v4555
      %v4625 = vmul.f32 %v4556, %v4556
      %v4626 = vmul.f32 %v4557, %v4557
      %v4627 = vmul.f32 %v4558, %v4558
      %v4628 = vmul.f32 %v4559, %v4559
      %v4629 = vmul.f32 %v4560, %v4560
      %v4630 = vmul.f32 %v4561, %v4561
      %v4631 = vmul.f32 %v4562, %v4562
      %v4632 = vmul.f32 %v4563, %v4563
      %v4633 = vmul.f32 %v4564, %v4564
      %v4634 = vmul.f32 %v4565, %v4565
      %v4635 = vmul.f32 %v4566, %v4566
      %v4636 = vmul.f32 %v4567, %v4567
      %v4637 = vmul.f32 %v4568, %v4568
      %v4638 = vmul.f32 %v4569, %v4569
      %v4639 = vmul.f32 %v4570, %v4570
      %v4640 = vmul.f32 %v4571, %v4571
      %v4641 = vmul.f32 %v4572, %v4572
      %v4642 = vmul.f32 %v4573, %v4573
      %v4643 = vmul.f32 %v4574, %v4574
      %v4644 = vmul.f32 %v4575, %v4575
      %v4645 = vmul.f32 %v4576, %v4576
      %v4646 = vmul.f32 %v4577, %v4577
      %v4647 = vadd.f32 %v4615, %v4616
      %v4648 = vadd.f32 %v4647, %v4617
      %v4649 = vadd.f32 %v4648, %v4618
      %v4650 = vadd.f32 %v4649, %v4619
      %v4651 = vadd.f32 %v4650, %v4620
      %v4652 = vadd.f32 %v4651, %v4621
      %v4653 = vadd.f32 %v4652, %v4622
      %v4654 = vadd.f32 %v4653, %v4623
      %v4655 = vadd.f32 %v4654, %v4624
      %v4656 = vadd.f32 %v4655, %v4625
      %v4657 = vadd.f32 %v4656, %v4626
      %v4658 = vadd.f32 %v4657, %v4627
      %v4659 = vadd.f32 %v4658, %v4628
      %v4660 = vadd.f32 %v4659, %v4629
      %v4661 = vadd.f32 %v4660, %v4630
      %v4662 = vadd.f32 %v4661, %v4631
      %v4663 = vadd.f32 %v4662, %v4632
      %v4664 = vadd.f32 %v4663, %v4633
      %v4665 = vadd.f32 %v4664, %v4634
      %v4666 = vadd.f32 %v4665, %v4635
      %v4667 = vadd.f32 %v4666, %v4636
      %v4668 = vadd.f32 %v4667, %v4637
      %v4669 = vadd.f32 %v4668, %v4638
      %v4670 = vadd.f32 %v4669, %v4639
      %v4671 = vadd.f32 %v4670, %v4640
      %v4672 = vadd.f32 %v4671, %v4641
      %v4673 = vadd.f32 %v4672, %v4642
      %v4674 = vadd.f32 %v4673, %v4643
      %v4675 = vadd.f32 %v4674, %v4644
      %v4676 = vadd.f32 %v4675, %v4645
      %v4677 = vadd.f32 %v4676, %v4646
      %v4678 = vrot.slane %v4677, 4
      %v4679 = vadd.f32 %v4677, %v4678
      %v4680 = vrot.slane %v4679, 2
      %v4681 = vadd.f32 %v4679, %v4680
      %v4682 = vrot.slane %v4681, 1
      %v4683 = vadd.f32 %v4681, %v4682
      %vm4684 = vcmask 1040384
      %v4685 = vsel %vm4684, %v4614, %v4683
      %4686 = vst [vmem:[%s338] sm:$0x3] %v4685
      %p4687 = scmp.lt.s32.totalorder %s22, 1
      %s4688 = scalar_select %p4687, %s22, 1
      %p4689 = scmp.lt.s32.totalorder %s23, 0
      %s4690 = scalar_select %p4689, %s23, 0
      %s4691 = smul.addr %s4688, 32
      %s4692 = sadd.s32 %s4690, %s4691
      %s4693 = smul.addr %s4692, 4
      %s4694 = scalar_lea.vmem %s5, %s4693
      %p4695 = scmp.lt.s32.totalorder %s22, 1
      %s4696 = scalar_select %p4695, %s22, 1
      %p4697 = scmp.lt.s32.totalorder %s23, 0
      %s4698 = scalar_select %p4697, %s23, 0
      %s4699 = sadd.s32 %s4698, %s4696
      %s4700 = smul.addr %s4699, 2
      %s4701 = scalar_lea.vmem %s6, %s4700
      // Predicated region
      $region41: #{dense_block.7} parent=39 // pred_check
        %p4702 = pneg %p172
      $region42: #{dense_block.7} parent=39 // pred_check_branch
        %4704 = sbr.rel (%p4702) target = $region44
      $region43: #{dense_block.7} parent=39 // pred_region
        _
      $region44: #{dense_block.7} parent=39 // pred_fallthru
        _
      // Predicated region
      $region45: #{dense_block.7} parent=39 // pred_check
        %p4705 = pneg %p200
      $region46: #{dense_block.7} parent=39 // pred_check_branch
        %4707 = sbr.rel (%p4705) target = $region48
      $region47: #{dense_block.7} parent=39 // pred_region
        _
      $region48: #{dense_block.7} parent=39 // pred_fallthru
        _
    $region40: #{dense_block.7} parent=5 // pred_fallthru
      _
    %p4708 = scmp.le.s32.totalorder 2, %s13
    // Predicated region
    $region49: #{dense_block.7} parent=5 // pred_check
      %p4709 = pneg %p4708
    $region50: #{dense_block.7} parent=5 // pred_check_branch
      %4711 = sbr.rel (%p4709) target = $region52
    $region51: #{dense_block.7} parent=5 // pred_region
      %s4712 = ssub.s32 %s13, 2
      // Predicated region
      $region53: #{dense_block.7} parent=51 // pred_check
        %p4713 = pneg %p178
      $region54: #{dense_block.7} parent=51 // pred_check_branch
        %4715 = sbr.rel (%p4713) target = $region56
      $region55: #{dense_block.7} parent=51 // pred_region
        %p4716 = scmp.lt.s32.totalorder %s24, 1
        %s4717 = scalar_select %p4716, %s24, 1
        %p4718 = scmp.lt.s32.totalorder %s25, 0
        %s4719 = scalar_select %p4718, %s25, 0
        %s4720 = smul.addr %s4717, 32
        %s4721 = sadd.s32 %s4719, %s4720
        %s4722 = smul.addr %s4721, 4
        %s4723 = scalar_lea.vmem %s5, %s4722
      $region56: #{dense_block.7} parent=51 // pred_fallthru
        _
      // Predicated region
      $region57: #{dense_block.7} parent=51 // pred_check
        %p4724 = pneg %p206
      $region58: #{dense_block.7} parent=51 // pred_check_branch
        %4726 = sbr.rel (%p4724) target = $region60
      $region59: #{dense_block.7} parent=51 // pred_region
        %p4727 = scmp.lt.s32.totalorder %s24, 1
        %s4728 = scalar_select %p4727, %s24, 1
        %p4729 = scmp.lt.s32.totalorder %s25, 0
        %s4730 = scalar_select %p4729, %s25, 0
        %s4731 = sadd.s32 %s4730, %s4728
        %s4732 = smul.addr %s4731, 2
        %s4733 = scalar_lea.vmem %s6, %s4732
      $region60: #{dense_block.7} parent=51 // pred_fallthru
        _
    $region52: #{dense_block.7} parent=5 // pred_fallthru
      _
  $region6: #{dense_block.7} parent=0 // loop_footer
    %s17 = sadd.s32 1, %s13
  $region7: #{dense_block.7} parent=0 // loop_footer_branch
    %12 = sbr.rel target = $region3
  $region8: #{dense_block.7} parent=0 // loop_exit
    _

// kernel: dense_block.9
$region0: #{dense_block.9}
  #allocation0 [shape = 'u32[]', space=smem, size = 0x4, offset = 0x4, fixed_abs, tag = 'smem constant byte address 0x4 - core index']
  #allocation1 [shape = 'u32[144,128]{1,0:T(1,128)}', space=vmem, size = 0x12000, scoped, tag = 'internal scratch']
  #allocation2 [shape = 'bf16[18,48,128]{2,1,0:T(16,128)(2,1)}', space=vmem, size = 0x36000, scoped, tag = 'scratch operand']
  %s0 = inlined_call_operand.vmem [shape: bf16[2,16,16,128], index: 0, kind: input, shape index: {}]
  %s1 = inlined_call_operand.vmem [shape: f32[1,128], index: 1, kind: input, shape index: {}]
  %s2 = inlined_call_operand.vmem [shape: f32[1,128], index: 2, kind: input, shape index: {}]
  %s3 = inlined_call_operand.vmem [shape: bf16[9,128,128], index: 3, kind: input, shape index: {}]
  %s4 = inlined_call_operand.vmem [shape: bf16[2,16,16,128], index: 4, kind: input, shape index: {}, may-alias: {4,5}]
  %s5 = inlined_call_operand.vmem [shape: bf16[2,16,16,128], index: 5, kind: output, shape index: {0}, may-alias: {4,5}]
  %s6 = inlined_call_operand.hbm [shape: f32[2,1,2,128], index: 6, kind: output, shape index: {1}]
  %7 = xla_tuple %s5, %s6
  %s8 = sld [smem:[#allocation0]]
  $region61: #{dense_block.9} parent=0
    _
  %s10 = ssub.s32 1, %s8
  %s11 = scalar_select 0, %s10, %s8
  $region1: #{dense_block.9} parent=0
    #allocation3 [shape = 'u8[2048]{0}', space=vmem, size = 0x800, scoped, tag = 'output window, operand 1']
    #allocation4 [shape = 's32[2]{0}', space=sflag, size = 0x8, scoped, tag = 'scoped memory for dense_block.9']
    %12 = vsyncpa [#allocation4], 0
    %s13 = scalar_lea.sflag [#allocation4], 1
    %14 = vsyncpa %s13, 0
    loop: start=0, step=1, limit=4
    $region2: #{dense_block.9} parent=1 // loop_pre_header
      _
    $region3: #{dense_block.9} parent=1 // loop_header
      %s16 = sphi 0, %s20
      %p17 = scmp.ge.s32.totalorder %s16, 4
      %s23 = sphi 0, %s35
      %s24 = sphi 0, %s31
      %s25 = sphi 0, %s23
      %s26 = sphi 0, %s24
      %s27 = sphi 0, %s25
      %s28 = sphi 0, %s26
      %s38 = sphi 0, %s40
      %s41 = sphi 0, %s38
      %s42 = sphi 0, %s41
      %s58 = sphi 0, %s42
      %s62 = sphi 0, %s62
      %s64 = sphi 0, %s62
      %s65 = sphi 0, %s64
      %s79 = sphi 0, %s65
      %s83 = sphi 0, %s83
      %s85 = sphi 0, %s83
      %s86 = sphi 0, %s85
      %s100 = sphi 0, %s86
      %s106 = sphi 0, %s108
      %s109 = sphi 0, %s106
      %s110 = sphi 0, %s109
      %s126 = sphi 0, %s110
      %s134 = sphi 0, %s136
      %s137 = sphi 0, %s134
      %s138 = sphi 0, %s137
      %s154 = sphi 0, %s138
      %s162 = sphi 0, %s164
      %s165 = sphi 0, %s162
      %s166 = sphi 0, %s165
      %s182 = sphi 0, %s166
      %s190 = sphi 0, %s192
      %s193 = sphi 0, %s190
      %s194 = sphi 0, %s193
      %s210 = sphi 0, %s194
    $region4: #{dense_block.9} parent=1 // loop_header_branch
      %19 = sbr.rel (%p17) target = $region8
    $region5: #{dense_block.9} parent=1 // loop_body
      %s21 = ssub.s32 %s16, 1
      %s22 = ssub.s32 %s16, 2
      %s29 = sadd.s32 1, %s24
      %p30 = scmp.ge.s32.totalorder %s29, 1
      %s31 = scalar_select %p30, 0, %s29
      %s32 = sadd.s32 1, %s23
      %s33 = scalar_select %p30, %s32, %s23
      %p34 = scmp.ge.s32.totalorder %s33, 2
      %s35 = scalar_select %p34, 0, %s33
      %s36 = ssub.s32 %s23, %s35
      %p37 = scmp.eq.s32.totalorder %s36, 0
      %s39 = sadd.s32 %s38, 1
      %s40 = scalar_select %p37, %s38, %s39
      %p43 = pneg %p37
      %p44 = scmp.eq.s32.totalorder %s16, 1
      %p45 = por %p43, %p44
      %p46 = scmp.ne.s32.totalorder %s38, %s41
      %p47 = scmp.eq.s32.totalorder %s16, 0
      %p48 = por %p46, %p47
      %p49 = scmp.ne.s32.totalorder %s38, %s41
      %p50 = scmp.eq.s32.totalorder %s21, 1
      %p51 = por %p49, %p50
      %p52 = scmp.ne.s32.totalorder %s41, %s42
      %p53 = scmp.eq.s32.totalorder %s21, 0
      %p54 = por %p52, %p53
      %p55 = scmp.ne.s32.totalorder %s41, %s42
      %p56 = scmp.eq.s32.totalorder %s22, 1
      %p57 = por %p55, %p56
      %p59 = scmp.ne.s32.totalorder %s42, %s58
      %p60 = scmp.eq.s32.totalorder %s22, 0
      %p61 = por %p59, %p60
      %s63 = sadd.s32 %s62, 1
      %p66 = scmp.eq.s32.totalorder %s16, 1
      %p67 = scmp.ne.s32.totalorder %s62, %s64
      %p68 = scmp.eq.s32.totalorder %s16, 0
      %p69 = por %p67, %p68
      %p70 = scmp.ne.s32.totalorder %s62, %s64
      %p71 = scmp.eq.s32.totalorder %s21, 1
      %p72 = por %p70, %p71
      %p73 = scmp.ne.s32.totalorder %s64, %s65
      %p74 = scmp.eq.s32.totalorder %s21, 0
      %p75 = por %p73, %p74
      %p76 = scmp.ne.s32.totalorder %s64, %s65
      %p77 = scmp.eq.s32.totalorder %s22, 1
      %p78 = por %p76, %p77
      %p80 = scmp.ne.s32.totalorder %s65, %s79
      %p81 = scmp.eq.s32.totalorder %s22, 0
      %p82 = por %p80, %p81
      %s84 = sadd.s32 %s83, 1
      %p87 = scmp.eq.s32.totalorder %s16, 1
      %p88 = scmp.ne.s32.totalorder %s83, %s85
      %p89 = scmp.eq.s32.totalorder %s16, 0
      %p90 = por %p88, %p89
      %p91 = scmp.ne.s32.totalorder %s83, %s85
      %p92 = scmp.eq.s32.totalorder %s21, 1
      %p93 = por %p91, %p92
      %p94 = scmp.ne.s32.totalorder %s85, %s86
      %p95 = scmp.eq.s32.totalorder %s21, 0
      %p96 = por %p94, %p95
      %p97 = scmp.ne.s32.totalorder %s85, %s86
      %p98 = scmp.eq.s32.totalorder %s22, 1
      %p99 = por %p97, %p98
      %p101 = scmp.ne.s32.totalorder %s86, %s100
      %p102 = scmp.eq.s32.totalorder %s22, 0
      %p103 = por %p101, %p102
      %s104 = ssub.s32 %s24, %s31
      %p105 = scmp.eq.s32.totalorder %s104, 0
      %s107 = sadd.s32 %s106, 1
      %s108 = scalar_select %p105, %s106, %s107
      %p111 = pneg %p105
      %p112 = scmp.eq.s32.totalorder %s16, 1
      %p113 = por %p111, %p112
      %p114 = scmp.ne.s32.totalorder %s106, %s109
      %p115 = scmp.eq.s32.totalorder %s16, 0
      %p116 = por %p114, %p115
      %p117 = scmp.ne.s32.totalorder %s106, %s109
      %p118 = scmp.eq.s32.totalorder %s21, 1
      %p119 = por %p117, %p118
      %p120 = scmp.ne.s32.totalorder %s109, %s110
      %p121 = scmp.eq.s32.totalorder %s21, 0
      %p122 = por %p120, %p121
      %p123 = scmp.ne.s32.totalorder %s109, %s110
      %p124 = scmp.eq.s32.totalorder %s22, 1
      %p125 = por %p123, %p124
      %p127 = scmp.ne.s32.totalorder %s110, %s126
      %p128 = scmp.eq.s32.totalorder %s22, 0
      %p129 = por %p127, %p128
      %s130 = ssub.s32 %s23, %s35
      %s131 = ssub.s32 %s24, %s31
      %s132 = sor.u32 %s130, %s131
      %p133 = scmp.eq.s32.totalorder %s132, 0
      %s135 = sadd.s32 %s134, 1
      %s136 = scalar_select %p133, %s134, %s135
      %p139 = pneg %p133
      %p140 = scmp.eq.s32.totalorder %s16, 1
      %p141 = por %p139, %p140
      %p142 = scmp.ne.s32.totalorder %s134, %s137
      %p143 = scmp.eq.s32.totalorder %s16, 0
      %p144 = por %p142, %p143
      %p145 = scmp.ne.s32.totalorder %s134, %s137
      %p146 = scmp.eq.s32.totalorder %s21, 1
      %p147 = por %p145, %p146
      %p148 = scmp.ne.s32.totalorder %s137, %s138
      %p149 = scmp.eq.s32.totalorder %s21, 0
      %p150 = por %p148, %p149
      %p151 = scmp.ne.s32.totalorder %s137, %s138
      %p152 = scmp.eq.s32.totalorder %s22, 1
      %p153 = por %p151, %p152
      %p155 = scmp.ne.s32.totalorder %s138, %s154
      %p156 = scmp.eq.s32.totalorder %s22, 0
      %p157 = por %p155, %p156
      %s158 = ssub.s32 %s23, %s35
      %s159 = ssub.s32 %s24, %s31
      %s160 = sor.u32 %s158, %s159
      %p161 = scmp.eq.s32.totalorder %s160, 0
      %s163 = sadd.s32 %s162, 1
      %s164 = scalar_select %p161, %s162, %s163
      %p167 = pneg %p161
      %p168 = scmp.eq.s32.totalorder %s16, 1
      %p169 = por %p167, %p168
      %p170 = scmp.ne.s32.totalorder %s162, %s165
      %p171 = scmp.eq.s32.totalorder %s16, 0
      %p172 = por %p170, %p171
      %p173 = scmp.ne.s32.totalorder %s162, %s165
      %p174 = scmp.eq.s32.totalorder %s21, 1
      %p175 = por %p173, %p174
      %p176 = scmp.ne.s32.totalorder %s165, %s166
      %p177 = scmp.eq.s32.totalorder %s21, 0
      %p178 = por %p176, %p177
      %p179 = scmp.ne.s32.totalorder %s165, %s166
      %p180 = scmp.eq.s32.totalorder %s22, 1
      %p181 = por %p179, %p180
      %p183 = scmp.ne.s32.totalorder %s166, %s182
      %p184 = scmp.eq.s32.totalorder %s22, 0
      %p185 = por %p183, %p184
      %s186 = ssub.s32 %s23, %s35
      %s187 = ssub.s32 %s24, %s31
      %s188 = sor.u32 %s186, %s187
      %p189 = scmp.eq.s32.totalorder %s188, 0
      %s191 = sadd.s32 %s190, 1
      %s192 = scalar_select %p189, %s190, %s191
      %p195 = pneg %p189
      %p196 = scmp.eq.s32.totalorder %s16, 1
      %p197 = por %p195, %p196
      %p198 = scmp.ne.s32.totalorder %s190, %s193
      %p199 = scmp.eq.s32.totalorder %s16, 0
      %p200 = por %p198, %p199
      %p201 = scmp.ne.s32.totalorder %s190, %s193
      %p202 = scmp.eq.s32.totalorder %s21, 1
      %p203 = por %p201, %p202
      %p204 = scmp.ne.s32.totalorder %s193, %s194
      %p205 = scmp.eq.s32.totalorder %s21, 0
      %p206 = por %p204, %p205
      %p207 = scmp.ne.s32.totalorder %s193, %s194
      %p208 = scmp.eq.s32.totalorder %s22, 1
      %p209 = por %p207, %p208
      %p211 = scmp.ne.s32.totalorder %s194, %s210
      %p212 = scmp.eq.s32.totalorder %s22, 0
      %p213 = por %p211, %p212
      %p214 = scmp.le.s32.totalorder 1, %s16
      %p215 = scmp.lt.s32.totalorder %s16, 3
      %p216 = pnand %p214, %p215
      %p217 = pneg %p216
      // Predicated region
      $region9: #{dense_block.9} parent=5 // pred_check
        _
      $region10: #{dense_block.9} parent=5 // pred_check_branch
        %219 = sbr.rel (%p216) target = $region12
      $region11: #{dense_block.9} parent=5 // pred_region
        %s220 = ssub.s32 %s16, 1
        // Predicated region
        $region13: #{dense_block.9} parent=11 // pred_check
          %p221 = pneg %p75
        $region14: #{dense_block.9} parent=11 // pred_check_branch
          %223 = sbr.rel (%p221) target = $region16
        $region15: #{dense_block.9} parent=11 // pred_region
          _
        $region16: #{dense_block.9} parent=11 // pred_fallthru
          _
        // Predicated region
        $region17: #{dense_block.9} parent=11 // pred_check
          %p224 = pneg %p96
        $region18: #{dense_block.9} parent=11 // pred_check_branch
          %226 = sbr.rel (%p224) target = $region20
        $region19: #{dense_block.9} parent=11 // pred_region
          _
        $region20: #{dense_block.9} parent=11 // pred_fallthru
          _
        // Predicated region
        $region21: #{dense_block.9} parent=11 // pred_check
          %p227 = pneg %p122
        $region22: #{dense_block.9} parent=11 // pred_check_branch
          %229 = sbr.rel (%p227) target = $region24
        $region23: #{dense_block.9} parent=11 // pred_region
          %p230 = scmp.lt.s32.totalorder %s26, 0
          %s231 = scalar_select %p230, %s26, 0
          %s232 = smul.addr %s231, 4
          %s233 = scalar_lea.vmem %s3, %s232
        $region24: #{dense_block.9} parent=11 // pred_fallthru
          _
      $region12: #{dense_block.9} parent=5 // pred_fallthru
        _
      %p234 = scmp.lt.s32.totalorder %s16, 2
      // Predicated region
      $region25: #{dense_block.9} parent=5 // pred_check
        %p235 = pneg %p234
      $region26: #{dense_block.9} parent=5 // pred_check_branch
        %237 = sbr.rel (%p235) target = $region28
      $region27: #{dense_block.9} parent=5 // pred_region
        // Predicated region
        $region29: #{dense_block.9} parent=27 // pred_check
          %p238 = pneg %p48
        $region30: #{dense_block.9} parent=27 // pred_check_branch
          %240 = sbr.rel (%p238) target = $region32
        $region31: #{dense_block.9} parent=27 // pred_region
          %p241 = scmp.lt.s32.totalorder %s23, 1
          %s242 = scalar_select %p241, %s23, 1
          %s243 = smul.addr %s242, 32
          %s244 = smul.addr %s243, 4
          %s245 = scalar_lea.vmem %s0, %s244
        $region32: #{dense_block.9} parent=27 // pred_fallthru
          _
        // Predicated region
        $region33: #{dense_block.9} parent=27 // pred_check
          %p246 = pneg %p144
        $region34: #{dense_block.9} parent=27 // pred_check_branch
          %248 = sbr.rel (%p246) target = $region36
        $region35: #{dense_block.9} parent=27 // pred_region
          %p249 = scmp.lt.s32.totalorder %s23, 1
          %s250 = scalar_select %p249, %s23, 1
          %p251 = scmp.lt.s32.totalorder %s24, 0
          %s252 = scalar_select %p251, %s24, 0
          %s253 = smul.addr %s250, 32
          %s254 = sadd.s32 %s252, %s253
          %s255 = smul.addr %s254, 4
          %s256 = scalar_lea.vmem %s4, %s255
        $region36: #{dense_block.9} parent=27 // pred_fallthru
          _
      $region28: #{dense_block.9} parent=5 // pred_fallthru
        _
      %p257 = scmp.le.s32.totalorder 1, %s16
      %p258 = scmp.lt.s32.totalorder %s16, 3
      %p259 = pnand %p257, %p258
      %p260 = pneg %p259
      // Predicated region
      $region37: #{dense_block.9} parent=5 // pred_check
        _
      $region38: #{dense_block.9} parent=5 // pred_check_branch
        %262 = sbr.rel (%p259) target = $region40
      $region39: #{dense_block.9} parent=5 // pred_region
        %s263 = ssub.s32 %s16, 1
        %p264 = scmp.lt.s32.totalorder %s25, 1
        %s265 = scalar_select %p264, %s25, 1
        %s266 = smul.addr %s265, 32
        %s267 = smul.addr %s266, 4
        %s268 = scalar_lea.vmem %s0, %s267
        %p269 = pneg %p54
        %p270 = pneg %p51
        %p271 = pneg %p75
        %p272 = pneg %p72
        %p273 = pneg %p96
        %p274 = pneg %p93
        %p275 = scmp.lt.s32.totalorder %s26, 0
        %s276 = scalar_select %p275, %s26, 0
        %s277 = smul.addr %s276, 4
        %s278 = scalar_lea.vmem %s3, %s277
        %p279 = pneg %p122
        %p280 = pneg %p119
        %p281 = scmp.lt.s32.totalorder %s25, 1
        %s282 = scalar_select %p281, %s25, 1
        %p283 = scmp.lt.s32.totalorder %s26, 0
        %s284 = scalar_select %p283, %s26, 0
        %s285 = smul.addr %s282, 32
        %s286 = sadd.s32 %s284, %s285
        %s287 = smul.addr %s286, 4
        %s288 = scalar_lea.vmem %s4, %s287
        %p289 = pneg %p150
        %p290 = pneg %p147
        %p291 = pneg %p178
        %p292 = pneg %p175
        %p293 = scmp.lt.s32.totalorder %s25, 1
        %s294 = scalar_select %p293, %s25, 1
        %p295 = scmp.lt.s32.totalorder %s26, 0
        %s296 = scalar_select %p295, %s26, 0
        %s297 = smul.addr %s294, 32
        %s298 = sadd.s32 %s296, %s297
        %s299 = smul.addr %s298, 4
        %s300 = scalar_lea.vmem %s5, %s299
        %p301 = pneg %p206
        %p302 = pneg %p203
        %s303 = sand.u32 %s193, 1
        %s304 = scalar_lea.sflag [#allocation4], %s303
        %s305 = sand.u32 %s193, 1
        %s306 = smul.addr %s305, 2
        %s307 = scalar_lea.vmem [#allocation3], %s306
        %p308 = scmp.lt.s32.totalorder %s25, 1
        %s309 = scalar_select %p308, %s25, 1
        %s310 = smul.addr %s309, 32
        %s311 = smul.addr %s310, 4
        %s312 = scalar_lea.vmem %s0, %s311
        %p313 = scmp.lt.s32.totalorder %s26, 0
        %s314 = scalar_select %p313, %s26, 0
        %s315 = smul.addr %s314, 4
        %s316 = scalar_lea.vmem %s3, %s315
        %p317 = scmp.lt.s32.totalorder %s25, 1
        %s318 = scalar_select %p317, %s25, 1
        %p319 = scmp.lt.s32.totalorder %s26, 0
        %s320 = scalar_select %p319, %s26, 0
        %s321 = smul.addr %s318, 32
        %s322 = sadd.s32 %s320, %s321
        %s323 = smul.addr %s322, 4
        %s324 = scalar_lea.vmem %s4, %s323
        %p325 = scmp.lt.s32.totalorder %s25, 1
        %s326 = scalar_select %p325, %s25, 1
        %p327 = scmp.lt.s32.totalorder %s26, 0
        %s328 = scalar_select %p327, %s26, 0
        %s329 = smul.addr %s326, 32
        %s330 = sadd.s32 %s328, %s329
        %s331 = smul.addr %s330, 4
        %s332 = scalar_lea.vmem %s5, %s331
        %v334 = vld [vmem:[%s312] sm:$0xf]
        %v335 = vld [vmem:[%s312 + $0x4] sm:$0xf]
        %v336 = vld [vmem:[%s312 + $0x8] sm:$0xf]
        %v337 = vld [vmem:[%s312 + $0xc] sm:$0xf]
        %v338 = vld [vmem:[%s312 + $0x10] sm:$0xf]
        %v339 = vld [vmem:[%s312 + $0x14] sm:$0xf]
        %v340 = vld [vmem:[%s312 + $0x18] sm:$0xf]
        %v341 = vld [vmem:[%s312 + $0x1c] sm:$0xf]
        %v342 = vld [vmem:[%s312 + $0x20] sm:$0xf]
        %v343 = vld [vmem:[%s312 + $0x24] sm:$0xf]
        %v344 = vld [vmem:[%s312 + $0x28] sm:$0xf]
        %v345 = vld [vmem:[%s312 + $0x2c] sm:$0xf]
        %v346 = vld [vmem:[%s312 + $0x30] sm:$0xf]
        %v347 = vld [vmem:[%s312 + $0x34] sm:$0xf]
        %v348 = vld [vmem:[%s312 + $0x38] sm:$0xf]
        %v349 = vld [vmem:[%s312 + $0x3c] sm:$0xf]
        %v350 = vld [vmem:[%s312 + $0x40] sm:$0xf]
        %v351 = vld [vmem:[%s312 + $0x44] sm:$0xf]
        %v352 = vld [vmem:[%s312 + $0x48] sm:$0xf]
        %v353 = vld [vmem:[%s312 + $0x4c] sm:$0xf]
        %v354 = vld [vmem:[%s312 + $0x50] sm:$0xf]
        %v355 = vld [vmem:[%s312 + $0x54] sm:$0xf]
        %v356 = vld [vmem:[%s312 + $0x58] sm:$0xf]
        %v357 = vld [vmem:[%s312 + $0x5c] sm:$0xf]
        %v358 = vld [vmem:[%s312 + $0x60] sm:$0xf]
        %v359 = vld [vmem:[%s312 + $0x64] sm:$0xf]
        %v360 = vld [vmem:[%s312 + $0x68] sm:$0xf]
        %v361 = vld [vmem:[%s312 + $0x6c] sm:$0xf]
        %v362 = vld [vmem:[%s312 + $0x70] sm:$0xf]
        %v363 = vld [vmem:[%s312 + $0x74] sm:$0xf]
        %v364 = vld [vmem:[%s312 + $0x78] sm:$0xf]
        %v365 = vld [vmem:[%s312 + $0x7c] sm:$0xf]
        %v366 = vunpack.c.l.bf16 %v334
        %v367 = vunpack.c.l.bf16 %v335
        %v368 = vunpack.c.l.bf16 %v336
        %v369 = vunpack.c.l.bf16 %v337
        %v370 = vunpack.c.l.bf16 %v338
        %v371 = vunpack.c.l.bf16 %v339
        %v372 = vunpack.c.l.bf16 %v340
        %v373 = vunpack.c.l.bf16 %v341
        %v374 = vunpack.c.l.bf16 %v342
        %v375 = vunpack.c.l.bf16 %v343
        %v376 = vunpack.c.l.bf16 %v344
        %v377 = vunpack.c.l.bf16 %v345
        %v378 = vunpack.c.l.bf16 %v346
        %v379 = vunpack.c.l.bf16 %v347
        %v380 = vunpack.c.l.bf16 %v348
        %v381 = vunpack.c.l.bf16 %v349
        %v382 = vunpack.c.l.bf16 %v350
        %v383 = vunpack.c.l.bf16 %v351
        %v384 = vunpack.c.l.bf16 %v352
        %v385 = vunpack.c.l.bf16 %v353
        %v386 = vunpack.c.l.bf16 %v354
        %v387 = vunpack.c.l.bf16 %v355
        %v388 = vunpack.c.l.bf16 %v356
        %v389 = vunpack.c.l.bf16 %v357
        %v390 = vunpack.c.l.bf16 %v358
        %v391 = vunpack.c.l.bf16 %v359
        %v392 = vunpack.c.l.bf16 %v360
        %v393 = vunpack.c.l.bf16 %v361
        %v394 = vunpack.c.l.bf16 %v362
        %v395 = vunpack.c.l.bf16 %v363
        %v396 = vunpack.c.l.bf16 %v364
        %v397 = vunpack.c.l.bf16 %v365
        %v398 = vld [vmem:[%s1] sm:$0x1]
        %v400 = vlaneseq
        %v401 = vshrl.u32 %v400, 7
        %v402 = vsub.s32 0, %v401
        %v403 = vrot.slane %v398, %v402
        %v405 = vmul.f32 %v366, %v403
        %v406 = vmul.f32 %v367, %v403
        %v407 = vmul.f32 %v368, %v403
        %v408 = vmul.f32 %v369, %v403
        %v409 = vmul.f32 %v370, %v403
        %v410 = vmul.f32 %v371, %v403
        %v411 = vmul.f32 %v372, %v403
        %v412 = vmul.f32 %v373, %v403
        %v413 = vmul.f32 %v374, %v403
        %v414 = vmul.f32 %v375, %v403
        %v415 = vmul.f32 %v376, %v403
        %v416 = vmul.f32 %v377, %v403
        %v417 = vmul.f32 %v378, %v403
        %v418 = vmul.f32 %v379, %v403
        %v419 = vmul.f32 %v380, %v403
        %v420 = vmul.f32 %v381, %v403
        %v421 = vmul.f32 %v382, %v403
        %v422 = vmul.f32 %v383, %v403
        %v423 = vmul.f32 %v384, %v403
        %v424 = vmul.f32 %v385, %v403
        %v425 = vmul.f32 %v386, %v403
        %v426 = vmul.f32 %v387, %v403
        %v427 = vmul.f32 %v388, %v403
        %v428 = vmul.f32 %v389, %v403
        %v429 = vmul.f32 %v390, %v403
        %v430 = vmul.f32 %v391, %v403
        %v431 = vmul.f32 %v392, %v403
        %v432 = vmul.f32 %v393, %v403
        %v433 = vmul.f32 %v394, %v403
        %v434 = vmul.f32 %v395, %v403
        %v435 = vmul.f32 %v396, %v403
        %v436 = vmul.f32 %v397, %v403
        %v437 = vld [vmem:[%s2] sm:$0x1]
        %v439 = vlaneseq
        %v440 = vshrl.u32 %v439, 7
        %v441 = vsub.s32 0, %v440
        %v442 = vrot.slane %v437, %v441
        %v444 = vadd.f32 %v405, %v442
        %v445 = vadd.f32 %v406, %v442
        %v446 = vadd.f32 %v407, %v442
        %v447 = vadd.f32 %v408, %v442
        %v448 = vadd.f32 %v409, %v442
        %v449 = vadd.f32 %v410, %v442
        %v450 = vadd.f32 %v411, %v442
        %v451 = vadd.f32 %v412, %v442
        %v452 = vadd.f32 %v413, %v442
        %v453 = vadd.f32 %v414, %v442
        %v454 = vadd.f32 %v415, %v442
        %v455 = vadd.f32 %v416, %v442
        %v456 = vadd.f32 %v417, %v442
        %v457 = vadd.f32 %v418, %v442
        %v458 = vadd.f32 %v419, %v442
        %v459 = vadd.f32 %v420, %v442
        %v460 = vadd.f32 %v421, %v442
        %v461 = vadd.f32 %v422, %v442
        %v462 = vadd.f32 %v423, %v442
        %v463 = vadd.f32 %v424, %v442
        %v464 = vadd.f32 %v425, %v442
        %v465 = vadd.f32 %v426, %v442
        %v466 = vadd.f32 %v427, %v442
        %v467 = vadd.f32 %v428, %v442
        %v468 = vadd.f32 %v429, %v442
        %v469 = vadd.f32 %v430, %v442
        %v470 = vadd.f32 %v431, %v442
        %v471 = vadd.f32 %v432, %v442
        %v472 = vadd.f32 %v433, %v442
        %v473 = vadd.f32 %v434, %v442
        %v474 = vadd.f32 %v435, %v442
        %v475 = vadd.f32 %v436, %v442
        %v476 = vmax.f32 %v444, 0.0
        %v477 = vmax.f32 %v445, 0.0
        %v478 = vmax.f32 %v446, 0.0
        %v479 = vmax.f32 %v447, 0.0
        %v480 = vmax.f32 %v448, 0.0
        %v481 = vmax.f32 %v449, 0.0
        %v482 = vmax.f32 %v450, 0.0
        %v483 = vmax.f32 %v451, 0.0
        %v484 = vmax.f32 %v452, 0.0
        %v485 = vmax.f32 %v453, 0.0
        %v486 = vmax.f32 %v454, 0.0
        %v487 = vmax.f32 %v455, 0.0
        %v488 = vmax.f32 %v456, 0.0
        %v489 = vmax.f32 %v457, 0.0
        %v490 = vmax.f32 %v458, 0.0
        %v491 = vmax.f32 %v459, 0.0
        %v492 = vmax.f32 %v460, 0.0
        %v493 = vmax.f32 %v461, 0.0
        %v494 = vmax.f32 %v462, 0.0
        %v495 = vmax.f32 %v463, 0.0
        %v496 = vmax.f32 %v464, 0.0
        %v497 = vmax.f32 %v465, 0.0
        %v498 = vmax.f32 %v466, 0.0
        %v499 = vmax.f32 %v467, 0.0
        %v500 = vmax.f32 %v468, 0.0
        %v501 = vmax.f32 %v469, 0.0
        %v502 = vmax.f32 %v470, 0.0
        %v503 = vmax.f32 %v471, 0.0
        %v504 = vmax.f32 %v472, 0.0
        %v505 = vmax.f32 %v473, 0.0
        %v506 = vmax.f32 %v474, 0.0
        %v507 = vmax.f32 %v475, 0.0
        %v508 = vpack.c.bf16 %v477, %v476
        %v509 = vpack.c.bf16 %v479, %v478
        %v510 = vpack.c.bf16 %v481, %v480
        %v511 = vpack.c.bf16 %v483, %v482
        %v512 = vpack.c.bf16 %v485, %v484
        %v513 = vpack.c.bf16 %v487, %v486
        %v514 = vpack.c.bf16 %v489, %v488
        %v515 = vpack.c.bf16 %v491, %v490
        %v516 = vpack.c.bf16 %v493, %v492
        %v517 = vpack.c.bf16 %v495, %v494
        %v518 = vpack.c.bf16 %v497, %v496
        %v519 = vpack.c.bf16 %v499, %v498
        %v520 = vpack.c.bf16 %v501, %v500
        %v521 = vpack.c.bf16 %v503, %v502
        %v522 = vpack.c.bf16 %v505, %v504
        %v523 = vpack.c.bf16 %v507, %v506
        %524 = vst [vmem:[#allocation2] sm:$0xff] 0
        %525 = vst [vmem:[#allocation2 + $0x8] sm:$0xff] 0
        %526 = vst [vmem:[#allocation2 + $0x10] sm:$0xff] 0
        %s527 = scalar_lea.vmem [#allocation2], 408
        %528 = vst [vmem:[%s527] sm:$0xff] 0
        %529 = vst [vmem:[%s527 + $0x8] sm:$0xff] 0
        %530 = vst [vmem:[%s527 + $0x10] sm:$0xff] 0
        %531 = vst [vmem:[#allocation2] sm:$0xff] 0
        %532 = vst [vmem:[#allocation2 + $0x18] sm:$0xff] 0
        %533 = vst [vmem:[#allocation2 + $0x30] sm:$0xff] 0
        %534 = vst [vmem:[#allocation2 + $0x48] sm:$0xff] 0
        %535 = vst [vmem:[#allocation2 + $0x60] sm:$0xff] 0
        %536 = vst [vmem:[#allocation2 + $0x78] sm:$0xff] 0
        %537 = vst [vmem:[#allocation2 + $0x90] sm:$0xff] 0
        %538 = vst [vmem:[#allocation2 + $0xa8] sm:$0xff] 0
        %539 = vst [vmem:[#allocation2 + $0xc0] sm:$0xff] 0
        %540 = vst [vmem:[#allocation2 + $0xd8] sm:$0xff] 0
        %541 = vst [vmem:[#allocation2 + $0xf0] sm:$0xff] 0
        %542 = vst [vmem:[#allocation2 + $0x108] sm:$0xff] 0
        %543 = vst [vmem:[#allocation2 + $0x120] sm:$0xff] 0
        %544 = vst [vmem:[#allocation2 + $0x138] sm:$0xff] 0
        %545 = vst [vmem:[#allocation2 + $0x150] sm:$0xff] 0
        %546 = vst [vmem:[#allocation2 + $0x168] sm:$0xff] 0
        %547 = vst [vmem:[#allocation2 + $0x180] sm:$0xff] 0
        %548 = vst [vmem:[#allocation2 + $0x198] sm:$0xff] 0
        %549 = vst [vmem:[#allocation2 + $0x10] sm:$0xff] 0
        %550 = vst [vmem:[#allocation2 + $0x28] sm:$0xff] 0
        %551 = vst [vmem:[#allocation2 + $0x40] sm:$0xff] 0
        %552 = vst [vmem:[#allocation2 + $0x58] sm:$0xff] 0
        %553 = vst [vmem:[#allocation2 + $0x70] sm:$0xff] 0
        %554 = vst [vmem:[#allocation2 + $0x88] sm:$0xff] 0
        %555 = vst [vmem:[#allocation2 + $0xa0] sm:$0xff] 0
        %556 = vst [vmem:[#allocation2 + $0xb8] sm:$0xff] 0
        %557 = vst [vmem:[#allocation2 + $0xd0] sm:$0xff] 0
        %558 = vst [vmem:[#allocation2 + $0xe8] sm:$0xff] 0
        %559 = vst [vmem:[#allocation2 + $0x100] sm:$0xff] 0
        %560 = vst [vmem:[#allocation2 + $0x118] sm:$0xff] 0
        %561 = vst [vmem:[#allocation2 + $0x130] sm:$0xff] 0
        %562 = vst [vmem:[#allocation2 + $0x148] sm:$0xff] 0
        %563 = vst [vmem:[#allocation2 + $0x160] sm:$0xff] 0
        %564 = vst [vmem:[#allocation2 + $0x178] sm:$0xff] 0
        %565 = vst [vmem:[#allocation2 + $0x190] sm:$0xff] 0
        %566 = vst [vmem:[#allocation2 + $0x1a8] sm:$0xff] 0
        %s567 = scalar_lea.vmem [#allocation2], 24
        %568 = vst [vmem:[%s567 + $0x8] sm:$0xff] %v508
        %569 = vst [vmem:[%s567 + $0x20] sm:$0xff] %v509
        %570 = vst [vmem:[%s567 + $0x38] sm:$0xff] %v510
        %571 = vst [vmem:[%s567 + $0x50] sm:$0xff] %v511
        %572 = vst [vmem:[%s567 + $0x68] sm:$0xff] %v512
        %573 = vst [vmem:[%s567 + $0x80] sm:$0xff] %v513
        %574 = vst [vmem:[%s567 + $0x98] sm:$0xff] %v514
        %575 = vst [vmem:[%s567 + $0xb0] sm:$0xff] %v515
        %576 = vst [vmem:[%s567 + $0xc8] sm:$0xff] %v516
        %577 = vst [vmem:[%s567 + $0xe0] sm:$0xff] %v517
        %578 = vst [vmem:[%s567 + $0xf8] sm:$0xff] %v518
        %579 = vst [vmem:[%s567 + $0x110] sm:$0xff] %v519
        %580 = vst [vmem:[%s567 + $0x128] sm:$0xff] %v520
        %581 = vst [vmem:[%s567 + $0x140] sm:$0xff] %v521
        %582 = vst [vmem:[%s567 + $0x158] sm:$0xff] %v522
        %583 = vst [vmem:[%s567 + $0x170] sm:$0xff] %v523
        %v584 = vld [vmem:[#allocation2] sm:$0x80]
        %v585 = vld [vmem:[#allocation2 + $0x8] sm:$0xff]
        %v586 = vld [vmem:[#allocation2 + $0x18] sm:$0x80]
        %v587 = vld [vmem:[#allocation2 + $0x20] sm:$0xff]
        %v588 = vld [vmem:[#allocation2 + $0x30] sm:$0x80]
        %v589 = vld [vmem:[#allocation2 + $0x38] sm:$0xff]
        %v590 = vld [vmem:[#allocation2 + $0x48] sm:$0x80]
        %v591 = vld [vmem:[#allocation2 + $0x50] sm:$0xff]
        %v592 = vld [vmem:[#allocation2 + $0x60] sm:$0x80]
        %v593 = vld [vmem:[#allocation2 + $0x68] sm:$0xff]
        %v594 = vld [vmem:[#allocation2 + $0x78] sm:$0x80]
        %v595 = vld [vmem:[#allocation2 + $0x80] sm:$0xff]
        %v596 = vld [vmem:[#allocation2 + $0x90] sm:$0x80]
        %v597 = vld [vmem:[#allocation2 + $0x98] sm:$0xff]
        %v598 = vld [vmem:[#allocation2 + $0xa8] sm:$0x80]
        %v599 = vld [vmem:[#allocation2 + $0xb0] sm:$0xff]
        %v600 = vld [vmem:[#allocation2 + $0xc0] sm:$0x80]
        %v601 = vld [vmem:[#allocation2 + $0xc8] sm:$0xff]
        %v602 = vld [vmem:[#allocation2 + $0xd8] sm:$0x80]
        %v603 = vld [vmem:[#allocation2 + $0xe0] sm:$0xff]
        %v604 = vld [vmem:[#allocation2 + $0xf0] sm:$0x80]
        %v605 = vld [vmem:[#allocation2 + $0xf8] sm:$0xff]
        %v606 = vld [vmem:[#allocation2 + $0x108] sm:$0x80]
        %v607 = vld [vmem:[#allocation2 + $0x110] sm:$0xff]
        %v608 = vld [vmem:[#allocation2 + $0x120] sm:$0x80]
        %v609 = vld [vmem:[#allocation2 + $0x128] sm:$0xff]
        %v610 = vld [vmem:[#allocation2 + $0x138] sm:$0x80]
        %v611 = vld [vmem:[#allocation2 + $0x140] sm:$0xff]
        %v612 = vld [vmem:[#allocation2 + $0x150] sm:$0x80]
        %v613 = vld [vmem:[#allocation2 + $0x158] sm:$0xff]
        %v614 = vld [vmem:[#allocation2 + $0x168] sm:$0x80]
        %v615 = vld [vmem:[#allocation2 + $0x170] sm:$0xff]
        %vm616 = vsmask.f32 256
        %v618 = vshrl.u32 %v584, 16
        %v620 = vrot.slane %v618, 7
        %v622 = vshrl.u32 %v585, 16
        %v624 = vrot.slane %v622, 7
        %v625 = vshll.u32 %v585, 16
        %v627 = vor.u32 %v624, %v625
        %v628 = vsel %vm616, %v620, %v627
        %v630 = vshrl.u32 %v586, 16
        %v632 = vrot.slane %v630, 7
        %v634 = vshrl.u32 %v587, 16
        %v636 = vrot.slane %v634, 7
        %v637 = vshll.u32 %v587, 16
        %v639 = vor.u32 %v636, %v637
        %v640 = vsel %vm616, %v632, %v639
        %v642 = vshrl.u32 %v588, 16
        %v644 = vrot.slane %v642, 7
        %v646 = vshrl.u32 %v589, 16
        %v648 = vrot.slane %v646, 7
        %v649 = vshll.u32 %v589, 16
        %v651 = vor.u32 %v648, %v649
        %v652 = vsel %vm616, %v644, %v651
        %v654 = vshrl.u32 %v590, 16
        %v656 = vrot.slane %v654, 7
        %v658 = vshrl.u32 %v591, 16
        %v660 = vrot.slane %v658, 7
        %v661 = vshll.u32 %v591, 16
        %v663 = vor.u32 %v660, %v661
        %v664 = vsel %vm616, %v656, %v663
        %v666 = vshrl.u32 %v592, 16
        %v668 = vrot.slane %v666, 7
        %v670 = vshrl.u32 %v593, 16
        %v672 = vrot.slane %v670, 7
        %v673 = vshll.u32 %v593, 16
        %v675 = vor.u32 %v672, %v673
        %v676 = vsel %vm616, %v668, %v675
        %v678 = vshrl.u32 %v594, 16
        %v680 = vrot.slane %v678, 7
        %v682 = vshrl.u32 %v595, 16
        %v684 = vrot.slane %v682, 7
        %v685 = vshll.u32 %v595, 16
        %v687 = vor.u32 %v684, %v685
        %v688 = vsel %vm616, %v680, %v687
        %v690 = vshrl.u32 %v596, 16
        %v692 = vrot.slane %v690, 7
        %v694 = vshrl.u32 %v597, 16
        %v696 = vrot.slane %v694, 7
        %v697 = vshll.u32 %v597, 16
        %v699 = vor.u32 %v696, %v697
        %v700 = vsel %vm616, %v692, %v699
        %v702 = vshrl.u32 %v598, 16
        %v704 = vrot.slane %v702, 7
        %v706 = vshrl.u32 %v599, 16
        %v708 = vrot.slane %v706, 7
        %v709 = vshll.u32 %v599, 16
        %v711 = vor.u32 %v708, %v709
        %v712 = vsel %vm616, %v704, %v711
        %v714 = vshrl.u32 %v600, 16
        %v716 = vrot.slane %v714, 7
        %v718 = vshrl.u32 %v601, 16
        %v720 = vrot.slane %v718, 7
        %v721 = vshll.u32 %v601, 16
        %v723 = vor.u32 %v720, %v721
        %v724 = vsel %vm616, %v716, %v723
        %v726 = vshrl.u32 %v602, 16
        %v728 = vrot.slane %v726, 7
        %v730 = vshrl.u32 %v603, 16
        %v732 = vrot.slane %v730, 7
        %v733 = vshll.u32 %v603, 16
        %v735 = vor.u32 %v732, %v733
        %v736 = vsel %vm616, %v728, %v735
        %v738 = vshrl.u32 %v604, 16
        %v740 = vrot.slane %v738, 7
        %v742 = vshrl.u32 %v605, 16
        %v744 = vrot.slane %v742, 7
        %v745 = vshll.u32 %v605, 16
        %v747 = vor.u32 %v744, %v745
        %v748 = vsel %vm616, %v740, %v747
        %v750 = vshrl.u32 %v606, 16
        %v752 = vrot.slane %v750, 7
        %v754 = vshrl.u32 %v607, 16
        %v756 = vrot.slane %v754, 7
        %v757 = vshll.u32 %v607, 16
        %v759 = vor.u32 %v756, %v757
        %v760 = vsel %vm616, %v752, %v759
        %v762 = vshrl.u32 %v608, 16
        %v764 = vrot.slane %v762, 7
        %v766 = vshrl.u32 %v609, 16
        %v768 = vrot.slane %v766, 7
        %v769 = vshll.u32 %v609, 16
        %v771 = vor.u32 %v768, %v769
        %v772 = vsel %vm616, %v764, %v771
        %v774 = vshrl.u32 %v610, 16
        %v776 = vrot.slane %v774, 7
        %v778 = vshrl.u32 %v611, 16
        %v780 = vrot.slane %v778, 7
        %v781 = vshll.u32 %v611, 16
        %v783 = vor.u32 %v780, %v781
        %v784 = vsel %vm616, %v776, %v783
        %v786 = vshrl.u32 %v612, 16
        %v788 = vrot.slane %v786, 7
        %v790 = vshrl.u32 %v613, 16
        %v792 = vrot.slane %v790, 7
        %v793 = vshll.u32 %v613, 16
        %v795 = vor.u32 %v792, %v793
        %v796 = vsel %vm616, %v788, %v795
        %v798 = vshrl.u32 %v614, 16
        %v800 = vrot.slane %v798, 7
        %v802 = vshrl.u32 %v615, 16
        %v804 = vrot.slane %v802, 7
        %v805 = vshll.u32 %v615, 16
        %v807 = vor.u32 %v804, %v805
        %v808 = vsel %vm616, %v800, %v807
        %v825 = vld [vmem:[%s316] sm:$0xf]
        %v826 = vld [vmem:[%s316 + $0x4] sm:$0xf]
        %v827 = vld [vmem:[%s316 + $0x8] sm:$0xf]
        %v828 = vld [vmem:[%s316 + $0xc] sm:$0xf]
        %v829 = vld [vmem:[%s316 + $0x10] sm:$0xf]
        %v830 = vld [vmem:[%s316 + $0x14] sm:$0xf]
        %v831 = vld [vmem:[%s316 + $0x18] sm:$0xf]
        %v832 = vld [vmem:[%s316 + $0x1c] sm:$0xf]
        %v833 = vld [vmem:[%s316 + $0x20] sm:$0xf]
        %v834 = vld [vmem:[%s316 + $0x24] sm:$0xf]
        %v835 = vld [vmem:[%s316 + $0x28] sm:$0xf]
        %v836 = vld [vmem:[%s316 + $0x2c] sm:$0xf]
        %v837 = vld [vmem:[%s316 + $0x30] sm:$0xf]
        %v838 = vld [vmem:[%s316 + $0x34] sm:$0xf]
        %v839 = vld [vmem:[%s316 + $0x38] sm:$0xf]
        %v840 = vld [vmem:[%s316 + $0x3c] sm:$0xf]
        %s841 = scalar_lea.vmem %s316, 64
        %v842 = vld [vmem:[%s841] sm:$0xf]
        %v843 = vld [vmem:[%s841 + $0x4] sm:$0xf]
        %v844 = vld [vmem:[%s841 + $0x8] sm:$0xf]
        %v845 = vld [vmem:[%s841 + $0xc] sm:$0xf]
        %v846 = vld [vmem:[%s841 + $0x10] sm:$0xf]
        %v847 = vld [vmem:[%s841 + $0x14] sm:$0xf]
        %v848 = vld [vmem:[%s841 + $0x18] sm:$0xf]
        %v849 = vld [vmem:[%s841 + $0x1c] sm:$0xf]
        %v850 = vld [vmem:[%s841 + $0x20] sm:$0xf]
        %v851 = vld [vmem:[%s841 + $0x24] sm:$0xf]
        %v852 = vld [vmem:[%s841 + $0x28] sm:$0xf]
        %v853 = vld [vmem:[%s841 + $0x2c] sm:$0xf]
        %v854 = vld [vmem:[%s841 + $0x30] sm:$0xf]
        %v855 = vld [vmem:[%s841 + $0x34] sm:$0xf]
        %v856 = vld [vmem:[%s841 + $0x38] sm:$0xf]
        %v857 = vld [vmem:[%s841 + $0x3c] sm:$0xf]
        %v874 = vunpack.c.l.b16 %v842
        %v875 = vunpack.c.l.b16 %v843
        %v876 = vunpack.c.l.b16 %v844
        %v877 = vunpack.c.l.b16 %v845
        %v878 = vunpack.c.l.b16 %v846
        %v879 = vunpack.c.l.b16 %v847
        %v880 = vunpack.c.l.b16 %v848
        %v881 = vunpack.c.l.b16 %v849
        %v882 = vunpack.c.l.b16 %v850
        %v883 = vunpack.c.l.b16 %v851
        %v884 = vunpack.c.l.b16 %v852
        %v885 = vunpack.c.l.b16 %v853
        %v886 = vunpack.c.l.b16 %v854
        %v887 = vunpack.c.l.b16 %v855
        %v888 = vunpack.c.l.b16 %v856
        %v889 = vunpack.c.l.b16 %v857
        %v890 = vpack.c.b16 %v875, %v874
        %v891 = vpack.c.b16 %v877, %v876
        %v892 = vpack.c.b16 %v879, %v878
        %v893 = vpack.c.b16 %v881, %v880
        %v894 = vpack.c.b16 %v883, %v882
        %v895 = vpack.c.b16 %v885, %v884
        %v896 = vpack.c.b16 %v887, %v886
        %v897 = vpack.c.b16 %v889, %v888
        %906 = vmatprep.subr.bf16.mxu0 0
        %907 = vmatpush1.bf16.msra.mxu0 %v890
        %908 = vmatprep.subr.bf16.mxu0 0
        %909 = vmatpush1.bf16.msra.mxu0 %v891
        %910 = vmatprep.subr.bf16.mxu0 0
        %911 = vmatpush1.bf16.msra.mxu0 %v892
        %912 = vmatprep.subr.bf16.mxu0 0
        %913 = vmatpush1.bf16.msra.mxu0 %v893
        %914 = vmatprep.subr.bf16.mxu0 0
        %915 = vmatpush1.bf16.msra.mxu0 %v894
        %916 = vmatprep.subr.bf16.mxu0 0
        %917 = vmatpush1.bf16.msra.mxu0 %v895
        %918 = vmatprep.subr.bf16.mxu0 0
        %919 = vmatpush1.bf16.msra.mxu0 %v896
        %920 = vmatprep.subr.bf16.mxu0 0
        %921 = vmatpush1.bf16.msra.mxu0 %v897
        %922 = vmatprep.subr.bf16.mxu0 0
        %923 = vmatpush1.bf16.msra.mxu0 0
        %924 = vmatprep.subr.bf16.mxu0 0
        %925 = vmatpush1.bf16.msra.mxu0 0
        %926 = vmatprep.subr.bf16.mxu0 0
        %927 = vmatpush1.bf16.msra.mxu0 0
        %928 = vmatprep.subr.bf16.mxu0 0
        %929 = vmatpush1.bf16.msra.mxu0 0
        %930 = vmatprep.subr.bf16.mxu0 0
        %931 = vmatpush1.bf16.msra.mxu0 0
        %932 = vmatprep.subr.bf16.mxu0 0
        %933 = vmatpush1.bf16.msra.mxu0 0
        %934 = vmatprep.subr.bf16.mxu0 0
        %935 = vmatpush1.bf16.msra.mxu0 0
        %936 = vmatprep.subr.bf16.mxu0 0
        %937 = vmatpush1.bf16.msra.mxu0 0
        %938 = vmatprep.mubr.bf16.mxu0 0
        %939 = vmatmul.mubr.bf16.gmra.mrb[0].mxu0 %v585
        %v940 = vpop.f32.mrb[0].mxu0
        %v941 = vadd.f32 0.0, %v940
        %v942 = vpop.f32.mrb[0].mxu0
        %v943 = vpop.f32.mrb[0].mxu0
        %v944 = vadd.f32 0.0, %v943
        %v945 = vpop.f32.mrb[0].mxu0
        %946 = vmatprep.mubr.bf16.mxu0 0
        %947 = vmatmul.mubr.bf16.gmra.mrb[0].mxu0 %v587
        %v948 = vpop.f32.mrb[0].mxu0
        %v949 = vadd.f32 0.0, %v948
        %v950 = vpop.f32.mrb[0].mxu0
        %v951 = vpop.f32.mrb[0].mxu0
        %v952 = vadd.f32 0.0, %v951
        %v953 = vpop.f32.mrb[0].mxu0
        %954 = vmatprep.mubr.bf16.mxu0 0
        %955 = vmatmul.mubr.bf16.gmra.mrb[0].mxu0 %v589
        %v956 = vpop.f32.mrb[0].mxu0
        %v957 = vadd.f32 0.0, %v956
        %v958 = vpop.f32.mrb[0].mxu0
        %v959 = vpop.f32.mrb[0].mxu0
        %v960 = vadd.f32 0.0, %v959
        %v961 = vpop.f32.mrb[0].mxu0
        %962 = vmatprep.mubr.bf16.mxu0 0
        %963 = vmatmul.mubr.bf16.gmra.mrb[0].mxu0 %v591
        %v964 = vpop.f32.mrb[0].mxu0
        %v965 = vadd.f32 0.0, %v964
        %v966 = vpop.f32.mrb[0].mxu0
        %v967 = vpop.f32.mrb[0].mxu0
        %v968 = vadd.f32 0.0, %v967
        %v969 = vpop.f32.mrb[0].mxu0
        %970 = vmatprep.mubr.bf16.mxu0 0
        %971 = vmatmul.mubr.bf16.gmra.mrb[0].mxu0 %v593
        %v972 = vpop.f32.mrb[0].mxu0
        %v973 = vadd.f32 0.0, %v972
        %v974 = vpop.f32.mrb[0].mxu0
        %v975 = vpop.f32.mrb[0].mxu0
        %v976 = vadd.f32 0.0, %v975
        %v977 = vpop.f32.mrb[0].mxu0
        %978 = vmatprep.mubr.bf16.mxu0 0
        %979 = vmatmul.mubr.bf16.gmra.mrb[0].mxu0 %v595
        %v980 = vpop.f32.mrb[0].mxu0
        %v981 = vadd.f32 0.0, %v980
        %v982 = vpop.f32.mrb[0].mxu0
        %v983 = vpop.f32.mrb[0].mxu0
        %v984 = vadd.f32 0.0, %v983
        %v985 = vpop.f32.mrb[0].mxu0
        %986 = vmatprep.mubr.bf16.mxu0 0
        %987 = vmatmul.mubr.bf16.gmra.mrb[0].mxu0 %v597
        %v988 = vpop.f32.mrb[0].mxu0
        %v989 = vadd.f32 0.0, %v988
        %v990 = vpop.f32.mrb[0].mxu0
        %v991 = vpop.f32.mrb[0].mxu0
        %v992 = vadd.f32 0.0, %v991
        %v993 = vpop.f32.mrb[0].mxu0
        %994 = vmatprep.mubr.bf16.mxu0 0
        %995 = vmatmul.mubr.bf16.gmra.mrb[0].mxu0 %v599
        %v996 = vpop.f32.mrb[0].mxu0
        %v997 = vadd.f32 0.0, %v996
        %v998 = vpop.f32.mrb[0].mxu0
        %v999 = vpop.f32.mrb[0].mxu0
        %v1000 = vadd.f32 0.0, %v999
        %v1001 = vpop.f32.mrb[0].mxu0
        %1002 = vmatprep.mubr.bf16.mxu0 0
        %1003 = vmatmul.mubr.bf16.gmra.mrb[0].mxu0 %v601
        %v1004 = vpop.f32.mrb[0].mxu0
        %v1005 = vadd.f32 0.0, %v1004
        %v1006 = vpop.f32.mrb[0].mxu0
        %v1007 = vpop.f32.mrb[0].mxu0
        %v1008 = vadd.f32 0.0, %v1007
        %v1009 = vpop.f32.mrb[0].mxu0
        %1010 = vmatprep.mubr.bf16.mxu0 0
        %1011 = vmatmul.mubr.bf16.gmra.mrb[0].mxu0 %v603
        %v1012 = vpop.f32.mrb[0].mxu0
        %v1013 = vadd.f32 0.0, %v1012
        %v1014 = vpop.f32.mrb[0].mxu0
        %v1015 = vpop.f32.mrb[0].mxu0
        %v1016 = vadd.f32 0.0, %v1015
        %v1017 = vpop.f32.mrb[0].mxu0
        %1018 = vmatprep.mubr.bf16.mxu0 0
        %1019 = vmatmul.mubr.bf16.gmra.mrb[0].mxu0 %v605
        %v1020 = vpop.f32.mrb[0].mxu0
        %v1021 = vadd.f32 0.0, %v1020
        %v1022 = vpop.f32.mrb[0].mxu0
        %v1023 = vpop.f32.mrb[0].mxu0
        %v1024 = vadd.f32 0.0, %v1023
        %v1025 = vpop.f32.mrb[0].mxu0
        %1026 = vmatprep.mubr.bf16.mxu0 0
        %1027 = vmatmul.mubr.bf16.gmra.mrb[0].mxu0 %v607
        %v1028 = vpop.f32.mrb[0].mxu0
        %v1029 = vadd.f32 0.0, %v1028
        %v1030 = vpop.f32.mrb[0].mxu0
        %v1031 = vpop.f32.mrb[0].mxu0
        %v1032 = vadd.f32 0.0, %v1031
        %v1033 = vpop.f32.mrb[0].mxu0
        %1034 = vmatprep.mubr.bf16.mxu0 0
        %1035 = vmatmul.mubr.bf16.gmra.mrb[0].mxu0 %v609
        %v1036 = vpop.f32.mrb[0].mxu0
        %v1037 = vadd.f32 0.0, %v1036
        %v1038 = vpop.f32.mrb[0].mxu0
        %v1039 = vpop.f32.mrb[0].mxu0
        %v1040 = vadd.f32 0.0, %v1039
        %v1041 = vpop.f32.mrb[0].mxu0
        %1042 = vmatprep.mubr.bf16.mxu0 0
        %1043 = vmatmul.mubr.bf16.gmra.mrb[0].mxu0 %v611
        %v1044 = vpop.f32.mrb[0].mxu0
        %v1045 = vadd.f32 0.0, %v1044
        %v1046 = vpop.f32.mrb[0].mxu0
        %v1047 = vpop.f32.mrb[0].mxu0
        %v1048 = vadd.f32 0.0, %v1047
        %v1049 = vpop.f32.mrb[0].mxu0
        %1050 = vmatprep.mubr.bf16.mxu0 0
        %1051 = vmatmul.mubr.bf16.gmra.mrb[0].mxu0 %v613
        %v1052 = vpop.f32.mrb[0].mxu0
        %v1053 = vadd.f32 0.0, %v1052
        %v1054 = vpop.f32.mrb[0].mxu0
        %v1055 = vpop.f32.mrb[0].mxu0
        %v1056 = vadd.f32 0.0, %v1055
        %v1057 = vpop.f32.mrb[0].mxu0
        %1058 = vmatprep.mubr.bf16.mxu0 0
        %1059 = vmatmul.mubr.bf16.gmra.mrb[0].mxu0 %v615
        %v1060 = vpop.f32.mrb[0].mxu0
        %v1061 = vadd.f32 0.0, %v1060
        %v1062 = vpop.f32.mrb[0].mxu0
        %v1063 = vpop.f32.mrb[0].mxu0
        %v1064 = vadd.f32 0.0, %v1063
        %v1065 = vpop.f32.mrb[0].mxu0
        %1066 = vdwg.mxu0
        %v1083 = vunpack.c.l.b16 %v825
        %v1084 = vunpack.c.l.b16 %v826
        %v1085 = vunpack.c.l.b16 %v827
        %v1086 = vunpack.c.l.b16 %v828
        %v1087 = vunpack.c.l.b16 %v829
        %v1088 = vunpack.c.l.b16 %v830
        %v1089 = vunpack.c.l.b16 %v831
        %v1090 = vunpack.c.l.b16 %v832
        %v1091 = vunpack.c.l.b16 %v833
        %v1092 = vunpack.c.l.b16 %v834
        %v1093 = vunpack.c.l.b16 %v835
        %v1094 = vunpack.c.l.b16 %v836
        %v1095 = vunpack.c.l.b16 %v837
        %v1096 = vunpack.c.l.b16 %v838
        %v1097 = vunpack.c.l.b16 %v839
        %v1098 = vunpack.c.l.b16 %v840
        %v1099 = vpack.c.b16 %v1084, %v1083
        %v1100 = vpack.c.b16 %v1086, %v1085
        %v1101 = vpack.c.b16 %v1088, %v1087
        %v1102 = vpack.c.b16 %v1090, %v1089
        %v1103 = vpack.c.b16 %v1092, %v1091
        %v1104 = vpack.c.b16 %v1094, %v1093
        %v1105 = vpack.c.b16 %v1096, %v1095
        %v1106 = vpack.c.b16 %v1098, %v1097
        %1115 = vmatprep.subr.bf16.mxu0 0
        %1116 = vmatpush1.bf16.msra.mxu0 %v1099
        %1117 = vmatprep.subr.bf16.mxu0 0
        %1118 = vmatpush1.bf16.msra.mxu0 %v1100
        %1119 = vmatprep.subr.bf16.mxu0 0
        %1120 = vmatpush1.bf16.msra.mxu0 %v1101
        %1121 = vmatprep.subr.bf16.mxu0 0
        %1122 = vmatpush1.bf16.msra.mxu0 %v1102
        %1123 = vmatprep.subr.bf16.mxu0 0
        %1124 = vmatpush1.bf16.msra.mxu0 %v1103
        %1125 = vmatprep.subr.bf16.mxu0 0
        %1126 = vmatpush1.bf16.msra.mxu0 %v1104
        %1127 = vmatprep.subr.bf16.mxu0 0
        %1128 = vmatpush1.bf16.msra.mxu0 %v1105
        %1129 = vmatprep.subr.bf16.mxu0 0
        %1130 = vmatpush1.bf16.msra.mxu0 %v1106
        %1131 = vmatprep.subr.bf16.mxu0 0
        %1132 = vmatpush1.bf16.msra.mxu0 0
        %1133 = vmatprep.subr.bf16.mxu0 0
        %1134 = vmatpush1.bf16.msra.mxu0 0
        %1135 = vmatprep.subr.bf16.mxu0 0
        %1136 = vmatpush1.bf16.msra.mxu0 0
        %1137 = vmatprep.subr.bf16.mxu0 0
        %1138 = vmatpush1.bf16.msra.mxu0 0
        %1139 = vmatprep.subr.bf16.mxu0 0
        %1140 = vmatpush1.bf16.msra.mxu0 0
        %1141 = vmatprep.subr.bf16.mxu0 0
        %1142 = vmatpush1.bf16.msra.mxu0 0
        %1143 = vmatprep.subr.bf16.mxu0 0
        %1144 = vmatpush1.bf16.msra.mxu0 0
        %1145 = vmatprep.subr.bf16.mxu0 0
        %1146 = vmatpush1.bf16.msra.mxu0 0
        %1147 = vmatprep.mubr.bf16.mxu0 0
        %1148 = vmatmul.mubr.bf16.gmra.mrb[0].mxu0 %v628
        %v1149 = vpop.f32.mrb[0].mxu0
        %v1150 = vadd.f32 %v941, %v1149
        %v1151 = vpop.f32.mrb[0].mxu0
        %v1152 = vpop.f32.mrb[0].mxu0
        %v1153 = vadd.f32 %v944, %v1152
        %v1154 = vpop.f32.mrb[0].mxu0
        %1155 = vmatprep.mubr.bf16.mxu0 0
        %1156 = vmatmul.mubr.bf16.gmra.mrb[0].mxu0 %v640
        %v1157 = vpop.f32.mrb[0].mxu0
        %v1158 = vadd.f32 %v949, %v1157
        %v1159 = vpop.f32.mrb[0].mxu0
        %v1160 = vpop.f32.mrb[0].mxu0
        %v1161 = vadd.f32 %v952, %v1160
        %v1162 = vpop.f32.mrb[0].mxu0
        %1163 = vmatprep.mubr.bf16.mxu0 0
        %1164 = vmatmul.mubr.bf16.gmra.mrb[0].mxu0 %v652
        %v1165 = vpop.f32.mrb[0].mxu0
        %v1166 = vadd.f32 %v957, %v1165
        %v1167 = vpop.f32.mrb[0].mxu0
        %v1168 = vpop.f32.mrb[0].mxu0
        %v1169 = vadd.f32 %v960, %v1168
        %v1170 = vpop.f32.mrb[0].mxu0
        %1171 = vmatprep.mubr.bf16.mxu0 0
        %1172 = vmatmul.mubr.bf16.gmra.mrb[0].mxu0 %v664
        %v1173 = vpop.f32.mrb[0].mxu0
        %v1174 = vadd.f32 %v965, %v1173
        %v1175 = vpop.f32.mrb[0].mxu0
        %v1176 = vpop.f32.mrb[0].mxu0
        %v1177 = vadd.f32 %v968, %v1176
        %v1178 = vpop.f32.mrb[0].mxu0
        %1179 = vmatprep.mubr.bf16.mxu0 0
        %1180 = vmatmul.mubr.bf16.gmra.mrb[0].mxu0 %v676
        %v1181 = vpop.f32.mrb[0].mxu0
        %v1182 = vadd.f32 %v973, %v1181
        %v1183 = vpop.f32.mrb[0].mxu0
        %v1184 = vpop.f32.mrb[0].mxu0
        %v1185 = vadd.f32 %v976, %v1184
        %v1186 = vpop.f32.mrb[0].mxu0
        %1187 = vmatprep.mubr.bf16.mxu0 0
        %1188 = vmatmul.mubr.bf16.gmra.mrb[0].mxu0 %v688
        %v1189 = vpop.f32.mrb[0].mxu0
        %v1190 = vadd.f32 %v981, %v1189
        %v1191 = vpop.f32.mrb[0].mxu0
        %v1192 = vpop.f32.mrb[0].mxu0
        %v1193 = vadd.f32 %v984, %v1192
        %v1194 = vpop.f32.mrb[0].mxu0
        %1195 = vmatprep.mubr.bf16.mxu0 0
        %1196 = vmatmul.mubr.bf16.gmra.mrb[0].mxu0 %v700
        %v1197 = vpop.f32.mrb[0].mxu0
        %v1198 = vadd.f32 %v989, %v1197
        %v1199 = vpop.f32.mrb[0].mxu0
        %v1200 = vpop.f32.mrb[0].mxu0
        %v1201 = vadd.f32 %v992, %v1200
        %v1202 = vpop.f32.mrb[0].mxu0
        %1203 = vmatprep.mubr.bf16.mxu0 0
        %1204 = vmatmul.mubr.bf16.gmra.mrb[0].mxu0 %v712
        %v1205 = vpop.f32.mrb[0].mxu0
        %v1206 = vadd.f32 %v997, %v1205
        %v1207 = vpop.f32.mrb[0].mxu0
        %v1208 = vpop.f32.mrb[0].mxu0
        %v1209 = vadd.f32 %v1000, %v1208
        %v1210 = vpop.f32.mrb[0].mxu0
        %1211 = vmatprep.mubr.bf16.mxu0 0
        %1212 = vmatmul.mubr.bf16.gmra.mrb[0].mxu0 %v724
        %v1213 = vpop.f32.mrb[0].mxu0
        %v1214 = vadd.f32 %v1005, %v1213
        %v1215 = vpop.f32.mrb[0].mxu0
        %v1216 = vpop.f32.mrb[0].mxu0
        %v1217 = vadd.f32 %v1008, %v1216
        %v1218 = vpop.f32.mrb[0].mxu0
        %1219 = vmatprep.mubr.bf16.mxu0 0
        %1220 = vmatmul.mubr.bf16.gmra.mrb[0].mxu0 %v736
        %v1221 = vpop.f32.mrb[0].mxu0
        %v1222 = vadd.f32 %v1013, %v1221
        %v1223 = vpop.f32.mrb[0].mxu0
        %v1224 = vpop.f32.mrb[0].mxu0
        %v1225 = vadd.f32 %v1016, %v1224
        %v1226 = vpop.f32.mrb[0].mxu0
        %1227 = vmatprep.mubr.bf16.mxu0 0
        %1228 = vmatmul.mubr.bf16.gmra.mrb[0].mxu0 %v748
        %v1229 = vpop.f32.mrb[0].mxu0
        %v1230 = vadd.f32 %v1021, %v1229
        %v1231 = vpop.f32.mrb[0].mxu0
        %v1232 = vpop.f32.mrb[0].mxu0
        %v1233 = vadd.f32 %v1024, %v1232
        %v1234 = vpop.f32.mrb[0].mxu0
        %1235 = vmatprep.mubr.bf16.mxu0 0
        %1236 = vmatmul.mubr.bf16.gmra.mrb[0].mxu0 %v760
        %v1237 = vpop.f32.mrb[0].mxu0
        %v1238 = vadd.f32 %v1029, %v1237
        %v1239 = vpop.f32.mrb[0].mxu0
        %v1240 = vpop.f32.mrb[0].mxu0
        %v1241 = vadd.f32 %v1032, %v1240
        %v1242 = vpop.f32.mrb[0].mxu0
        %1243 = vmatprep.mubr.bf16.mxu0 0
        %1244 = vmatmul.mubr.bf16.gmra.mrb[0].mxu0 %v772
        %v1245 = vpop.f32.mrb[0].mxu0
        %v1246 = vadd.f32 %v1037, %v1245
        %v1247 = vpop.f32.mrb[0].mxu0
        %v1248 = vpop.f32.mrb[0].mxu0
        %v1249 = vadd.f32 %v1040, %v1248
        %v1250 = vpop.f32.mrb[0].mxu0
        %1251 = vmatprep.mubr.bf16.mxu0 0
        %1252 = vmatmul.mubr.bf16.gmra.mrb[0].mxu0 %v784
        %v1253 = vpop.f32.mrb[0].mxu0
        %v1254 = vadd.f32 %v1045, %v1253
        %v1255 = vpop.f32.mrb[0].mxu0
        %v1256 = vpop.f32.mrb[0].mxu0
        %v1257 = vadd.f32 %v1048, %v1256
        %v1258 = vpop.f32.mrb[0].mxu0
        %1259 = vmatprep.mubr.bf16.mxu0 0
        %1260 = vmatmul.mubr.bf16.gmra.mrb[0].mxu0 %v796
        %v1261 = vpop.f32.mrb[0].mxu0
        %v1262 = vadd.f32 %v1053, %v1261
        %v1263 = vpop.f32.mrb[0].mxu0
        %v1264 = vpop.f32.mrb[0].mxu0
        %v1265 = vadd.f32 %v1056, %v1264
        %v1266 = vpop.f32.mrb[0].mxu0
        %1267 = vmatprep.mubr.bf16.mxu0 0
        %1268 = vmatmul.mubr.bf16.gmra.mrb[0].mxu0 %v808
        %v1269 = vpop.f32.mrb[0].mxu0
        %v1270 = vadd.f32 %v1061, %v1269
        %v1271 = vpop.f32.mrb[0].mxu0
        %v1272 = vpop.f32.mrb[0].mxu0
        %v1273 = vadd.f32 %v1064, %v1272
        %v1274 = vpop.f32.mrb[0].mxu0
        %1275 = vdwg.mxu0
        %v1276 = vld [vmem:[#allocation2 + $0x8] sm:$0xff]
        %v1277 = vld [vmem:[#allocation2 + $0x10] sm:$0x1]
        %v1278 = vld [vmem:[#allocation2 + $0x20] sm:$0xff]
        %v1279 = vld [vmem:[#allocation2 + $0x28] sm:$0x1]
        %v1280 = vld [vmem:[#allocation2 + $0x38] sm:$0xff]
        %v1281 = vld [vmem:[#allocation2 + $0x40] sm:$0x1]
        %v1282 = vld [vmem:[#allocation2 + $0x50] sm:$0xff]
        %v1283 = vld [vmem:[#allocation2 + $0x58] sm:$0x1]
        %v1284 = vld [vmem:[#allocation2 + $0x68] sm:$0xff]
        %v1285 = vld [vmem:[#allocation2 + $0x70] sm:$0x1]
        %v1286 = vld [vmem:[#allocation2 + $0x80] sm:$0xff]
        %v1287 = vld [vmem:[#allocation2 + $0x88] sm:$0x1]
        %v1288 = vld [vmem:[#allocation2 + $0x98] sm:$0xff]
        %v1289 = vld [vmem:[#allocation2 + $0xa0] sm:$0x1]
        %v1290 = vld [vmem:[#allocation2 + $0xb0] sm:$0xff]
        %v1291 = vld [vmem:[#allocation2 + $0xb8] sm:$0x1]
        %v1292 = vld [vmem:[#allocation2 + $0xc8] sm:$0xff]
        %v1293 = vld [vmem:[#allocation2 + $0xd0] sm:$0x1]
        %v1294 = vld [vmem:[#allocation2 + $0xe0] sm:$0xff]
        %v1295 = vld [vmem:[#allocation2 + $0xe8] sm:$0x1]
        %v1296 = vld [vmem:[#allocation2 + $0xf8] sm:$0xff]
        %v1297 = vld [vmem:[#allocation2 + $0x100] sm:$0x1]
        %v1298 = vld [vmem:[#allocation2 + $0x110] sm:$0xff]
        %v1299 = vld [vmem:[#allocation2 + $0x118] sm:$0x1]
        %v1300 = vld [vmem:[#allocation2 + $0x128] sm:$0xff]
        %v1301 = vld [vmem:[#allocation2 + $0x130] sm:$0x1]
        %v1302 = vld [vmem:[#allocation2 + $0x140] sm:$0xff]
        %v1303 = vld [vmem:[#allocation2 + $0x148] sm:$0x1]
        %v1304 = vld [vmem:[#allocation2 + $0x158] sm:$0xff]
        %v1305 = vld [vmem:[#allocation2 + $0x160] sm:$0x1]
        %v1306 = vld [vmem:[#allocation2 + $0x170] sm:$0xff]
        %v1307 = vld [vmem:[#allocation2 + $0x178] sm:$0x1]
        %vm1308 = vsmask.f32 7424
        %v1310 = vshrl.u32 %v1276, 16
        %v1312 = vshll.u32 %v1276, 16
        %v1314 = vrot.slane %v1312, 1
        %v1315 = vor.u32 %v1310, %v1314
        %v1317 = vshll.u32 %v1277, 16
        %v1319 = vrot.slane %v1317, 1
        %v1320 = vsel %vm1308, %v1315, %v1319
        %v1322 = vshrl.u32 %v1278, 16
        %v1324 = vshll.u32 %v1278, 16
        %v1326 = vrot.slane %v1324, 1
        %v1327 = vor.u32 %v1322, %v1326
        %v1329 = vshll.u32 %v1279, 16
        %v1331 = vrot.slane %v1329, 1
        %v1332 = vsel %vm1308, %v1327, %v1331
        %v1334 = vshrl.u32 %v1280, 16
        %v1336 = vshll.u32 %v1280, 16
        %v1338 = vrot.slane %v1336, 1
        %v1339 = vor.u32 %v1334, %v1338
        %v1341 = vshll.u32 %v1281, 16
        %v1343 = vrot.slane %v1341, 1
        %v1344 = vsel %vm1308, %v1339, %v1343
        %v1346 = vshrl.u32 %v1282, 16
        %v1348 = vshll.u32 %v1282, 16
        %v1350 = vrot.slane %v1348, 1
        %v1351 = vor.u32 %v1346, %v1350
        %v1353 = vshll.u32 %v1283, 16
        %v1355 = vrot.slane %v1353, 1
        %v1356 = vsel %vm1308, %v1351, %v1355
        %v1358 = vshrl.u32 %v1284, 16
        %v1360 = vshll.u32 %v1284, 16
        %v1362 = vrot.slane %v1360, 1
        %v1363 = vor.u32 %v1358, %v1362
        %v1365 = vshll.u32 %v1285, 16
        %v1367 = vrot.slane %v1365, 1
        %v1368 = vsel %vm1308, %v1363, %v1367
        %v1370 = vshrl.u32 %v1286, 16
        %v1372 = vshll.u32 %v1286, 16
        %v1374 = vrot.slane %v1372, 1
        %v1375 = vor.u32 %v1370, %v1374
        %v1377 = vshll.u32 %v1287, 16
        %v1379 = vrot.slane %v1377, 1
        %v1380 = vsel %vm1308, %v1375, %v1379
        %v1382 = vshrl.u32 %v1288, 16
        %v1384 = vshll.u32 %v1288, 16
        %v1386 = vrot.slane %v1384, 1
        %v1387 = vor.u32 %v1382, %v1386
        %v1389 = vshll.u32 %v1289, 16
        %v1391 = vrot.slane %v1389, 1
        %v1392 = vsel %vm1308, %v1387, %v1391
        %v1394 = vshrl.u32 %v1290, 16
        %v1396 = vshll.u32 %v1290, 16
        %v1398 = vrot.slane %v1396, 1
        %v1399 = vor.u32 %v1394, %v1398
        %v1401 = vshll.u32 %v1291, 16
        %v1403 = vrot.slane %v1401, 1
        %v1404 = vsel %vm1308, %v1399, %v1403
        %v1406 = vshrl.u32 %v1292, 16
        %v1408 = vshll.u32 %v1292, 16
        %v1410 = vrot.slane %v1408, 1
        %v1411 = vor.u32 %v1406, %v1410
        %v1413 = vshll.u32 %v1293, 16
        %v1415 = vrot.slane %v1413, 1
        %v1416 = vsel %vm1308, %v1411, %v1415
        %v1418 = vshrl.u32 %v1294, 16
        %v1420 = vshll.u32 %v1294, 16
        %v1422 = vrot.slane %v1420, 1
        %v1423 = vor.u32 %v1418, %v1422
        %v1425 = vshll.u32 %v1295, 16
        %v1427 = vrot.slane %v1425, 1
        %v1428 = vsel %vm1308, %v1423, %v1427
        %v1430 = vshrl.u32 %v1296, 16
        %v1432 = vshll.u32 %v1296, 16
        %v1434 = vrot.slane %v1432, 1
        %v1435 = vor.u32 %v1430, %v1434
        %v1437 = vshll.u32 %v1297, 16
        %v1439 = vrot.slane %v1437, 1
        %v1440 = vsel %vm1308, %v1435, %v1439
        %v1442 = vshrl.u32 %v1298, 16
        %v1444 = vshll.u32 %v1298, 16
        %v1446 = vrot.slane %v1444, 1
        %v1447 = vor.u32 %v1442, %v1446
        %v1449 = vshll.u32 %v1299, 16
        %v1451 = vrot.slane %v1449, 1
        %v1452 = vsel %vm1308, %v1447, %v1451
        %v1454 = vshrl.u32 %v1300, 16
        %v1456 = vshll.u32 %v1300, 16
        %v1458 = vrot.slane %v1456, 1
        %v1459 = vor.u32 %v1454, %v1458
        %v1461 = vshll.u32 %v1301, 16
        %v1463 = vrot.slane %v1461, 1
        %v1464 = vsel %vm1308, %v1459, %v1463
        %v1466 = vshrl.u32 %v1302, 16
        %v1468 = vshll.u32 %v1302, 16
        %v1470 = vrot.slane %v1468, 1
        %v1471 = vor.u32 %v1466, %v1470
        %v1473 = vshll.u32 %v1303, 16
        %v1475 = vrot.slane %v1473, 1
        %v1476 = vsel %vm1308, %v1471, %v1475
        %v1478 = vshrl.u32 %v1304, 16
        %v1480 = vshll.u32 %v1304, 16
        %v1482 = vrot.slane %v1480, 1
        %v1483 = vor.u32 %v1478, %v1482
        %v1485 = vshll.u32 %v1305, 16
        %v1487 = vrot.slane %v1485, 1
        %v1488 = vsel %vm1308, %v1483, %v1487
        %v1490 = vshrl.u32 %v1306, 16
        %v1492 = vshll.u32 %v1306, 16
        %v1494 = vrot.slane %v1492, 1
        %v1495 = vor.u32 %v1490, %v1494
        %v1497 = vshll.u32 %v1307, 16
        %v1499 = vrot.slane %v1497, 1
        %v1500 = vsel %vm1308, %v1495, %v1499
        %s1517 = scalar_lea.vmem %s316, 128
        %v1518 = vld [vmem:[%s1517] sm:$0xf]
        %v1519 = vld [vmem:[%s1517 + $0x4] sm:$0xf]
        %v1520 = vld [vmem:[%s1517 + $0x8] sm:$0xf]
        %v1521 = vld [vmem:[%s1517 + $0xc] sm:$0xf]
        %v1522 = vld [vmem:[%s1517 + $0x10] sm:$0xf]
        %v1523 = vld [vmem:[%s1517 + $0x14] sm:$0xf]
        %v1524 = vld [vmem:[%s1517 + $0x18] sm:$0xf]
        %v1525 = vld [vmem:[%s1517 + $0x1c] sm:$0xf]
        %v1526 = vld [vmem:[%s1517 + $0x20] sm:$0xf]
        %v1527 = vld [vmem:[%s1517 + $0x24] sm:$0xf]
        %v1528 = vld [vmem:[%s1517 + $0x28] sm:$0xf]
        %v1529 = vld [vmem:[%s1517 + $0x2c] sm:$0xf]
        %v1530 = vld [vmem:[%s1517 + $0x30] sm:$0xf]
        %v1531 = vld [vmem:[%s1517 + $0x34] sm:$0xf]
        %v1532 = vld [vmem:[%s1517 + $0x38] sm:$0xf]
        %v1533 = vld [vmem:[%s1517 + $0x3c] sm:$0xf]
        %v1550 = vunpack.c.l.b16 %v1518
        %v1551 = vunpack.c.l.b16 %v1519
        %v1552 = vunpack.c.l.b16 %v1520
        %v1553 = vunpack.c.l.b16 %v1521
        %v1554 = vunpack.c.l.b16 %v1522
        %v1555 = vunpack.c.l.b16 %v1523
        %v1556 = vunpack.c.l.b16 %v1524
        %v1557 = vunpack.c.l.b16 %v1525
        %v1558 = vunpack.c.l.b16 %v1526
        %v1559 = vunpack.c.l.b16 %v1527
        %v1560 = vunpack.c.l.b16 %v1528
        %v1561 = vunpack.c.l.b16 %v1529
        %v1562 = vunpack.c.l.b16 %v1530
        %v1563 = vunpack.c.l.b16 %v1531
        %v1564 = vunpack.c.l.b16 %v1532
        %v1565 = vunpack.c.l.b16 %v1533
        %v1566 = vpack.c.b16 %v1551, %v1550
        %v1567 = vpack.c.b16 %v1553, %v1552
        %v1568 = vpack.c.b16 %v1555, %v1554
        %v1569 = vpack.c.b16 %v1557, %v1556
        %v1570 = vpack.c.b16 %v1559, %v1558
        %v1571 = vpack.c.b16 %v1561, %v1560
        %v1572 = vpack.c.b16 %v1563, %v1562
        %v1573 = vpack.c.b16 %v1565, %v1564
        %1582 = vmatprep.subr.bf16.mxu0 0
        %1583 = vmatpush1.bf16.msra.mxu0 %v1566
        %1584 = vmatprep.subr.bf16.mxu0 0
        %1585 = vmatpush1.bf16.msra.mxu0 %v1567
        %1586 = vmatprep.subr.bf16.mxu0 0
        %1587 = vmatpush1.bf16.msra.mxu0 %v1568
        %1588 = vmatprep.subr.bf16.mxu0 0
        %1589 = vmatpush1.bf16.msra.mxu0 %v1569
        %1590 = vmatprep.subr.bf16.mxu0 0
        %1591 = vmatpush1.bf16.msra.mxu0 %v1570
        %1592 = vmatprep.subr.bf16.mxu0 0
        %1593 = vmatpush1.bf16.msra.mxu0 %v1571
        %1594 = vmatprep.subr.bf16.mxu0 0
        %1595 = vmatpush1.bf16.msra.mxu0 %v1572
        %1596 = vmatprep.subr.bf16.mxu0 0
        %1597 = vmatpush1.bf16.msra.mxu0 %v1573
        %1598 = vmatprep.subr.bf16.mxu0 0
        %1599 = vmatpush1.bf16.msra.mxu0 0
        %1600 = vmatprep.subr.bf16.mxu0 0
        %1601 = vmatpush1.bf16.msra.mxu0 0
        %1602 = vmatprep.subr.bf16.mxu0 0
        %1603 = vmatpush1.bf16.msra.mxu0 0
        %1604 = vmatprep.subr.bf16.mxu0 0
        %1605 = vmatpush1.bf16.msra.mxu0 0
        %1606 = vmatprep.subr.bf16.mxu0 0
        %1607 = vmatpush1.bf16.msra.mxu0 0
        %1608 = vmatprep.subr.bf16.mxu0 0
        %1609 = vmatpush1.bf16.msra.mxu0 0
        %1610 = vmatprep.subr.bf16.mxu0 0
        %1611 = vmatpush1.bf16.msra.mxu0 0
        %1612 = vmatprep.subr.bf16.mxu0 0
        %1613 = vmatpush1.bf16.msra.mxu0 0
        %1614 = vmatprep.mubr.bf16.mxu0 0
        %1615 = vmatmul.mubr.bf16.gmra.mrb[0].mxu0 %v1320
        %v1616 = vpop.f32.mrb[0].mxu0
        %v1617 = vadd.f32 0.0, %v1616
        %v1618 = vpop.f32.mrb[0].mxu0
        %v1619 = vpop.f32.mrb[0].mxu0
        %v1620 = vadd.f32 0.0, %v1619
        %v1621 = vpop.f32.mrb[0].mxu0
        %1622 = vmatprep.mubr.bf16.mxu0 0
        %1623 = vmatmul.mubr.bf16.gmra.mrb[0].mxu0 %v1332
        %v1624 = vpop.f32.mrb[0].mxu0
        %v1625 = vadd.f32 0.0, %v1624
        %v1626 = vpop.f32.mrb[0].mxu0
        %v1627 = vpop.f32.mrb[0].mxu0
        %v1628 = vadd.f32 0.0, %v1627
        %v1629 = vpop.f32.mrb[0].mxu0
        %1630 = vmatprep.mubr.bf16.mxu0 0
        %1631 = vmatmul.mubr.bf16.gmra.mrb[0].mxu0 %v1344
        %v1632 = vpop.f32.mrb[0].mxu0
        %v1633 = vadd.f32 0.0, %v1632
        %v1634 = vpop.f32.mrb[0].mxu0
        %v1635 = vpop.f32.mrb[0].mxu0
        %v1636 = vadd.f32 0.0, %v1635
        %v1637 = vpop.f32.mrb[0].mxu0
        %1638 = vmatprep.mubr.bf16.mxu0 0
        %1639 = vmatmul.mubr.bf16.gmra.mrb[0].mxu0 %v1356
        %v1640 = vpop.f32.mrb[0].mxu0
        %v1641 = vadd.f32 0.0, %v1640
        %v1642 = vpop.f32.mrb[0].mxu0
        %v1643 = vpop.f32.mrb[0].mxu0
        %v1644 = vadd.f32 0.0, %v1643
        %v1645 = vpop.f32.mrb[0].mxu0
        %1646 = vmatprep.mubr.bf16.mxu0 0
        %1647 = vmatmul.mubr.bf16.gmra.mrb[0].mxu0 %v1368
        %v1648 = vpop.f32.mrb[0].mxu0
        %v1649 = vadd.f32 0.0, %v1648
        %v1650 = vpop.f32.mrb[0].mxu0
        %v1651 = vpop.f32.mrb[0].mxu0
        %v1652 = vadd.f32 0.0, %v1651
        %v1653 = vpop.f32.mrb[0].mxu0
        %1654 = vmatprep.mubr.bf16.mxu0 0
        %1655 = vmatmul.mubr.bf16.gmra.mrb[0].mxu0 %v1380
        %v1656 = vpop.f32.mrb[0].mxu0
        %v1657 = vadd.f32 0.0, %v1656
        %v1658 = vpop.f32.mrb[0].mxu0
        %v1659 = vpop.f32.mrb[0].mxu0
        %v1660 = vadd.f32 0.0, %v1659
        %v1661 = vpop.f32.mrb[0].mxu0
        %1662 = vmatprep.mubr.bf16.mxu0 0
        %1663 = vmatmul.mubr.bf16.gmra.mrb[0].mxu0 %v1392
        %v1664 = vpop.f32.mrb[0].mxu0
        %v1665 = vadd.f32 0.0, %v1664
        %v1666 = vpop.f32.mrb[0].mxu0
        %v1667 = vpop.f32.mrb[0].mxu0
        %v1668 = vadd.f32 0.0, %v1667
        %v1669 = vpop.f32.mrb[0].mxu0
        %1670 = vmatprep.mubr.bf16.mxu0 0
        %1671 = vmatmul.mubr.bf16.gmra.mrb[0].mxu0 %v1404
        %v1672 = vpop.f32.mrb[0].mxu0
        %v1673 = vadd.f32 0.0, %v1672
        %v1674 = vpop.f32.mrb[0].mxu0
        %v1675 = vpop.f32.mrb[0].mxu0
        %v1676 = vadd.f32 0.0, %v1675
        %v1677 = vpop.f32.mrb[0].mxu0
        %1678 = vmatprep.mubr.bf16.mxu0 0
        %1679 = vmatmul.mubr.bf16.gmra.mrb[0].mxu0 %v1416
        %v1680 = vpop.f32.mrb[0].mxu0
        %v1681 = vadd.f32 0.0, %v1680
        %v1682 = vpop.f32.mrb[0].mxu0
        %v1683 = vpop.f32.mrb[0].mxu0
        %v1684 = vadd.f32 0.0, %v1683
        %v1685 = vpop.f32.mrb[0].mxu0
        %1686 = vmatprep.mubr.bf16.mxu0 0
        %1687 = vmatmul.mubr.bf16.gmra.mrb[0].mxu0 %v1428
        %v1688 = vpop.f32.mrb[0].mxu0
        %v1689 = vadd.f32 0.0, %v1688
        %v1690 = vpop.f32.mrb[0].mxu0
        %v1691 = vpop.f32.mrb[0].mxu0
        %v1692 = vadd.f32 0.0, %v1691
        %v1693 = vpop.f32.mrb[0].mxu0
        %1694 = vmatprep.mubr.bf16.mxu0 0
        %1695 = vmatmul.mubr.bf16.gmra.mrb[0].mxu0 %v1440
        %v1696 = vpop.f32.mrb[0].mxu0
        %v1697 = vadd.f32 0.0, %v1696
        %v1698 = vpop.f32.mrb[0].mxu0
        %v1699 = vpop.f32.mrb[0].mxu0
        %v1700 = vadd.f32 0.0, %v1699
        %v1701 = vpop.f32.mrb[0].mxu0
        %1702 = vmatprep.mubr.bf16.mxu0 0
        %1703 = vmatmul.mubr.bf16.gmra.mrb[0].mxu0 %v1452
        %v1704 = vpop.f32.mrb[0].mxu0
        %v1705 = vadd.f32 0.0, %v1704
        %v1706 = vpop.f32.mrb[0].mxu0
        %v1707 = vpop.f32.mrb[0].mxu0
        %v1708 = vadd.f32 0.0, %v1707
        %v1709 = vpop.f32.mrb[0].mxu0
        %1710 = vmatprep.mubr.bf16.mxu0 0
        %1711 = vmatmul.mubr.bf16.gmra.mrb[0].mxu0 %v1464
        %v1712 = vpop.f32.mrb[0].mxu0
        %v1713 = vadd.f32 0.0, %v1712
        %v1714 = vpop.f32.mrb[0].mxu0
        %v1715 = vpop.f32.mrb[0].mxu0
        %v1716 = vadd.f32 0.0, %v1715
        %v1717 = vpop.f32.mrb[0].mxu0
        %1718 = vmatprep.mubr.bf16.mxu0 0
        %1719 = vmatmul.mubr.bf16.gmra.mrb[0].mxu0 %v1476
        %v1720 = vpop.f32.mrb[0].mxu0
        %v1721 = vadd.f32 0.0, %v1720
        %v1722 = vpop.f32.mrb[0].mxu0
        %v1723 = vpop.f32.mrb[0].mxu0
        %v1724 = vadd.f32 0.0, %v1723
        %v1725 = vpop.f32.mrb[0].mxu0
        %1726 = vmatprep.mubr.bf16.mxu0 0
        %1727 = vmatmul.mubr.bf16.gmra.mrb[0].mxu0 %v1488
        %v1728 = vpop.f32.mrb[0].mxu0
        %v1729 = vadd.f32 0.0, %v1728
        %v1730 = vpop.f32.mrb[0].mxu0
        %v1731 = vpop.f32.mrb[0].mxu0
        %v1732 = vadd.f32 0.0, %v1731
        %v1733 = vpop.f32.mrb[0].mxu0
        %1734 = vmatprep.mubr.bf16.mxu0 0
        %1735 = vmatmul.mubr.bf16.gmra.mrb[0].mxu0 %v1500
        %v1736 = vpop.f32.mrb[0].mxu0
        %v1737 = vadd.f32 0.0, %v1736
        %v1738 = vpop.f32.mrb[0].mxu0
        %v1739 = vpop.f32.mrb[0].mxu0
        %v1740 = vadd.f32 0.0, %v1739
        %v1741 = vpop.f32.mrb[0].mxu0
        %1742 = vdwg.mxu0
        %v1743 = vadd.f32 %v1150, %v1617
        %v1744 = vadd.f32 %v1153, %v1620
        %v1745 = vadd.f32 %v1158, %v1625
        %v1746 = vadd.f32 %v1161, %v1628
        %v1747 = vadd.f32 %v1166, %v1633
        %v1748 = vadd.f32 %v1169, %v1636
        %v1749 = vadd.f32 %v1174, %v1641
        %v1750 = vadd.f32 %v1177, %v1644
        %v1751 = vadd.f32 %v1182, %v1649
        %v1752 = vadd.f32 %v1185, %v1652
        %v1753 = vadd.f32 %v1190, %v1657
        %v1754 = vadd.f32 %v1193, %v1660
        %v1755 = vadd.f32 %v1198, %v1665
        %v1756 = vadd.f32 %v1201, %v1668
        %v1757 = vadd.f32 %v1206, %v1673
        %v1758 = vadd.f32 %v1209, %v1676
        %v1759 = vadd.f32 %v1214, %v1681
        %v1760 = vadd.f32 %v1217, %v1684
        %v1761 = vadd.f32 %v1222, %v1689
        %v1762 = vadd.f32 %v1225, %v1692
        %v1763 = vadd.f32 %v1230, %v1697
        %v1764 = vadd.f32 %v1233, %v1700
        %v1765 = vadd.f32 %v1238, %v1705
        %v1766 = vadd.f32 %v1241, %v1708
        %v1767 = vadd.f32 %v1246, %v1713
        %v1768 = vadd.f32 %v1249, %v1716
        %v1769 = vadd.f32 %v1254, %v1721
        %v1770 = vadd.f32 %v1257, %v1724
        %v1771 = vadd.f32 %v1262, %v1729
        %v1772 = vadd.f32 %v1265, %v1732
        %v1773 = vadd.f32 %v1270, %v1737
        %v1774 = vadd.f32 %v1273, %v1740
        %v1775 = vld [vmem:[%s567] sm:$0x80]
        %v1776 = vld [vmem:[%s567 + $0x8] sm:$0xff]
        %v1777 = vld [vmem:[%s567 + $0x18] sm:$0x80]
        %v1778 = vld [vmem:[%s567 + $0x20] sm:$0xff]
        %v1779 = vld [vmem:[%s567 + $0x30] sm:$0x80]
        %v1780 = vld [vmem:[%s567 + $0x38] sm:$0xff]
        %v1781 = vld [vmem:[%s567 + $0x48] sm:$0x80]
        %v1782 = vld [vmem:[%s567 + $0x50] sm:$0xff]
        %v1783 = vld [vmem:[%s567 + $0x60] sm:$0x80]
        %v1784 = vld [vmem:[%s567 + $0x68] sm:$0xff]
        %v1785 = vld [vmem:[%s567 + $0x78] sm:$0x80]
        %v1786 = vld [vmem:[%s567 + $0x80] sm:$0xff]
        %v1787 = vld [vmem:[%s567 + $0x90] sm:$0x80]
        %v1788 = vld [vmem:[%s567 + $0x98] sm:$0xff]
        %v1789 = vld [vmem:[%s567 + $0xa8] sm:$0x80]
        %v1790 = vld [vmem:[%s567 + $0xb0] sm:$0xff]
        %v1791 = vld [vmem:[%s567 + $0xc0] sm:$0x80]
        %v1792 = vld [vmem:[%s567 + $0xc8] sm:$0xff]
        %v1793 = vld [vmem:[%s567 + $0xd8] sm:$0x80]
        %v1794 = vld [vmem:[%s567 + $0xe0] sm:$0xff]
        %v1795 = vld [vmem:[%s567 + $0xf0] sm:$0x80]
        %v1796 = vld [vmem:[%s567 + $0xf8] sm:$0xff]
        %v1797 = vld [vmem:[%s567 + $0x108] sm:$0x80]
        %v1798 = vld [vmem:[%s567 + $0x110] sm:$0xff]
        %v1799 = vld [vmem:[%s567 + $0x120] sm:$0x80]
        %v1800 = vld [vmem:[%s567 + $0x128] sm:$0xff]
        %v1801 = vld [vmem:[%s567 + $0x138] sm:$0x80]
        %v1802 = vld [vmem:[%s567 + $0x140] sm:$0xff]
        %v1803 = vld [vmem:[%s567 + $0x150] sm:$0x80]
        %v1804 = vld [vmem:[%s567 + $0x158] sm:$0xff]
        %v1805 = vld [vmem:[%s567 + $0x168] sm:$0x80]
        %v1806 = vld [vmem:[%s567 + $0x170] sm:$0xff]
        %v1808 = vshrl.u32 %v1775, 16
        %v1810 = vrot.slane %v1808, 7
        %v1812 = vshrl.u32 %v1776, 16
        %v1814 = vrot.slane %v1812, 7
        %v1815 = vshll.u32 %v1776, 16
        %v1817 = vor.u32 %v1814, %v1815
        %v1818 = vsel %vm616, %v1810, %v1817
        %v1820 = vshrl.u32 %v1777, 16
        %v1822 = vrot.slane %v1820, 7
        %v1824 = vshrl.u32 %v1778, 16
        %v1826 = vrot.slane %v1824, 7
        %v1827 = vshll.u32 %v1778, 16
        %v1829 = vor.u32 %v1826, %v1827
        %v1830 = vsel %vm616, %v1822, %v1829
        %v1832 = vshrl.u32 %v1779, 16
        %v1834 = vrot.slane %v1832, 7
        %v1836 = vshrl.u32 %v1780, 16
        %v1838 = vrot.slane %v1836, 7
        %v1839 = vshll.u32 %v1780, 16
        %v1841 = vor.u32 %v1838, %v1839
        %v1842 = vsel %vm616, %v1834, %v1841
        %v1844 = vshrl.u32 %v1781, 16
        %v1846 = vrot.slane %v1844, 7
        %v1848 = vshrl.u32 %v1782, 16
        %v1850 = vrot.slane %v1848, 7
        %v1851 = vshll.u32 %v1782, 16
        %v1853 = vor.u32 %v1850, %v1851
        %v1854 = vsel %vm616, %v1846, %v1853
        %v1856 = vshrl.u32 %v1783, 16
        %v1858 = vrot.slane %v1856, 7
        %v1860 = vshrl.u32 %v1784, 16
        %v1862 = vrot.slane %v1860, 7
        %v1863 = vshll.u32 %v1784, 16
        %v1865 = vor.u32 %v1862, %v1863
        %v1866 = vsel %vm616, %v1858, %v1865
        %v1868 = vshrl.u32 %v1785, 16
        %v1870 = vrot.slane %v1868, 7
        %v1872 = vshrl.u32 %v1786, 16
        %v1874 = vrot.slane %v1872, 7
        %v1875 = vshll.u32 %v1786, 16
        %v1877 = vor.u32 %v1874, %v1875
        %v1878 = vsel %vm616, %v1870, %v1877
        %v1880 = vshrl.u32 %v1787, 16
        %v1882 = vrot.slane %v1880, 7
        %v1884 = vshrl.u32 %v1788, 16
        %v1886 = vrot.slane %v1884, 7
        %v1887 = vshll.u32 %v1788, 16
        %v1889 = vor.u32 %v1886, %v1887
        %v1890 = vsel %vm616, %v1882, %v1889
        %v1892 = vshrl.u32 %v1789, 16
        %v1894 = vrot.slane %v1892, 7
        %v1896 = vshrl.u32 %v1790, 16
        %v1898 = vrot.slane %v1896, 7
        %v1899 = vshll.u32 %v1790, 16
        %v1901 = vor.u32 %v1898, %v1899
        %v1902 = vsel %vm616, %v1894, %v1901
        %v1904 = vshrl.u32 %v1791, 16
        %v1906 = vrot.slane %v1904, 7
        %v1908 = vshrl.u32 %v1792, 16
        %v1910 = vrot.slane %v1908, 7
        %v1911 = vshll.u32 %v1792, 16
        %v1913 = vor.u32 %v1910, %v1911
        %v1914 = vsel %vm616, %v1906, %v1913
        %v1916 = vshrl.u32 %v1793, 16
        %v1918 = vrot.slane %v1916, 7
        %v1920 = vshrl.u32 %v1794, 16
        %v1922 = vrot.slane %v1920, 7
        %v1923 = vshll.u32 %v1794, 16
        %v1925 = vor.u32 %v1922, %v1923
        %v1926 = vsel %vm616, %v1918, %v1925
        %v1928 = vshrl.u32 %v1795, 16
        %v1930 = vrot.slane %v1928, 7
        %v1932 = vshrl.u32 %v1796, 16
        %v1934 = vrot.slane %v1932, 7
        %v1935 = vshll.u32 %v1796, 16
        %v1937 = vor.u32 %v1934, %v1935
        %v1938 = vsel %vm616, %v1930, %v1937
        %v1940 = vshrl.u32 %v1797, 16
        %v1942 = vrot.slane %v1940, 7
        %v1944 = vshrl.u32 %v1798, 16
        %v1946 = vrot.slane %v1944, 7
        %v1947 = vshll.u32 %v1798, 16
        %v1949 = vor.u32 %v1946, %v1947
        %v1950 = vsel %vm616, %v1942, %v1949
        %v1952 = vshrl.u32 %v1799, 16
        %v1954 = vrot.slane %v1952, 7
        %v1956 = vshrl.u32 %v1800, 16
        %v1958 = vrot.slane %v1956, 7
        %v1959 = vshll.u32 %v1800, 16
        %v1961 = vor.u32 %v1958, %v1959
        %v1962 = vsel %vm616, %v1954, %v1961
        %v1964 = vshrl.u32 %v1801, 16
        %v1966 = vrot.slane %v1964, 7
        %v1968 = vshrl.u32 %v1802, 16
        %v1970 = vrot.slane %v1968, 7
        %v1971 = vshll.u32 %v1802, 16
        %v1973 = vor.u32 %v1970, %v1971
        %v1974 = vsel %vm616, %v1966, %v1973
        %v1976 = vshrl.u32 %v1803, 16
        %v1978 = vrot.slane %v1976, 7
        %v1980 = vshrl.u32 %v1804, 16
        %v1982 = vrot.slane %v1980, 7
        %v1983 = vshll.u32 %v1804, 16
        %v1985 = vor.u32 %v1982, %v1983
        %v1986 = vsel %vm616, %v1978, %v1985
        %v1988 = vshrl.u32 %v1805, 16
        %v1990 = vrot.slane %v1988, 7
        %v1992 = vshrl.u32 %v1806, 16
        %v1994 = vrot.slane %v1992, 7
        %v1995 = vshll.u32 %v1806, 16
        %v1997 = vor.u32 %v1994, %v1995
        %v1998 = vsel %vm616, %v1990, %v1997
        %s2015 = scalar_lea.vmem %s316, 192
        %v2016 = vld [vmem:[%s2015] sm:$0xf]
        %v2017 = vld [vmem:[%s2015 + $0x4] sm:$0xf]
        %v2018 = vld [vmem:[%s2015 + $0x8] sm:$0xf]
        %v2019 = vld [vmem:[%s2015 + $0xc] sm:$0xf]
        %v2020 = vld [vmem:[%s2015 + $0x10] sm:$0xf]
        %v2021 = vld [vmem:[%s2015 + $0x14] sm:$0xf]
        %v2022 = vld [vmem:[%s2015 + $0x18] sm:$0xf]
        %v2023 = vld [vmem:[%s2015 + $0x1c] sm:$0xf]
        %v2024 = vld [vmem:[%s2015 + $0x20] sm:$0xf]
        %v2025 = vld [vmem:[%s2015 + $0x24] sm:$0xf]
        %v2026 = vld [vmem:[%s2015 + $0x28] sm:$0xf]
        %v2027 = vld [vmem:[%s2015 + $0x2c] sm:$0xf]
        %v2028 = vld [vmem:[%s2015 + $0x30] sm:$0xf]
        %v2029 = vld [vmem:[%s2015 + $0x34] sm:$0xf]
        %v2030 = vld [vmem:[%s2015 + $0x38] sm:$0xf]
        %v2031 = vld [vmem:[%s2015 + $0x3c] sm:$0xf]
        %v2048 = vunpack.c.l.b16 %v2016
        %v2049 = vunpack.c.l.b16 %v2017
        %v2050 = vunpack.c.l.b16 %v2018
        %v2051 = vunpack.c.l.b16 %v2019
        %v2052 = vunpack.c.l.b16 %v2020
        %v2053 = vunpack.c.l.b16 %v2021
        %v2054 = vunpack.c.l.b16 %v2022
        %v2055 = vunpack.c.l.b16 %v2023
        %v2056 = vunpack.c.l.b16 %v2024
        %v2057 = vunpack.c.l.b16 %v2025
        %v2058 = vunpack.c.l.b16 %v2026
        %v2059 = vunpack.c.l.b16 %v2027
        %v2060 = vunpack.c.l.b16 %v2028
        %v2061 = vunpack.c.l.b16 %v2029
        %v2062 = vunpack.c.l.b16 %v2030
        %v2063 = vunpack.c.l.b16 %v2031
        %v2064 = vpack.c.b16 %v2049, %v2048
        %v2065 = vpack.c.b16 %v2051, %v2050
        %v2066 = vpack.c.b16 %v2053, %v2052
        %v2067 = vpack.c.b16 %v2055, %v2054
        %v2068 = vpack.c.b16 %v2057, %v2056
        %v2069 = vpack.c.b16 %v2059, %v2058
        %v2070 = vpack.c.b16 %v2061, %v2060
        %v2071 = vpack.c.b16 %v2063, %v2062
        %2080 = vmatprep.subr.bf16.mxu0 0
        %2081 = vmatpush1.bf16.msra.mxu0 %v2064
        %2082 = vmatprep.subr.bf16.mxu0 0
        %2083 = vmatpush1.bf16.msra.mxu0 %v2065
        %2084 = vmatprep.subr.bf16.mxu0 0
        %2085 = vmatpush1.bf16.msra.mxu0 %v2066
        %2086 = vmatprep.subr.bf16.mxu0 0
        %2087 = vmatpush1.bf16.msra.mxu0 %v2067
        %2088 = vmatprep.subr.bf16.mxu0 0
        %2089 = vmatpush1.bf16.msra.mxu0 %v2068
        %2090 = vmatprep.subr.bf16.mxu0 0
        %2091 = vmatpush1.bf16.msra.mxu0 %v2069
        %2092 = vmatprep.subr.bf16.mxu0 0
        %2093 = vmatpush1.bf16.msra.mxu0 %v2070
        %2094 = vmatprep.subr.bf16.mxu0 0
        %2095 = vmatpush1.bf16.msra.mxu0 %v2071
        %2096 = vmatprep.subr.bf16.mxu0 0
        %2097 = vmatpush1.bf16.msra.mxu0 0
        %2098 = vmatprep.subr.bf16.mxu0 0
        %2099 = vmatpush1.bf16.msra.mxu0 0
        %2100 = vmatprep.subr.bf16.mxu0 0
        %2101 = vmatpush1.bf16.msra.mxu0 0
        %2102 = vmatprep.subr.bf16.mxu0 0
        %2103 = vmatpush1.bf16.msra.mxu0 0
        %2104 = vmatprep.subr.bf16.mxu0 0
        %2105 = vmatpush1.bf16.msra.mxu0 0
        %2106 = vmatprep.subr.bf16.mxu0 0
        %2107 = vmatpush1.bf16.msra.mxu0 0
        %2108 = vmatprep.subr.bf16.mxu0 0
        %2109 = vmatpush1.bf16.msra.mxu0 0
        %2110 = vmatprep.subr.bf16.mxu0 0
        %2111 = vmatpush1.bf16.msra.mxu0 0
        %2112 = vmatprep.mubr.bf16.mxu0 0
        %2113 = vmatmul.mubr.bf16.gmra.mrb[0].mxu0 %v1818
        %v2114 = vpop.f32.mrb[0].mxu0
        %v2115 = vadd.f32 0.0, %v2114
        %v2116 = vpop.f32.mrb[0].mxu0
        %v2117 = vpop.f32.mrb[0].mxu0
        %v2118 = vadd.f32 0.0, %v2117
        %v2119 = vpop.f32.mrb[0].mxu0
        %2120 = vmatprep.mubr.bf16.mxu0 0
        %2121 = vmatmul.mubr.bf16.gmra.mrb[0].mxu0 %v1830
        %v2122 = vpop.f32.mrb[0].mxu0
        %v2123 = vadd.f32 0.0, %v2122
        %v2124 = vpop.f32.mrb[0].mxu0
        %v2125 = vpop.f32.mrb[0].mxu0
        %v2126 = vadd.f32 0.0, %v2125
        %v2127 = vpop.f32.mrb[0].mxu0
        %2128 = vmatprep.mubr.bf16.mxu0 0
        %2129 = vmatmul.mubr.bf16.gmra.mrb[0].mxu0 %v1842
        %v2130 = vpop.f32.mrb[0].mxu0
        %v2131 = vadd.f32 0.0, %v2130
        %v2132 = vpop.f32.mrb[0].mxu0
        %v2133 = vpop.f32.mrb[0].mxu0
        %v2134 = vadd.f32 0.0, %v2133
        %v2135 = vpop.f32.mrb[0].mxu0
        %2136 = vmatprep.mubr.bf16.mxu0 0
        %2137 = vmatmul.mubr.bf16.gmra.mrb[0].mxu0 %v1854
        %v2138 = vpop.f32.mrb[0].mxu0
        %v2139 = vadd.f32 0.0, %v2138
        %v2140 = vpop.f32.mrb[0].mxu0
        %v2141 = vpop.f32.mrb[0].mxu0
        %v2142 = vadd.f32 0.0, %v2141
        %v2143 = vpop.f32.mrb[0].mxu0
        %2144 = vmatprep.mubr.bf16.mxu0 0
        %2145 = vmatmul.mubr.bf16.gmra.mrb[0].mxu0 %v1866
        %v2146 = vpop.f32.mrb[0].mxu0
        %v2147 = vadd.f32 0.0, %v2146
        %v2148 = vpop.f32.mrb[0].mxu0
        %v2149 = vpop.f32.mrb[0].mxu0
        %v2150 = vadd.f32 0.0, %v2149
        %v2151 = vpop.f32.mrb[0].mxu0
        %2152 = vmatprep.mubr.bf16.mxu0 0
        %2153 = vmatmul.mubr.bf16.gmra.mrb[0].mxu0 %v1878
        %v2154 = vpop.f32.mrb[0].mxu0
        %v2155 = vadd.f32 0.0, %v2154
        %v2156 = vpop.f32.mrb[0].mxu0
        %v2157 = vpop.f32.mrb[0].mxu0
        %v2158 = vadd.f32 0.0, %v2157
        %v2159 = vpop.f32.mrb[0].mxu0
        %2160 = vmatprep.mubr.bf16.mxu0 0
        %2161 = vmatmul.mubr.bf16.gmra.mrb[0].mxu0 %v1890
        %v2162 = vpop.f32.mrb[0].mxu0
        %v2163 = vadd.f32 0.0, %v2162
        %v2164 = vpop.f32.mrb[0].mxu0
        %v2165 = vpop.f32.mrb[0].mxu0
        %v2166 = vadd.f32 0.0, %v2165
        %v2167 = vpop.f32.mrb[0].mxu0
        %2168 = vmatprep.mubr.bf16.mxu0 0
        %2169 = vmatmul.mubr.bf16.gmra.mrb[0].mxu0 %v1902
        %v2170 = vpop.f32.mrb[0].mxu0
        %v2171 = vadd.f32 0.0, %v2170
        %v2172 = vpop.f32.mrb[0].mxu0
        %v2173 = vpop.f32.mrb[0].mxu0
        %v2174 = vadd.f32 0.0, %v2173
        %v2175 = vpop.f32.mrb[0].mxu0
        %2176 = vmatprep.mubr.bf16.mxu0 0
        %2177 = vmatmul.mubr.bf16.gmra.mrb[0].mxu0 %v1914
        %v2178 = vpop.f32.mrb[0].mxu0
        %v2179 = vadd.f32 0.0, %v2178
        %v2180 = vpop.f32.mrb[0].mxu0
        %v2181 = vpop.f32.mrb[0].mxu0
        %v2182 = vadd.f32 0.0, %v2181
        %v2183 = vpop.f32.mrb[0].mxu0
        %2184 = vmatprep.mubr.bf16.mxu0 0
        %2185 = vmatmul.mubr.bf16.gmra.mrb[0].mxu0 %v1926
        %v2186 = vpop.f32.mrb[0].mxu0
        %v2187 = vadd.f32 0.0, %v2186
        %v2188 = vpop.f32.mrb[0].mxu0
        %v2189 = vpop.f32.mrb[0].mxu0
        %v2190 = vadd.f32 0.0, %v2189
        %v2191 = vpop.f32.mrb[0].mxu0
        %2192 = vmatprep.mubr.bf16.mxu0 0
        %2193 = vmatmul.mubr.bf16.gmra.mrb[0].mxu0 %v1938
        %v2194 = vpop.f32.mrb[0].mxu0
        %v2195 = vadd.f32 0.0, %v2194
        %v2196 = vpop.f32.mrb[0].mxu0
        %v2197 = vpop.f32.mrb[0].mxu0
        %v2198 = vadd.f32 0.0, %v2197
        %v2199 = vpop.f32.mrb[0].mxu0
        %2200 = vmatprep.mubr.bf16.mxu0 0
        %2201 = vmatmul.mubr.bf16.gmra.mrb[0].mxu0 %v1950
        %v2202 = vpop.f32.mrb[0].mxu0
        %v2203 = vadd.f32 0.0, %v2202
        %v2204 = vpop.f32.mrb[0].mxu0
        %v2205 = vpop.f32.mrb[0].mxu0
        %v2206 = vadd.f32 0.0, %v2205
        %v2207 = vpop.f32.mrb[0].mxu0
        %2208 = vmatprep.mubr.bf16.mxu0 0
        %2209 = vmatmul.mubr.bf16.gmra.mrb[0].mxu0 %v1962
        %v2210 = vpop.f32.mrb[0].mxu0
        %v2211 = vadd.f32 0.0, %v2210
        %v2212 = vpop.f32.mrb[0].mxu0
        %v2213 = vpop.f32.mrb[0].mxu0
        %v2214 = vadd.f32 0.0, %v2213
        %v2215 = vpop.f32.mrb[0].mxu0
        %2216 = vmatprep.mubr.bf16.mxu0 0
        %2217 = vmatmul.mubr.bf16.gmra.mrb[0].mxu0 %v1974
        %v2218 = vpop.f32.mrb[0].mxu0
        %v2219 = vadd.f32 0.0, %v2218
        %v2220 = vpop.f32.mrb[0].mxu0
        %v2221 = vpop.f32.mrb[0].mxu0
        %v2222 = vadd.f32 0.0, %v2221
        %v2223 = vpop.f32.mrb[0].mxu0
        %2224 = vmatprep.mubr.bf16.mxu0 0
        %2225 = vmatmul.mubr.bf16.gmra.mrb[0].mxu0 %v1986
        %v2226 = vpop.f32.mrb[0].mxu0
        %v2227 = vadd.f32 0.0, %v2226
        %v2228 = vpop.f32.mrb[0].mxu0
        %v2229 = vpop.f32.mrb[0].mxu0
        %v2230 = vadd.f32 0.0, %v2229
        %v2231 = vpop.f32.mrb[0].mxu0
        %2232 = vmatprep.mubr.bf16.mxu0 0
        %2233 = vmatmul.mubr.bf16.gmra.mrb[0].mxu0 %v1998
        %v2234 = vpop.f32.mrb[0].mxu0
        %v2235 = vadd.f32 0.0, %v2234
        %v2236 = vpop.f32.mrb[0].mxu0
        %v2237 = vpop.f32.mrb[0].mxu0
        %v2238 = vadd.f32 0.0, %v2237
        %v2239 = vpop.f32.mrb[0].mxu0
        %2240 = vdwg.mxu0
        %v2241 = vadd.f32 %v1743, %v2115
        %v2242 = vadd.f32 %v1744, %v2118
        %v2243 = vadd.f32 %v1745, %v2123
        %v2244 = vadd.f32 %v1746, %v2126
        %v2245 = vadd.f32 %v1747, %v2131
        %v2246 = vadd.f32 %v1748, %v2134
        %v2247 = vadd.f32 %v1749, %v2139
        %v2248 = vadd.f32 %v1750, %v2142
        %v2249 = vadd.f32 %v1751, %v2147
        %v2250 = vadd.f32 %v1752, %v2150
        %v2251 = vadd.f32 %v1753, %v2155
        %v2252 = vadd.f32 %v1754, %v2158
        %v2253 = vadd.f32 %v1755, %v2163
        %v2254 = vadd.f32 %v1756, %v2166
        %v2255 = vadd.f32 %v1757, %v2171
        %v2256 = vadd.f32 %v1758, %v2174
        %v2257 = vadd.f32 %v1759, %v2179
        %v2258 = vadd.f32 %v1760, %v2182
        %v2259 = vadd.f32 %v1761, %v2187
        %v2260 = vadd.f32 %v1762, %v2190
        %v2261 = vadd.f32 %v1763, %v2195
        %v2262 = vadd.f32 %v1764, %v2198
        %v2263 = vadd.f32 %v1765, %v2203
        %v2264 = vadd.f32 %v1766, %v2206
        %v2265 = vadd.f32 %v1767, %v2211
        %v2266 = vadd.f32 %v1768, %v2214
        %v2267 = vadd.f32 %v1769, %v2219
        %v2268 = vadd.f32 %v1770, %v2222
        %v2269 = vadd.f32 %v1771, %v2227
        %v2270 = vadd.f32 %v1772, %v2230
        %v2271 = vadd.f32 %v1773, %v2235
        %v2272 = vadd.f32 %v1774, %v2238
        %s2273 = scalar_lea.vmem %s316, 256
        %v2274 = vld [vmem:[%s2273] sm:$0xf]
        %v2275 = vld [vmem:[%s2273 + $0x4] sm:$0xf]
        %v2276 = vld [vmem:[%s2273 + $0x8] sm:$0xf]
        %v2277 = vld [vmem:[%s2273 + $0xc] sm:$0xf]
        %v2278 = vld [vmem:[%s2273 + $0x10] sm:$0xf]
        %v2279 = vld [vmem:[%s2273 + $0x14] sm:$0xf]
        %v2280 = vld [vmem:[%s2273 + $0x18] sm:$0xf]
        %v2281 = vld [vmem:[%s2273 + $0x1c] sm:$0xf]
        %v2282 = vld [vmem:[%s2273 + $0x20] sm:$0xf]
        %v2283 = vld [vmem:[%s2273 + $0x24] sm:$0xf]
        %v2284 = vld [vmem:[%s2273 + $0x28] sm:$0xf]
        %v2285 = vld [vmem:[%s2273 + $0x2c] sm:$0xf]
        %v2286 = vld [vmem:[%s2273 + $0x30] sm:$0xf]
        %v2287 = vld [vmem:[%s2273 + $0x34] sm:$0xf]
        %v2288 = vld [vmem:[%s2273 + $0x38] sm:$0xf]
        %v2289 = vld [vmem:[%s2273 + $0x3c] sm:$0xf]
        %v2306 = vunpack.c.l.b16 %v2274
        %v2307 = vunpack.c.l.b16 %v2275
        %v2308 = vunpack.c.l.b16 %v2276
        %v2309 = vunpack.c.l.b16 %v2277
        %v2310 = vunpack.c.l.b16 %v2278
        %v2311 = vunpack.c.l.b16 %v2279
        %v2312 = vunpack.c.l.b16 %v2280
        %v2313 = vunpack.c.l.b16 %v2281
        %v2314 = vunpack.c.l.b16 %v2282
        %v2315 = vunpack.c.l.b16 %v2283
        %v2316 = vunpack.c.l.b16 %v2284
        %v2317 = vunpack.c.l.b16 %v2285
        %v2318 = vunpack.c.l.b16 %v2286
        %v2319 = vunpack.c.l.b16 %v2287
        %v2320 = vunpack.c.l.b16 %v2288
        %v2321 = vunpack.c.l.b16 %v2289
        %v2322 = vpack.c.b16 %v2307, %v2306
        %v2323 = vpack.c.b16 %v2309, %v2308
        %v2324 = vpack.c.b16 %v2311, %v2310
        %v2325 = vpack.c.b16 %v2313, %v2312
        %v2326 = vpack.c.b16 %v2315, %v2314
        %v2327 = vpack.c.b16 %v2317, %v2316
        %v2328 = vpack.c.b16 %v2319, %v2318
        %v2329 = vpack.c.b16 %v2321, %v2320
        %2338 = vmatprep.subr.bf16.mxu0 0
        %2339 = vmatpush1.bf16.msra.mxu0 %v2322
        %2340 = vmatprep.subr.bf16.mxu0 0
        %2341 = vmatpush1.bf16.msra.mxu0 %v2323
        %2342 = vmatprep.subr.bf16.mxu0 0
        %2343 = vmatpush1.bf16.msra.mxu0 %v2324
        %2344 = vmatprep.subr.bf16.mxu0 0
        %2345 = vmatpush1.bf16.msra.mxu0 %v2325
        %2346 = vmatprep.subr.bf16.mxu0 0
        %2347 = vmatpush1.bf16.msra.mxu0 %v2326
        %2348 = vmatprep.subr.bf16.mxu0 0
        %2349 = vmatpush1.bf16.msra.mxu0 %v2327
        %2350 = vmatprep.subr.bf16.mxu0 0
        %2351 = vmatpush1.bf16.msra.mxu0 %v2328
        %2352 = vmatprep.subr.bf16.mxu0 0
        %2353 = vmatpush1.bf16.msra.mxu0 %v2329
        %2354 = vmatprep.subr.bf16.mxu0 0
        %2355 = vmatpush1.bf16.msra.mxu0 0
        %2356 = vmatprep.subr.bf16.mxu0 0
        %2357 = vmatpush1.bf16.msra.mxu0 0
        %2358 = vmatprep.subr.bf16.mxu0 0
        %2359 = vmatpush1.bf16.msra.mxu0 0
        %2360 = vmatprep.subr.bf16.mxu0 0
        %2361 = vmatpush1.bf16.msra.mxu0 0
        %2362 = vmatprep.subr.bf16.mxu0 0
        %2363 = vmatpush1.bf16.msra.mxu0 0
        %2364 = vmatprep.subr.bf16.mxu0 0
        %2365 = vmatpush1.bf16.msra.mxu0 0
        %2366 = vmatprep.subr.bf16.mxu0 0
        %2367 = vmatpush1.bf16.msra.mxu0 0
        %2368 = vmatprep.subr.bf16.mxu0 0
        %2369 = vmatpush1.bf16.msra.mxu0 0
        %2370 = vmatprep.mubr.bf16.mxu0 0
        %2371 = vmatmul.mubr.bf16.gmra.mrb[0].mxu0 %v1776
        %v2372 = vpop.f32.mrb[0].mxu0
        %v2373 = vadd.f32 0.0, %v2372
        %v2374 = vpop.f32.mrb[0].mxu0
        %v2375 = vpop.f32.mrb[0].mxu0
        %v2376 = vadd.f32 0.0, %v2375
        %v2377 = vpop.f32.mrb[0].mxu0
        %2378 = vmatprep.mubr.bf16.mxu0 0
        %2379 = vmatmul.mubr.bf16.gmra.mrb[0].mxu0 %v1778
        %v2380 = vpop.f32.mrb[0].mxu0
        %v2381 = vadd.f32 0.0, %v2380
        %v2382 = vpop.f32.mrb[0].mxu0
        %v2383 = vpop.f32.mrb[0].mxu0
        %v2384 = vadd.f32 0.0, %v2383
        %v2385 = vpop.f32.mrb[0].mxu0
        %2386 = vmatprep.mubr.bf16.mxu0 0
        %2387 = vmatmul.mubr.bf16.gmra.mrb[0].mxu0 %v1780
        %v2388 = vpop.f32.mrb[0].mxu0
        %v2389 = vadd.f32 0.0, %v2388
        %v2390 = vpop.f32.mrb[0].mxu0
        %v2391 = vpop.f32.mrb[0].mxu0
        %v2392 = vadd.f32 0.0, %v2391
        %v2393 = vpop.f32.mrb[0].mxu0
        %2394 = vmatprep.mubr.bf16.mxu0 0
        %2395 = vmatmul.mubr.bf16.gmra.mrb[0].mxu0 %v1782
        %v2396 = vpop.f32.mrb[0].mxu0
        %v2397 = vadd.f32 0.0, %v2396
        %v2398 = vpop.f32.mrb[0].mxu0
        %v2399 = vpop.f32.mrb[0].mxu0
        %v2400 = vadd.f32 0.0, %v2399
        %v2401 = vpop.f32.mrb[0].mxu0
        %2402 = vmatprep.mubr.bf16.mxu0 0
        %2403 = vmatmul.mubr.bf16.gmra.mrb[0].mxu0 %v1784
        %v2404 = vpop.f32.mrb[0].mxu0
        %v2405 = vadd.f32 0.0, %v2404
        %v2406 = vpop.f32.mrb[0].mxu0
        %v2407 = vpop.f32.mrb[0].mxu0
        %v2408 = vadd.f32 0.0, %v2407
        %v2409 = vpop.f32.mrb[0].mxu0
        %2410 = vmatprep.mubr.bf16.mxu0 0
        %2411 = vmatmul.mubr.bf16.gmra.mrb[0].mxu0 %v1786
        %v2412 = vpop.f32.mrb[0].mxu0
        %v2413 = vadd.f32 0.0, %v2412
        %v2414 = vpop.f32.mrb[0].mxu0
        %v2415 = vpop.f32.mrb[0].mxu0
        %v2416 = vadd.f32 0.0, %v2415
        %v2417 = vpop.f32.mrb[0].mxu0
        %2418 = vmatprep.mubr.bf16.mxu0 0
        %2419 = vmatmul.mubr.bf16.gmra.mrb[0].mxu0 %v1788
        %v2420 = vpop.f32.mrb[0].mxu0
        %v2421 = vadd.f32 0.0, %v2420
        %v2422 = vpop.f32.mrb[0].mxu0
        %v2423 = vpop.f32.mrb[0].mxu0
        %v2424 = vadd.f32 0.0, %v2423
        %v2425 = vpop.f32.mrb[0].mxu0
        %2426 = vmatprep.mubr.bf16.mxu0 0
        %2427 = vmatmul.mubr.bf16.gmra.mrb[0].mxu0 %v1790
        %v2428 = vpop.f32.mrb[0].mxu0
        %v2429 = vadd.f32 0.0, %v2428
        %v2430 = vpop.f32.mrb[0].mxu0
        %v2431 = vpop.f32.mrb[0].mxu0
        %v2432 = vadd.f32 0.0, %v2431
        %v2433 = vpop.f32.mrb[0].mxu0
        %2434 = vmatprep.mubr.bf16.mxu0 0
        %2435 = vmatmul.mubr.bf16.gmra.mrb[0].mxu0 %v1792
        %v2436 = vpop.f32.mrb[0].mxu0
        %v2437 = vadd.f32 0.0, %v2436
        %v2438 = vpop.f32.mrb[0].mxu0
        %v2439 = vpop.f32.mrb[0].mxu0
        %v2440 = vadd.f32 0.0, %v2439
        %v2441 = vpop.f32.mrb[0].mxu0
        %2442 = vmatprep.mubr.bf16.mxu0 0
        %2443 = vmatmul.mubr.bf16.gmra.mrb[0].mxu0 %v1794
        %v2444 = vpop.f32.mrb[0].mxu0
        %v2445 = vadd.f32 0.0, %v2444
        %v2446 = vpop.f32.mrb[0].mxu0
        %v2447 = vpop.f32.mrb[0].mxu0
        %v2448 = vadd.f32 0.0, %v2447
        %v2449 = vpop.f32.mrb[0].mxu0
        %2450 = vmatprep.mubr.bf16.mxu0 0
        %2451 = vmatmul.mubr.bf16.gmra.mrb[0].mxu0 %v1796
        %v2452 = vpop.f32.mrb[0].mxu0
        %v2453 = vadd.f32 0.0, %v2452
        %v2454 = vpop.f32.mrb[0].mxu0
        %v2455 = vpop.f32.mrb[0].mxu0
        %v2456 = vadd.f32 0.0, %v2455
        %v2457 = vpop.f32.mrb[0].mxu0
        %2458 = vmatprep.mubr.bf16.mxu0 0
        %2459 = vmatmul.mubr.bf16.gmra.mrb[0].mxu0 %v1798
        %v2460 = vpop.f32.mrb[0].mxu0
        %v2461 = vadd.f32 0.0, %v2460
        %v2462 = vpop.f32.mrb[0].mxu0
        %v2463 = vpop.f32.mrb[0].mxu0
        %v2464 = vadd.f32 0.0, %v2463
        %v2465 = vpop.f32.mrb[0].mxu0
        %2466 = vmatprep.mubr.bf16.mxu0 0
        %2467 = vmatmul.mubr.bf16.gmra.mrb[0].mxu0 %v1800
        %v2468 = vpop.f32.mrb[0].mxu0
        %v2469 = vadd.f32 0.0, %v2468
        %v2470 = vpop.f32.mrb[0].mxu0
        %v2471 = vpop.f32.mrb[0].mxu0
        %v2472 = vadd.f32 0.0, %v2471
        %v2473 = vpop.f32.mrb[0].mxu0
        %2474 = vmatprep.mubr.bf16.mxu0 0
        %2475 = vmatmul.mubr.bf16.gmra.mrb[0].mxu0 %v1802
        %v2476 = vpop.f32.mrb[0].mxu0
        %v2477 = vadd.f32 0.0, %v2476
        %v2478 = vpop.f32.mrb[0].mxu0
        %v2479 = vpop.f32.mrb[0].mxu0
        %v2480 = vadd.f32 0.0, %v2479
        %v2481 = vpop.f32.mrb[0].mxu0
        %2482 = vmatprep.mubr.bf16.mxu0 0
        %2483 = vmatmul.mubr.bf16.gmra.mrb[0].mxu0 %v1804
        %v2484 = vpop.f32.mrb[0].mxu0
        %v2485 = vadd.f32 0.0, %v2484
        %v2486 = vpop.f32.mrb[0].mxu0
        %v2487 = vpop.f32.mrb[0].mxu0
        %v2488 = vadd.f32 0.0, %v2487
        %v2489 = vpop.f32.mrb[0].mxu0
        %2490 = vmatprep.mubr.bf16.mxu0 0
        %2491 = vmatmul.mubr.bf16.gmra.mrb[0].mxu0 %v1806
        %v2492 = vpop.f32.mrb[0].mxu0
        %v2493 = vadd.f32 0.0, %v2492
        %v2494 = vpop.f32.mrb[0].mxu0
        %v2495 = vpop.f32.mrb[0].mxu0
        %v2496 = vadd.f32 0.0, %v2495
        %v2497 = vpop.f32.mrb[0].mxu0
        %2498 = vdwg.mxu0
        %v2499 = vadd.f32 %v2241, %v2373
        %v2500 = vadd.f32 %v2242, %v2376
        %v2501 = vadd.f32 %v2243, %v2381
        %v2502 = vadd.f32 %v2244, %v2384
        %v2503 = vadd.f32 %v2245, %v2389
        %v2504 = vadd.f32 %v2246, %v2392
        %v2505 = vadd.f32 %v2247, %v2397
        %v2506 = vadd.f32 %v2248, %v2400
        %v2507 = vadd.f32 %v2249, %v2405
        %v2508 = vadd.f32 %v2250, %v2408
        %v2509 = vadd.f32 %v2251, %v2413
        %v2510 = vadd.f32 %v2252, %v2416
        %v2511 = vadd.f32 %v2253, %v2421
        %v2512 = vadd.f32 %v2254, %v2424
        %v2513 = vadd.f32 %v2255, %v2429
        %v2514 = vadd.f32 %v2256, %v2432
        %v2515 = vadd.f32 %v2257, %v2437
        %v2516 = vadd.f32 %v2258, %v2440
        %v2517 = vadd.f32 %v2259, %v2445
        %v2518 = vadd.f32 %v2260, %v2448
        %v2519 = vadd.f32 %v2261, %v2453
        %v2520 = vadd.f32 %v2262, %v2456
        %v2521 = vadd.f32 %v2263, %v2461
        %v2522 = vadd.f32 %v2264, %v2464
        %v2523 = vadd.f32 %v2265, %v2469
        %v2524 = vadd.f32 %v2266, %v2472
        %v2525 = vadd.f32 %v2267, %v2477
        %v2526 = vadd.f32 %v2268, %v2480
        %v2527 = vadd.f32 %v2269, %v2485
        %v2528 = vadd.f32 %v2270, %v2488
        %v2529 = vadd.f32 %v2271, %v2493
        %v2530 = vadd.f32 %v2272, %v2496
        %v2531 = vld [vmem:[%s567 + $0x8] sm:$0xff]
        %v2532 = vld [vmem:[%s567 + $0x10] sm:$0x1]
        %v2533 = vld [vmem:[%s567 + $0x20] sm:$0xff]
        %v2534 = vld [vmem:[%s567 + $0x28] sm:$0x1]
        %v2535 = vld [vmem:[%s567 + $0x38] sm:$0xff]
        %v2536 = vld [vmem:[%s567 + $0x40] sm:$0x1]
        %v2537 = vld [vmem:[%s567 + $0x50] sm:$0xff]
        %v2538 = vld [vmem:[%s567 + $0x58] sm:$0x1]
        %v2539 = vld [vmem:[%s567 + $0x68] sm:$0xff]
        %v2540 = vld [vmem:[%s567 + $0x70] sm:$0x1]
        %v2541 = vld [vmem:[%s567 + $0x80] sm:$0xff]
        %v2542 = vld [vmem:[%s567 + $0x88] sm:$0x1]
        %v2543 = vld [vmem:[%s567 + $0x98] sm:$0xff]
        %v2544 = vld [vmem:[%s567 + $0xa0] sm:$0x1]
        %v2545 = vld [vmem:[%s567 + $0xb0] sm:$0xff]
        %v2546 = vld [vmem:[%s567 + $0xb8] sm:$0x1]
        %v2547 = vld [vmem:[%s567 + $0xc8] sm:$0xff]
        %v2548 = vld [vmem:[%s567 + $0xd0] sm:$0x1]
        %v2549 = vld [vmem:[%s567 + $0xe0] sm:$0xff]
        %v2550 = vld [vmem:[%s567 + $0xe8] sm:$0x1]
        %v2551 = vld [vmem:[%s567 + $0xf8] sm:$0xff]
        %v2552 = vld [vmem:[%s567 + $0x100] sm:$0x1]
        %v2553 = vld [vmem:[%s567 + $0x110] sm:$0xff]
        %v2554 = vld [vmem:[%s567 + $0x118] sm:$0x1]
        %v2555 = vld [vmem:[%s567 + $0x128] sm:$0xff]
        %v2556 = vld [vmem:[%s567 + $0x130] sm:$0x1]
        %v2557 = vld [vmem:[%s567 + $0x140] sm:$0xff]
        %v2558 = vld [vmem:[%s567 + $0x148] sm:$0x1]
        %v2559 = vld [vmem:[%s567 + $0x158] sm:$0xff]
        %v2560 = vld [vmem:[%s567 + $0x160] sm:$0x1]
        %v2561 = vld [vmem:[%s567 + $0x170] sm:$0xff]
        %v2562 = vld [vmem:[%s567 + $0x178] sm:$0x1]
        %v2564 = vshrl.u32 %v2531, 16
        %v2566 = vshll.u32 %v2531, 16
        %v2568 = vrot.slane %v2566, 1
        %v2569 = vor.u32 %v2564, %v2568
        %v2571 = vshll.u32 %v2532, 16
        %v2573 = vrot.slane %v2571, 1
        %v2574 = vsel %vm1308, %v2569, %v2573
        %v2576 = vshrl.u32 %v2533, 16
        %v2578 = vshll.u32 %v2533, 16
        %v2580 = vrot.slane %v2578, 1
        %v2581 = vor.u32 %v2576, %v2580
        %v2583 = vshll.u32 %v2534, 16
        %v2585 = vrot.slane %v2583, 1
        %v2586 = vsel %vm1308, %v2581, %v2585
        %v2588 = vshrl.u32 %v2535, 16
        %v2590 = vshll.u32 %v2535, 16
        %v2592 = vrot.slane %v2590, 1
        %v2593 = vor.u32 %v2588, %v2592
        %v2595 = vshll.u32 %v2536, 16
        %v2597 = vrot.slane %v2595, 1
        %v2598 = vsel %vm1308, %v2593, %v2597
        %v2600 = vshrl.u32 %v2537, 16
        %v2602 = vshll.u32 %v2537, 16
        %v2604 = vrot.slane %v2602, 1
        %v2605 = vor.u32 %v2600, %v2604
        %v2607 = vshll.u32 %v2538, 16
        %v2609 = vrot.slane %v2607, 1
        %v2610 = vsel %vm1308, %v2605, %v2609
        %v2612 = vshrl.u32 %v2539, 16
        %v2614 = vshll.u32 %v2539, 16
        %v2616 = vrot.slane %v2614, 1
        %v2617 = vor.u32 %v2612, %v2616
        %v2619 = vshll.u32 %v2540, 16
        %v2621 = vrot.slane %v2619, 1
        %v2622 = vsel %vm1308, %v2617, %v2621
        %v2624 = vshrl.u32 %v2541, 16
        %v2626 = vshll.u32 %v2541, 16
        %v2628 = vrot.slane %v2626, 1
        %v2629 = vor.u32 %v2624, %v2628
        %v2631 = vshll.u32 %v2542, 16
        %v2633 = vrot.slane %v2631, 1
        %v2634 = vsel %vm1308, %v2629, %v2633
        %v2636 = vshrl.u32 %v2543, 16
        %v2638 = vshll.u32 %v2543, 16
        %v2640 = vrot.slane %v2638, 1
        %v2641 = vor.u32 %v2636, %v2640
        %v2643 = vshll.u32 %v2544, 16
        %v2645 = vrot.slane %v2643, 1
        %v2646 = vsel %vm1308, %v2641, %v2645
        %v2648 = vshrl.u32 %v2545, 16
        %v2650 = vshll.u32 %v2545, 16
        %v2652 = vrot.slane %v2650, 1
        %v2653 = vor.u32 %v2648, %v2652
        %v2655 = vshll.u32 %v2546, 16
        %v2657 = vrot.slane %v2655, 1
        %v2658 = vsel %vm1308, %v2653, %v2657
        %v2660 = vshrl.u32 %v2547, 16
        %v2662 = vshll.u32 %v2547, 16
        %v2664 = vrot.slane %v2662, 1
        %v2665 = vor.u32 %v2660, %v2664
        %v2667 = vshll.u32 %v2548, 16
        %v2669 = vrot.slane %v2667, 1
        %v2670 = vsel %vm1308, %v2665, %v2669
        %v2672 = vshrl.u32 %v2549, 16
        %v2674 = vshll.u32 %v2549, 16
        %v2676 = vrot.slane %v2674, 1
        %v2677 = vor.u32 %v2672, %v2676
        %v2679 = vshll.u32 %v2550, 16
        %v2681 = vrot.slane %v2679, 1
        %v2682 = vsel %vm1308, %v2677, %v2681
        %v2684 = vshrl.u32 %v2551, 16
        %v2686 = vshll.u32 %v2551, 16
        %v2688 = vrot.slane %v2686, 1
        %v2689 = vor.u32 %v2684, %v2688
        %v2691 = vshll.u32 %v2552, 16
        %v2693 = vrot.slane %v2691, 1
        %v2694 = vsel %vm1308, %v2689, %v2693
        %v2696 = vshrl.u32 %v2553, 16
        %v2698 = vshll.u32 %v2553, 16
        %v2700 = vrot.slane %v2698, 1
        %v2701 = vor.u32 %v2696, %v2700
        %v2703 = vshll.u32 %v2554, 16
        %v2705 = vrot.slane %v2703, 1
        %v2706 = vsel %vm1308, %v2701, %v2705
        %v2708 = vshrl.u32 %v2555, 16
        %v2710 = vshll.u32 %v2555, 16
        %v2712 = vrot.slane %v2710, 1
        %v2713 = vor.u32 %v2708, %v2712
        %v2715 = vshll.u32 %v2556, 16
        %v2717 = vrot.slane %v2715, 1
        %v2718 = vsel %vm1308, %v2713, %v2717
        %v2720 = vshrl.u32 %v2557, 16
        %v2722 = vshll.u32 %v2557, 16
        %v2724 = vrot.slane %v2722, 1
        %v2725 = vor.u32 %v2720, %v2724
        %v2727 = vshll.u32 %v2558, 16
        %v2729 = vrot.slane %v2727, 1
        %v2730 = vsel %vm1308, %v2725, %v2729
        %v2732 = vshrl.u32 %v2559, 16
        %v2734 = vshll.u32 %v2559, 16
        %v2736 = vrot.slane %v2734, 1
        %v2737 = vor.u32 %v2732, %v2736
        %v2739 = vshll.u32 %v2560, 16
        %v2741 = vrot.slane %v2739, 1
        %v2742 = vsel %vm1308, %v2737, %v2741
        %v2744 = vshrl.u32 %v2561, 16
        %v2746 = vshll.u32 %v2561, 16
        %v2748 = vrot.slane %v2746, 1
        %v2749 = vor.u32 %v2744, %v2748
        %v2751 = vshll.u32 %v2562, 16
        %v2753 = vrot.slane %v2751, 1
        %v2754 = vsel %vm1308, %v2749, %v2753
        %s2771 = scalar_lea.vmem %s316, 320
        %v2772 = vld [vmem:[%s2771] sm:$0xf]
        %v2773 = vld [vmem:[%s2771 + $0x4] sm:$0xf]
        %v2774 = vld [vmem:[%s2771 + $0x8] sm:$0xf]
        %v2775 = vld [vmem:[%s2771 + $0xc] sm:$0xf]
        %v2776 = vld [vmem:[%s2771 + $0x10] sm:$0xf]
        %v2777 = vld [vmem:[%s2771 + $0x14] sm:$0xf]
        %v2778 = vld [vmem:[%s2771 + $0x18] sm:$0xf]
        %v2779 = vld [vmem:[%s2771 + $0x1c] sm:$0xf]
        %v2780 = vld [vmem:[%s2771 + $0x20] sm:$0xf]
        %v2781 = vld [vmem:[%s2771 + $0x24] sm:$0xf]
        %v2782 = vld [vmem:[%s2771 + $0x28] sm:$0xf]
        %v2783 = vld [vmem:[%s2771 + $0x2c] sm:$0xf]
        %v2784 = vld [vmem:[%s2771 + $0x30] sm:$0xf]
        %v2785 = vld [vmem:[%s2771 + $0x34] sm:$0xf]
        %v2786 = vld [vmem:[%s2771 + $0x38] sm:$0xf]
        %v2787 = vld [vmem:[%s2771 + $0x3c] sm:$0xf]
        %v2804 = vunpack.c.l.b16 %v2772
        %v2805 = vunpack.c.l.b16 %v2773
        %v2806 = vunpack.c.l.b16 %v2774
        %v2807 = vunpack.c.l.b16 %v2775
        %v2808 = vunpack.c.l.b16 %v2776
        %v2809 = vunpack.c.l.b16 %v2777
        %v2810 = vunpack.c.l.b16 %v2778
        %v2811 = vunpack.c.l.b16 %v2779
        %v2812 = vunpack.c.l.b16 %v2780
        %v2813 = vunpack.c.l.b16 %v2781
        %v2814 = vunpack.c.l.b16 %v2782
        %v2815 = vunpack.c.l.b16 %v2783
        %v2816 = vunpack.c.l.b16 %v2784
        %v2817 = vunpack.c.l.b16 %v2785
        %v2818 = vunpack.c.l.b16 %v2786
        %v2819 = vunpack.c.l.b16 %v2787
        %v2820 = vpack.c.b16 %v2805, %v2804
        %v2821 = vpack.c.b16 %v2807, %v2806
        %v2822 = vpack.c.b16 %v2809, %v2808
        %v2823 = vpack.c.b16 %v2811, %v2810
        %v2824 = vpack.c.b16 %v2813, %v2812
        %v2825 = vpack.c.b16 %v2815, %v2814
        %v2826 = vpack.c.b16 %v2817, %v2816
        %v2827 = vpack.c.b16 %v2819, %v2818
        %2836 = vmatprep.subr.bf16.mxu0 0
        %2837 = vmatpush1.bf16.msra.mxu0 %v2820
        %2838 = vmatprep.subr.bf16.mxu0 0
        %2839 = vmatpush1.bf16.msra.mxu0 %v2821
        %2840 = vmatprep.subr.bf16.mxu0 0
        %2841 = vmatpush1.bf16.msra.mxu0 %v2822
        %2842 = vmatprep.subr.bf16.mxu0 0
        %2843 = vmatpush1.bf16.msra.mxu0 %v2823
        %2844 = vmatprep.subr.bf16.mxu0 0
        %2845 = vmatpush1.bf16.msra.mxu0 %v2824
        %2846 = vmatprep.subr.bf16.mxu0 0
        %2847 = vmatpush1.bf16.msra.mxu0 %v2825
        %2848 = vmatprep.subr.bf16.mxu0 0
        %2849 = vmatpush1.bf16.msra.mxu0 %v2826
        %2850 = vmatprep.subr.bf16.mxu0 0
        %2851 = vmatpush1.bf16.msra.mxu0 %v2827
        %2852 = vmatprep.subr.bf16.mxu0 0
        %2853 = vmatpush1.bf16.msra.mxu0 0
        %2854 = vmatprep.subr.bf16.mxu0 0
        %2855 = vmatpush1.bf16.msra.mxu0 0
        %2856 = vmatprep.subr.bf16.mxu0 0
        %2857 = vmatpush1.bf16.msra.mxu0 0
        %2858 = vmatprep.subr.bf16.mxu0 0
        %2859 = vmatpush1.bf16.msra.mxu0 0
        %2860 = vmatprep.subr.bf16.mxu0 0
        %2861 = vmatpush1.bf16.msra.mxu0 0
        %2862 = vmatprep.subr.bf16.mxu0 0
        %2863 = vmatpush1.bf16.msra.mxu0 0
        %2864 = vmatprep.subr.bf16.mxu0 0
        %2865 = vmatpush1.bf16.msra.mxu0 0
        %2866 = vmatprep.subr.bf16.mxu0 0
        %2867 = vmatpush1.bf16.msra.mxu0 0
        %2868 = vmatprep.mubr.bf16.mxu0 0
        %2869 = vmatmul.mubr.bf16.gmra.mrb[0].mxu0 %v2574
        %v2870 = vpop.f32.mrb[0].mxu0
        %v2871 = vadd.f32 0.0, %v2870
        %v2872 = vpop.f32.mrb[0].mxu0
        %v2873 = vpop.f32.mrb[0].mxu0
        %v2874 = vadd.f32 0.0, %v2873
        %v2875 = vpop.f32.mrb[0].mxu0
        %2876 = vmatprep.mubr.bf16.mxu0 0
        %2877 = vmatmul.mubr.bf16.gmra.mrb[0].mxu0 %v2586
        %v2878 = vpop.f32.mrb[0].mxu0
        %v2879 = vadd.f32 0.0, %v2878
        %v2880 = vpop.f32.mrb[0].mxu0
        %v2881 = vpop.f32.mrb[0].mxu0
        %v2882 = vadd.f32 0.0, %v2881
        %v2883 = vpop.f32.mrb[0].mxu0
        %2884 = vmatprep.mubr.bf16.mxu0 0
        %2885 = vmatmul.mubr.bf16.gmra.mrb[0].mxu0 %v2598
        %v2886 = vpop.f32.mrb[0].mxu0
        %v2887 = vadd.f32 0.0, %v2886
        %v2888 = vpop.f32.mrb[0].mxu0
        %v2889 = vpop.f32.mrb[0].mxu0
        %v2890 = vadd.f32 0.0, %v2889
        %v2891 = vpop.f32.mrb[0].mxu0
        %2892 = vmatprep.mubr.bf16.mxu0 0
        %2893 = vmatmul.mubr.bf16.gmra.mrb[0].mxu0 %v2610
        %v2894 = vpop.f32.mrb[0].mxu0
        %v2895 = vadd.f32 0.0, %v2894
        %v2896 = vpop.f32.mrb[0].mxu0
        %v2897 = vpop.f32.mrb[0].mxu0
        %v2898 = vadd.f32 0.0, %v2897
        %v2899 = vpop.f32.mrb[0].mxu0
        %2900 = vmatprep.mubr.bf16.mxu0 0
        %2901 = vmatmul.mubr.bf16.gmra.mrb[0].mxu0 %v2622
        %v2902 = vpop.f32.mrb[0].mxu0
        %v2903 = vadd.f32 0.0, %v2902
        %v2904 = vpop.f32.mrb[0].mxu0
        %v2905 = vpop.f32.mrb[0].mxu0
        %v2906 = vadd.f32 0.0, %v2905
        %v2907 = vpop.f32.mrb[0].mxu0
        %2908 = vmatprep.mubr.bf16.mxu0 0
        %2909 = vmatmul.mubr.bf16.gmra.mrb[0].mxu0 %v2634
        %v2910 = vpop.f32.mrb[0].mxu0
        %v2911 = vadd.f32 0.0, %v2910
        %v2912 = vpop.f32.mrb[0].mxu0
        %v2913 = vpop.f32.mrb[0].mxu0
        %v2914 = vadd.f32 0.0, %v2913
        %v2915 = vpop.f32.mrb[0].mxu0
        %2916 = vmatprep.mubr.bf16.mxu0 0
        %2917 = vmatmul.mubr.bf16.gmra.mrb[0].mxu0 %v2646
        %v2918 = vpop.f32.mrb[0].mxu0
        %v2919 = vadd.f32 0.0, %v2918
        %v2920 = vpop.f32.mrb[0].mxu0
        %v2921 = vpop.f32.mrb[0].mxu0
        %v2922 = vadd.f32 0.0, %v2921
        %v2923 = vpop.f32.mrb[0].mxu0
        %2924 = vmatprep.mubr.bf16.mxu0 0
        %2925 = vmatmul.mubr.bf16.gmra.mrb[0].mxu0 %v2658
        %v2926 = vpop.f32.mrb[0].mxu0
        %v2927 = vadd.f32 0.0, %v2926
        %v2928 = vpop.f32.mrb[0].mxu0
        %v2929 = vpop.f32.mrb[0].mxu0
        %v2930 = vadd.f32 0.0, %v2929
        %v2931 = vpop.f32.mrb[0].mxu0
        %2932 = vmatprep.mubr.bf16.mxu0 0
        %2933 = vmatmul.mubr.bf16.gmra.mrb[0].mxu0 %v2670
        %v2934 = vpop.f32.mrb[0].mxu0
        %v2935 = vadd.f32 0.0, %v2934
        %v2936 = vpop.f32.mrb[0].mxu0
        %v2937 = vpop.f32.mrb[0].mxu0
        %v2938 = vadd.f32 0.0, %v2937
        %v2939 = vpop.f32.mrb[0].mxu0
        %2940 = vmatprep.mubr.bf16.mxu0 0
        %2941 = vmatmul.mubr.bf16.gmra.mrb[0].mxu0 %v2682
        %v2942 = vpop.f32.mrb[0].mxu0
        %v2943 = vadd.f32 0.0, %v2942
        %v2944 = vpop.f32.mrb[0].mxu0
        %v2945 = vpop.f32.mrb[0].mxu0
        %v2946 = vadd.f32 0.0, %v2945
        %v2947 = vpop.f32.mrb[0].mxu0
        %2948 = vmatprep.mubr.bf16.mxu0 0
        %2949 = vmatmul.mubr.bf16.gmra.mrb[0].mxu0 %v2694
        %v2950 = vpop.f32.mrb[0].mxu0
        %v2951 = vadd.f32 0.0, %v2950
        %v2952 = vpop.f32.mrb[0].mxu0
        %v2953 = vpop.f32.mrb[0].mxu0
        %v2954 = vadd.f32 0.0, %v2953
        %v2955 = vpop.f32.mrb[0].mxu0
        %2956 = vmatprep.mubr.bf16.mxu0 0
        %2957 = vmatmul.mubr.bf16.gmra.mrb[0].mxu0 %v2706
        %v2958 = vpop.f32.mrb[0].mxu0
        %v2959 = vadd.f32 0.0, %v2958
        %v2960 = vpop.f32.mrb[0].mxu0
        %v2961 = vpop.f32.mrb[0].mxu0
        %v2962 = vadd.f32 0.0, %v2961
        %v2963 = vpop.f32.mrb[0].mxu0
        %2964 = vmatprep.mubr.bf16.mxu0 0
        %2965 = vmatmul.mubr.bf16.gmra.mrb[0].mxu0 %v2718
        %v2966 = vpop.f32.mrb[0].mxu0
        %v2967 = vadd.f32 0.0, %v2966
        %v2968 = vpop.f32.mrb[0].mxu0
        %v2969 = vpop.f32.mrb[0].mxu0
        %v2970 = vadd.f32 0.0, %v2969
        %v2971 = vpop.f32.mrb[0].mxu0
        %2972 = vmatprep.mubr.bf16.mxu0 0
        %2973 = vmatmul.mubr.bf16.gmra.mrb[0].mxu0 %v2730
        %v2974 = vpop.f32.mrb[0].mxu0
        %v2975 = vadd.f32 0.0, %v2974
        %v2976 = vpop.f32.mrb[0].mxu0
        %v2977 = vpop.f32.mrb[0].mxu0
        %v2978 = vadd.f32 0.0, %v2977
        %v2979 = vpop.f32.mrb[0].mxu0
        %2980 = vmatprep.mubr.bf16.mxu0 0
        %2981 = vmatmul.mubr.bf16.gmra.mrb[0].mxu0 %v2742
        %v2982 = vpop.f32.mrb[0].mxu0
        %v2983 = vadd.f32 0.0, %v2982
        %v2984 = vpop.f32.mrb[0].mxu0
        %v2985 = vpop.f32.mrb[0].mxu0
        %v2986 = vadd.f32 0.0, %v2985
        %v2987 = vpop.f32.mrb[0].mxu0
        %2988 = vmatprep.mubr.bf16.mxu0 0
        %2989 = vmatmul.mubr.bf16.gmra.mrb[0].mxu0 %v2754
        %v2990 = vpop.f32.mrb[0].mxu0
        %v2991 = vadd.f32 0.0, %v2990
        %v2992 = vpop.f32.mrb[0].mxu0
        %v2993 = vpop.f32.mrb[0].mxu0
        %v2994 = vadd.f32 0.0, %v2993
        %v2995 = vpop.f32.mrb[0].mxu0
        %2996 = vdwg.mxu0
        %v2997 = vadd.f32 %v2499, %v2871
        %v2998 = vadd.f32 %v2500, %v2874
        %v2999 = vadd.f32 %v2501, %v2879
        %v3000 = vadd.f32 %v2502, %v2882
        %v3001 = vadd.f32 %v2503, %v2887
        %v3002 = vadd.f32 %v2504, %v2890
        %v3003 = vadd.f32 %v2505, %v2895
        %v3004 = vadd.f32 %v2506, %v2898
        %v3005 = vadd.f32 %v2507, %v2903
        %v3006 = vadd.f32 %v2508, %v2906
        %v3007 = vadd.f32 %v2509, %v2911
        %v3008 = vadd.f32 %v2510, %v2914
        %v3009 = vadd.f32 %v2511, %v2919
        %v3010 = vadd.f32 %v2512, %v2922
        %v3011 = vadd.f32 %v2513, %v2927
        %v3012 = vadd.f32 %v2514, %v2930
        %v3013 = vadd.f32 %v2515, %v2935
        %v3014 = vadd.f32 %v2516, %v2938
        %v3015 = vadd.f32 %v2517, %v2943
        %v3016 = vadd.f32 %v2518, %v2946
        %v3017 = vadd.f32 %v2519, %v2951
        %v3018 = vadd.f32 %v2520, %v2954
        %v3019 = vadd.f32 %v2521, %v2959
        %v3020 = vadd.f32 %v2522, %v2962
        %v3021 = vadd.f32 %v2523, %v2967
        %v3022 = vadd.f32 %v2524, %v2970
        %v3023 = vadd.f32 %v2525, %v2975
        %v3024 = vadd.f32 %v2526, %v2978
        %v3025 = vadd.f32 %v2527, %v2983
        %v3026 = vadd.f32 %v2528, %v2986
        %v3027 = vadd.f32 %v2529, %v2991
        %v3028 = vadd.f32 %v2530, %v2994
        %s3029 = scalar_lea.vmem [#allocation2], 48
        %v3030 = vld [vmem:[%s3029] sm:$0x80]
        %v3031 = vld [vmem:[%s3029 + $0x8] sm:$0xff]
        %v3032 = vld [vmem:[%s3029 + $0x18] sm:$0x80]
        %v3033 = vld [vmem:[%s3029 + $0x20] sm:$0xff]
        %v3034 = vld [vmem:[%s3029 + $0x30] sm:$0x80]
        %v3035 = vld [vmem:[%s3029 + $0x38] sm:$0xff]
        %v3036 = vld [vmem:[%s3029 + $0x48] sm:$0x80]
        %v3037 = vld [vmem:[%s3029 + $0x50] sm:$0xff]
        %v3038 = vld [vmem:[%s3029 + $0x60] sm:$0x80]
        %v3039 = vld [vmem:[%s3029 + $0x68] sm:$0xff]
        %v3040 = vld [vmem:[%s3029 + $0x78] sm:$0x80]
        %v3041 = vld [vmem:[%s3029 + $0x80] sm:$0xff]
        %v3042 = vld [vmem:[%s3029 + $0x90] sm:$0x80]
        %v3043 = vld [vmem:[%s3029 + $0x98] sm:$0xff]
        %v3044 = vld [vmem:[%s3029 + $0xa8] sm:$0x80]
        %v3045 = vld [vmem:[%s3029 + $0xb0] sm:$0xff]
        %v3046 = vld [vmem:[%s3029 + $0xc0] sm:$0x80]
        %v3047 = vld [vmem:[%s3029 + $0xc8] sm:$0xff]
        %v3048 = vld [vmem:[%s3029 + $0xd8] sm:$0x80]
        %v3049 = vld [vmem:[%s3029 + $0xe0] sm:$0xff]
        %v3050 = vld [vmem:[%s3029 + $0xf0] sm:$0x80]
        %v3051 = vld [vmem:[%s3029 + $0xf8] sm:$0xff]
        %v3052 = vld [vmem:[%s3029 + $0x108] sm:$0x80]
        %v3053 = vld [vmem:[%s3029 + $0x110] sm:$0xff]
        %v3054 = vld [vmem:[%s3029 + $0x120] sm:$0x80]
        %v3055 = vld [vmem:[%s3029 + $0x128] sm:$0xff]
        %v3056 = vld [vmem:[%s3029 + $0x138] sm:$0x80]
        %v3057 = vld [vmem:[%s3029 + $0x140] sm:$0xff]
        %v3058 = vld [vmem:[%s3029 + $0x150] sm:$0x80]
        %v3059 = vld [vmem:[%s3029 + $0x158] sm:$0xff]
        %v3060 = vld [vmem:[%s3029 + $0x168] sm:$0x80]
        %v3061 = vld [vmem:[%s3029 + $0x170] sm:$0xff]
        %v3063 = vshrl.u32 %v3030, 16
        %v3065 = vrot.slane %v3063, 7
        %v3067 = vshrl.u32 %v3031, 16
        %v3069 = vrot.slane %v3067, 7
        %v3070 = vshll.u32 %v3031, 16
        %v3072 = vor.u32 %v3069, %v3070
        %v3073 = vsel %vm616, %v3065, %v3072
        %v3075 = vshrl.u32 %v3032, 16
        %v3077 = vrot.slane %v3075, 7
        %v3079 = vshrl.u32 %v3033, 16
        %v3081 = vrot.slane %v3079, 7
        %v3082 = vshll.u32 %v3033, 16
        %v3084 = vor.u32 %v3081, %v3082
        %v3085 = vsel %vm616, %v3077, %v3084
        %v3087 = vshrl.u32 %v3034, 16
        %v3089 = vrot.slane %v3087, 7
        %v3091 = vshrl.u32 %v3035, 16
        %v3093 = vrot.slane %v3091, 7
        %v3094 = vshll.u32 %v3035, 16
        %v3096 = vor.u32 %v3093, %v3094
        %v3097 = vsel %vm616, %v3089, %v3096
        %v3099 = vshrl.u32 %v3036, 16
        %v3101 = vrot.slane %v3099, 7
        %v3103 = vshrl.u32 %v3037, 16
        %v3105 = vrot.slane %v3103, 7
        %v3106 = vshll.u32 %v3037, 16
        %v3108 = vor.u32 %v3105, %v3106
        %v3109 = vsel %vm616, %v3101, %v3108
        %v3111 = vshrl.u32 %v3038, 16
        %v3113 = vrot.slane %v3111, 7
        %v3115 = vshrl.u32 %v3039, 16
        %v3117 = vrot.slane %v3115, 7
        %v3118 = vshll.u32 %v3039, 16
        %v3120 = vor.u32 %v3117, %v3118
        %v3121 = vsel %vm616, %v3113, %v3120
        %v3123 = vshrl.u32 %v3040, 16
        %v3125 = vrot.slane %v3123, 7
        %v3127 = vshrl.u32 %v3041, 16
        %v3129 = vrot.slane %v3127, 7
        %v3130 = vshll.u32 %v3041, 16
        %v3132 = vor.u32 %v3129, %v3130
        %v3133 = vsel %vm616, %v3125, %v3132
        %v3135 = vshrl.u32 %v3042, 16
        %v3137 = vrot.slane %v3135, 7
        %v3139 = vshrl.u32 %v3043, 16
        %v3141 = vrot.slane %v3139, 7
        %v3142 = vshll.u32 %v3043, 16
        %v3144 = vor.u32 %v3141, %v3142
        %v3145 = vsel %vm616, %v3137, %v3144
        %v3147 = vshrl.u32 %v3044, 16
        %v3149 = vrot.slane %v3147, 7
        %v3151 = vshrl.u32 %v3045, 16
        %v3153 = vrot.slane %v3151, 7
        %v3154 = vshll.u32 %v3045, 16
        %v3156 = vor.u32 %v3153, %v3154
        %v3157 = vsel %vm616, %v3149, %v3156
        %v3159 = vshrl.u32 %v3046, 16
        %v3161 = vrot.slane %v3159, 7
        %v3163 = vshrl.u32 %v3047, 16
        %v3165 = vrot.slane %v3163, 7
        %v3166 = vshll.u32 %v3047, 16
        %v3168 = vor.u32 %v3165, %v3166
        %v3169 = vsel %vm616, %v3161, %v3168
        %v3171 = vshrl.u32 %v3048, 16
        %v3173 = vrot.slane %v3171, 7
        %v3175 = vshrl.u32 %v3049, 16
        %v3177 = vrot.slane %v3175, 7
        %v3178 = vshll.u32 %v3049, 16
        %v3180 = vor.u32 %v3177, %v3178
        %v3181 = vsel %vm616, %v3173, %v3180
        %v3183 = vshrl.u32 %v3050, 16
        %v3185 = vrot.slane %v3183, 7
        %v3187 = vshrl.u32 %v3051, 16
        %v3189 = vrot.slane %v3187, 7
        %v3190 = vshll.u32 %v3051, 16
        %v3192 = vor.u32 %v3189, %v3190
        %v3193 = vsel %vm616, %v3185, %v3192
        %v3195 = vshrl.u32 %v3052, 16
        %v3197 = vrot.slane %v3195, 7
        %v3199 = vshrl.u32 %v3053, 16
        %v3201 = vrot.slane %v3199, 7
        %v3202 = vshll.u32 %v3053, 16
        %v3204 = vor.u32 %v3201, %v3202
        %v3205 = vsel %vm616, %v3197, %v3204
        %v3207 = vshrl.u32 %v3054, 16
        %v3209 = vrot.slane %v3207, 7
        %v3211 = vshrl.u32 %v3055, 16
        %v3213 = vrot.slane %v3211, 7
        %v3214 = vshll.u32 %v3055, 16
        %v3216 = vor.u32 %v3213, %v3214
        %v3217 = vsel %vm616, %v3209, %v3216
        %v3219 = vshrl.u32 %v3056, 16
        %v3221 = vrot.slane %v3219, 7
        %v3223 = vshrl.u32 %v3057, 16
        %v3225 = vrot.slane %v3223, 7
        %v3226 = vshll.u32 %v3057, 16
        %v3228 = vor.u32 %v3225, %v3226
        %v3229 = vsel %vm616, %v3221, %v3228
        %v3231 = vshrl.u32 %v3058, 16
        %v3233 = vrot.slane %v3231, 7
        %v3235 = vshrl.u32 %v3059, 16
        %v3237 = vrot.slane %v3235, 7
        %v3238 = vshll.u32 %v3059, 16
        %v3240 = vor.u32 %v3237, %v3238
        %v3241 = vsel %vm616, %v3233, %v3240
        %v3243 = vshrl.u32 %v3060, 16
        %v3245 = vrot.slane %v3243, 7
        %v3247 = vshrl.u32 %v3061, 16
        %v3249 = vrot.slane %v3247, 7
        %v3250 = vshll.u32 %v3061, 16
        %v3252 = vor.u32 %v3249, %v3250
        %v3253 = vsel %vm616, %v3245, %v3252
        %s3270 = scalar_lea.vmem %s316, 384
        %v3271 = vld [vmem:[%s3270] sm:$0xf]
        %v3272 = vld [vmem:[%s3270 + $0x4] sm:$0xf]
        %v3273 = vld [vmem:[%s3270 + $0x8] sm:$0xf]
        %v3274 = vld [vmem:[%s3270 + $0xc] sm:$0xf]
        %v3275 = vld [vmem:[%s3270 + $0x10] sm:$0xf]
        %v3276 = vld [vmem:[%s3270 + $0x14] sm:$0xf]
        %v3277 = vld [vmem:[%s3270 + $0x18] sm:$0xf]
        %v3278 = vld [vmem:[%s3270 + $0x1c] sm:$0xf]
        %v3279 = vld [vmem:[%s3270 + $0x20] sm:$0xf]
        %v3280 = vld [vmem:[%s3270 + $0x24] sm:$0xf]
        %v3281 = vld [vmem:[%s3270 + $0x28] sm:$0xf]
        %v3282 = vld [vmem:[%s3270 + $0x2c] sm:$0xf]
        %v3283 = vld [vmem:[%s3270 + $0x30] sm:$0xf]
        %v3284 = vld [vmem:[%s3270 + $0x34] sm:$0xf]
        %v3285 = vld [vmem:[%s3270 + $0x38] sm:$0xf]
        %v3286 = vld [vmem:[%s3270 + $0x3c] sm:$0xf]
        %v3303 = vunpack.c.l.b16 %v3271
        %v3304 = vunpack.c.l.b16 %v3272
        %v3305 = vunpack.c.l.b16 %v3273
        %v3306 = vunpack.c.l.b16 %v3274
        %v3307 = vunpack.c.l.b16 %v3275
        %v3308 = vunpack.c.l.b16 %v3276
        %v3309 = vunpack.c.l.b16 %v3277
        %v3310 = vunpack.c.l.b16 %v3278
        %v3311 = vunpack.c.l.b16 %v3279
        %v3312 = vunpack.c.l.b16 %v3280
        %v3313 = vunpack.c.l.b16 %v3281
        %v3314 = vunpack.c.l.b16 %v3282
        %v3315 = vunpack.c.l.b16 %v3283
        %v3316 = vunpack.c.l.b16 %v3284
        %v3317 = vunpack.c.l.b16 %v3285
        %v3318 = vunpack.c.l.b16 %v3286
        %v3319 = vpack.c.b16 %v3304, %v3303
        %v3320 = vpack.c.b16 %v3306, %v3305
        %v3321 = vpack.c.b16 %v3308, %v3307
        %v3322 = vpack.c.b16 %v3310, %v3309
        %v3323 = vpack.c.b16 %v3312, %v3311
        %v3324 = vpack.c.b16 %v3314, %v3313
        %v3325 = vpack.c.b16 %v3316, %v3315
        %v3326 = vpack.c.b16 %v3318, %v3317
        %3335 = vmatprep.subr.bf16.mxu0 0
        %3336 = vmatpush1.bf16.msra.mxu0 %v3319
        %3337 = vmatprep.subr.bf16.mxu0 0
        %3338 = vmatpush1.bf16.msra.mxu0 %v3320
        %3339 = vmatprep.subr.bf16.mxu0 0
        %3340 = vmatpush1.bf16.msra.mxu0 %v3321
        %3341 = vmatprep.subr.bf16.mxu0 0
        %3342 = vmatpush1.bf16.msra.mxu0 %v3322
        %3343 = vmatprep.subr.bf16.mxu0 0
        %3344 = vmatpush1.bf16.msra.mxu0 %v3323
        %3345 = vmatprep.subr.bf16.mxu0 0
        %3346 = vmatpush1.bf16.msra.mxu0 %v3324
        %3347 = vmatprep.subr.bf16.mxu0 0
        %3348 = vmatpush1.bf16.msra.mxu0 %v3325
        %3349 = vmatprep.subr.bf16.mxu0 0
        %3350 = vmatpush1.bf16.msra.mxu0 %v3326
        %3351 = vmatprep.subr.bf16.mxu0 0
        %3352 = vmatpush1.bf16.msra.mxu0 0
        %3353 = vmatprep.subr.bf16.mxu0 0
        %3354 = vmatpush1.bf16.msra.mxu0 0
        %3355 = vmatprep.subr.bf16.mxu0 0
        %3356 = vmatpush1.bf16.msra.mxu0 0
        %3357 = vmatprep.subr.bf16.mxu0 0
        %3358 = vmatpush1.bf16.msra.mxu0 0
        %3359 = vmatprep.subr.bf16.mxu0 0
        %3360 = vmatpush1.bf16.msra.mxu0 0
        %3361 = vmatprep.subr.bf16.mxu0 0
        %3362 = vmatpush1.bf16.msra.mxu0 0
        %3363 = vmatprep.subr.bf16.mxu0 0
        %3364 = vmatpush1.bf16.msra.mxu0 0
        %3365 = vmatprep.subr.bf16.mxu0 0
        %3366 = vmatpush1.bf16.msra.mxu0 0
        %3367 = vmatprep.mubr.bf16.mxu0 0
        %3368 = vmatmul.mubr.bf16.gmra.mrb[0].mxu0 %v3073
        %v3369 = vpop.f32.mrb[0].mxu0
        %v3370 = vadd.f32 0.0, %v3369
        %v3371 = vpop.f32.mrb[0].mxu0
        %v3372 = vpop.f32.mrb[0].mxu0
        %v3373 = vadd.f32 0.0, %v3372
        %v3374 = vpop.f32.mrb[0].mxu0
        %3375 = vmatprep.mubr.bf16.mxu0 0
        %3376 = vmatmul.mubr.bf16.gmra.mrb[0].mxu0 %v3085
        %v3377 = vpop.f32.mrb[0].mxu0
        %v3378 = vadd.f32 0.0, %v3377
        %v3379 = vpop.f32.mrb[0].mxu0
        %v3380 = vpop.f32.mrb[0].mxu0
        %v3381 = vadd.f32 0.0, %v3380
        %v3382 = vpop.f32.mrb[0].mxu0
        %3383 = vmatprep.mubr.bf16.mxu0 0
        %3384 = vmatmul.mubr.bf16.gmra.mrb[0].mxu0 %v3097
        %v3385 = vpop.f32.mrb[0].mxu0
        %v3386 = vadd.f32 0.0, %v3385
        %v3387 = vpop.f32.mrb[0].mxu0
        %v3388 = vpop.f32.mrb[0].mxu0
        %v3389 = vadd.f32 0.0, %v3388
        %v3390 = vpop.f32.mrb[0].mxu0
        %3391 = vmatprep.mubr.bf16.mxu0 0
        %3392 = vmatmul.mubr.bf16.gmra.mrb[0].mxu0 %v3109
        %v3393 = vpop.f32.mrb[0].mxu0
        %v3394 = vadd.f32 0.0, %v3393
        %v3395 = vpop.f32.mrb[0].mxu0
        %v3396 = vpop.f32.mrb[0].mxu0
        %v3397 = vadd.f32 0.0, %v3396
        %v3398 = vpop.f32.mrb[0].mxu0
        %3399 = vmatprep.mubr.bf16.mxu0 0
        %3400 = vmatmul.mubr.bf16.gmra.mrb[0].mxu0 %v3121
        %v3401 = vpop.f32.mrb[0].mxu0
        %v3402 = vadd.f32 0.0, %v3401
        %v3403 = vpop.f32.mrb[0].mxu0
        %v3404 = vpop.f32.mrb[0].mxu0
        %v3405 = vadd.f32 0.0, %v3404
        %v3406 = vpop.f32.mrb[0].mxu0
        %3407 = vmatprep.mubr.bf16.mxu0 0
        %3408 = vmatmul.mubr.bf16.gmra.mrb[0].mxu0 %v3133
        %v3409 = vpop.f32.mrb[0].mxu0
        %v3410 = vadd.f32 0.0, %v3409
        %v3411 = vpop.f32.mrb[0].mxu0
        %v3412 = vpop.f32.mrb[0].mxu0
        %v3413 = vadd.f32 0.0, %v3412
        %v3414 = vpop.f32.mrb[0].mxu0
        %3415 = vmatprep.mubr.bf16.mxu0 0
        %3416 = vmatmul.mubr.bf16.gmra.mrb[0].mxu0 %v3145
        %v3417 = vpop.f32.mrb[0].mxu0
        %v3418 = vadd.f32 0.0, %v3417
        %v3419 = vpop.f32.mrb[0].mxu0
        %v3420 = vpop.f32.mrb[0].mxu0
        %v3421 = vadd.f32 0.0, %v3420
        %v3422 = vpop.f32.mrb[0].mxu0
        %3423 = vmatprep.mubr.bf16.mxu0 0
        %3424 = vmatmul.mubr.bf16.gmra.mrb[0].mxu0 %v3157
        %v3425 = vpop.f32.mrb[0].mxu0
        %v3426 = vadd.f32 0.0, %v3425
        %v3427 = vpop.f32.mrb[0].mxu0
        %v3428 = vpop.f32.mrb[0].mxu0
        %v3429 = vadd.f32 0.0, %v3428
        %v3430 = vpop.f32.mrb[0].mxu0
        %3431 = vmatprep.mubr.bf16.mxu0 0
        %3432 = vmatmul.mubr.bf16.gmra.mrb[0].mxu0 %v3169
        %v3433 = vpop.f32.mrb[0].mxu0
        %v3434 = vadd.f32 0.0, %v3433
        %v3435 = vpop.f32.mrb[0].mxu0
        %v3436 = vpop.f32.mrb[0].mxu0
        %v3437 = vadd.f32 0.0, %v3436
        %v3438 = vpop.f32.mrb[0].mxu0
        %3439 = vmatprep.mubr.bf16.mxu0 0
        %3440 = vmatmul.mubr.bf16.gmra.mrb[0].mxu0 %v3181
        %v3441 = vpop.f32.mrb[0].mxu0
        %v3442 = vadd.f32 0.0, %v3441
        %v3443 = vpop.f32.mrb[0].mxu0
        %v3444 = vpop.f32.mrb[0].mxu0
        %v3445 = vadd.f32 0.0, %v3444
        %v3446 = vpop.f32.mrb[0].mxu0
        %3447 = vmatprep.mubr.bf16.mxu0 0
        %3448 = vmatmul.mubr.bf16.gmra.mrb[0].mxu0 %v3193
        %v3449 = vpop.f32.mrb[0].mxu0
        %v3450 = vadd.f32 0.0, %v3449
        %v3451 = vpop.f32.mrb[0].mxu0
        %v3452 = vpop.f32.mrb[0].mxu0
        %v3453 = vadd.f32 0.0, %v3452
        %v3454 = vpop.f32.mrb[0].mxu0
        %3455 = vmatprep.mubr.bf16.mxu0 0
        %3456 = vmatmul.mubr.bf16.gmra.mrb[0].mxu0 %v3205
        %v3457 = vpop.f32.mrb[0].mxu0
        %v3458 = vadd.f32 0.0, %v3457
        %v3459 = vpop.f32.mrb[0].mxu0
        %v3460 = vpop.f32.mrb[0].mxu0
        %v3461 = vadd.f32 0.0, %v3460
        %v3462 = vpop.f32.mrb[0].mxu0
        %3463 = vmatprep.mubr.bf16.mxu0 0
        %3464 = vmatmul.mubr.bf16.gmra.mrb[0].mxu0 %v3217
        %v3465 = vpop.f32.mrb[0].mxu0
        %v3466 = vadd.f32 0.0, %v3465
        %v3467 = vpop.f32.mrb[0].mxu0
        %v3468 = vpop.f32.mrb[0].mxu0
        %v3469 = vadd.f32 0.0, %v3468
        %v3470 = vpop.f32.mrb[0].mxu0
        %3471 = vmatprep.mubr.bf16.mxu0 0
        %3472 = vmatmul.mubr.bf16.gmra.mrb[0].mxu0 %v3229
        %v3473 = vpop.f32.mrb[0].mxu0
        %v3474 = vadd.f32 0.0, %v3473
        %v3475 = vpop.f32.mrb[0].mxu0
        %v3476 = vpop.f32.mrb[0].mxu0
        %v3477 = vadd.f32 0.0, %v3476
        %v3478 = vpop.f32.mrb[0].mxu0
        %3479 = vmatprep.mubr.bf16.mxu0 0
        %3480 = vmatmul.mubr.bf16.gmra.mrb[0].mxu0 %v3241
        %v3481 = vpop.f32.mrb[0].mxu0
        %v3482 = vadd.f32 0.0, %v3481
        %v3483 = vpop.f32.mrb[0].mxu0
        %v3484 = vpop.f32.mrb[0].mxu0
        %v3485 = vadd.f32 0.0, %v3484
        %v3486 = vpop.f32.mrb[0].mxu0
        %3487 = vmatprep.mubr.bf16.mxu0 0
        %3488 = vmatmul.mubr.bf16.gmra.mrb[0].mxu0 %v3253
        %v3489 = vpop.f32.mrb[0].mxu0
        %v3490 = vadd.f32 0.0, %v3489
        %v3491 = vpop.f32.mrb[0].mxu0
        %v3492 = vpop.f32.mrb[0].mxu0
        %v3493 = vadd.f32 0.0, %v3492
        %v3494 = vpop.f32.mrb[0].mxu0
        %3495 = vdwg.mxu0
        %v3496 = vadd.f32 %v2997, %v3370
        %v3497 = vadd.f32 %v2998, %v3373
        %v3498 = vadd.f32 %v2999, %v3378
        %v3499 = vadd.f32 %v3000, %v3381
        %v3500 = vadd.f32 %v3001, %v3386
        %v3501 = vadd.f32 %v3002, %v3389
        %v3502 = vadd.f32 %v3003, %v3394
        %v3503 = vadd.f32 %v3004, %v3397
        %v3504 = vadd.f32 %v3005, %v3402
        %v3505 = vadd.f32 %v3006, %v3405
        %v3506 = vadd.f32 %v3007, %v3410
        %v3507 = vadd.f32 %v3008, %v3413
        %v3508 = vadd.f32 %v3009, %v3418
        %v3509 = vadd.f32 %v3010, %v3421
        %v3510 = vadd.f32 %v3011, %v3426
        %v3511 = vadd.f32 %v3012, %v3429
        %v3512 = vadd.f32 %v3013, %v3434
        %v3513 = vadd.f32 %v3014, %v3437
        %v3514 = vadd.f32 %v3015, %v3442
        %v3515 = vadd.f32 %v3016, %v3445
        %v3516 = vadd.f32 %v3017, %v3450
        %v3517 = vadd.f32 %v3018, %v3453
        %v3518 = vadd.f32 %v3019, %v3458
        %v3519 = vadd.f32 %v3020, %v3461
        %v3520 = vadd.f32 %v3021, %v3466
        %v3521 = vadd.f32 %v3022, %v3469
        %v3522 = vadd.f32 %v3023, %v3474
        %v3523 = vadd.f32 %v3024, %v3477
        %v3524 = vadd.f32 %v3025, %v3482
        %v3525 = vadd.f32 %v3026, %v3485
        %v3526 = vadd.f32 %v3027, %v3490
        %v3527 = vadd.f32 %v3028, %v3493
        %s3528 = scalar_lea.vmem %s316, 448
        %v3529 = vld [vmem:[%s3528] sm:$0xf]
        %v3530 = vld [vmem:[%s3528 + $0x4] sm:$0xf]
        %v3531 = vld [vmem:[%s3528 + $0x8] sm:$0xf]
        %v3532 = vld [vmem:[%s3528 + $0xc] sm:$0xf]
        %v3533 = vld [vmem:[%s3528 + $0x10] sm:$0xf]
        %v3534 = vld [vmem:[%s3528 + $0x14] sm:$0xf]
        %v3535 = vld [vmem:[%s3528 + $0x18] sm:$0xf]
        %v3536 = vld [vmem:[%s3528 + $0x1c] sm:$0xf]
        %v3537 = vld [vmem:[%s3528 + $0x20] sm:$0xf]
        %v3538 = vld [vmem:[%s3528 + $0x24] sm:$0xf]
        %v3539 = vld [vmem:[%s3528 + $0x28] sm:$0xf]
        %v3540 = vld [vmem:[%s3528 + $0x2c] sm:$0xf]
        %v3541 = vld [vmem:[%s3528 + $0x30] sm:$0xf]
        %v3542 = vld [vmem:[%s3528 + $0x34] sm:$0xf]
        %v3543 = vld [vmem:[%s3528 + $0x38] sm:$0xf]
        %v3544 = vld [vmem:[%s3528 + $0x3c] sm:$0xf]
        %v3561 = vunpack.c.l.b16 %v3529
        %v3562 = vunpack.c.l.b16 %v3530
        %v3563 = vunpack.c.l.b16 %v3531
        %v3564 = vunpack.c.l.b16 %v3532
        %v3565 = vunpack.c.l.b16 %v3533
        %v3566 = vunpack.c.l.b16 %v3534
        %v3567 = vunpack.c.l.b16 %v3535
        %v3568 = vunpack.c.l.b16 %v3536
        %v3569 = vunpack.c.l.b16 %v3537
        %v3570 = vunpack.c.l.b16 %v3538
        %v3571 = vunpack.c.l.b16 %v3539
        %v3572 = vunpack.c.l.b16 %v3540
        %v3573 = vunpack.c.l.b16 %v3541
        %v3574 = vunpack.c.l.b16 %v3542
        %v3575 = vunpack.c.l.b16 %v3543
        %v3576 = vunpack.c.l.b16 %v3544
        %v3577 = vpack.c.b16 %v3562, %v3561
        %v3578 = vpack.c.b16 %v3564, %v3563
        %v3579 = vpack.c.b16 %v3566, %v3565
        %v3580 = vpack.c.b16 %v3568, %v3567
        %v3581 = vpack.c.b16 %v3570, %v3569
        %v3582 = vpack.c.b16 %v3572, %v3571
        %v3583 = vpack.c.b16 %v3574, %v3573
        %v3584 = vpack.c.b16 %v3576, %v3575
        %3593 = vmatprep.subr.bf16.mxu0 0
        %3594 = vmatpush1.bf16.msra.mxu0 %v3577
        %3595 = vmatprep.subr.bf16.mxu0 0
        %3596 = vmatpush1.bf16.msra.mxu0 %v3578
        %3597 = vmatprep.subr.bf16.mxu0 0
        %3598 = vmatpush1.bf16.msra.mxu0 %v3579
        %3599 = vmatprep.subr.bf16.mxu0 0
        %3600 = vmatpush1.bf16.msra.mxu0 %v3580
        %3601 = vmatprep.subr.bf16.mxu0 0
        %3602 = vmatpush1.bf16.msra.mxu0 %v3581
        %3603 = vmatprep.subr.bf16.mxu0 0
        %3604 = vmatpush1.bf16.msra.mxu0 %v3582
        %3605 = vmatprep.subr.bf16.mxu0 0
        %3606 = vmatpush1.bf16.msra.mxu0 %v3583
        %3607 = vmatprep.subr.bf16.mxu0 0
        %3608 = vmatpush1.bf16.msra.mxu0 %v3584
        %3609 = vmatprep.subr.bf16.mxu0 0
        %3610 = vmatpush1.bf16.msra.mxu0 0
        %3611 = vmatprep.subr.bf16.mxu0 0
        %3612 = vmatpush1.bf16.msra.mxu0 0
        %3613 = vmatprep.subr.bf16.mxu0 0
        %3614 = vmatpush1.bf16.msra.mxu0 0
        %3615 = vmatprep.subr.bf16.mxu0 0
        %3616 = vmatpush1.bf16.msra.mxu0 0
        %3617 = vmatprep.subr.bf16.mxu0 0
        %3618 = vmatpush1.bf16.msra.mxu0 0
        %3619 = vmatprep.subr.bf16.mxu0 0
        %3620 = vmatpush1.bf16.msra.mxu0 0
        %3621 = vmatprep.subr.bf16.mxu0 0
        %3622 = vmatpush1.bf16.msra.mxu0 0
        %3623 = vmatprep.subr.bf16.mxu0 0
        %3624 = vmatpush1.bf16.msra.mxu0 0
        %3625 = vmatprep.mubr.bf16.mxu0 0
        %3626 = vmatmul.mubr.bf16.gmra.mrb[0].mxu0 %v3031
        %v3627 = vpop.f32.mrb[0].mxu0
        %v3628 = vadd.f32 0.0, %v3627
        %v3629 = vpop.f32.mrb[0].mxu0
        %v3630 = vpop.f32.mrb[0].mxu0
        %v3631 = vadd.f32 0.0, %v3630
        %v3632 = vpop.f32.mrb[0].mxu0
        %3633 = vmatprep.mubr.bf16.mxu0 0
        %3634 = vmatmul.mubr.bf16.gmra.mrb[0].mxu0 %v3033
        %v3635 = vpop.f32.mrb[0].mxu0
        %v3636 = vadd.f32 0.0, %v3635
        %v3637 = vpop.f32.mrb[0].mxu0
        %v3638 = vpop.f32.mrb[0].mxu0
        %v3639 = vadd.f32 0.0, %v3638
        %v3640 = vpop.f32.mrb[0].mxu0
        %3641 = vmatprep.mubr.bf16.mxu0 0
        %3642 = vmatmul.mubr.bf16.gmra.mrb[0].mxu0 %v3035
        %v3643 = vpop.f32.mrb[0].mxu0
        %v3644 = vadd.f32 0.0, %v3643
        %v3645 = vpop.f32.mrb[0].mxu0
        %v3646 = vpop.f32.mrb[0].mxu0
        %v3647 = vadd.f32 0.0, %v3646
        %v3648 = vpop.f32.mrb[0].mxu0
        %3649 = vmatprep.mubr.bf16.mxu0 0
        %3650 = vmatmul.mubr.bf16.gmra.mrb[0].mxu0 %v3037
        %v3651 = vpop.f32.mrb[0].mxu0
        %v3652 = vadd.f32 0.0, %v3651
        %v3653 = vpop.f32.mrb[0].mxu0
        %v3654 = vpop.f32.mrb[0].mxu0
        %v3655 = vadd.f32 0.0, %v3654
        %v3656 = vpop.f32.mrb[0].mxu0
        %3657 = vmatprep.mubr.bf16.mxu0 0
        %3658 = vmatmul.mubr.bf16.gmra.mrb[0].mxu0 %v3039
        %v3659 = vpop.f32.mrb[0].mxu0
        %v3660 = vadd.f32 0.0, %v3659
        %v3661 = vpop.f32.mrb[0].mxu0
        %v3662 = vpop.f32.mrb[0].mxu0
        %v3663 = vadd.f32 0.0, %v3662
        %v3664 = vpop.f32.mrb[0].mxu0
        %3665 = vmatprep.mubr.bf16.mxu0 0
        %3666 = vmatmul.mubr.bf16.gmra.mrb[0].mxu0 %v3041
        %v3667 = vpop.f32.mrb[0].mxu0
        %v3668 = vadd.f32 0.0, %v3667
        %v3669 = vpop.f32.mrb[0].mxu0
        %v3670 = vpop.f32.mrb[0].mxu0
        %v3671 = vadd.f32 0.0, %v3670
        %v3672 = vpop.f32.mrb[0].mxu0
        %3673 = vmatprep.mubr.bf16.mxu0 0
        %3674 = vmatmul.mubr.bf16.gmra.mrb[0].mxu0 %v3043
        %v3675 = vpop.f32.mrb[0].mxu0
        %v3676 = vadd.f32 0.0, %v3675
        %v3677 = vpop.f32.mrb[0].mxu0
        %v3678 = vpop.f32.mrb[0].mxu0
        %v3679 = vadd.f32 0.0, %v3678
        %v3680 = vpop.f32.mrb[0].mxu0
        %3681 = vmatprep.mubr.bf16.mxu0 0
        %3682 = vmatmul.mubr.bf16.gmra.mrb[0].mxu0 %v3045
        %v3683 = vpop.f32.mrb[0].mxu0
        %v3684 = vadd.f32 0.0, %v3683
        %v3685 = vpop.f32.mrb[0].mxu0
        %v3686 = vpop.f32.mrb[0].mxu0
        %v3687 = vadd.f32 0.0, %v3686
        %v3688 = vpop.f32.mrb[0].mxu0
        %3689 = vmatprep.mubr.bf16.mxu0 0
        %3690 = vmatmul.mubr.bf16.gmra.mrb[0].mxu0 %v3047
        %v3691 = vpop.f32.mrb[0].mxu0
        %v3692 = vadd.f32 0.0, %v3691
        %v3693 = vpop.f32.mrb[0].mxu0
        %v3694 = vpop.f32.mrb[0].mxu0
        %v3695 = vadd.f32 0.0, %v3694
        %v3696 = vpop.f32.mrb[0].mxu0
        %3697 = vmatprep.mubr.bf16.mxu0 0
        %3698 = vmatmul.mubr.bf16.gmra.mrb[0].mxu0 %v3049
        %v3699 = vpop.f32.mrb[0].mxu0
        %v3700 = vadd.f32 0.0, %v3699
        %v3701 = vpop.f32.mrb[0].mxu0
        %v3702 = vpop.f32.mrb[0].mxu0
        %v3703 = vadd.f32 0.0, %v3702
        %v3704 = vpop.f32.mrb[0].mxu0
        %3705 = vmatprep.mubr.bf16.mxu0 0
        %3706 = vmatmul.mubr.bf16.gmra.mrb[0].mxu0 %v3051
        %v3707 = vpop.f32.mrb[0].mxu0
        %v3708 = vadd.f32 0.0, %v3707
        %v3709 = vpop.f32.mrb[0].mxu0
        %v3710 = vpop.f32.mrb[0].mxu0
        %v3711 = vadd.f32 0.0, %v3710
        %v3712 = vpop.f32.mrb[0].mxu0
        %3713 = vmatprep.mubr.bf16.mxu0 0
        %3714 = vmatmul.mubr.bf16.gmra.mrb[0].mxu0 %v3053
        %v3715 = vpop.f32.mrb[0].mxu0
        %v3716 = vadd.f32 0.0, %v3715
        %v3717 = vpop.f32.mrb[0].mxu0
        %v3718 = vpop.f32.mrb[0].mxu0
        %v3719 = vadd.f32 0.0, %v3718
        %v3720 = vpop.f32.mrb[0].mxu0
        %3721 = vmatprep.mubr.bf16.mxu0 0
        %3722 = vmatmul.mubr.bf16.gmra.mrb[0].mxu0 %v3055
        %v3723 = vpop.f32.mrb[0].mxu0
        %v3724 = vadd.f32 0.0, %v3723
        %v3725 = vpop.f32.mrb[0].mxu0
        %v3726 = vpop.f32.mrb[0].mxu0
        %v3727 = vadd.f32 0.0, %v3726
        %v3728 = vpop.f32.mrb[0].mxu0
        %3729 = vmatprep.mubr.bf16.mxu0 0
        %3730 = vmatmul.mubr.bf16.gmra.mrb[0].mxu0 %v3057
        %v3731 = vpop.f32.mrb[0].mxu0
        %v3732 = vadd.f32 0.0, %v3731
        %v3733 = vpop.f32.mrb[0].mxu0
        %v3734 = vpop.f32.mrb[0].mxu0
        %v3735 = vadd.f32 0.0, %v3734
        %v3736 = vpop.f32.mrb[0].mxu0
        %3737 = vmatprep.mubr.bf16.mxu0 0
        %3738 = vmatmul.mubr.bf16.gmra.mrb[0].mxu0 %v3059
        %v3739 = vpop.f32.mrb[0].mxu0
        %v3740 = vadd.f32 0.0, %v3739
        %v3741 = vpop.f32.mrb[0].mxu0
        %v3742 = vpop.f32.mrb[0].mxu0
        %v3743 = vadd.f32 0.0, %v3742
        %v3744 = vpop.f32.mrb[0].mxu0
        %3745 = vmatprep.mubr.bf16.mxu0 0
        %3746 = vmatmul.mubr.bf16.gmra.mrb[0].mxu0 %v3061
        %v3747 = vpop.f32.mrb[0].mxu0
        %v3748 = vadd.f32 0.0, %v3747
        %v3749 = vpop.f32.mrb[0].mxu0
        %v3750 = vpop.f32.mrb[0].mxu0
        %v3751 = vadd.f32 0.0, %v3750
        %v3752 = vpop.f32.mrb[0].mxu0
        %3753 = vdwg.mxu0
        %v3754 = vadd.f32 %v3496, %v3628
        %v3755 = vadd.f32 %v3497, %v3631
        %v3756 = vadd.f32 %v3498, %v3636
        %v3757 = vadd.f32 %v3499, %v3639
        %v3758 = vadd.f32 %v3500, %v3644
        %v3759 = vadd.f32 %v3501, %v3647
        %v3760 = vadd.f32 %v3502, %v3652
        %v3761 = vadd.f32 %v3503, %v3655
        %v3762 = vadd.f32 %v3504, %v3660
        %v3763 = vadd.f32 %v3505, %v3663
        %v3764 = vadd.f32 %v3506, %v3668
        %v3765 = vadd.f32 %v3507, %v3671
        %v3766 = vadd.f32 %v3508, %v3676
        %v3767 = vadd.f32 %v3509, %v3679
        %v3768 = vadd.f32 %v3510, %v3684
        %v3769 = vadd.f32 %v3511, %v3687
        %v3770 = vadd.f32 %v3512, %v3692
        %v3771 = vadd.f32 %v3513, %v3695
        %v3772 = vadd.f32 %v3514, %v3700
        %v3773 = vadd.f32 %v3515, %v3703
        %v3774 = vadd.f32 %v3516, %v3708
        %v3775 = vadd.f32 %v3517, %v3711
        %v3776 = vadd.f32 %v3518, %v3716
        %v3777 = vadd.f32 %v3519, %v3719
        %v3778 = vadd.f32 %v3520, %v3724
        %v3779 = vadd.f32 %v3521, %v3727
        %v3780 = vadd.f32 %v3522, %v3732
        %v3781 = vadd.f32 %v3523, %v3735
        %v3782 = vadd.f32 %v3524, %v3740
        %v3783 = vadd.f32 %v3525, %v3743
        %v3784 = vadd.f32 %v3526, %v3748
        %v3785 = vadd.f32 %v3527, %v3751
        %v3786 = vld [vmem:[%s3029 + $0x8] sm:$0xff]
        %v3787 = vld [vmem:[%s3029 + $0x10] sm:$0x1]
        %v3788 = vld [vmem:[%s3029 + $0x20] sm:$0xff]
        %v3789 = vld [vmem:[%s3029 + $0x28] sm:$0x1]
        %v3790 = vld [vmem:[%s3029 + $0x38] sm:$0xff]
        %v3791 = vld [vmem:[%s3029 + $0x40] sm:$0x1]
        %v3792 = vld [vmem:[%s3029 + $0x50] sm:$0xff]
        %v3793 = vld [vmem:[%s3029 + $0x58] sm:$0x1]
        %v3794 = vld [vmem:[%s3029 + $0x68] sm:$0xff]
        %v3795 = vld [vmem:[%s3029 + $0x70] sm:$0x1]
        %v3796 = vld [vmem:[%s3029 + $0x80] sm:$0xff]
        %v3797 = vld [vmem:[%s3029 + $0x88] sm:$0x1]
        %v3798 = vld [vmem:[%s3029 + $0x98] sm:$0xff]
        %v3799 = vld [vmem:[%s3029 + $0xa0] sm:$0x1]
        %v3800 = vld [vmem:[%s3029 + $0xb0] sm:$0xff]
        %v3801 = vld [vmem:[%s3029 + $0xb8] sm:$0x1]
        %v3802 = vld [vmem:[%s3029 + $0xc8] sm:$0xff]
        %v3803 = vld [vmem:[%s3029 + $0xd0] sm:$0x1]
        %v3804 = vld [vmem:[%s3029 + $0xe0] sm:$0xff]
        %v3805 = vld [vmem:[%s3029 + $0xe8] sm:$0x1]
        %v3806 = vld [vmem:[%s3029 + $0xf8] sm:$0xff]
        %v3807 = vld [vmem:[%s3029 + $0x100] sm:$0x1]
        %v3808 = vld [vmem:[%s3029 + $0x110] sm:$0xff]
        %v3809 = vld [vmem:[%s3029 + $0x118] sm:$0x1]
        %v3810 = vld [vmem:[%s3029 + $0x128] sm:$0xff]
        %v3811 = vld [vmem:[%s3029 + $0x130] sm:$0x1]
        %v3812 = vld [vmem:[%s3029 + $0x140] sm:$0xff]
        %v3813 = vld [vmem:[%s3029 + $0x148] sm:$0x1]
        %v3814 = vld [vmem:[%s3029 + $0x158] sm:$0xff]
        %v3815 = vld [vmem:[%s3029 + $0x160] sm:$0x1]
        %v3816 = vld [vmem:[%s3029 + $0x170] sm:$0xff]
        %v3817 = vld [vmem:[%s3029 + $0x178] sm:$0x1]
        %v3819 = vshrl.u32 %v3786, 16
        %v3821 = vshll.u32 %v3786, 16
        %v3823 = vrot.slane %v3821, 1
        %v3824 = vor.u32 %v3819, %v3823
        %v3826 = vshll.u32 %v3787, 16
        %v3828 = vrot.slane %v3826, 1
        %v3829 = vsel %vm1308, %v3824, %v3828
        %v3831 = vshrl.u32 %v3788, 16
        %v3833 = vshll.u32 %v3788, 16
        %v3835 = vrot.slane %v3833, 1
        %v3836 = vor.u32 %v3831, %v3835
        %v3838 = vshll.u32 %v3789, 16
        %v3840 = vrot.slane %v3838, 1
        %v3841 = vsel %vm1308, %v3836, %v3840
        %v3843 = vshrl.u32 %v3790, 16
        %v3845 = vshll.u32 %v3790, 16
        %v3847 = vrot.slane %v3845, 1
        %v3848 = vor.u32 %v3843, %v3847
        %v3850 = vshll.u32 %v3791, 16
        %v3852 = vrot.slane %v3850, 1
        %v3853 = vsel %vm1308, %v3848, %v3852
        %v3855 = vshrl.u32 %v3792, 16
        %v3857 = vshll.u32 %v3792, 16
        %v3859 = vrot.slane %v3857, 1
        %v3860 = vor.u32 %v3855, %v3859
        %v3862 = vshll.u32 %v3793, 16
        %v3864 = vrot.slane %v3862, 1
        %v3865 = vsel %vm1308, %v3860, %v3864
        %v3867 = vshrl.u32 %v3794, 16
        %v3869 = vshll.u32 %v3794, 16
        %v3871 = vrot.slane %v3869, 1
        %v3872 = vor.u32 %v3867, %v3871
        %v3874 = vshll.u32 %v3795, 16
        %v3876 = vrot.slane %v3874, 1
        %v3877 = vsel %vm1308, %v3872, %v3876
        %v3879 = vshrl.u32 %v3796, 16
        %v3881 = vshll.u32 %v3796, 16
        %v3883 = vrot.slane %v3881, 1
        %v3884 = vor.u32 %v3879, %v3883
        %v3886 = vshll.u32 %v3797, 16
        %v3888 = vrot.slane %v3886, 1
        %v3889 = vsel %vm1308, %v3884, %v3888
        %v3891 = vshrl.u32 %v3798, 16
        %v3893 = vshll.u32 %v3798, 16
        %v3895 = vrot.slane %v3893, 1
        %v3896 = vor.u32 %v3891, %v3895
        %v3898 = vshll.u32 %v3799, 16
        %v3900 = vrot.slane %v3898, 1
        %v3901 = vsel %vm1308, %v3896, %v3900
        %v3903 = vshrl.u32 %v3800, 16
        %v3905 = vshll.u32 %v3800, 16
        %v3907 = vrot.slane %v3905, 1
        %v3908 = vor.u32 %v3903, %v3907
        %v3910 = vshll.u32 %v3801, 16
        %v3912 = vrot.slane %v3910, 1
        %v3913 = vsel %vm1308, %v3908, %v3912
        %v3915 = vshrl.u32 %v3802, 16
        %v3917 = vshll.u32 %v3802, 16
        %v3919 = vrot.slane %v3917, 1
        %v3920 = vor.u32 %v3915, %v3919
        %v3922 = vshll.u32 %v3803, 16
        %v3924 = vrot.slane %v3922, 1
        %v3925 = vsel %vm1308, %v3920, %v3924
        %v3927 = vshrl.u32 %v3804, 16
        %v3929 = vshll.u32 %v3804, 16
        %v3931 = vrot.slane %v3929, 1
        %v3932 = vor.u32 %v3927, %v3931
        %v3934 = vshll.u32 %v3805, 16
        %v3936 = vrot.slane %v3934, 1
        %v3937 = vsel %vm1308, %v3932, %v3936
        %v3939 = vshrl.u32 %v3806, 16
        %v3941 = vshll.u32 %v3806, 16
        %v3943 = vrot.slane %v3941, 1
        %v3944 = vor.u32 %v3939, %v3943
        %v3946 = vshll.u32 %v3807, 16
        %v3948 = vrot.slane %v3946, 1
        %v3949 = vsel %vm1308, %v3944, %v3948
        %v3951 = vshrl.u32 %v3808, 16
        %v3953 = vshll.u32 %v3808, 16
        %v3955 = vrot.slane %v3953, 1
        %v3956 = vor.u32 %v3951, %v3955
        %v3958 = vshll.u32 %v3809, 16
        %v3960 = vrot.slane %v3958, 1
        %v3961 = vsel %vm1308, %v3956, %v3960
        %v3963 = vshrl.u32 %v3810, 16
        %v3965 = vshll.u32 %v3810, 16
        %v3967 = vrot.slane %v3965, 1
        %v3968 = vor.u32 %v3963, %v3967
        %v3970 = vshll.u32 %v3811, 16
        %v3972 = vrot.slane %v3970, 1
        %v3973 = vsel %vm1308, %v3968, %v3972
        %v3975 = vshrl.u32 %v3812, 16
        %v3977 = vshll.u32 %v3812, 16
        %v3979 = vrot.slane %v3977, 1
        %v3980 = vor.u32 %v3975, %v3979
        %v3982 = vshll.u32 %v3813, 16
        %v3984 = vrot.slane %v3982, 1
        %v3985 = vsel %vm1308, %v3980, %v3984
        %v3987 = vshrl.u32 %v3814, 16
        %v3989 = vshll.u32 %v3814, 16
        %v3991 = vrot.slane %v3989, 1
        %v3992 = vor.u32 %v3987, %v3991
        %v3994 = vshll.u32 %v3815, 16
        %v3996 = vrot.slane %v3994, 1
        %v3997 = vsel %vm1308, %v3992, %v3996
        %v3999 = vshrl.u32 %v3816, 16
        %v4001 = vshll.u32 %v3816, 16
        %v4003 = vrot.slane %v4001, 1
        %v4004 = vor.u32 %v3999, %v4003
        %v4006 = vshll.u32 %v3817, 16
        %v4008 = vrot.slane %v4006, 1
        %v4009 = vsel %vm1308, %v4004, %v4008
        %s4026 = scalar_lea.vmem %s316, 512
        %v4027 = vld [vmem:[%s4026] sm:$0xf]
        %v4028 = vld [vmem:[%s4026 + $0x4] sm:$0xf]
        %v4029 = vld [vmem:[%s4026 + $0x8] sm:$0xf]
        %v4030 = vld [vmem:[%s4026 + $0xc] sm:$0xf]
        %v4031 = vld [vmem:[%s4026 + $0x10] sm:$0xf]
        %v4032 = vld [vmem:[%s4026 + $0x14] sm:$0xf]
        %v4033 = vld [vmem:[%s4026 + $0x18] sm:$0xf]
        %v4034 = vld [vmem:[%s4026 + $0x1c] sm:$0xf]
        %v4035 = vld [vmem:[%s4026 + $0x20] sm:$0xf]
        %v4036 = vld [vmem:[%s4026 + $0x24] sm:$0xf]
        %v4037 = vld [vmem:[%s4026 + $0x28] sm:$0xf]
        %v4038 = vld [vmem:[%s4026 + $0x2c] sm:$0xf]
        %v4039 = vld [vmem:[%s4026 + $0x30] sm:$0xf]
        %v4040 = vld [vmem:[%s4026 + $0x34] sm:$0xf]
        %v4041 = vld [vmem:[%s4026 + $0x38] sm:$0xf]
        %v4042 = vld [vmem:[%s4026 + $0x3c] sm:$0xf]
        %v4059 = vunpack.c.l.b16 %v4027
        %v4060 = vunpack.c.l.b16 %v4028
        %v4061 = vunpack.c.l.b16 %v4029
        %v4062 = vunpack.c.l.b16 %v4030
        %v4063 = vunpack.c.l.b16 %v4031
        %v4064 = vunpack.c.l.b16 %v4032
        %v4065 = vunpack.c.l.b16 %v4033
        %v4066 = vunpack.c.l.b16 %v4034
        %v4067 = vunpack.c.l.b16 %v4035
        %v4068 = vunpack.c.l.b16 %v4036
        %v4069 = vunpack.c.l.b16 %v4037
        %v4070 = vunpack.c.l.b16 %v4038
        %v4071 = vunpack.c.l.b16 %v4039
        %v4072 = vunpack.c.l.b16 %v4040
        %v4073 = vunpack.c.l.b16 %v4041
        %v4074 = vunpack.c.l.b16 %v4042
        %v4075 = vpack.c.b16 %v4060, %v4059
        %v4076 = vpack.c.b16 %v4062, %v4061
        %v4077 = vpack.c.b16 %v4064, %v4063
        %v4078 = vpack.c.b16 %v4066, %v4065
        %v4079 = vpack.c.b16 %v4068, %v4067
        %v4080 = vpack.c.b16 %v4070, %v4069
        %v4081 = vpack.c.b16 %v4072, %v4071
        %v4082 = vpack.c.b16 %v4074, %v4073
        %4091 = vmatprep.subr.bf16.mxu0 0
        %4092 = vmatpush1.bf16.msra.mxu0 %v4075
        %4093 = vmatprep.subr.bf16.mxu0 0
        %4094 = vmatpush1.bf16.msra.mxu0 %v4076
        %4095 = vmatprep.subr.bf16.mxu0 0
        %4096 = vmatpush1.bf16.msra.mxu0 %v4077
        %4097 = vmatprep.subr.bf16.mxu0 0
        %4098 = vmatpush1.bf16.msra.mxu0 %v4078
        %4099 = vmatprep.subr.bf16.mxu0 0
        %4100 = vmatpush1.bf16.msra.mxu0 %v4079
        %4101 = vmatprep.subr.bf16.mxu0 0
        %4102 = vmatpush1.bf16.msra.mxu0 %v4080
        %4103 = vmatprep.subr.bf16.mxu0 0
        %4104 = vmatpush1.bf16.msra.mxu0 %v4081
        %4105 = vmatprep.subr.bf16.mxu0 0
        %4106 = vmatpush1.bf16.msra.mxu0 %v4082
        %4107 = vmatprep.subr.bf16.mxu0 0
        %4108 = vmatpush1.bf16.msra.mxu0 0
        %4109 = vmatprep.subr.bf16.mxu0 0
        %4110 = vmatpush1.bf16.msra.mxu0 0
        %4111 = vmatprep.subr.bf16.mxu0 0
        %4112 = vmatpush1.bf16.msra.mxu0 0
        %4113 = vmatprep.subr.bf16.mxu0 0
        %4114 = vmatpush1.bf16.msra.mxu0 0
        %4115 = vmatprep.subr.bf16.mxu0 0
        %4116 = vmatpush1.bf16.msra.mxu0 0
        %4117 = vmatprep.subr.bf16.mxu0 0
        %4118 = vmatpush1.bf16.msra.mxu0 0
        %4119 = vmatprep.subr.bf16.mxu0 0
        %4120 = vmatpush1.bf16.msra.mxu0 0
        %4121 = vmatprep.subr.bf16.mxu0 0
        %4122 = vmatpush1.bf16.msra.mxu0 0
        %4123 = vmatprep.mubr.bf16.mxu0 0
        %4124 = vmatmul.mubr.bf16.gmra.mrb[0].mxu0 %v3829
        %v4125 = vpop.f32.mrb[0].mxu0
        %v4126 = vadd.f32 0.0, %v4125
        %v4127 = vpop.f32.mrb[0].mxu0
        %v4128 = vpop.f32.mrb[0].mxu0
        %v4129 = vadd.f32 0.0, %v4128
        %v4130 = vpop.f32.mrb[0].mxu0
        %4131 = vmatprep.mubr.bf16.mxu0 0
        %4132 = vmatmul.mubr.bf16.gmra.mrb[0].mxu0 %v3841
        %v4133 = vpop.f32.mrb[0].mxu0
        %v4134 = vadd.f32 0.0, %v4133
        %v4135 = vpop.f32.mrb[0].mxu0
        %v4136 = vpop.f32.mrb[0].mxu0
        %v4137 = vadd.f32 0.0, %v4136
        %v4138 = vpop.f32.mrb[0].mxu0
        %4139 = vmatprep.mubr.bf16.mxu0 0
        %4140 = vmatmul.mubr.bf16.gmra.mrb[0].mxu0 %v3853
        %v4141 = vpop.f32.mrb[0].mxu0
        %v4142 = vadd.f32 0.0, %v4141
        %v4143 = vpop.f32.mrb[0].mxu0
        %v4144 = vpop.f32.mrb[0].mxu0
        %v4145 = vadd.f32 0.0, %v4144
        %v4146 = vpop.f32.mrb[0].mxu0
        %4147 = vmatprep.mubr.bf16.mxu0 0
        %4148 = vmatmul.mubr.bf16.gmra.mrb[0].mxu0 %v3865
        %v4149 = vpop.f32.mrb[0].mxu0
        %v4150 = vadd.f32 0.0, %v4149
        %v4151 = vpop.f32.mrb[0].mxu0
        %v4152 = vpop.f32.mrb[0].mxu0
        %v4153 = vadd.f32 0.0, %v4152
        %v4154 = vpop.f32.mrb[0].mxu0
        %4155 = vmatprep.mubr.bf16.mxu0 0
        %4156 = vmatmul.mubr.bf16.gmra.mrb[0].mxu0 %v3877
        %v4157 = vpop.f32.mrb[0].mxu0
        %v4158 = vadd.f32 0.0, %v4157
        %v4159 = vpop.f32.mrb[0].mxu0
        %v4160 = vpop.f32.mrb[0].mxu0
        %v4161 = vadd.f32 0.0, %v4160
        %v4162 = vpop.f32.mrb[0].mxu0
        %4163 = vmatprep.mubr.bf16.mxu0 0
        %4164 = vmatmul.mubr.bf16.gmra.mrb[0].mxu0 %v3889
        %v4165 = vpop.f32.mrb[0].mxu0
        %v4166 = vadd.f32 0.0, %v4165
        %v4167 = vpop.f32.mrb[0].mxu0
        %v4168 = vpop.f32.mrb[0].mxu0
        %v4169 = vadd.f32 0.0, %v4168
        %v4170 = vpop.f32.mrb[0].mxu0
        %4171 = vmatprep.mubr.bf16.mxu0 0
        %4172 = vmatmul.mubr.bf16.gmra.mrb[0].mxu0 %v3901
        %v4173 = vpop.f32.mrb[0].mxu0
        %v4174 = vadd.f32 0.0, %v4173
        %v4175 = vpop.f32.mrb[0].mxu0
        %v4176 = vpop.f32.mrb[0].mxu0
        %v4177 = vadd.f32 0.0, %v4176
        %v4178 = vpop.f32.mrb[0].mxu0
        %4179 = vmatprep.mubr.bf16.mxu0 0
        %4180 = vmatmul.mubr.bf16.gmra.mrb[0].mxu0 %v3913
        %v4181 = vpop.f32.mrb[0].mxu0
        %v4182 = vadd.f32 0.0, %v4181
        %v4183 = vpop.f32.mrb[0].mxu0
        %v4184 = vpop.f32.mrb[0].mxu0
        %v4185 = vadd.f32 0.0, %v4184
        %v4186 = vpop.f32.mrb[0].mxu0
        %4187 = vmatprep.mubr.bf16.mxu0 0
        %4188 = vmatmul.mubr.bf16.gmra.mrb[0].mxu0 %v3925
        %v4189 = vpop.f32.mrb[0].mxu0
        %v4190 = vadd.f32 0.0, %v4189
        %v4191 = vpop.f32.mrb[0].mxu0
        %v4192 = vpop.f32.mrb[0].mxu0
        %v4193 = vadd.f32 0.0, %v4192
        %v4194 = vpop.f32.mrb[0].mxu0
        %4195 = vmatprep.mubr.bf16.mxu0 0
        %4196 = vmatmul.mubr.bf16.gmra.mrb[0].mxu0 %v3937
        %v4197 = vpop.f32.mrb[0].mxu0
        %v4198 = vadd.f32 0.0, %v4197
        %v4199 = vpop.f32.mrb[0].mxu0
        %v4200 = vpop.f32.mrb[0].mxu0
        %v4201 = vadd.f32 0.0, %v4200
        %v4202 = vpop.f32.mrb[0].mxu0
        %4203 = vmatprep.mubr.bf16.mxu0 0
        %4204 = vmatmul.mubr.bf16.gmra.mrb[0].mxu0 %v3949
        %v4205 = vpop.f32.mrb[0].mxu0
        %v4206 = vadd.f32 0.0, %v4205
        %v4207 = vpop.f32.mrb[0].mxu0
        %v4208 = vpop.f32.mrb[0].mxu0
        %v4209 = vadd.f32 0.0, %v4208
        %v4210 = vpop.f32.mrb[0].mxu0
        %4211 = vmatprep.mubr.bf16.mxu0 0
        %4212 = vmatmul.mubr.bf16.gmra.mrb[0].mxu0 %v3961
        %v4213 = vpop.f32.mrb[0].mxu0
        %v4214 = vadd.f32 0.0, %v4213
        %v4215 = vpop.f32.mrb[0].mxu0
        %v4216 = vpop.f32.mrb[0].mxu0
        %v4217 = vadd.f32 0.0, %v4216
        %v4218 = vpop.f32.mrb[0].mxu0
        %4219 = vmatprep.mubr.bf16.mxu0 0
        %4220 = vmatmul.mubr.bf16.gmra.mrb[0].mxu0 %v3973
        %v4221 = vpop.f32.mrb[0].mxu0
        %v4222 = vadd.f32 0.0, %v4221
        %v4223 = vpop.f32.mrb[0].mxu0
        %v4224 = vpop.f32.mrb[0].mxu0
        %v4225 = vadd.f32 0.0, %v4224
        %v4226 = vpop.f32.mrb[0].mxu0
        %4227 = vmatprep.mubr.bf16.mxu0 0
        %4228 = vmatmul.mubr.bf16.gmra.mrb[0].mxu0 %v3985
        %v4229 = vpop.f32.mrb[0].mxu0
        %v4230 = vadd.f32 0.0, %v4229
        %v4231 = vpop.f32.mrb[0].mxu0
        %v4232 = vpop.f32.mrb[0].mxu0
        %v4233 = vadd.f32 0.0, %v4232
        %v4234 = vpop.f32.mrb[0].mxu0
        %4235 = vmatprep.mubr.bf16.mxu0 0
        %4236 = vmatmul.mubr.bf16.gmra.mrb[0].mxu0 %v3997
        %v4237 = vpop.f32.mrb[0].mxu0
        %v4238 = vadd.f32 0.0, %v4237
        %v4239 = vpop.f32.mrb[0].mxu0
        %v4240 = vpop.f32.mrb[0].mxu0
        %v4241 = vadd.f32 0.0, %v4240
        %v4242 = vpop.f32.mrb[0].mxu0
        %4243 = vmatprep.mubr.bf16.mxu0 0
        %4244 = vmatmul.mubr.bf16.gmra.mrb[0].mxu0 %v4009
        %v4245 = vpop.f32.mrb[0].mxu0
        %v4246 = vadd.f32 0.0, %v4245
        %v4247 = vpop.f32.mrb[0].mxu0
        %v4248 = vpop.f32.mrb[0].mxu0
        %v4249 = vadd.f32 0.0, %v4248
        %v4250 = vpop.f32.mrb[0].mxu0
        %4251 = vdwg.mxu0
        %v4252 = vadd.f32 %v3754, %v4126
        %v4253 = vadd.f32 %v3755, %v4129
        %v4254 = vadd.f32 %v3756, %v4134
        %v4255 = vadd.f32 %v3757, %v4137
        %v4256 = vadd.f32 %v3758, %v4142
        %v4257 = vadd.f32 %v3759, %v4145
        %v4258 = vadd.f32 %v3760, %v4150
        %v4259 = vadd.f32 %v3761, %v4153
        %v4260 = vadd.f32 %v3762, %v4158
        %v4261 = vadd.f32 %v3763, %v4161
        %v4262 = vadd.f32 %v3764, %v4166
        %v4263 = vadd.f32 %v3765, %v4169
        %v4264 = vadd.f32 %v3766, %v4174
        %v4265 = vadd.f32 %v3767, %v4177
        %v4266 = vadd.f32 %v3768, %v4182
        %v4267 = vadd.f32 %v3769, %v4185
        %v4268 = vadd.f32 %v3770, %v4190
        %v4269 = vadd.f32 %v3771, %v4193
        %v4270 = vadd.f32 %v3772, %v4198
        %v4271 = vadd.f32 %v3773, %v4201
        %v4272 = vadd.f32 %v3774, %v4206
        %v4273 = vadd.f32 %v3775, %v4209
        %v4274 = vadd.f32 %v3776, %v4214
        %v4275 = vadd.f32 %v3777, %v4217
        %v4276 = vadd.f32 %v3778, %v4222
        %v4277 = vadd.f32 %v3779, %v4225
        %v4278 = vadd.f32 %v3780, %v4230
        %v4279 = vadd.f32 %v3781, %v4233
        %v4280 = vadd.f32 %v3782, %v4238
        %v4281 = vadd.f32 %v3783, %v4241
        %v4282 = vadd.f32 %v3784, %v4246
        %v4283 = vadd.f32 %v3785, %v4249
        %v4284 = vld [vmem:[%s324] sm:$0xf]
        %v4285 = vld [vmem:[%s324 + $0x4] sm:$0xf]
        %v4286 = vld [vmem:[%s324 + $0x8] sm:$0xf]
        %v4287 = vld [vmem:[%s324 + $0xc] sm:$0xf]
        %v4288 = vld [vmem:[%s324 + $0x10] sm:$0xf]
        %v4289 = vld [vmem:[%s324 + $0x14] sm:$0xf]
        %v4290 = vld [vmem:[%s324 + $0x18] sm:$0xf]
        %v4291 = vld [vmem:[%s324 + $0x1c] sm:$0xf]
        %v4292 = vld [vmem:[%s324 + $0x20] sm:$0xf]
        %v4293 = vld [vmem:[%s324 + $0x24] sm:$0xf]
        %v4294 = vld [vmem:[%s324 + $0x28] sm:$0xf]
        %v4295 = vld [vmem:[%s324 + $0x2c] sm:$0xf]
        %v4296 = vld [vmem:[%s324 + $0x30] sm:$0xf]
        %v4297 = vld [vmem:[%s324 + $0x34] sm:$0xf]
        %v4298 = vld [vmem:[%s324 + $0x38] sm:$0xf]
        %v4299 = vld [vmem:[%s324 + $0x3c] sm:$0xf]
        %v4300 = vld [vmem:[%s324 + $0x40] sm:$0xf]
        %v4301 = vld [vmem:[%s324 + $0x44] sm:$0xf]
        %v4302 = vld [vmem:[%s324 + $0x48] sm:$0xf]
        %v4303 = vld [vmem:[%s324 + $0x4c] sm:$0xf]
        %v4304 = vld [vmem:[%s324 + $0x50] sm:$0xf]
        %v4305 = vld [vmem:[%s324 + $0x54] sm:$0xf]
        %v4306 = vld [vmem:[%s324 + $0x58] sm:$0xf]
        %v4307 = vld [vmem:[%s324 + $0x5c] sm:$0xf]
        %v4308 = vld [vmem:[%s324 + $0x60] sm:$0xf]
        %v4309 = vld [vmem:[%s324 + $0x64] sm:$0xf]
        %v4310 = vld [vmem:[%s324 + $0x68] sm:$0xf]
        %v4311 = vld [vmem:[%s324 + $0x6c] sm:$0xf]
        %v4312 = vld [vmem:[%s324 + $0x70] sm:$0xf]
        %v4313 = vld [vmem:[%s324 + $0x74] sm:$0xf]
        %v4314 = vld [vmem:[%s324 + $0x78] sm:$0xf]
        %v4315 = vld [vmem:[%s324 + $0x7c] sm:$0xf]
        %v4316 = vunpack.c.l.bf16 %v4284
        %v4317 = vunpack.c.l.bf16 %v4285
        %v4318 = vunpack.c.l.bf16 %v4286
        %v4319 = vunpack.c.l.bf16 %v4287
        %v4320 = vunpack.c.l.bf16 %v4288
        %v4321 = vunpack.c.l.bf16 %v4289
        %v4322 = vunpack.c.l.bf16 %v4290
        %v4323 = vunpack.c.l.bf16 %v4291
        %v4324 = vunpack.c.l.bf16 %v4292
        %v4325 = vunpack.c.l.bf16 %v4293
        %v4326 = vunpack.c.l.bf16 %v4294
        %v4327 = vunpack.c.l.bf16 %v4295
        %v4328 = vunpack.c.l.bf16 %v4296
        %v4329 = vunpack.c.l.bf16 %v4297
        %v4330 = vunpack.c.l.bf16 %v4298
        %v4331 = vunpack.c.l.bf16 %v4299
        %v4332 = vunpack.c.l.bf16 %v4300
        %v4333 = vunpack.c.l.bf16 %v4301
        %v4334 = vunpack.c.l.bf16 %v4302
        %v4335 = vunpack.c.l.bf16 %v4303
        %v4336 = vunpack.c.l.bf16 %v4304
        %v4337 = vunpack.c.l.bf16 %v4305
        %v4338 = vunpack.c.l.bf16 %v4306
        %v4339 = vunpack.c.l.bf16 %v4307
        %v4340 = vunpack.c.l.bf16 %v4308
        %v4341 = vunpack.c.l.bf16 %v4309
        %v4342 = vunpack.c.l.bf16 %v4310
        %v4343 = vunpack.c.l.bf16 %v4311
        %v4344 = vunpack.c.l.bf16 %v4312
        %v4345 = vunpack.c.l.bf16 %v4313
        %v4346 = vunpack.c.l.bf16 %v4314
        %v4347 = vunpack.c.l.bf16 %v4315
        %v4348 = vadd.f32 %v4316, %v4252
        %v4349 = vadd.f32 %v4317, %v4253
        %v4350 = vadd.f32 %v4318, %v4254
        %v4351 = vadd.f32 %v4319, %v4255
        %v4352 = vadd.f32 %v4320, %v4256
        %v4353 = vadd.f32 %v4321, %v4257
        %v4354 = vadd.f32 %v4322, %v4258
        %v4355 = vadd.f32 %v4323, %v4259
        %v4356 = vadd.f32 %v4324, %v4260
        %v4357 = vadd.f32 %v4325, %v4261
        %v4358 = vadd.f32 %v4326, %v4262
        %v4359 = vadd.f32 %v4327, %v4263
        %v4360 = vadd.f32 %v4328, %v4264
        %v4361 = vadd.f32 %v4329, %v4265
        %v4362 = vadd.f32 %v4330, %v4266
        %v4363 = vadd.f32 %v4331, %v4267
        %v4364 = vadd.f32 %v4332, %v4268
        %v4365 = vadd.f32 %v4333, %v4269
        %v4366 = vadd.f32 %v4334, %v4270
        %v4367 = vadd.f32 %v4335, %v4271
        %v4368 = vadd.f32 %v4336, %v4272
        %v4369 = vadd.f32 %v4337, %v4273
        %v4370 = vadd.f32 %v4338, %v4274
        %v4371 = vadd.f32 %v4339, %v4275
        %v4372 = vadd.f32 %v4340, %v4276
        %v4373 = vadd.f32 %v4341, %v4277
        %v4374 = vadd.f32 %v4342, %v4278
        %v4375 = vadd.f32 %v4343, %v4279
        %v4376 = vadd.f32 %v4344, %v4280
        %v4377 = vadd.f32 %v4345, %v4281
        %v4378 = vadd.f32 %v4346, %v4282
        %v4379 = vadd.f32 %v4347, %v4283
        %v4380 = vpack.c.bf16 %v4349, %v4348
        %v4381 = vpack.c.bf16 %v4351, %v4350
        %v4382 = vpack.c.bf16 %v4353, %v4352
        %v4383 = vpack.c.bf16 %v4355, %v4354
        %v4384 = vpack.c.bf16 %v4357, %v4356
        %v4385 = vpack.c.bf16 %v4359, %v4358
        %v4386 = vpack.c.bf16 %v4361, %v4360
        %v4387 = vpack.c.bf16 %v4363, %v4362
        %v4388 = vpack.c.bf16 %v4365, %v4364
        %v4389 = vpack.c.bf16 %v4367, %v4366
        %v4390 = vpack.c.bf16 %v4369, %v4368
        %v4391 = vpack.c.bf16 %v4371, %v4370
        %v4392 = vpack.c.bf16 %v4373, %v4372
        %v4393 = vpack.c.bf16 %v4375, %v4374
        %v4394 = vpack.c.bf16 %v4377, %v4376
        %v4395 = vpack.c.bf16 %v4379, %v4378
        %v4412 = vunpack.c.l.b16 %v4380
        %v4413 = vunpack.c.h.b16 %v4380
        %v4414 = vunpack.c.l.b16 %v4381
        %v4415 = vunpack.c.h.b16 %v4381
        %v4416 = vunpack.c.l.b16 %v4382
        %v4417 = vunpack.c.h.b16 %v4382
        %v4418 = vunpack.c.l.b16 %v4383
        %v4419 = vunpack.c.h.b16 %v4383
        %v4420 = vunpack.c.l.b16 %v4384
        %v4421 = vunpack.c.h.b16 %v4384
        %v4422 = vunpack.c.l.b16 %v4385
        %v4423 = vunpack.c.h.b16 %v4385
        %v4424 = vunpack.c.l.b16 %v4386
        %v4425 = vunpack.c.h.b16 %v4386
        %v4426 = vunpack.c.l.b16 %v4387
        %v4427 = vunpack.c.h.b16 %v4387
        %v4428 = vunpack.c.l.b16 %v4388
        %v4429 = vunpack.c.h.b16 %v4388
        %v4430 = vunpack.c.l.b16 %v4389
        %v4431 = vunpack.c.h.b16 %v4389
        %v4432 = vunpack.c.l.b16 %v4390
        %v4433 = vunpack.c.h.b16 %v4390
        %v4434 = vunpack.c.l.b16 %v4391
        %v4435 = vunpack.c.h.b16 %v4391
        %v4436 = vunpack.c.l.b16 %v4392
        %v4437 = vunpack.c.h.b16 %v4392
        %v4438 = vunpack.c.l.b16 %v4393
        %v4439 = vunpack.c.h.b16 %v4393
        %v4440 = vunpack.c.l.b16 %v4394
        %v4441 = vunpack.c.h.b16 %v4394
        %v4442 = vunpack.c.l.b16 %v4395
        %v4443 = vunpack.c.h.b16 %v4395
        %v4444 = vpack.c.b16 %v4412, %v4412
        %v4445 = vpack.c.b16 %v4413, %v4413
        %v4446 = vpack.c.b16 %v4414, %v4414
        %v4447 = vpack.c.b16 %v4415, %v4415
        %v4448 = vpack.c.b16 %v4416, %v4416
        %v4449 = vpack.c.b16 %v4417, %v4417
        %v4450 = vpack.c.b16 %v4418, %v4418
        %v4451 = vpack.c.b16 %v4419, %v4419
        %v4452 = vpack.c.b16 %v4420, %v4420
        %v4453 = vpack.c.b16 %v4421, %v4421
        %v4454 = vpack.c.b16 %v4422, %v4422
        %v4455 = vpack.c.b16 %v4423, %v4423
        %v4456 = vpack.c.b16 %v4424, %v4424
        %v4457 = vpack.c.b16 %v4425, %v4425
        %v4458 = vpack.c.b16 %v4426, %v4426
        %v4459 = vpack.c.b16 %v4427, %v4427
        %v4460 = vpack.c.b16 %v4428, %v4428
        %v4461 = vpack.c.b16 %v4429, %v4429
        %v4462 = vpack.c.b16 %v4430, %v4430
        %v4463 = vpack.c.b16 %v4431, %v4431
        %v4464 = vpack.c.b16 %v4432, %v4432
        %v4465 = vpack.c.b16 %v4433, %v4433
        %v4466 = vpack.c.b16 %v4434, %v4434
        %v4467 = vpack.c.b16 %v4435, %v4435
        %v4468 = vpack.c.b16 %v4436, %v4436
        %v4469 = vpack.c.b16 %v4437, %v4437
        %v4470 = vpack.c.b16 %v4438, %v4438
        %v4471 = vpack.c.b16 %v4439, %v4439
        %v4472 = vpack.c.b16 %v4440, %v4440
        %v4473 = vpack.c.b16 %v4441, %v4441
        %v4474 = vpack.c.b16 %v4442, %v4442
        %v4475 = vpack.c.b16 %v4443, %v4443
        %4508 = vst [vmem:[%s332] sm:$0xf] %v4444
        %4509 = vst [vmem:[%s332 + $0x4] sm:$0xf] %v4445
        %4510 = vst [vmem:[%s332 + $0x8] sm:$0xf] %v4446
        %4511 = vst [vmem:[%s332 + $0xc] sm:$0xf] %v4447
        %4512 = vst [vmem:[%s332 + $0x10] sm:$0xf] %v4448
        %4513 = vst [vmem:[%s332 + $0x14] sm:$0xf] %v4449
        %4514 = vst [vmem:[%s332 + $0x18] sm:$0xf] %v4450
        %4515 = vst [vmem:[%s332 + $0x1c] sm:$0xf] %v4451
        %4516 = vst [vmem:[%s332 + $0x20] sm:$0xf] %v4452
        %4517 = vst [vmem:[%s332 + $0x24] sm:$0xf] %v4453
        %4518 = vst [vmem:[%s332 + $0x28] sm:$0xf] %v4454
        %4519 = vst [vmem:[%s332 + $0x2c] sm:$0xf] %v4455
        %4520 = vst [vmem:[%s332 + $0x30] sm:$0xf] %v4456
        %4521 = vst [vmem:[%s332 + $0x34] sm:$0xf] %v4457
        %4522 = vst [vmem:[%s332 + $0x38] sm:$0xf] %v4458
        %4523 = vst [vmem:[%s332 + $0x3c] sm:$0xf] %v4459
        %4524 = vst [vmem:[%s332 + $0x40] sm:$0xf] %v4460
        %4525 = vst [vmem:[%s332 + $0x44] sm:$0xf] %v4461
        %4526 = vst [vmem:[%s332 + $0x48] sm:$0xf] %v4462
        %4527 = vst [vmem:[%s332 + $0x4c] sm:$0xf] %v4463
        %4528 = vst [vmem:[%s332 + $0x50] sm:$0xf] %v4464
        %4529 = vst [vmem:[%s332 + $0x54] sm:$0xf] %v4465
        %4530 = vst [vmem:[%s332 + $0x58] sm:$0xf] %v4466
        %4531 = vst [vmem:[%s332 + $0x5c] sm:$0xf] %v4467
        %4532 = vst [vmem:[%s332 + $0x60] sm:$0xf] %v4468
        %4533 = vst [vmem:[%s332 + $0x64] sm:$0xf] %v4469
        %4534 = vst [vmem:[%s332 + $0x68] sm:$0xf] %v4470
        %4535 = vst [vmem:[%s332 + $0x6c] sm:$0xf] %v4471
        %4536 = vst [vmem:[%s332 + $0x70] sm:$0xf] %v4472
        %4537 = vst [vmem:[%s332 + $0x74] sm:$0xf] %v4473
        %4538 = vst [vmem:[%s332 + $0x78] sm:$0xf] %v4474
        %4539 = vst [vmem:[%s332 + $0x7c] sm:$0xf] %v4475
        %v4540 = vunpack.c.l.bf16 %v4380
        %v4541 = vunpack.c.h.bf16 %v4380
        %v4542 = vunpack.c.l.bf16 %v4381
        %v4543 = vunpack.c.h.bf16 %v4381
        %v4544 = vunpack.c.l.bf16 %v4382
        %v4545 = vunpack.c.h.bf16 %v4382
        %v4546 = vunpack.c.l.bf16 %v4383
        %v4547 = vunpack.c.h.bf16 %v4383
        %v4548 = vunpack.c.l.bf16 %v4384
        %v4549 = vunpack.c.h.bf16 %v4384
        %v4550 = vunpack.c.l.bf16 %v4385
        %v4551 = vunpack.c.h.bf16 %v4385
        %v4552 = vunpack.c.l.bf16 %v4386
        %v4553 = vunpack.c.h.bf16 %v4386
        %v4554 = vunpack.c.l.bf16 %v4387
        %v4555 = vunpack.c.h.bf16 %v4387
        %v4556 = vunpack.c.l.bf16 %v4388
        %v4557 = vunpack.c.h.bf16 %v4388
        %v4558 = vunpack.c.l.bf16 %v4389
        %v4559 = vunpack.c.h.bf16 %v4389
        %v4560 = vunpack.c.l.bf16 %v4390
        %v4561 = vunpack.c.h.bf16 %v4390
        %v4562 = vunpack.c.l.bf16 %v4391
        %v4563 = vunpack.c.h.bf16 %v4391
        %v4564 = vunpack.c.l.bf16 %v4392
        %v4565 = vunpack.c.h.bf16 %v4392
        %v4566 = vunpack.c.l.bf16 %v4393
        %v4567 = vunpack.c.h.bf16 %v4393
        %v4568 = vunpack.c.l.bf16 %v4394
        %v4569 = vunpack.c.h.bf16 %v4394
        %v4570 = vunpack.c.l.bf16 %v4395
        %v4571 = vunpack.c.h.bf16 %v4395
        %v4572 = vadd.f32 %v4540, %v4541
        %v4573 = vadd.f32 %v4572, %v4542
        %v4574 = vadd.f32 %v4573, %v4543
        %v4575 = vadd.f32 %v4574, %v4544
        %v4576 = vadd.f32 %v4575, %v4545
        %v4577 = vadd.f32 %v4576, %v4546
        %v4578 = vadd.f32 %v4577, %v4547
        %v4579 = vadd.f32 %v4578, %v4548
        %v4580 = vadd.f32 %v4579, %v4549
        %v4581 = vadd.f32 %v4580, %v4550
        %v4582 = vadd.f32 %v4581, %v4551
        %v4583 = vadd.f32 %v4582, %v4552
        %v4584 = vadd.f32 %v4583, %v4553
        %v4585 = vadd.f32 %v4584, %v4554
        %v4586 = vadd.f32 %v4585, %v4555
        %v4587 = vadd.f32 %v4586, %v4556
        %v4588 = vadd.f32 %v4587, %v4557
        %v4589 = vadd.f32 %v4588, %v4558
        %v4590 = vadd.f32 %v4589, %v4559
        %v4591 = vadd.f32 %v4590, %v4560
        %v4592 = vadd.f32 %v4591, %v4561
        %v4593 = vadd.f32 %v4592, %v4562
        %v4594 = vadd.f32 %v4593, %v4563
        %v4595 = vadd.f32 %v4594, %v4564
        %v4596 = vadd.f32 %v4595, %v4565
        %v4597 = vadd.f32 %v4596, %v4566
        %v4598 = vadd.f32 %v4597, %v4567
        %v4599 = vadd.f32 %v4598, %v4568
        %v4600 = vadd.f32 %v4599, %v4569
        %v4601 = vadd.f32 %v4600, %v4570
        %v4602 = vadd.f32 %v4601, %v4571
        %v4603 = vrot.slane %v4602, 4
        %v4604 = vadd.f32 %v4602, %v4603
        %v4605 = vrot.slane %v4604, 2
        %v4606 = vadd.f32 %v4604, %v4605
        %v4607 = vrot.slane %v4606, 1
        %v4608 = vadd.f32 %v4606, %v4607
        %v4609 = vmul.f32 %v4540, %v4540
        %v4610 = vmul.f32 %v4541, %v4541
        %v4611 = vmul.f32 %v4542, %v4542
        %v4612 = vmul.f32 %v4543, %v4543
        %v4613 = vmul.f32 %v4544, %v4544
        %v4614 = vmul.f32 %v4545, %v4545
        %v4615 = vmul.f32 %v4546, %v4546
        %v4616 = vmul.f32 %v4547, %v4547
        %v4617 = vmul.f32 %v4548, %v4548
        %v4618 = vmul.f32 %v4549, %v4549
        %v4619 = vmul.f32 %v4550, %v4550
        %v4620 = vmul.f32 %v4551, %v4551
        %v4621 = vmul.f32 %v4552, %v4552
        %v4622 = vmul.f32 %v4553, %v4553
        %v4623 = vmul.f32 %v4554, %v4554
        %v4624 = vmul.f32 %v4555, %v4555
        %v4625 = vmul.f32 %v4556, %v4556
        %v4626 = vmul.f32 %v4557, %v4557
        %v4627 = vmul.f32 %v4558, %v4558
        %v4628 = vmul.f32 %v4559, %v4559
        %v4629 = vmul.f32 %v4560, %v4560
        %v4630 = vmul.f32 %v4561, %v4561
        %v4631 = vmul.f32 %v4562, %v4562
        %v4632 = vmul.f32 %v4563, %v4563
        %v4633 = vmul.f32 %v4564, %v4564
        %v4634 = vmul.f32 %v4565, %v4565
        %v4635 = vmul.f32 %v4566, %v4566
        %v4636 = vmul.f32 %v4567, %v4567
        %v4637 = vmul.f32 %v4568, %v4568
        %v4638 = vmul.f32 %v4569, %v4569
        %v4639 = vmul.f32 %v4570, %v4570
        %v4640 = vmul.f32 %v4571, %v4571
        %v4641 = vadd.f32 %v4609, %v4610
        %v4642 = vadd.f32 %v4641, %v4611
        %v4643 = vadd.f32 %v4642, %v4612
        %v4644 = vadd.f32 %v4643, %v4613
        %v4645 = vadd.f32 %v4644, %v4614
        %v4646 = vadd.f32 %v4645, %v4615
        %v4647 = vadd.f32 %v4646, %v4616
        %v4648 = vadd.f32 %v4647, %v4617
        %v4649 = vadd.f32 %v4648, %v4618
        %v4650 = vadd.f32 %v4649, %v4619
        %v4651 = vadd.f32 %v4650, %v4620
        %v4652 = vadd.f32 %v4651, %v4621
        %v4653 = vadd.f32 %v4652, %v4622
        %v4654 = vadd.f32 %v4653, %v4623
        %v4655 = vadd.f32 %v4654, %v4624
        %v4656 = vadd.f32 %v4655, %v4625
        %v4657 = vadd.f32 %v4656, %v4626
        %v4658 = vadd.f32 %v4657, %v4627
        %v4659 = vadd.f32 %v4658, %v4628
        %v4660 = vadd.f32 %v4659, %v4629
        %v4661 = vadd.f32 %v4660, %v4630
        %v4662 = vadd.f32 %v4661, %v4631
        %v4663 = vadd.f32 %v4662, %v4632
        %v4664 = vadd.f32 %v4663, %v4633
        %v4665 = vadd.f32 %v4664, %v4634
        %v4666 = vadd.f32 %v4665, %v4635
        %v4667 = vadd.f32 %v4666, %v4636
        %v4668 = vadd.f32 %v4667, %v4637
        %v4669 = vadd.f32 %v4668, %v4638
        %v4670 = vadd.f32 %v4669, %v4639
        %v4671 = vadd.f32 %v4670, %v4640
        %v4672 = vrot.slane %v4671, 4
        %v4673 = vadd.f32 %v4671, %v4672
        %v4674 = vrot.slane %v4673, 2
        %v4675 = vadd.f32 %v4673, %v4674
        %v4676 = vrot.slane %v4675, 1
        %v4677 = vadd.f32 %v4675, %v4676
        %vm4678 = vcmask 1040384
        %v4679 = vsel %vm4678, %v4608, %v4677
        %4680 = vst [vmem:[%s307] sm:$0x3] %v4679
        %p4681 = scmp.lt.s32.totalorder %s25, 1
        %s4682 = scalar_select %p4681, %s25, 1
        %p4683 = scmp.lt.s32.totalorder %s26, 0
        %s4684 = scalar_select %p4683, %s26, 0
        %s4685 = smul.addr %s4682, 32
        %s4686 = sadd.s32 %s4684, %s4685
        %s4687 = smul.addr %s4686, 4
        %s4688 = scalar_lea.vmem %s5, %s4687
        %s4689 = sand.u32 %s193, 1
        %s4690 = scalar_lea.sflag [#allocation4], %s4689
        %s4691 = sand.u32 %s193, 1
        %s4692 = smul.addr %s4691, 2
        %s4693 = scalar_lea.vmem [#allocation3], %s4692
        // Predicated region
        $region41: #{dense_block.9} parent=39 // pred_check
          %p4694 = pneg %p175
        $region42: #{dense_block.9} parent=39 // pred_check_branch
          %4696 = sbr.rel (%p4694) target = $region44
        $region43: #{dense_block.9} parent=39 // pred_region
          _
        $region44: #{dense_block.9} parent=39 // pred_fallthru
          _
        // Predicated region
        $region45: #{dense_block.9} parent=39 // pred_check
          %p4697 = pneg %p203
        $region46: #{dense_block.9} parent=39 // pred_check_branch
          %4699 = sbr.rel (%p4697) target = $region48
        $region47: #{dense_block.9} parent=39 // pred_region
          %s4701 = ssub.s32 32, 32
          %4702 = vsyncadd %s4690, %s4701
          %s4703 = sadd.s32 %s26, %s25
          %s4704 = smul.addr %s4703, 32
          %s4705 = scalar_lea.hbm %s6, %s4704
          %s4707 = sshll.u32 %s4693, 4
          %s4708 = int_to_ptr.vmem [resolvable:$true] %s4707
          %4710 = dma.vmem_to_hbm [thread:$0]  %s4708, 32, %s4705, %s4690
        $region48: #{dense_block.9} parent=39 // pred_fallthru
          _
      $region40: #{dense_block.9} parent=5 // pred_fallthru
        _
      %p4711 = scmp.le.s32.totalorder 2, %s16
      // Predicated region
      $region49: #{dense_block.9} parent=5 // pred_check
        %p4712 = pneg %p4711
      $region50: #{dense_block.9} parent=5 // pred_check_branch
        %4714 = sbr.rel (%p4712) target = $region52
      $region51: #{dense_block.9} parent=5 // pred_region
        %s4715 = ssub.s32 %s16, 2
        // Predicated region
        $region53: #{dense_block.9} parent=51 // pred_check
          %p4716 = pneg %p181
        $region54: #{dense_block.9} parent=51 // pred_check_branch
          %4718 = sbr.rel (%p4716) target = $region56
        $region55: #{dense_block.9} parent=51 // pred_region
          %p4719 = scmp.lt.s32.totalorder %s27, 1
          %s4720 = scalar_select %p4719, %s27, 1
          %p4721 = scmp.lt.s32.totalorder %s28, 0
          %s4722 = scalar_select %p4721, %s28, 0
          %s4723 = smul.addr %s4720, 32
          %s4724 = sadd.s32 %s4722, %s4723
          %s4725 = smul.addr %s4724, 4
          %s4726 = scalar_lea.vmem %s5, %s4725
        $region56: #{dense_block.9} parent=51 // pred_fallthru
          _
        // Predicated region
        $region57: #{dense_block.9} parent=51 // pred_check
          %p4727 = pneg %p209
        $region58: #{dense_block.9} parent=51 // pred_check_branch
          %4729 = sbr.rel (%p4727) target = $region60
        $region59: #{dense_block.9} parent=51 // pred_region
          %s4730 = sand.u32 %s194, 1
          %s4731 = scalar_lea.sflag [#allocation4], %s4730
          %s4732 = sand.u32 %s194, 1
          %s4733 = smul.addr %s4732, 2
          %s4734 = scalar_lea.vmem [#allocation3], %s4733
          %4735 = dma.done %s4731, 32
        $region60: #{dense_block.9} parent=51 // pred_fallthru
          _
      $region52: #{dense_block.9} parent=5 // pred_fallthru
        _
    $region6: #{dense_block.9} parent=1 // loop_footer
      %s20 = sadd.s32 1, %s16
    $region7: #{dense_block.9} parent=1 // loop_footer_branch
      %15 = sbr.rel target = $region3
    $region8: #{dense_block.9} parent=1 // loop_exit
      _
    %4736 = vsyncpa [#allocation4], 1
    %s4737 = scalar_lea.sflag [#allocation4], 1
    %4738 = vsyncpa %s4737, 1

</llo_original>
